<compile_context>
chip_gen: v7x
topology: tpu7x:2x2x1
jax: 0.10.0
libtpu: 0.0.40
codegen_flags: <defaults>
</compile_context>

<pallas_src>
import jax
import jax.numpy as jnp
from jax.experimental import pallas as pl
from jax.experimental.pallas import tpu as pltpu

_VMEM_LIMIT = 32 * 1024 * 1024  # sized against v7x's 64 MiB VMEM; fine on v5e/v6e


# ---------------------------------------------------------------------------
# Fused Bottleneck kernel (one batch element per grid step)
# ---------------------------------------------------------------------------

def bottleneck_fused_kernel(x_ref, w1_ref, b1_ref, w2_ref, b2_ref,
                            w3_ref, b3_ref, o_ref, pad_ref):
    """Whole Bottleneck block (eval-mode BN folded into weights) for one image.

    x_ref:   (H, W, Cin)    bf16 NHWC input tile; doubles as the identity branch
    w1_ref:  (Cin, C)       bf16 1x1 conv1 weights, BN1 scale folded
    b1_ref:  (1, C)         f32  BN1 bias
    w2_ref:  (3, 3*C, C)    bf16 3x3 conv2 weights, dh-major, K index = dw*C+ci,
                            BN2 scale folded
    b2_ref:  (1, C)         f32  BN2 bias
    w3_ref:  (C, Cout)      bf16 1x1 conv3 weights, BN3 scale folded
    b3_ref:  (1, Cout)      f32  BN3 bias
    o_ref:   (H, W, Cout)   bf16 output tile (lane-dense, Cout multiple of 128)
    pad_ref: (H+2, W+4, C)  bf16 VMEM scratch: zero-padded stage-1 activation.
                            Interior is stored at column offset 2 so the store
                            stays packed-sublane aligned for bf16; the 3x3
                            windows read columns 1+dw .. 1+dw+W.
    """
    H, W, Cin = x_ref.shape
    C = w1_ref.shape[1]
    Cout = w3_ref.shape[1]
    HW = H * W

    # --- stage 1: 1x1 conv (BN1 folded) + bias + ReLU -> padded scratch -----
    h1 = jnp.dot(x_ref[...].reshape(HW, Cin), w1_ref[...],
                 preferred_element_type=jnp.float32)
    h1 = jnp.maximum(h1 + b1_ref[...], 0.0)
    pad_ref[...] = jnp.zeros_like(pad_ref)            # (re)zero the halo
    pad_ref[1:H + 1, 2:W + 2, :] = h1.reshape(H, W, C).astype(pad_ref.dtype)

    # --- stage 2: 3x3 conv (BN2 folded) + bias + ReLU ------------------------
    # dh-major: 3 MXU matmuls with K = 3*C.  The three dw windows are loaded
    # per-tap from the scratch ref (never held live as one big padded value)
    # and concatenated along the lane axis (128-aligned -> layout-free).
    acc = None
    for dh in range(3):
        lhs = jnp.concatenate(
            [pad_ref[dh:dh + H, 1 + dw:1 + dw + W, :] for dw in range(3)],
            axis=-1).reshape(HW, 3 * C)
        part = jnp.dot(lhs, w2_ref[dh], preferred_element_type=jnp.float32)
        acc = part if acc is None else acc + part
    z = jnp.maximum(acc + b2_ref[...], 0.0).astype(w3_ref.dtype)

    # --- stage 3: 1x1 conv (BN3 folded) + bias + residual + ReLU -------------
    y = jnp.dot(z, w3_ref[...], preferred_element_type=jnp.float32)
    y = y + b3_ref[...] + x_ref[...].reshape(HW, Cout).astype(jnp.float32)
    o_ref[...] = jnp.maximum(y, 0.0).reshape(H, W, Cout).astype(o_ref.dtype)


# ---------------------------------------------------------------------------
# Wrapper
# ---------------------------------------------------------------------------

def bottleneck_forward(x_nchw, params):
    N, Cin, H, W = x_nchw.shape
    width = params["w1"].shape[1]
    Cout = params["w3"].shape[1]
    assert Cin == Cout, "stride=1 / no-downsample path needs inplanes == planes*expansion"

    # NCHW -> NHWC (channels on the lane axis), bf16 operands.
    x_nhwc = jnp.transpose(x_nchw, (0, 2, 3, 1)).astype(jnp.bfloat16)

    flops = 2 * N * H * W * (Cin * width + 9 * width * width + width * Cout)
    bytes_accessed = (N * H * W * (Cin + Cout) * 2
                      + 2 * (Cin * width + 9 * width * width + width * Cout))

    out = pl.pallas_call(
        bottleneck_fused_kernel,
        grid=(N,),
        in_specs=[
            pl.BlockSpec((None, H, W, Cin), lambda n: (n, 0, 0, 0)),
            pl.BlockSpec((Cin, width), lambda n: (0, 0)),          # resident
            pl.BlockSpec((1, width), lambda n: (0, 0)),
            pl.BlockSpec((3, 3 * width, width), lambda n: (0, 0, 0)),
            pl.BlockSpec((1, width), lambda n: (0, 0)),
            pl.BlockSpec((width, Cout), lambda n: (0, 0)),
            pl.BlockSpec((1, Cout), lambda n: (0, 0)),
        ],
        out_specs=pl.BlockSpec((None, H, W, Cout), lambda n: (n, 0, 0, 0)),
        out_shape=jax.ShapeDtypeStruct((N, H, W, Cout), jnp.bfloat16),
        scratch_shapes=[pltpu.VMEM((H + 2, W + 4, width), jnp.bfloat16)],
        compiler_params=pltpu.CompilerParams(
            dimension_semantics=("parallel",),
            vmem_limit_bytes=_VMEM_LIMIT),
        cost_estimate=pl.CostEstimate(
            flops=flops, transcendentals=0, bytes_accessed=bytes_accessed),
    )(x_nhwc, params["w1"], params["b1"], params["w2"], params["b2"],
      params["w3"], params["b3"])

    # NHWC (bf16) -> NCHW (f32) to match the PyTorch module's layout/dtype.
    return jnp.transpose(out, (0, 3, 1, 2)).astype(jnp.float32)


# ---------------------------------------------------------------------------
# Deterministic parameter init (BN scales folded for the kernel) + reference
# ---------------------------------------------------------------------------

def make_params(key, inplanes, planes, base_width=64, groups=1, expansion=4):
    width = int(planes * (base_width / 64.0)) * groups
    out_planes = planes * expansion
    eps = 1e-5
    ks = jax.random.split(key, 15)

    def bn_fold(kg, kb, km, kv, c):
        gamma = 0.5 + jax.random.uniform(kg, (c,), jnp.float32)
        beta = 0.1 * jax.random.normal(kb, (c,), jnp.float32)
        mean = 0.1 * jax.random.normal(km, (c,), jnp.float32)
        var = 1.0 + 0.1 * jax.random.uniform(kv, (c,), jnp.float32)
        scale = gamma / jnp.sqrt(var + eps)
        bias = beta - mean * scale
        return scale, bias

    def kaiming(k, shape, fan_in):
        return jnp.sqrt(2.0 / fan_in) * jax.random.normal(k, shape, jnp.float32)

    # conv weights in HWIO
    w1_hwio = kaiming(ks[0], (1, 1, inplanes, width), inplanes)
    w2_hwio = kaiming(ks[1], (3, 3, width, width), 9 * width)
    w3_hwio = kaiming(ks[2], (1, 1, width, out_planes), width)
    s1, b1 = bn_fold(ks[3], ks[4], ks[5], ks[6], width)
    s2, b2 = bn_fold(ks[7], ks[8], ks[9], ks[10], width)
    s3, b3 = bn_fold(ks[11], ks[12], ks[13], ks[14], out_planes)

    # Fold BN scales into the weights once (f32), then cast to bf16.
    w1_k = (w1_hwio[0, 0] * s1[None, :]).astype(jnp.bfloat16)           # (Cin, width)
    w2_k = (w2_hwio * s2[None, None, None, :]).reshape(
        3, 3 * width, width).astype(jnp.bfloat16)                       # (3, 3*C, C), dh-major
    w3_k = (w3_hwio[0, 0] * s3[None, :]).astype(jnp.bfloat16)           # (width, out_planes)

    return dict(
        # kernel-side params (BN scale folded, bf16 weights, f32 biases)
        w1=w1_k, b1=b1[None, :],
        w2=w2_k, b2=b2[None, :],
        w3=w3_k, b3=b3[None, :],
        # unfolded copies for the XLA reference
        w1_hwio=w1_hwio, w2_hwio=w2_hwio, w3_hwio=w3_hwio,
        scale1=s1, bias1=b1, scale2=s2, bias2=b2, scale3=s3, bias3=b3,
    )


def reference_forward(x_nchw, params):
    """XLA conv reference (eval-mode BN applied post-conv, bf16 operands)."""
    dn = ("NHWC", "HWIO", "NHWC")
    x = jnp.transpose(x_nchw, (0, 2, 3, 1))
    w1 = params["w1_hwio"].astype(jnp.bfloat16)
    w2 = params["w2_hwio"].astype(jnp.bfloat16)
    w3 = params["w3_hwio"].astype(jnp.bfloat16)

    h = jax.lax.conv_general_dilated(x.astype(jnp.bfloat16), w1, (1, 1), "VALID",
                                     dimension_numbers=dn,
                                     preferred_element_type=jnp.float32)
    h = jnp.maximum(h * params["scale1"] + params["bias1"], 0.0).astype(jnp.bfloat16)
    h = jax.lax.conv_general_dilated(h, w2, (1, 1), ((1, 1), (1, 1)),
                                     dimension_numbers=dn,
                                     preferred_element_type=jnp.float32)
    h = jnp.maximum(h * params["scale2"] + params["bias2"], 0.0).astype(jnp.bfloat16)
    h = jax.lax.conv_general_dilated(h, w3, (1, 1), "VALID",
                                     dimension_numbers=dn,
                                     preferred_element_type=jnp.float32)
    h = h * params["scale3"] + params["bias3"] + x
    h = jnp.maximum(h, 0.0)
    return jnp.transpose(h, (0, 3, 1, 2))


# ---------------------------------------------------------------------------
if __name__ == "__main__":
    # Bottleneck config with lane-dense channels (width=128, out=512),
    # stride=1, no downsample (inplanes == planes * expansion).
    N, inplanes, planes, H, W = 2, 512, 128, 16, 16

    key = jax.random.PRNGKey(0)
    kx, kp = jax.random.split(key)
    x = jax.random.normal(kx, (N, inplanes, H, W), jnp.float32)   # NCHW like PyTorch
    params = make_params(kp, inplanes, planes)

    out = jax.block_until_ready(jax.jit(bottleneck_forward)(x, params))

    ref = reference_forward(x, params)
    assert out.shape == (N, planes * 4, H, W), out.shape
    max_err = float(jnp.max(jnp.abs(out - ref)))
    assert jnp.allclose(out, ref, atol=7.5e-2, rtol=5e-2), max_err

    print("KERNEL_OK")
</pallas_src>

<mosaic_0001>
module attributes {stable_mosaic.version = 11 : i64} {
  func.func @bottleneck_fused_kernel(%arg0: i32, %arg1: memref<1x16x16x512xbf16, #tpu.memory_space<vmem>>, %arg2: memref<512x128xbf16, #tpu.memory_space<vmem>>, %arg3: memref<1x128xf32, #tpu.memory_space<vmem>>, %arg4: memref<3x384x128xbf16, #tpu.memory_space<vmem>>, %arg5: memref<1x128xf32, #tpu.memory_space<vmem>>, %arg6: memref<128x512xbf16, #tpu.memory_space<vmem>>, %arg7: memref<1x512xf32, #tpu.memory_space<vmem>>, %arg8: memref<1x16x16x512xbf16, #tpu.memory_space<vmem>>, %arg9: memref<18x20x128xbf16, #tpu.memory_space<vmem>>) attributes {dimension_semantics = [#tpu.dimension_semantics<parallel>], iteration_bounds = array<i64: 2>, scalar_prefetch = 0 : i64, scratch_operands = 1 : i64, tpu.core_type = #tpu.core_type<tc>, window_params = [{transform_indices = @transform_0, window_bounds = array<i64: 1, 16, 16, 512>}, {pipeline_mode = #tpu.pipeline_mode<synchronous>, transform_indices = @transform_1, window_bounds = array<i64: 512, 128>}, {pipeline_mode = #tpu.pipeline_mode<synchronous>, transform_indices = @transform_2, window_bounds = array<i64: 1, 128>}, {pipeline_mode = #tpu.pipeline_mode<synchronous>, transform_indices = @transform_3, window_bounds = array<i64: 3, 384, 128>}, {pipeline_mode = #tpu.pipeline_mode<synchronous>, transform_indices = @transform_4, window_bounds = array<i64: 1, 128>}, {pipeline_mode = #tpu.pipeline_mode<synchronous>, transform_indices = @transform_5, window_bounds = array<i64: 128, 512>}, {pipeline_mode = #tpu.pipeline_mode<synchronous>, transform_indices = @transform_6, window_bounds = array<i64: 1, 512>}, {transform_indices = @transform_7, window_bounds = array<i64: 1, 16, 16, 512>}]} {
    %c0 = arith.constant 0 : index
    %c0_0 = arith.constant 0 : index
    %c0_1 = arith.constant 0 : index
    %c0_2 = arith.constant 0 : index
    %0 = vector.load %arg1[%c0, %c0_0, %c0_1, %c0_2] : memref<1x16x16x512xbf16, #tpu.memory_space<vmem>>, vector<1x16x16x512xbf16>
    %1 = vector.shape_cast %0 : vector<1x16x16x512xbf16> to vector<16x16x512xbf16>
    %2 = vector.shape_cast %1 : vector<16x16x512xbf16> to vector<256x512xbf16>
    %c0_3 = arith.constant 0 : index
    %c0_4 = arith.constant 0 : index
    %3 = vector.load %arg2[%c0_3, %c0_4] : memref<512x128xbf16, #tpu.memory_space<vmem>>, vector<512x128xbf16>
    %cst = arith.constant dense<0.000000e+00> : vector<256x128xf32>
    %4 = tpu.matmul %2, %3, %cst {dimension_numbers = #tpu.dot_dimension_numbers<[1], [0], [0], [1], [0, 0, 1, 1], [], []>} : vector<256x512xbf16>, vector<512x128xbf16>, vector<256x128xf32> -> vector<256x128xf32>
    %c0_5 = arith.constant 0 : index
    %c0_6 = arith.constant 0 : index
    %5 = vector.load %arg3[%c0_5, %c0_6] : memref<1x128xf32, #tpu.memory_space<vmem>>, vector<1x128xf32>
    %6 = vector.broadcast %5 : vector<1x128xf32> to vector<256x128xf32>
    %7 = arith.addf %4, %6 : vector<256x128xf32>
    %cst_7 = arith.constant 0.000000e+00 : f32
    %8 = vector.broadcast %cst_7 : f32 to vector<256x128xf32>
    %9 = arith.maximumf %7, %8 : vector<256x128xf32>
    %cst_8 = arith.constant 0.000000e+00 : bf16
    %10 = vector.broadcast %cst_8 : bf16 to vector<18x20x128xbf16>
    %c0_9 = arith.constant 0 : index
    %c0_10 = arith.constant 0 : index
    %c0_11 = arith.constant 0 : index
    %11 = vector.load %arg9[%c0_9, %c0_10, %c0_11] : memref<18x20x128xbf16, #tpu.memory_space<vmem>>, vector<18x20x128xbf16>
    tpu.vector_store %arg9[%c0_9, %c0_10, %c0_11], %10 {strides = array<i32>} : memref<18x20x128xbf16, #tpu.memory_space<vmem>>, vector<18x20x128xbf16>,
    %12 = vector.shape_cast %9 : vector<256x128xf32> to vector<16x16x128xf32>
    %13 = arith.truncf %12 : vector<16x16x128xf32> to vector<16x16x128xbf16>
    %c1 = arith.constant 1 : index
    %c2 = arith.constant 2 : index
    %c0_12 = arith.constant 0 : index
    %14 = vector.load %arg9[%c1, %c2, %c0_12] : memref<18x20x128xbf16, #tpu.memory_space<vmem>>, vector<16x16x128xbf16>
    tpu.vector_store %arg9[%c1, %c2, %c0_12], %13 {strides = array<i32>} : memref<18x20x128xbf16, #tpu.memory_space<vmem>>, vector<16x16x128xbf16>,
    %c0_13 = arith.constant 0 : index
    %c1_14 = arith.constant 1 : index
    %c0_15 = arith.constant 0 : index
    %15 = vector.load %arg9[%c0_13, %c1_14, %c0_15] : memref<18x20x128xbf16, #tpu.memory_space<vmem>>, vector<16x16x128xbf16>
    %c0_16 = arith.constant 0 : index
    %c2_17 = arith.constant 2 : index
    %c0_18 = arith.constant 0 : index
    %16 = vector.load %arg9[%c0_16, %c2_17, %c0_18] : memref<18x20x128xbf16, #tpu.memory_space<vmem>>, vector<16x16x128xbf16>
    %c0_19 = arith.constant 0 : index
    %c3 = arith.constant 3 : index
    %c0_20 = arith.constant 0 : index
    %17 = vector.load %arg9[%c0_19, %c3, %c0_20] : memref<18x20x128xbf16, #tpu.memory_space<vmem>>, vector<16x16x128xbf16>
    %18 = tpu.concatenate %15, %16, %17 in 2 : vector<16x16x128xbf16>, vector<16x16x128xbf16>, vector<16x16x128xbf16> -> vector<16x16x384xbf16>
    %19 = vector.shape_cast %18 : vector<16x16x384xbf16> to vector<256x384xbf16>
    %c0_21 = arith.constant 0 : index
    %c0_22 = arith.constant 0 : index
    %c0_23 = arith.constant 0 : index
    %20 = vector.load %arg4[%c0_21, %c0_22, %c0_23] : memref<3x384x128xbf16, #tpu.memory_space<vmem>>, vector<1x384x128xbf16>
    %21 = vector.shape_cast %20 : vector<1x384x128xbf16> to vector<384x128xbf16>
    %cst_24 = arith.constant dense<0.000000e+00> : vector<256x128xf32>
    %22 = tpu.matmul %19, %21, %cst_24 {dimension_numbers = #tpu.dot_dimension_numbers<[1], [0], [0], [1], [0, 0, 1, 1], [], []>} : vector<256x384xbf16>, vector<384x128xbf16>, vector<256x128xf32> -> vector<256x128xf32>
    %c1_25 = arith.constant 1 : index
    %c1_26 = arith.constant 1 : index
    %c0_27 = arith.constant 0 : index
    %23 = vector.load %arg9[%c1_25, %c1_26, %c0_27] : memref<18x20x128xbf16, #tpu.memory_space<vmem>>, vector<16x16x128xbf16>
    %c1_28 = arith.constant 1 : index
    %c2_29 = arith.constant 2 : index
    %c0_30 = arith.constant 0 : index
    %24 = vector.load %arg9[%c1_28, %c2_29, %c0_30] : memref<18x20x128xbf16, #tpu.memory_space<vmem>>, vector<16x16x128xbf16>
    %c1_31 = arith.constant 1 : index
    %c3_32 = arith.constant 3 : index
    %c0_33 = arith.constant 0 : index
    %25 = vector.load %arg9[%c1_31, %c3_32, %c0_33] : memref<18x20x128xbf16, #tpu.memory_space<vmem>>, vector<16x16x128xbf16>
    %26 = tpu.concatenate %23, %24, %25 in 2 : vector<16x16x128xbf16>, vector<16x16x128xbf16>, vector<16x16x128xbf16> -> vector<16x16x384xbf16>
    %27 = vector.shape_cast %26 : vector<16x16x384xbf16> to vector<256x384xbf16>
    %c1_34 = arith.constant 1 : index
    %c0_35 = arith.constant 0 : index
    %c0_36 = arith.constant 0 : index
    %28 = vector.load %arg4[%c1_34, %c0_35, %c0_36] : memref<3x384x128xbf16, #tpu.memory_space<vmem>>, vector<1x384x128xbf16>
    %29 = vector.shape_cast %28 : vector<1x384x128xbf16> to vector<384x128xbf16>
    %cst_37 = arith.constant dense<0.000000e+00> : vector<256x128xf32>
    %30 = tpu.matmul %27, %29, %cst_37 {dimension_numbers = #tpu.dot_dimension_numbers<[1], [0], [0], [1], [0, 0, 1, 1], [], []>} : vector<256x384xbf16>, vector<384x128xbf16>, vector<256x128xf32> -> vector<256x128xf32>
    %31 = arith.addf %22, %30 : vector<256x128xf32>
    %c2_38 = arith.constant 2 : index
    %c1_39 = arith.constant 1 : index
    %c0_40 = arith.constant 0 : index
    %32 = vector.load %arg9[%c2_38, %c1_39, %c0_40] : memref<18x20x128xbf16, #tpu.memory_space<vmem>>, vector<16x16x128xbf16>
    %c2_41 = arith.constant 2 : index
    %c2_42 = arith.constant 2 : index
    %c0_43 = arith.constant 0 : index
    %33 = vector.load %arg9[%c2_41, %c2_42, %c0_43] : memref<18x20x128xbf16, #tpu.memory_space<vmem>>, vector<16x16x128xbf16>
    %c2_44 = arith.constant 2 : index
    %c3_45 = arith.constant 3 : index
    %c0_46 = arith.constant 0 : index
    %34 = vector.load %arg9[%c2_44, %c3_45, %c0_46] : memref<18x20x128xbf16, #tpu.memory_space<vmem>>, vector<16x16x128xbf16>
    %35 = tpu.concatenate %32, %33, %34 in 2 : vector<16x16x128xbf16>, vector<16x16x128xbf16>, vector<16x16x128xbf16> -> vector<16x16x384xbf16>
    %36 = vector.shape_cast %35 : vector<16x16x384xbf16> to vector<256x384xbf16>
    %c2_47 = arith.constant 2 : index
    %c0_48 = arith.constant 0 : index
    %c0_49 = arith.constant 0 : index
    %37 = vector.load %arg4[%c2_47, %c0_48, %c0_49] : memref<3x384x128xbf16, #tpu.memory_space<vmem>>, vector<1x384x128xbf16>
    %38 = vector.shape_cast %37 : vector<1x384x128xbf16> to vector<384x128xbf16>
    %cst_50 = arith.constant dense<0.000000e+00> : vector<256x128xf32>
    %39 = tpu.matmul %36, %38, %cst_50 {dimension_numbers = #tpu.dot_dimension_numbers<[1], [0], [0], [1], [0, 0, 1, 1], [], []>} : vector<256x384xbf16>, vector<384x128xbf16>, vector<256x128xf32> -> vector<256x128xf32>
    %40 = arith.addf %31, %39 : vector<256x128xf32>
    %c0_51 = arith.constant 0 : index
    %c0_52 = arith.constant 0 : index
    %41 = vector.load %arg5[%c0_51, %c0_52] : memref<1x128xf32, #tpu.memory_space<vmem>>, vector<1x128xf32>
    %42 = vector.broadcast %41 : vector<1x128xf32> to vector<256x128xf32>
    %43 = arith.addf %40, %42 : vector<256x128xf32>
    %cst_53 = arith.constant 0.000000e+00 : f32
    %44 = vector.broadcast %cst_53 : f32 to vector<256x128xf32>
    %45 = arith.maximumf %43, %44 : vector<256x128xf32>
    %46 = arith.truncf %45 : vector<256x128xf32> to vector<256x128xbf16>
    %c0_54 = arith.constant 0 : index
    %c0_55 = arith.constant 0 : index
    %47 = vector.load %arg6[%c0_54, %c0_55] : memref<128x512xbf16, #tpu.memory_space<vmem>>, vector<128x512xbf16>
    %cst_56 = arith.constant dense<0.000000e+00> : vector<256x512xf32>
    %48 = tpu.matmul %46, %47, %cst_56 {dimension_numbers = #tpu.dot_dimension_numbers<[1], [0], [0], [1], [0, 0, 1, 1], [], []>} : vector<256x128xbf16>, vector<128x512xbf16>, vector<256x512xf32> -> vector<256x512xf32>
    %c0_57 = arith.constant 0 : index
    %c0_58 = arith.constant 0 : index
    %49 = vector.load %arg7[%c0_57, %c0_58] : memref<1x512xf32, #tpu.memory_space<vmem>>, vector<1x512xf32>
    %50 = vector.broadcast %49 : vector<1x512xf32> to vector<256x512xf32>
    %51 = arith.addf %48, %50 : vector<256x512xf32>
    %c0_59 = arith.constant 0 : index
    %c0_60 = arith.constant 0 : index
    %c0_61 = arith.constant 0 : index
    %c0_62 = arith.constant 0 : index
    %52 = vector.load %arg1[%c0_59, %c0_60, %c0_61, %c0_62] : memref<1x16x16x512xbf16, #tpu.memory_space<vmem>>, vector<1x16x16x512xbf16>
    %53 = vector.shape_cast %52 : vector<1x16x16x512xbf16> to vector<16x16x512xbf16>
    %54 = vector.shape_cast %53 : vector<16x16x512xbf16> to vector<256x512xbf16>
    %55 = arith.extf %54 : vector<256x512xbf16> to vector<256x512xf32>
    %56 = arith.addf %51, %55 : vector<256x512xf32>
    %cst_63 = arith.constant 0.000000e+00 : f32
    %57 = vector.broadcast %cst_63 : f32 to vector<256x512xf32>
    %58 = arith.maximumf %56, %57 : vector<256x512xf32>
    %59 = vector.shape_cast %58 : vector<256x512xf32> to vector<16x16x512xf32>
    %60 = arith.truncf %59 : vector<16x16x512xf32> to vector<16x16x512xbf16>
    %c0_64 = arith.constant 0 : index
    %c0_65 = arith.constant 0 : index
    %c0_66 = arith.constant 0 : index
    %c0_67 = arith.constant 0 : index
    %61 = vector.load %arg8[%c0_64, %c0_65, %c0_66, %c0_67] : memref<1x16x16x512xbf16, #tpu.memory_space<vmem>>, vector<1x16x16x512xbf16>
    %62 = vector.shape_cast %61 : vector<1x16x16x512xbf16> to vector<16x16x512xbf16>
    %63 = vector.shape_cast %60 : vector<16x16x512xbf16> to vector<1x16x16x512xbf16>
    tpu.vector_store %arg8[%c0_64, %c0_65, %c0_66, %c0_67], %63 {strides = array<i32>} : memref<1x16x16x512xbf16, #tpu.memory_space<vmem>>, vector<1x16x16x512xbf16>,
    return
  }
  func.func @transform_0(%arg0: i32) -> (i32, i32, i32, i32) {
    %c0_i32 = arith.constant 0 : i32
    %c0_i32_0 = arith.constant 0 : i32
    %c0_i32_1 = arith.constant 0 : i32
    %c0_i32_2 = arith.constant 0 : i32
    return %arg0, %c0_i32, %c0_i32_0, %c0_i32_1 : i32, i32, i32, i32
  }
  func.func @transform_1(%arg0: i32) -> (i32, i32) {
    %c0_i32 = arith.constant 0 : i32
    %c0_i32_0 = arith.constant 0 : i32
    %c0_i32_1 = arith.constant 0 : i32
    return %c0_i32, %c0_i32_0 : i32, i32
  }
  func.func @transform_2(%arg0: i32) -> (i32, i32) {
    %c0_i32 = arith.constant 0 : i32
    %c0_i32_0 = arith.constant 0 : i32
    %c0_i32_1 = arith.constant 0 : i32
    return %c0_i32, %c0_i32_0 : i32, i32
  }
  func.func @transform_3(%arg0: i32) -> (i32, i32, i32) {
    %c0_i32 = arith.constant 0 : i32
    %c0_i32_0 = arith.constant 0 : i32
    %c0_i32_1 = arith.constant 0 : i32
    %c0_i32_2 = arith.constant 0 : i32
    return %c0_i32, %c0_i32_0, %c0_i32_1 : i32, i32, i32
  }
  func.func @transform_4(%arg0: i32) -> (i32, i32) {
    %c0_i32 = arith.constant 0 : i32
    %c0_i32_0 = arith.constant 0 : i32
    %c0_i32_1 = arith.constant 0 : i32
    return %c0_i32, %c0_i32_0 : i32, i32
  }
  func.func @transform_5(%arg0: i32) -> (i32, i32) {
    %c0_i32 = arith.constant 0 : i32
    %c0_i32_0 = arith.constant 0 : i32
    %c0_i32_1 = arith.constant 0 : i32
    return %c0_i32, %c0_i32_0 : i32, i32
  }
  func.func @transform_6(%arg0: i32) -> (i32, i32) {
    %c0_i32 = arith.constant 0 : i32
    %c0_i32_0 = arith.constant 0 : i32
    %c0_i32_1 = arith.constant 0 : i32
    return %c0_i32, %c0_i32_0 : i32, i32
  }
  func.func @transform_7(%arg0: i32) -> (i32, i32, i32, i32) {
    %c0_i32 = arith.constant 0 : i32
    %c0_i32_0 = arith.constant 0 : i32
    %c0_i32_1 = arith.constant 0 : i32
    %c0_i32_2 = arith.constant 0 : i32
    return %arg0, %c0_i32, %c0_i32_0, %c0_i32_1 : i32, i32, i32, i32
  }
}

</mosaic_0001>

<llo_original>
// kernel: bottleneck_forward.1
$region0: #{bottleneck_forward.1}
  #allocation0 [shape = 'u32[]', space=smem, size = 0x4, offset = 0x4, fixed_abs, tag = 'smem constant byte address 0x4 - core index']
  #allocation1 [shape = 'u32[144,128]{1,0:T(1,128)}', space=vmem, size = 0x12000, scoped, tag = 'internal scratch']
  #allocation2 [shape = 'bf16[18,20,128]{2,1,0:T(8,128)(2,1)}', space=vmem, size = 0x1b000, scoped, tag = 'scratch operand']
  %s0 = inlined_call_operand.vmem [shape: bf16[2,16,16,512], index: 0, kind: input, shape index: {}]
  %s1 = inlined_call_operand.vmem [shape: bf16[512,128], index: 1, kind: input, shape index: {}]
  %s2 = inlined_call_operand.vmem [shape: f32[1,128], index: 2, kind: input, shape index: {}]
  %s3 = inlined_call_operand.vmem [shape: bf16[3,384,128], index: 3, kind: input, shape index: {}]
  %s4 = inlined_call_operand.vmem [shape: f32[1,128], index: 4, kind: input, shape index: {}]
  %s5 = inlined_call_operand.vmem [shape: bf16[128,512], index: 5, kind: input, shape index: {}]
  %s6 = inlined_call_operand.vmem [shape: f32[1,512], index: 6, kind: input, shape index: {}]
  %s7 = inlined_call_operand.vmem [shape: bf16[2,16,16,512], index: 7, kind: output, shape index: {}]
  %s8 = sld [smem:[#allocation0]]
  $region61: #{bottleneck_forward.1} parent=0
    _
  %s10 = ssub.s32 1, %s8
  %s11 = scalar_select 0, %s10, %s8
  loop: start=0, step=1, limit=4
  $region2: #{bottleneck_forward.1} parent=0 // loop_pre_header
    _
  $region3: #{bottleneck_forward.1} parent=0 // loop_header
    %s13 = sphi 0, %s17
    %p14 = scmp.ge.s32.totalorder %s13, 4
    %s23 = sphi 0, %s25
    %s26 = sphi 0, %s23
    %s27 = sphi 0, %s26
    %s43 = sphi 0, %s27
    %s47 = sphi 0, %s47
    %s49 = sphi 0, %s47
    %s50 = sphi 0, %s49
    %s64 = sphi 0, %s50
    %s68 = sphi 0, %s68
    %s70 = sphi 0, %s68
    %s71 = sphi 0, %s70
    %s85 = sphi 0, %s71
    %s89 = sphi 0, %s89
    %s91 = sphi 0, %s89
    %s92 = sphi 0, %s91
    %s106 = sphi 0, %s92
    %s110 = sphi 0, %s110
    %s112 = sphi 0, %s110
    %s113 = sphi 0, %s112
    %s127 = sphi 0, %s113
    %s131 = sphi 0, %s131
    %s133 = sphi 0, %s131
    %s134 = sphi 0, %s133
    %s148 = sphi 0, %s134
    %s152 = sphi 0, %s152
    %s154 = sphi 0, %s152
    %s155 = sphi 0, %s154
    %s169 = sphi 0, %s155
    %s175 = sphi 0, %s177
    %s178 = sphi 0, %s175
    %s179 = sphi 0, %s178
    %s195 = sphi 0, %s179
  $region4: #{bottleneck_forward.1} parent=0 // loop_header_branch
    %16 = sbr.rel (%p14) target = $region8
  $region5: #{bottleneck_forward.1} parent=0 // loop_body
    %s18 = ssub.s32 %s13, 1
    %s19 = ssub.s32 %s13, 2
    %s20 = sadd.s32 %s13, 1
    %s21 = ssub.s32 %s13, %s20
    %p22 = scmp.eq.s32.totalorder %s21, 0
    %s24 = sadd.s32 %s23, 1
    %s25 = scalar_select %p22, %s23, %s24
    %p28 = pneg %p22
    %p29 = scmp.eq.s32.totalorder %s13, 1
    %p30 = por %p28, %p29
    %p31 = scmp.ne.s32.totalorder %s23, %s26
    %p32 = scmp.eq.s32.totalorder %s13, 0
    %p33 = por %p31, %p32
    %p34 = scmp.ne.s32.totalorder %s23, %s26
    %p35 = scmp.eq.s32.totalorder %s18, 1
    %p36 = por %p34, %p35
    %p37 = scmp.ne.s32.totalorder %s26, %s27
    %p38 = scmp.eq.s32.totalorder %s18, 0
    %p39 = por %p37, %p38
    %p40 = scmp.ne.s32.totalorder %s26, %s27
    %p41 = scmp.eq.s32.totalorder %s19, 1
    %p42 = por %p40, %p41
    %p44 = scmp.ne.s32.totalorder %s27, %s43
    %p45 = scmp.eq.s32.totalorder %s19, 0
    %p46 = por %p44, %p45
    %s48 = sadd.s32 %s47, 1
    %p51 = scmp.eq.s32.totalorder %s13, 1
    %p52 = scmp.ne.s32.totalorder %s47, %s49
    %p53 = scmp.eq.s32.totalorder %s13, 0
    %p54 = por %p52, %p53
    %p55 = scmp.ne.s32.totalorder %s47, %s49
    %p56 = scmp.eq.s32.totalorder %s18, 1
    %p57 = por %p55, %p56
    %p58 = scmp.ne.s32.totalorder %s49, %s50
    %p59 = scmp.eq.s32.totalorder %s18, 0
    %p60 = por %p58, %p59
    %p61 = scmp.ne.s32.totalorder %s49, %s50
    %p62 = scmp.eq.s32.totalorder %s19, 1
    %p63 = por %p61, %p62
    %p65 = scmp.ne.s32.totalorder %s50, %s64
    %p66 = scmp.eq.s32.totalorder %s19, 0
    %p67 = por %p65, %p66
    %s69 = sadd.s32 %s68, 1
    %p72 = scmp.eq.s32.totalorder %s13, 1
    %p73 = scmp.ne.s32.totalorder %s68, %s70
    %p74 = scmp.eq.s32.totalorder %s13, 0
    %p75 = por %p73, %p74
    %p76 = scmp.ne.s32.totalorder %s68, %s70
    %p77 = scmp.eq.s32.totalorder %s18, 1
    %p78 = por %p76, %p77
    %p79 = scmp.ne.s32.totalorder %s70, %s71
    %p80 = scmp.eq.s32.totalorder %s18, 0
    %p81 = por %p79, %p80
    %p82 = scmp.ne.s32.totalorder %s70, %s71
    %p83 = scmp.eq.s32.totalorder %s19, 1
    %p84 = por %p82, %p83
    %p86 = scmp.ne.s32.totalorder %s71, %s85
    %p87 = scmp.eq.s32.totalorder %s19, 0
    %p88 = por %p86, %p87
    %s90 = sadd.s32 %s89, 1
    %p93 = scmp.eq.s32.totalorder %s13, 1
    %p94 = scmp.ne.s32.totalorder %s89, %s91
    %p95 = scmp.eq.s32.totalorder %s13, 0
    %p96 = por %p94, %p95
    %p97 = scmp.ne.s32.totalorder %s89, %s91
    %p98 = scmp.eq.s32.totalorder %s18, 1
    %p99 = por %p97, %p98
    %p100 = scmp.ne.s32.totalorder %s91, %s92
    %p101 = scmp.eq.s32.totalorder %s18, 0
    %p102 = por %p100, %p101
    %p103 = scmp.ne.s32.totalorder %s91, %s92
    %p104 = scmp.eq.s32.totalorder %s19, 1
    %p105 = por %p103, %p104
    %p107 = scmp.ne.s32.totalorder %s92, %s106
    %p108 = scmp.eq.s32.totalorder %s19, 0
    %p109 = por %p107, %p108
    %s111 = sadd.s32 %s110, 1
    %p114 = scmp.eq.s32.totalorder %s13, 1
    %p115 = scmp.ne.s32.totalorder %s110, %s112
    %p116 = scmp.eq.s32.totalorder %s13, 0
    %p117 = por %p115, %p116
    %p118 = scmp.ne.s32.totalorder %s110, %s112
    %p119 = scmp.eq.s32.totalorder %s18, 1
    %p120 = por %p118, %p119
    %p121 = scmp.ne.s32.totalorder %s112, %s113
    %p122 = scmp.eq.s32.totalorder %s18, 0
    %p123 = por %p121, %p122
    %p124 = scmp.ne.s32.totalorder %s112, %s113
    %p125 = scmp.eq.s32.totalorder %s19, 1
    %p126 = por %p124, %p125
    %p128 = scmp.ne.s32.totalorder %s113, %s127
    %p129 = scmp.eq.s32.totalorder %s19, 0
    %p130 = por %p128, %p129
    %s132 = sadd.s32 %s131, 1
    %p135 = scmp.eq.s32.totalorder %s13, 1
    %p136 = scmp.ne.s32.totalorder %s131, %s133
    %p137 = scmp.eq.s32.totalorder %s13, 0
    %p138 = por %p136, %p137
    %p139 = scmp.ne.s32.totalorder %s131, %s133
    %p140 = scmp.eq.s32.totalorder %s18, 1
    %p141 = por %p139, %p140
    %p142 = scmp.ne.s32.totalorder %s133, %s134
    %p143 = scmp.eq.s32.totalorder %s18, 0
    %p144 = por %p142, %p143
    %p145 = scmp.ne.s32.totalorder %s133, %s134
    %p146 = scmp.eq.s32.totalorder %s19, 1
    %p147 = por %p145, %p146
    %p149 = scmp.ne.s32.totalorder %s134, %s148
    %p150 = scmp.eq.s32.totalorder %s19, 0
    %p151 = por %p149, %p150
    %s153 = sadd.s32 %s152, 1
    %p156 = scmp.eq.s32.totalorder %s13, 1
    %p157 = scmp.ne.s32.totalorder %s152, %s154
    %p158 = scmp.eq.s32.totalorder %s13, 0
    %p159 = por %p157, %p158
    %p160 = scmp.ne.s32.totalorder %s152, %s154
    %p161 = scmp.eq.s32.totalorder %s18, 1
    %p162 = por %p160, %p161
    %p163 = scmp.ne.s32.totalorder %s154, %s155
    %p164 = scmp.eq.s32.totalorder %s18, 0
    %p165 = por %p163, %p164
    %p166 = scmp.ne.s32.totalorder %s154, %s155
    %p167 = scmp.eq.s32.totalorder %s19, 1
    %p168 = por %p166, %p167
    %p170 = scmp.ne.s32.totalorder %s155, %s169
    %p171 = scmp.eq.s32.totalorder %s19, 0
    %p172 = por %p170, %p171
    %s173 = ssub.s32 %s13, %s20
    %p174 = scmp.eq.s32.totalorder %s173, 0
    %s176 = sadd.s32 %s175, 1
    %s177 = scalar_select %p174, %s175, %s176
    %p180 = pneg %p174
    %p181 = scmp.eq.s32.totalorder %s13, 1
    %p182 = por %p180, %p181
    %p183 = scmp.ne.s32.totalorder %s175, %s178
    %p184 = scmp.eq.s32.totalorder %s13, 0
    %p185 = por %p183, %p184
    %p186 = scmp.ne.s32.totalorder %s175, %s178
    %p187 = scmp.eq.s32.totalorder %s18, 1
    %p188 = por %p186, %p187
    %p189 = scmp.ne.s32.totalorder %s178, %s179
    %p190 = scmp.eq.s32.totalorder %s18, 0
    %p191 = por %p189, %p190
    %p192 = scmp.ne.s32.totalorder %s178, %s179
    %p193 = scmp.eq.s32.totalorder %s19, 1
    %p194 = por %p192, %p193
    %p196 = scmp.ne.s32.totalorder %s179, %s195
    %p197 = scmp.eq.s32.totalorder %s19, 0
    %p198 = por %p196, %p197
    %p199 = scmp.le.s32.totalorder 1, %s13
    %p200 = scmp.lt.s32.totalorder %s13, 3
    %p201 = pnand %p199, %p200
    %p202 = pneg %p201
    // Predicated region
    $region9: #{bottleneck_forward.1} parent=5 // pred_check
      _
    $region10: #{bottleneck_forward.1} parent=5 // pred_check_branch
      %204 = sbr.rel (%p201) target = $region12
    $region11: #{bottleneck_forward.1} parent=5 // pred_region
      %s205 = ssub.s32 %s13, 1
      // Predicated region
      $region13: #{bottleneck_forward.1} parent=11 // pred_check
        %p206 = pneg %p60
      $region14: #{bottleneck_forward.1} parent=11 // pred_check_branch
        %208 = sbr.rel (%p206) target = $region16
      $region15: #{bottleneck_forward.1} parent=11 // pred_region
        _
      $region16: #{bottleneck_forward.1} parent=11 // pred_fallthru
        _
      // Predicated region
      $region17: #{bottleneck_forward.1} parent=11 // pred_check
        %p209 = pneg %p81
      $region18: #{bottleneck_forward.1} parent=11 // pred_check_branch
        %211 = sbr.rel (%p209) target = $region20
      $region19: #{bottleneck_forward.1} parent=11 // pred_region
        _
      $region20: #{bottleneck_forward.1} parent=11 // pred_fallthru
        _
      // Predicated region
      $region21: #{bottleneck_forward.1} parent=11 // pred_check
        %p212 = pneg %p102
      $region22: #{bottleneck_forward.1} parent=11 // pred_check_branch
        %214 = sbr.rel (%p212) target = $region24
      $region23: #{bottleneck_forward.1} parent=11 // pred_region
        _
      $region24: #{bottleneck_forward.1} parent=11 // pred_fallthru
        _
      // Predicated region
      $region25: #{bottleneck_forward.1} parent=11 // pred_check
        %p215 = pneg %p123
      $region26: #{bottleneck_forward.1} parent=11 // pred_check_branch
        %217 = sbr.rel (%p215) target = $region28
      $region27: #{bottleneck_forward.1} parent=11 // pred_region
        _
      $region28: #{bottleneck_forward.1} parent=11 // pred_fallthru
        _
      // Predicated region
      $region29: #{bottleneck_forward.1} parent=11 // pred_check
        %p218 = pneg %p144
      $region30: #{bottleneck_forward.1} parent=11 // pred_check_branch
        %220 = sbr.rel (%p218) target = $region32
      $region31: #{bottleneck_forward.1} parent=11 // pred_region
        _
      $region32: #{bottleneck_forward.1} parent=11 // pred_fallthru
        _
      // Predicated region
      $region33: #{bottleneck_forward.1} parent=11 // pred_check
        %p221 = pneg %p165
      $region34: #{bottleneck_forward.1} parent=11 // pred_check_branch
        %223 = sbr.rel (%p221) target = $region36
      $region35: #{bottleneck_forward.1} parent=11 // pred_region
        _
      $region36: #{bottleneck_forward.1} parent=11 // pred_fallthru
        _
    $region12: #{bottleneck_forward.1} parent=5 // pred_fallthru
      _
    %p224 = scmp.lt.s32.totalorder %s13, 2
    // Predicated region
    $region37: #{bottleneck_forward.1} parent=5 // pred_check
      %p225 = pneg %p224
    $region38: #{bottleneck_forward.1} parent=5 // pred_check_branch
      %227 = sbr.rel (%p225) target = $region40
    $region39: #{bottleneck_forward.1} parent=5 // pred_region
      // Predicated region
      $region41: #{bottleneck_forward.1} parent=39 // pred_check
        %p228 = pneg %p33
      $region42: #{bottleneck_forward.1} parent=39 // pred_check_branch
        %230 = sbr.rel (%p228) target = $region44
      $region43: #{bottleneck_forward.1} parent=39 // pred_region
        %p231 = scmp.lt.s32.totalorder %s13, 1
        %s232 = scalar_select %p231, %s13, 1
        %s233 = smul.addr %s232, 128
        %s234 = smul.addr %s233, 4
        %s235 = scalar_lea.vmem %s0, %s234
      $region44: #{bottleneck_forward.1} parent=39 // pred_fallthru
        _
    $region40: #{bottleneck_forward.1} parent=5 // pred_fallthru
      _
    %p236 = scmp.le.s32.totalorder 1, %s13
    %p237 = scmp.lt.s32.totalorder %s13, 3
    %p238 = pnand %p236, %p237
    %p239 = pneg %p238
    // Predicated region
    $region45: #{bottleneck_forward.1} parent=5 // pred_check
      _
    $region46: #{bottleneck_forward.1} parent=5 // pred_check_branch
      %241 = sbr.rel (%p238) target = $region48
    $region47: #{bottleneck_forward.1} parent=5 // pred_region
      %s242 = ssub.s32 %s13, 1
      %p243 = scmp.lt.s32.totalorder %s18, 1
      %s244 = scalar_select %p243, %s18, 1
      %s245 = smul.addr %s244, 128
      %s246 = smul.addr %s245, 4
      %s247 = scalar_lea.vmem %s0, %s246
      %p248 = pneg %p39
      %p249 = pneg %p36
      %p250 = pneg %p60
      %p251 = pneg %p57
      %p252 = pneg %p81
      %p253 = pneg %p78
      %p254 = pneg %p102
      %p255 = pneg %p99
      %p256 = pneg %p123
      %p257 = pneg %p120
      %p258 = pneg %p144
      %p259 = pneg %p141
      %p260 = pneg %p165
      %p261 = pneg %p162
      %p262 = pneg %p191
      %p263 = pneg %p188
      %p264 = scmp.lt.s32.totalorder %s18, 1
      %s265 = scalar_select %p264, %s18, 1
      %s266 = smul.addr %s265, 128
      %s267 = smul.addr %s266, 4
      %s268 = scalar_lea.vmem %s7, %s267
      %p269 = scmp.lt.s32.totalorder %s18, 1
      %s270 = scalar_select %p269, %s18, 1
      %s271 = smul.addr %s270, 128
      %s272 = smul.addr %s271, 4
      %s273 = scalar_lea.vmem %s0, %s272
      %p274 = scmp.lt.s32.totalorder %s18, 1
      %s275 = scalar_select %p274, %s18, 1
      %s276 = smul.addr %s275, 128
      %s277 = smul.addr %s276, 4
      %s278 = scalar_lea.vmem %s7, %s277
      %v280 = vld [vmem:[%s273] sm:$0xff]
      %v281 = vld [vmem:[%s273 + $0x8] sm:$0xff]
      %v282 = vld [vmem:[%s273 + $0x10] sm:$0xff]
      %v283 = vld [vmem:[%s273 + $0x18] sm:$0xff]
      %v284 = vld [vmem:[%s273 + $0x20] sm:$0xff]
      %v285 = vld [vmem:[%s273 + $0x28] sm:$0xff]
      %v286 = vld [vmem:[%s273 + $0x30] sm:$0xff]
      %v287 = vld [vmem:[%s273 + $0x38] sm:$0xff]
      %v288 = vld [vmem:[%s273 + $0x40] sm:$0xff]
      %v289 = vld [vmem:[%s273 + $0x48] sm:$0xff]
      %v290 = vld [vmem:[%s273 + $0x50] sm:$0xff]
      %v291 = vld [vmem:[%s273 + $0x58] sm:$0xff]
      %v292 = vld [vmem:[%s273 + $0x60] sm:$0xff]
      %v293 = vld [vmem:[%s273 + $0x68] sm:$0xff]
      %v294 = vld [vmem:[%s273 + $0x70] sm:$0xff]
      %v295 = vld [vmem:[%s273 + $0x78] sm:$0xff]
      %v296 = vld [vmem:[%s273 + $0x80] sm:$0xff]
      %v297 = vld [vmem:[%s273 + $0x88] sm:$0xff]
      %v298 = vld [vmem:[%s273 + $0x90] sm:$0xff]
      %v299 = vld [vmem:[%s273 + $0x98] sm:$0xff]
      %v300 = vld [vmem:[%s273 + $0xa0] sm:$0xff]
      %v301 = vld [vmem:[%s273 + $0xa8] sm:$0xff]
      %v302 = vld [vmem:[%s273 + $0xb0] sm:$0xff]
      %v303 = vld [vmem:[%s273 + $0xb8] sm:$0xff]
      %v304 = vld [vmem:[%s273 + $0xc0] sm:$0xff]
      %v305 = vld [vmem:[%s273 + $0xc8] sm:$0xff]
      %v306 = vld [vmem:[%s273 + $0xd0] sm:$0xff]
      %v307 = vld [vmem:[%s273 + $0xd8] sm:$0xff]
      %v308 = vld [vmem:[%s273 + $0xe0] sm:$0xff]
      %v309 = vld [vmem:[%s273 + $0xe8] sm:$0xff]
      %v310 = vld [vmem:[%s273 + $0xf0] sm:$0xff]
      %v311 = vld [vmem:[%s273 + $0xf8] sm:$0xff]
      %v312 = vld [vmem:[%s273 + $0x100] sm:$0xff]
      %v313 = vld [vmem:[%s273 + $0x108] sm:$0xff]
      %v314 = vld [vmem:[%s273 + $0x110] sm:$0xff]
      %v315 = vld [vmem:[%s273 + $0x118] sm:$0xff]
      %v316 = vld [vmem:[%s273 + $0x120] sm:$0xff]
      %v317 = vld [vmem:[%s273 + $0x128] sm:$0xff]
      %v318 = vld [vmem:[%s273 + $0x130] sm:$0xff]
      %v319 = vld [vmem:[%s273 + $0x138] sm:$0xff]
      %v320 = vld [vmem:[%s273 + $0x140] sm:$0xff]
      %v321 = vld [vmem:[%s273 + $0x148] sm:$0xff]
      %v322 = vld [vmem:[%s273 + $0x150] sm:$0xff]
      %v323 = vld [vmem:[%s273 + $0x158] sm:$0xff]
      %v324 = vld [vmem:[%s273 + $0x160] sm:$0xff]
      %v325 = vld [vmem:[%s273 + $0x168] sm:$0xff]
      %v326 = vld [vmem:[%s273 + $0x170] sm:$0xff]
      %v327 = vld [vmem:[%s273 + $0x178] sm:$0xff]
      %v328 = vld [vmem:[%s273 + $0x180] sm:$0xff]
      %v329 = vld [vmem:[%s273 + $0x188] sm:$0xff]
      %v330 = vld [vmem:[%s273 + $0x190] sm:$0xff]
      %v331 = vld [vmem:[%s273 + $0x198] sm:$0xff]
      %v332 = vld [vmem:[%s273 + $0x1a0] sm:$0xff]
      %v333 = vld [vmem:[%s273 + $0x1a8] sm:$0xff]
      %v334 = vld [vmem:[%s273 + $0x1b0] sm:$0xff]
      %v335 = vld [vmem:[%s273 + $0x1b8] sm:$0xff]
      %v336 = vld [vmem:[%s273 + $0x1c0] sm:$0xff]
      %v337 = vld [vmem:[%s273 + $0x1c8] sm:$0xff]
      %v338 = vld [vmem:[%s273 + $0x1d0] sm:$0xff]
      %v339 = vld [vmem:[%s273 + $0x1d8] sm:$0xff]
      %v340 = vld [vmem:[%s273 + $0x1e0] sm:$0xff]
      %v341 = vld [vmem:[%s273 + $0x1e8] sm:$0xff]
      %v342 = vld [vmem:[%s273 + $0x1f0] sm:$0xff]
      %v343 = vld [vmem:[%s273 + $0x1f8] sm:$0xff]
      %v344 = vld [vmem:[%s1] sm:$0xf]
      %v345 = vld [vmem:[%s1 + $0x4] sm:$0xf]
      %v346 = vld [vmem:[%s1 + $0x8] sm:$0xf]
      %v347 = vld [vmem:[%s1 + $0xc] sm:$0xf]
      %v348 = vld [vmem:[%s1 + $0x10] sm:$0xf]
      %v349 = vld [vmem:[%s1 + $0x14] sm:$0xf]
      %v350 = vld [vmem:[%s1 + $0x18] sm:$0xf]
      %v351 = vld [vmem:[%s1 + $0x1c] sm:$0xf]
      %v352 = vld [vmem:[%s1 + $0x20] sm:$0xf]
      %v353 = vld [vmem:[%s1 + $0x24] sm:$0xf]
      %v354 = vld [vmem:[%s1 + $0x28] sm:$0xf]
      %v355 = vld [vmem:[%s1 + $0x2c] sm:$0xf]
      %v356 = vld [vmem:[%s1 + $0x30] sm:$0xf]
      %v357 = vld [vmem:[%s1 + $0x34] sm:$0xf]
      %v358 = vld [vmem:[%s1 + $0x38] sm:$0xf]
      %v359 = vld [vmem:[%s1 + $0x3c] sm:$0xf]
      %v360 = vld [vmem:[%s1 + $0x40] sm:$0xf]
      %v361 = vld [vmem:[%s1 + $0x44] sm:$0xf]
      %v362 = vld [vmem:[%s1 + $0x48] sm:$0xf]
      %v363 = vld [vmem:[%s1 + $0x4c] sm:$0xf]
      %v364 = vld [vmem:[%s1 + $0x50] sm:$0xf]
      %v365 = vld [vmem:[%s1 + $0x54] sm:$0xf]
      %v366 = vld [vmem:[%s1 + $0x58] sm:$0xf]
      %v367 = vld [vmem:[%s1 + $0x5c] sm:$0xf]
      %v368 = vld [vmem:[%s1 + $0x60] sm:$0xf]
      %v369 = vld [vmem:[%s1 + $0x64] sm:$0xf]
      %v370 = vld [vmem:[%s1 + $0x68] sm:$0xf]
      %v371 = vld [vmem:[%s1 + $0x6c] sm:$0xf]
      %v372 = vld [vmem:[%s1 + $0x70] sm:$0xf]
      %v373 = vld [vmem:[%s1 + $0x74] sm:$0xf]
      %v374 = vld [vmem:[%s1 + $0x78] sm:$0xf]
      %v375 = vld [vmem:[%s1 + $0x7c] sm:$0xf]
      %v376 = vld [vmem:[%s1 + $0x80] sm:$0xf]
      %v377 = vld [vmem:[%s1 + $0x84] sm:$0xf]
      %v378 = vld [vmem:[%s1 + $0x88] sm:$0xf]
      %v379 = vld [vmem:[%s1 + $0x8c] sm:$0xf]
      %v380 = vld [vmem:[%s1 + $0x90] sm:$0xf]
      %v381 = vld [vmem:[%s1 + $0x94] sm:$0xf]
      %v382 = vld [vmem:[%s1 + $0x98] sm:$0xf]
      %v383 = vld [vmem:[%s1 + $0x9c] sm:$0xf]
      %v384 = vld [vmem:[%s1 + $0xa0] sm:$0xf]
      %v385 = vld [vmem:[%s1 + $0xa4] sm:$0xf]
      %v386 = vld [vmem:[%s1 + $0xa8] sm:$0xf]
      %v387 = vld [vmem:[%s1 + $0xac] sm:$0xf]
      %v388 = vld [vmem:[%s1 + $0xb0] sm:$0xf]
      %v389 = vld [vmem:[%s1 + $0xb4] sm:$0xf]
      %v390 = vld [vmem:[%s1 + $0xb8] sm:$0xf]
      %v391 = vld [vmem:[%s1 + $0xbc] sm:$0xf]
      %v392 = vld [vmem:[%s1 + $0xc0] sm:$0xf]
      %v393 = vld [vmem:[%s1 + $0xc4] sm:$0xf]
      %v394 = vld [vmem:[%s1 + $0xc8] sm:$0xf]
      %v395 = vld [vmem:[%s1 + $0xcc] sm:$0xf]
      %v396 = vld [vmem:[%s1 + $0xd0] sm:$0xf]
      %v397 = vld [vmem:[%s1 + $0xd4] sm:$0xf]
      %v398 = vld [vmem:[%s1 + $0xd8] sm:$0xf]
      %v399 = vld [vmem:[%s1 + $0xdc] sm:$0xf]
      %v400 = vld [vmem:[%s1 + $0xe0] sm:$0xf]
      %v401 = vld [vmem:[%s1 + $0xe4] sm:$0xf]
      %v402 = vld [vmem:[%s1 + $0xe8] sm:$0xf]
      %v403 = vld [vmem:[%s1 + $0xec] sm:$0xf]
      %v404 = vld [vmem:[%s1 + $0xf0] sm:$0xf]
      %v405 = vld [vmem:[%s1 + $0xf4] sm:$0xf]
      %v406 = vld [vmem:[%s1 + $0xf8] sm:$0xf]
      %v407 = vld [vmem:[%s1 + $0xfc] sm:$0xf]
      %v408 = vld [vmem:[%s2] sm:$0x1]
      %v410 = vlaneseq
      %v411 = vshrl.u32 %v410, 7
      %v412 = vsub.s32 0, %v411
      %v413 = vrot.slane %v408, %v412
      %v479 = vunpack.c.l.b16 %v280
      %v480 = vunpack.c.h.b16 %v280
      %v481 = vunpack.c.l.b16 %v281
      %v482 = vunpack.c.h.b16 %v281
      %v483 = vunpack.c.l.b16 %v282
      %v484 = vunpack.c.h.b16 %v282
      %v485 = vunpack.c.l.b16 %v283
      %v486 = vunpack.c.h.b16 %v283
      %v487 = vunpack.c.l.b16 %v284
      %v488 = vunpack.c.h.b16 %v284
      %v489 = vunpack.c.l.b16 %v285
      %v490 = vunpack.c.h.b16 %v285
      %v491 = vunpack.c.l.b16 %v286
      %v492 = vunpack.c.h.b16 %v286
      %v493 = vunpack.c.l.b16 %v287
      %v494 = vunpack.c.h.b16 %v287
      %v495 = vunpack.c.l.b16 %v288
      %v496 = vunpack.c.h.b16 %v288
      %v497 = vunpack.c.l.b16 %v289
      %v498 = vunpack.c.h.b16 %v289
      %v499 = vunpack.c.l.b16 %v290
      %v500 = vunpack.c.h.b16 %v290
      %v501 = vunpack.c.l.b16 %v291
      %v502 = vunpack.c.h.b16 %v291
      %v503 = vunpack.c.l.b16 %v292
      %v504 = vunpack.c.h.b16 %v292
      %v505 = vunpack.c.l.b16 %v293
      %v506 = vunpack.c.h.b16 %v293
      %v507 = vunpack.c.l.b16 %v294
      %v508 = vunpack.c.h.b16 %v294
      %v509 = vunpack.c.l.b16 %v295
      %v510 = vunpack.c.h.b16 %v295
      %v511 = vunpack.c.l.b16 %v296
      %v512 = vunpack.c.h.b16 %v296
      %v513 = vunpack.c.l.b16 %v297
      %v514 = vunpack.c.h.b16 %v297
      %v515 = vunpack.c.l.b16 %v298
      %v516 = vunpack.c.h.b16 %v298
      %v517 = vunpack.c.l.b16 %v299
      %v518 = vunpack.c.h.b16 %v299
      %v519 = vunpack.c.l.b16 %v300
      %v520 = vunpack.c.h.b16 %v300
      %v521 = vunpack.c.l.b16 %v301
      %v522 = vunpack.c.h.b16 %v301
      %v523 = vunpack.c.l.b16 %v302
      %v524 = vunpack.c.h.b16 %v302
      %v525 = vunpack.c.l.b16 %v303
      %v526 = vunpack.c.h.b16 %v303
      %v527 = vunpack.c.l.b16 %v304
      %v528 = vunpack.c.h.b16 %v304
      %v529 = vunpack.c.l.b16 %v305
      %v530 = vunpack.c.h.b16 %v305
      %v531 = vunpack.c.l.b16 %v306
      %v532 = vunpack.c.h.b16 %v306
      %v533 = vunpack.c.l.b16 %v307
      %v534 = vunpack.c.h.b16 %v307
      %v535 = vunpack.c.l.b16 %v308
      %v536 = vunpack.c.h.b16 %v308
      %v537 = vunpack.c.l.b16 %v309
      %v538 = vunpack.c.h.b16 %v309
      %v539 = vunpack.c.l.b16 %v310
      %v540 = vunpack.c.h.b16 %v310
      %v541 = vunpack.c.l.b16 %v311
      %v542 = vunpack.c.h.b16 %v311
      %v543 = vunpack.c.l.b16 %v312
      %v544 = vunpack.c.h.b16 %v312
      %v545 = vunpack.c.l.b16 %v313
      %v546 = vunpack.c.h.b16 %v313
      %v547 = vunpack.c.l.b16 %v314
      %v548 = vunpack.c.h.b16 %v314
      %v549 = vunpack.c.l.b16 %v315
      %v550 = vunpack.c.h.b16 %v315
      %v551 = vunpack.c.l.b16 %v316
      %v552 = vunpack.c.h.b16 %v316
      %v553 = vunpack.c.l.b16 %v317
      %v554 = vunpack.c.h.b16 %v317
      %v555 = vunpack.c.l.b16 %v318
      %v556 = vunpack.c.h.b16 %v318
      %v557 = vunpack.c.l.b16 %v319
      %v558 = vunpack.c.h.b16 %v319
      %v559 = vunpack.c.l.b16 %v320
      %v560 = vunpack.c.h.b16 %v320
      %v561 = vunpack.c.l.b16 %v321
      %v562 = vunpack.c.h.b16 %v321
      %v563 = vunpack.c.l.b16 %v322
      %v564 = vunpack.c.h.b16 %v322
      %v565 = vunpack.c.l.b16 %v323
      %v566 = vunpack.c.h.b16 %v323
      %v567 = vunpack.c.l.b16 %v324
      %v568 = vunpack.c.h.b16 %v324
      %v569 = vunpack.c.l.b16 %v325
      %v570 = vunpack.c.h.b16 %v325
      %v571 = vunpack.c.l.b16 %v326
      %v572 = vunpack.c.h.b16 %v326
      %v573 = vunpack.c.l.b16 %v327
      %v574 = vunpack.c.h.b16 %v327
      %v575 = vunpack.c.l.b16 %v328
      %v576 = vunpack.c.h.b16 %v328
      %v577 = vunpack.c.l.b16 %v329
      %v578 = vunpack.c.h.b16 %v329
      %v579 = vunpack.c.l.b16 %v330
      %v580 = vunpack.c.h.b16 %v330
      %v581 = vunpack.c.l.b16 %v331
      %v582 = vunpack.c.h.b16 %v331
      %v583 = vunpack.c.l.b16 %v332
      %v584 = vunpack.c.h.b16 %v332
      %v585 = vunpack.c.l.b16 %v333
      %v586 = vunpack.c.h.b16 %v333
      %v587 = vunpack.c.l.b16 %v334
      %v588 = vunpack.c.h.b16 %v334
      %v589 = vunpack.c.l.b16 %v335
      %v590 = vunpack.c.h.b16 %v335
      %v591 = vunpack.c.l.b16 %v336
      %v592 = vunpack.c.h.b16 %v336
      %v593 = vunpack.c.l.b16 %v337
      %v594 = vunpack.c.h.b16 %v337
      %v595 = vunpack.c.l.b16 %v338
      %v596 = vunpack.c.h.b16 %v338
      %v597 = vunpack.c.l.b16 %v339
      %v598 = vunpack.c.h.b16 %v339
      %v599 = vunpack.c.l.b16 %v340
      %v600 = vunpack.c.h.b16 %v340
      %v601 = vunpack.c.l.b16 %v341
      %v602 = vunpack.c.h.b16 %v341
      %v603 = vunpack.c.l.b16 %v342
      %v604 = vunpack.c.h.b16 %v342
      %v605 = vunpack.c.l.b16 %v343
      %v606 = vunpack.c.h.b16 %v343
      %v607 = vpack.c.b16 %v483, %v479
      %v608 = vpack.c.b16 %v484, %v480
      %v609 = vpack.c.b16 %v485, %v481
      %v610 = vpack.c.b16 %v486, %v482
      %v611 = vpack.c.b16 %v491, %v487
      %v612 = vpack.c.b16 %v492, %v488
      %v613 = vpack.c.b16 %v493, %v489
      %v614 = vpack.c.b16 %v494, %v490
      %v615 = vpack.c.b16 %v499, %v495
      %v616 = vpack.c.b16 %v500, %v496
      %v617 = vpack.c.b16 %v501, %v497
      %v618 = vpack.c.b16 %v502, %v498
      %v619 = vpack.c.b16 %v507, %v503
      %v620 = vpack.c.b16 %v508, %v504
      %v621 = vpack.c.b16 %v509, %v505
      %v622 = vpack.c.b16 %v510, %v506
      %v623 = vpack.c.b16 %v515, %v511
      %v624 = vpack.c.b16 %v516, %v512
      %v625 = vpack.c.b16 %v517, %v513
      %v626 = vpack.c.b16 %v518, %v514
      %v627 = vpack.c.b16 %v523, %v519
      %v628 = vpack.c.b16 %v524, %v520
      %v629 = vpack.c.b16 %v525, %v521
      %v630 = vpack.c.b16 %v526, %v522
      %v631 = vpack.c.b16 %v531, %v527
      %v632 = vpack.c.b16 %v532, %v528
      %v633 = vpack.c.b16 %v533, %v529
      %v634 = vpack.c.b16 %v534, %v530
      %v635 = vpack.c.b16 %v539, %v535
      %v636 = vpack.c.b16 %v540, %v536
      %v637 = vpack.c.b16 %v541, %v537
      %v638 = vpack.c.b16 %v542, %v538
      %v639 = vpack.c.b16 %v547, %v543
      %v640 = vpack.c.b16 %v548, %v544
      %v641 = vpack.c.b16 %v549, %v545
      %v642 = vpack.c.b16 %v550, %v546
      %v643 = vpack.c.b16 %v555, %v551
      %v644 = vpack.c.b16 %v556, %v552
      %v645 = vpack.c.b16 %v557, %v553
      %v646 = vpack.c.b16 %v558, %v554
      %v647 = vpack.c.b16 %v563, %v559
      %v648 = vpack.c.b16 %v564, %v560
      %v649 = vpack.c.b16 %v565, %v561
      %v650 = vpack.c.b16 %v566, %v562
      %v651 = vpack.c.b16 %v571, %v567
      %v652 = vpack.c.b16 %v572, %v568
      %v653 = vpack.c.b16 %v573, %v569
      %v654 = vpack.c.b16 %v574, %v570
      %v655 = vpack.c.b16 %v579, %v575
      %v656 = vpack.c.b16 %v580, %v576
      %v657 = vpack.c.b16 %v581, %v577
      %v658 = vpack.c.b16 %v582, %v578
      %v659 = vpack.c.b16 %v587, %v583
      %v660 = vpack.c.b16 %v588, %v584
      %v661 = vpack.c.b16 %v589, %v585
      %v662 = vpack.c.b16 %v590, %v586
      %v663 = vpack.c.b16 %v595, %v591
      %v664 = vpack.c.b16 %v596, %v592
      %v665 = vpack.c.b16 %v597, %v593
      %v666 = vpack.c.b16 %v598, %v594
      %v667 = vpack.c.b16 %v603, %v599
      %v668 = vpack.c.b16 %v604, %v600
      %v669 = vpack.c.b16 %v605, %v601
      %v670 = vpack.c.b16 %v606, %v602
      %v799 = vunpack.c.l.b16 %v344
      %v800 = vunpack.c.l.b16 %v345
      %v801 = vunpack.c.l.b16 %v346
      %v802 = vunpack.c.l.b16 %v347
      %v803 = vunpack.c.l.b16 %v348
      %v804 = vunpack.c.l.b16 %v349
      %v805 = vunpack.c.l.b16 %v350
      %v806 = vunpack.c.l.b16 %v351
      %v807 = vunpack.c.l.b16 %v352
      %v808 = vunpack.c.l.b16 %v353
      %v809 = vunpack.c.l.b16 %v354
      %v810 = vunpack.c.l.b16 %v355
      %v811 = vunpack.c.l.b16 %v356
      %v812 = vunpack.c.l.b16 %v357
      %v813 = vunpack.c.l.b16 %v358
      %v814 = vunpack.c.l.b16 %v359
      %v815 = vunpack.c.l.b16 %v360
      %v816 = vunpack.c.l.b16 %v361
      %v817 = vunpack.c.l.b16 %v362
      %v818 = vunpack.c.l.b16 %v363
      %v819 = vunpack.c.l.b16 %v364
      %v820 = vunpack.c.l.b16 %v365
      %v821 = vunpack.c.l.b16 %v366
      %v822 = vunpack.c.l.b16 %v367
      %v823 = vunpack.c.l.b16 %v368
      %v824 = vunpack.c.l.b16 %v369
      %v825 = vunpack.c.l.b16 %v370
      %v826 = vunpack.c.l.b16 %v371
      %v827 = vunpack.c.l.b16 %v372
      %v828 = vunpack.c.l.b16 %v373
      %v829 = vunpack.c.l.b16 %v374
      %v830 = vunpack.c.l.b16 %v375
      %v831 = vunpack.c.l.b16 %v376
      %v832 = vunpack.c.l.b16 %v377
      %v833 = vunpack.c.l.b16 %v378
      %v834 = vunpack.c.l.b16 %v379
      %v835 = vunpack.c.l.b16 %v380
      %v836 = vunpack.c.l.b16 %v381
      %v837 = vunpack.c.l.b16 %v382
      %v838 = vunpack.c.l.b16 %v383
      %v839 = vunpack.c.l.b16 %v384
      %v840 = vunpack.c.l.b16 %v385
      %v841 = vunpack.c.l.b16 %v386
      %v842 = vunpack.c.l.b16 %v387
      %v843 = vunpack.c.l.b16 %v388
      %v844 = vunpack.c.l.b16 %v389
      %v845 = vunpack.c.l.b16 %v390
      %v846 = vunpack.c.l.b16 %v391
      %v847 = vunpack.c.l.b16 %v392
      %v848 = vunpack.c.l.b16 %v393
      %v849 = vunpack.c.l.b16 %v394
      %v850 = vunpack.c.l.b16 %v395
      %v851 = vunpack.c.l.b16 %v396
      %v852 = vunpack.c.l.b16 %v397
      %v853 = vunpack.c.l.b16 %v398
      %v854 = vunpack.c.l.b16 %v399
      %v855 = vunpack.c.l.b16 %v400
      %v856 = vunpack.c.l.b16 %v401
      %v857 = vunpack.c.l.b16 %v402
      %v858 = vunpack.c.l.b16 %v403
      %v859 = vunpack.c.l.b16 %v404
      %v860 = vunpack.c.l.b16 %v405
      %v861 = vunpack.c.l.b16 %v406
      %v862 = vunpack.c.l.b16 %v407
      %v863 = vpack.c.b16 %v800, %v799
      %v864 = vpack.c.b16 %v802, %v801
      %v865 = vpack.c.b16 %v804, %v803
      %v866 = vpack.c.b16 %v806, %v805
      %v867 = vpack.c.b16 %v808, %v807
      %v868 = vpack.c.b16 %v810, %v809
      %v869 = vpack.c.b16 %v812, %v811
      %v870 = vpack.c.b16 %v814, %v813
      %v871 = vpack.c.b16 %v816, %v815
      %v872 = vpack.c.b16 %v818, %v817
      %v873 = vpack.c.b16 %v820, %v819
      %v874 = vpack.c.b16 %v822, %v821
      %v875 = vpack.c.b16 %v824, %v823
      %v876 = vpack.c.b16 %v826, %v825
      %v877 = vpack.c.b16 %v828, %v827
      %v878 = vpack.c.b16 %v830, %v829
      %v879 = vpack.c.b16 %v832, %v831
      %v880 = vpack.c.b16 %v834, %v833
      %v881 = vpack.c.b16 %v836, %v835
      %v882 = vpack.c.b16 %v838, %v837
      %v883 = vpack.c.b16 %v840, %v839
      %v884 = vpack.c.b16 %v842, %v841
      %v885 = vpack.c.b16 %v844, %v843
      %v886 = vpack.c.b16 %v846, %v845
      %v887 = vpack.c.b16 %v848, %v847
      %v888 = vpack.c.b16 %v850, %v849
      %v889 = vpack.c.b16 %v852, %v851
      %v890 = vpack.c.b16 %v854, %v853
      %v891 = vpack.c.b16 %v856, %v855
      %v892 = vpack.c.b16 %v858, %v857
      %v893 = vpack.c.b16 %v860, %v859
      %v894 = vpack.c.b16 %v862, %v861
      %927 = vmatprep.subr.bf16.mxu0 0
      %928 = vmatpush1.bf16.msra.mxu0 %v863
      %929 = vmatprep.subr.bf16.mxu0 0
      %930 = vmatpush1.bf16.msra.mxu0 %v864
      %931 = vmatprep.subr.bf16.mxu0 0
      %932 = vmatpush1.bf16.msra.mxu0 %v865
      %933 = vmatprep.subr.bf16.mxu0 0
      %934 = vmatpush1.bf16.msra.mxu0 %v866
      %935 = vmatprep.subr.bf16.mxu0 0
      %936 = vmatpush1.bf16.msra.mxu0 %v867
      %937 = vmatprep.subr.bf16.mxu0 0
      %938 = vmatpush1.bf16.msra.mxu0 %v868
      %939 = vmatprep.subr.bf16.mxu0 0
      %940 = vmatpush1.bf16.msra.mxu0 %v869
      %941 = vmatprep.subr.bf16.mxu0 0
      %942 = vmatpush1.bf16.msra.mxu0 %v870
      %943 = vmatprep.subr.bf16.mxu0 0
      %944 = vmatpush1.bf16.msra.mxu0 %v871
      %945 = vmatprep.subr.bf16.mxu0 0
      %946 = vmatpush1.bf16.msra.mxu0 %v872
      %947 = vmatprep.subr.bf16.mxu0 0
      %948 = vmatpush1.bf16.msra.mxu0 %v873
      %949 = vmatprep.subr.bf16.mxu0 0
      %950 = vmatpush1.bf16.msra.mxu0 %v874
      %951 = vmatprep.subr.bf16.mxu0 0
      %952 = vmatpush1.bf16.msra.mxu0 %v875
      %953 = vmatprep.subr.bf16.mxu0 0
      %954 = vmatpush1.bf16.msra.mxu0 %v876
      %955 = vmatprep.subr.bf16.mxu0 0
      %956 = vmatpush1.bf16.msra.mxu0 %v877
      %957 = vmatprep.subr.bf16.mxu0 0
      %958 = vmatpush1.bf16.msra.mxu0 %v878
      %959 = vmatprep.mubr.bf16.mxu0 %v608
      %960 = vmatmul.mubr.bf16.gmra.mrb[0].mxu0 %v607
      %v961 = vpop.f32.mrb[0].mxu0
      %v962 = vadd.f32 %v413, %v961
      %v963 = vpop.f32.mrb[0].mxu0
      %v964 = vpop.f32.mrb[0].mxu0
      %v965 = vadd.f32 %v413, %v964
      %v966 = vpop.f32.mrb[0].mxu0
      %967 = vmatprep.mubr.bf16.mxu0 %v612
      %968 = vmatmul.mubr.bf16.gmra.mrb[0].mxu0 %v611
      %v969 = vpop.f32.mrb[0].mxu0
      %v970 = vadd.f32 %v413, %v969
      %v971 = vpop.f32.mrb[0].mxu0
      %v972 = vpop.f32.mrb[0].mxu0
      %v973 = vadd.f32 %v413, %v972
      %v974 = vpop.f32.mrb[0].mxu0
      %975 = vmatprep.mubr.bf16.mxu0 %v616
      %976 = vmatmul.mubr.bf16.gmra.mrb[0].mxu0 %v615
      %v977 = vpop.f32.mrb[0].mxu0
      %v978 = vadd.f32 %v413, %v977
      %v979 = vpop.f32.mrb[0].mxu0
      %v980 = vpop.f32.mrb[0].mxu0
      %v981 = vadd.f32 %v413, %v980
      %v982 = vpop.f32.mrb[0].mxu0
      %983 = vmatprep.mubr.bf16.mxu0 %v620
      %984 = vmatmul.mubr.bf16.gmra.mrb[0].mxu0 %v619
      %v985 = vpop.f32.mrb[0].mxu0
      %v986 = vadd.f32 %v413, %v985
      %v987 = vpop.f32.mrb[0].mxu0
      %v988 = vpop.f32.mrb[0].mxu0
      %v989 = vadd.f32 %v413, %v988
      %v990 = vpop.f32.mrb[0].mxu0
      %991 = vmatprep.mubr.bf16.mxu0 %v624
      %992 = vmatmul.mubr.bf16.gmra.mrb[0].mxu0 %v623
      %v993 = vpop.f32.mrb[0].mxu0
      %v994 = vadd.f32 %v413, %v993
      %v995 = vpop.f32.mrb[0].mxu0
      %v996 = vpop.f32.mrb[0].mxu0
      %v997 = vadd.f32 %v413, %v996
      %v998 = vpop.f32.mrb[0].mxu0
      %999 = vmatprep.mubr.bf16.mxu0 %v628
      %1000 = vmatmul.mubr.bf16.gmra.mrb[0].mxu0 %v627
      %v1001 = vpop.f32.mrb[0].mxu0
      %v1002 = vadd.f32 %v413, %v1001
      %v1003 = vpop.f32.mrb[0].mxu0
      %v1004 = vpop.f32.mrb[0].mxu0
      %v1005 = vadd.f32 %v413, %v1004
      %v1006 = vpop.f32.mrb[0].mxu0
      %1007 = vmatprep.mubr.bf16.mxu0 %v632
      %1008 = vmatmul.mubr.bf16.gmra.mrb[0].mxu0 %v631
      %v1009 = vpop.f32.mrb[0].mxu0
      %v1010 = vadd.f32 %v413, %v1009
      %v1011 = vpop.f32.mrb[0].mxu0
      %v1012 = vpop.f32.mrb[0].mxu0
      %v1013 = vadd.f32 %v413, %v1012
      %v1014 = vpop.f32.mrb[0].mxu0
      %1015 = vmatprep.mubr.bf16.mxu0 %v636
      %1016 = vmatmul.mubr.bf16.gmra.mrb[0].mxu0 %v635
      %v1017 = vpop.f32.mrb[0].mxu0
      %v1018 = vadd.f32 %v413, %v1017
      %v1019 = vpop.f32.mrb[0].mxu0
      %v1020 = vpop.f32.mrb[0].mxu0
      %v1021 = vadd.f32 %v413, %v1020
      %v1022 = vpop.f32.mrb[0].mxu0
      %1023 = vmatprep.mubr.bf16.mxu0 %v640
      %1024 = vmatmul.mubr.bf16.gmra.mrb[0].mxu0 %v639
      %v1025 = vpop.f32.mrb[0].mxu0
      %v1026 = vadd.f32 %v413, %v1025
      %v1027 = vpop.f32.mrb[0].mxu0
      %v1028 = vpop.f32.mrb[0].mxu0
      %v1029 = vadd.f32 %v413, %v1028
      %v1030 = vpop.f32.mrb[0].mxu0
      %1031 = vmatprep.mubr.bf16.mxu0 %v644
      %1032 = vmatmul.mubr.bf16.gmra.mrb[0].mxu0 %v643
      %v1033 = vpop.f32.mrb[0].mxu0
      %v1034 = vadd.f32 %v413, %v1033
      %v1035 = vpop.f32.mrb[0].mxu0
      %v1036 = vpop.f32.mrb[0].mxu0
      %v1037 = vadd.f32 %v413, %v1036
      %v1038 = vpop.f32.mrb[0].mxu0
      %1039 = vmatprep.mubr.bf16.mxu0 %v648
      %1040 = vmatmul.mubr.bf16.gmra.mrb[0].mxu0 %v647
      %v1041 = vpop.f32.mrb[0].mxu0
      %v1042 = vadd.f32 %v413, %v1041
      %v1043 = vpop.f32.mrb[0].mxu0
      %v1044 = vpop.f32.mrb[0].mxu0
      %v1045 = vadd.f32 %v413, %v1044
      %v1046 = vpop.f32.mrb[0].mxu0
      %1047 = vmatprep.mubr.bf16.mxu0 %v652
      %1048 = vmatmul.mubr.bf16.gmra.mrb[0].mxu0 %v651
      %v1049 = vpop.f32.mrb[0].mxu0
      %v1050 = vadd.f32 %v413, %v1049
      %v1051 = vpop.f32.mrb[0].mxu0
      %v1052 = vpop.f32.mrb[0].mxu0
      %v1053 = vadd.f32 %v413, %v1052
      %v1054 = vpop.f32.mrb[0].mxu0
      %1055 = vmatprep.mubr.bf16.mxu0 %v656
      %1056 = vmatmul.mubr.bf16.gmra.mrb[0].mxu0 %v655
      %v1057 = vpop.f32.mrb[0].mxu0
      %v1058 = vadd.f32 %v413, %v1057
      %v1059 = vpop.f32.mrb[0].mxu0
      %v1060 = vpop.f32.mrb[0].mxu0
      %v1061 = vadd.f32 %v413, %v1060
      %v1062 = vpop.f32.mrb[0].mxu0
      %1063 = vmatprep.mubr.bf16.mxu0 %v660
      %1064 = vmatmul.mubr.bf16.gmra.mrb[0].mxu0 %v659
      %v1065 = vpop.f32.mrb[0].mxu0
      %v1066 = vadd.f32 %v413, %v1065
      %v1067 = vpop.f32.mrb[0].mxu0
      %v1068 = vpop.f32.mrb[0].mxu0
      %v1069 = vadd.f32 %v413, %v1068
      %v1070 = vpop.f32.mrb[0].mxu0
      %1071 = vmatprep.mubr.bf16.mxu0 %v664
      %1072 = vmatmul.mubr.bf16.gmra.mrb[0].mxu0 %v663
      %v1073 = vpop.f32.mrb[0].mxu0
      %v1074 = vadd.f32 %v413, %v1073
      %v1075 = vpop.f32.mrb[0].mxu0
      %v1076 = vpop.f32.mrb[0].mxu0
      %v1077 = vadd.f32 %v413, %v1076
      %v1078 = vpop.f32.mrb[0].mxu0
      %1079 = vmatprep.mubr.bf16.mxu0 %v668
      %1080 = vmatmul.mubr.bf16.gmra.mrb[0].mxu0 %v667
      %v1081 = vpop.f32.mrb[0].mxu0
      %v1082 = vadd.f32 %v413, %v1081
      %v1083 = vpop.f32.mrb[0].mxu0
      %v1084 = vpop.f32.mrb[0].mxu0
      %v1085 = vadd.f32 %v413, %v1084
      %v1086 = vpop.f32.mrb[0].mxu0
      %1087 = vdwg.mxu0
      %1088 = vmatprep.subr.bf16.mxu0 0
      %1089 = vmatpush1.bf16.msra.mxu0 %v879
      %1090 = vmatprep.subr.bf16.mxu0 0
      %1091 = vmatpush1.bf16.msra.mxu0 %v880
      %1092 = vmatprep.subr.bf16.mxu0 0
      %1093 = vmatpush1.bf16.msra.mxu0 %v881
      %1094 = vmatprep.subr.bf16.mxu0 0
      %1095 = vmatpush1.bf16.msra.mxu0 %v882
      %1096 = vmatprep.subr.bf16.mxu0 0
      %1097 = vmatpush1.bf16.msra.mxu0 %v883
      %1098 = vmatprep.subr.bf16.mxu0 0
      %1099 = vmatpush1.bf16.msra.mxu0 %v884
      %1100 = vmatprep.subr.bf16.mxu0 0
      %1101 = vmatpush1.bf16.msra.mxu0 %v885
      %1102 = vmatprep.subr.bf16.mxu0 0
      %1103 = vmatpush1.bf16.msra.mxu0 %v886
      %1104 = vmatprep.subr.bf16.mxu0 0
      %1105 = vmatpush1.bf16.msra.mxu0 %v887
      %1106 = vmatprep.subr.bf16.mxu0 0
      %1107 = vmatpush1.bf16.msra.mxu0 %v888
      %1108 = vmatprep.subr.bf16.mxu0 0
      %1109 = vmatpush1.bf16.msra.mxu0 %v889
      %1110 = vmatprep.subr.bf16.mxu0 0
      %1111 = vmatpush1.bf16.msra.mxu0 %v890
      %1112 = vmatprep.subr.bf16.mxu0 0
      %1113 = vmatpush1.bf16.msra.mxu0 %v891
      %1114 = vmatprep.subr.bf16.mxu0 0
      %1115 = vmatpush1.bf16.msra.mxu0 %v892
      %1116 = vmatprep.subr.bf16.mxu0 0
      %1117 = vmatpush1.bf16.msra.mxu0 %v893
      %1118 = vmatprep.subr.bf16.mxu0 0
      %1119 = vmatpush1.bf16.msra.mxu0 %v894
      %1120 = vmatprep.mubr.bf16.mxu0 %v610
      %1121 = vmatmul.mubr.bf16.gmra.mrb[0].mxu0 %v609
      %v1122 = vpop.f32.mrb[0].mxu0
      %v1123 = vadd.f32 %v962, %v1122
      %v1124 = vpop.f32.mrb[0].mxu0
      %v1125 = vpop.f32.mrb[0].mxu0
      %v1126 = vadd.f32 %v965, %v1125
      %v1127 = vpop.f32.mrb[0].mxu0
      %1128 = vmatprep.mubr.bf16.mxu0 %v614
      %1129 = vmatmul.mubr.bf16.gmra.mrb[0].mxu0 %v613
      %v1130 = vpop.f32.mrb[0].mxu0
      %v1131 = vadd.f32 %v970, %v1130
      %v1132 = vpop.f32.mrb[0].mxu0
      %v1133 = vpop.f32.mrb[0].mxu0
      %v1134 = vadd.f32 %v973, %v1133
      %v1135 = vpop.f32.mrb[0].mxu0
      %1136 = vmatprep.mubr.bf16.mxu0 %v618
      %1137 = vmatmul.mubr.bf16.gmra.mrb[0].mxu0 %v617
      %v1138 = vpop.f32.mrb[0].mxu0
      %v1139 = vadd.f32 %v978, %v1138
      %v1140 = vpop.f32.mrb[0].mxu0
      %v1141 = vpop.f32.mrb[0].mxu0
      %v1142 = vadd.f32 %v981, %v1141
      %v1143 = vpop.f32.mrb[0].mxu0
      %1144 = vmatprep.mubr.bf16.mxu0 %v622
      %1145 = vmatmul.mubr.bf16.gmra.mrb[0].mxu0 %v621
      %v1146 = vpop.f32.mrb[0].mxu0
      %v1147 = vadd.f32 %v986, %v1146
      %v1148 = vpop.f32.mrb[0].mxu0
      %v1149 = vpop.f32.mrb[0].mxu0
      %v1150 = vadd.f32 %v989, %v1149
      %v1151 = vpop.f32.mrb[0].mxu0
      %1152 = vmatprep.mubr.bf16.mxu0 %v626
      %1153 = vmatmul.mubr.bf16.gmra.mrb[0].mxu0 %v625
      %v1154 = vpop.f32.mrb[0].mxu0
      %v1155 = vadd.f32 %v994, %v1154
      %v1156 = vpop.f32.mrb[0].mxu0
      %v1157 = vpop.f32.mrb[0].mxu0
      %v1158 = vadd.f32 %v997, %v1157
      %v1159 = vpop.f32.mrb[0].mxu0
      %1160 = vmatprep.mubr.bf16.mxu0 %v630
      %1161 = vmatmul.mubr.bf16.gmra.mrb[0].mxu0 %v629
      %v1162 = vpop.f32.mrb[0].mxu0
      %v1163 = vadd.f32 %v1002, %v1162
      %v1164 = vpop.f32.mrb[0].mxu0
      %v1165 = vpop.f32.mrb[0].mxu0
      %v1166 = vadd.f32 %v1005, %v1165
      %v1167 = vpop.f32.mrb[0].mxu0
      %1168 = vmatprep.mubr.bf16.mxu0 %v634
      %1169 = vmatmul.mubr.bf16.gmra.mrb[0].mxu0 %v633
      %v1170 = vpop.f32.mrb[0].mxu0
      %v1171 = vadd.f32 %v1010, %v1170
      %v1172 = vpop.f32.mrb[0].mxu0
      %v1173 = vpop.f32.mrb[0].mxu0
      %v1174 = vadd.f32 %v1013, %v1173
      %v1175 = vpop.f32.mrb[0].mxu0
      %1176 = vmatprep.mubr.bf16.mxu0 %v638
      %1177 = vmatmul.mubr.bf16.gmra.mrb[0].mxu0 %v637
      %v1178 = vpop.f32.mrb[0].mxu0
      %v1179 = vadd.f32 %v1018, %v1178
      %v1180 = vpop.f32.mrb[0].mxu0
      %v1181 = vpop.f32.mrb[0].mxu0
      %v1182 = vadd.f32 %v1021, %v1181
      %v1183 = vpop.f32.mrb[0].mxu0
      %1184 = vmatprep.mubr.bf16.mxu0 %v642
      %1185 = vmatmul.mubr.bf16.gmra.mrb[0].mxu0 %v641
      %v1186 = vpop.f32.mrb[0].mxu0
      %v1187 = vadd.f32 %v1026, %v1186
      %v1188 = vpop.f32.mrb[0].mxu0
      %v1189 = vpop.f32.mrb[0].mxu0
      %v1190 = vadd.f32 %v1029, %v1189
      %v1191 = vpop.f32.mrb[0].mxu0
      %1192 = vmatprep.mubr.bf16.mxu0 %v646
      %1193 = vmatmul.mubr.bf16.gmra.mrb[0].mxu0 %v645
      %v1194 = vpop.f32.mrb[0].mxu0
      %v1195 = vadd.f32 %v1034, %v1194
      %v1196 = vpop.f32.mrb[0].mxu0
      %v1197 = vpop.f32.mrb[0].mxu0
      %v1198 = vadd.f32 %v1037, %v1197
      %v1199 = vpop.f32.mrb[0].mxu0
      %1200 = vmatprep.mubr.bf16.mxu0 %v650
      %1201 = vmatmul.mubr.bf16.gmra.mrb[0].mxu0 %v649
      %v1202 = vpop.f32.mrb[0].mxu0
      %v1203 = vadd.f32 %v1042, %v1202
      %v1204 = vpop.f32.mrb[0].mxu0
      %v1205 = vpop.f32.mrb[0].mxu0
      %v1206 = vadd.f32 %v1045, %v1205
      %v1207 = vpop.f32.mrb[0].mxu0
      %1208 = vmatprep.mubr.bf16.mxu0 %v654
      %1209 = vmatmul.mubr.bf16.gmra.mrb[0].mxu0 %v653
      %v1210 = vpop.f32.mrb[0].mxu0
      %v1211 = vadd.f32 %v1050, %v1210
      %v1212 = vpop.f32.mrb[0].mxu0
      %v1213 = vpop.f32.mrb[0].mxu0
      %v1214 = vadd.f32 %v1053, %v1213
      %v1215 = vpop.f32.mrb[0].mxu0
      %1216 = vmatprep.mubr.bf16.mxu0 %v658
      %1217 = vmatmul.mubr.bf16.gmra.mrb[0].mxu0 %v657
      %v1218 = vpop.f32.mrb[0].mxu0
      %v1219 = vadd.f32 %v1058, %v1218
      %v1220 = vpop.f32.mrb[0].mxu0
      %v1221 = vpop.f32.mrb[0].mxu0
      %v1222 = vadd.f32 %v1061, %v1221
      %v1223 = vpop.f32.mrb[0].mxu0
      %1224 = vmatprep.mubr.bf16.mxu0 %v662
      %1225 = vmatmul.mubr.bf16.gmra.mrb[0].mxu0 %v661
      %v1226 = vpop.f32.mrb[0].mxu0
      %v1227 = vadd.f32 %v1066, %v1226
      %v1228 = vpop.f32.mrb[0].mxu0
      %v1229 = vpop.f32.mrb[0].mxu0
      %v1230 = vadd.f32 %v1069, %v1229
      %v1231 = vpop.f32.mrb[0].mxu0
      %1232 = vmatprep.mubr.bf16.mxu0 %v666
      %1233 = vmatmul.mubr.bf16.gmra.mrb[0].mxu0 %v665
      %v1234 = vpop.f32.mrb[0].mxu0
      %v1235 = vadd.f32 %v1074, %v1234
      %v1236 = vpop.f32.mrb[0].mxu0
      %v1237 = vpop.f32.mrb[0].mxu0
      %v1238 = vadd.f32 %v1077, %v1237
      %v1239 = vpop.f32.mrb[0].mxu0
      %1240 = vmatprep.mubr.bf16.mxu0 %v670
      %1241 = vmatmul.mubr.bf16.gmra.mrb[0].mxu0 %v669
      %v1242 = vpop.f32.mrb[0].mxu0
      %v1243 = vadd.f32 %v1082, %v1242
      %v1244 = vpop.f32.mrb[0].mxu0
      %v1245 = vpop.f32.mrb[0].mxu0
      %v1246 = vadd.f32 %v1085, %v1245
      %v1247 = vpop.f32.mrb[0].mxu0
      %1248 = vdwg.mxu0
      %v1249 = vmax.f32 %v1123, 0.0
      %v1250 = vmax.f32 %v1126, 0.0
      %v1251 = vmax.f32 %v1131, 0.0
      %v1252 = vmax.f32 %v1134, 0.0
      %v1253 = vmax.f32 %v1139, 0.0
      %v1254 = vmax.f32 %v1142, 0.0
      %v1255 = vmax.f32 %v1147, 0.0
      %v1256 = vmax.f32 %v1150, 0.0
      %v1257 = vmax.f32 %v1155, 0.0
      %v1258 = vmax.f32 %v1158, 0.0
      %v1259 = vmax.f32 %v1163, 0.0
      %v1260 = vmax.f32 %v1166, 0.0
      %v1261 = vmax.f32 %v1171, 0.0
      %v1262 = vmax.f32 %v1174, 0.0
      %v1263 = vmax.f32 %v1179, 0.0
      %v1264 = vmax.f32 %v1182, 0.0
      %v1265 = vmax.f32 %v1187, 0.0
      %v1266 = vmax.f32 %v1190, 0.0
      %v1267 = vmax.f32 %v1195, 0.0
      %v1268 = vmax.f32 %v1198, 0.0
      %v1269 = vmax.f32 %v1203, 0.0
      %v1270 = vmax.f32 %v1206, 0.0
      %v1271 = vmax.f32 %v1211, 0.0
      %v1272 = vmax.f32 %v1214, 0.0
      %v1273 = vmax.f32 %v1219, 0.0
      %v1274 = vmax.f32 %v1222, 0.0
      %v1275 = vmax.f32 %v1227, 0.0
      %v1276 = vmax.f32 %v1230, 0.0
      %v1277 = vmax.f32 %v1235, 0.0
      %v1278 = vmax.f32 %v1238, 0.0
      %v1279 = vmax.f32 %v1243, 0.0
      %v1280 = vmax.f32 %v1246, 0.0
      %1281 = vst [vmem:[#allocation2] sm:$0xf] 0
      %1282 = vst [vmem:[#allocation2 + $0x4] sm:$0xf] 0
      %1283 = vst [vmem:[#allocation2 + $0x8] sm:$0x3] 0
      %1284 = vst [vmem:[#allocation2 + $0xc] sm:$0xf] 0
      %1285 = vst [vmem:[#allocation2 + $0x10] sm:$0xf] 0
      %1286 = vst [vmem:[#allocation2 + $0x14] sm:$0x3] 0
      %1287 = vst [vmem:[#allocation2 + $0x18] sm:$0xf] 0
      %1288 = vst [vmem:[#allocation2 + $0x1c] sm:$0xf] 0
      %1289 = vst [vmem:[#allocation2 + $0x20] sm:$0x3] 0
      %1290 = vst [vmem:[#allocation2 + $0x24] sm:$0xf] 0
      %1291 = vst [vmem:[#allocation2 + $0x28] sm:$0xf] 0
      %1292 = vst [vmem:[#allocation2 + $0x2c] sm:$0x3] 0
      %1293 = vst [vmem:[#allocation2 + $0x30] sm:$0xf] 0
      %1294 = vst [vmem:[#allocation2 + $0x34] sm:$0xf] 0
      %1295 = vst [vmem:[#allocation2 + $0x38] sm:$0x3] 0
      %1296 = vst [vmem:[#allocation2 + $0x3c] sm:$0xf] 0
      %1297 = vst [vmem:[#allocation2 + $0x40] sm:$0xf] 0
      %1298 = vst [vmem:[#allocation2 + $0x44] sm:$0x3] 0
      %1299 = vst [vmem:[#allocation2 + $0x48] sm:$0xf] 0
      %1300 = vst [vmem:[#allocation2 + $0x4c] sm:$0xf] 0
      %1301 = vst [vmem:[#allocation2 + $0x50] sm:$0x3] 0
      %1302 = vst [vmem:[#allocation2 + $0x54] sm:$0xf] 0
      %1303 = vst [vmem:[#allocation2 + $0x58] sm:$0xf] 0
      %1304 = vst [vmem:[#allocation2 + $0x5c] sm:$0x3] 0
      %1305 = vst [vmem:[#allocation2 + $0x60] sm:$0xf] 0
      %1306 = vst [vmem:[#allocation2 + $0x64] sm:$0xf] 0
      %1307 = vst [vmem:[#allocation2 + $0x68] sm:$0x3] 0
      %1308 = vst [vmem:[#allocation2 + $0x6c] sm:$0xf] 0
      %1309 = vst [vmem:[#allocation2 + $0x70] sm:$0xf] 0
      %1310 = vst [vmem:[#allocation2 + $0x74] sm:$0x3] 0
      %1311 = vst [vmem:[#allocation2 + $0x78] sm:$0xf] 0
      %1312 = vst [vmem:[#allocation2 + $0x7c] sm:$0xf] 0
      %1313 = vst [vmem:[#allocation2 + $0x80] sm:$0x3] 0
      %1314 = vst [vmem:[#allocation2 + $0x84] sm:$0xf] 0
      %1315 = vst [vmem:[#allocation2 + $0x88] sm:$0xf] 0
      %1316 = vst [vmem:[#allocation2 + $0x8c] sm:$0x3] 0
      %1317 = vst [vmem:[#allocation2 + $0x90] sm:$0xf] 0
      %1318 = vst [vmem:[#allocation2 + $0x94] sm:$0xf] 0
      %1319 = vst [vmem:[#allocation2 + $0x98] sm:$0x3] 0
      %1320 = vst [vmem:[#allocation2 + $0x9c] sm:$0xf] 0
      %1321 = vst [vmem:[#allocation2 + $0xa0] sm:$0xf] 0
      %1322 = vst [vmem:[#allocation2 + $0xa4] sm:$0x3] 0
      %1323 = vst [vmem:[#allocation2 + $0xa8] sm:$0xf] 0
      %1324 = vst [vmem:[#allocation2 + $0xac] sm:$0xf] 0
      %1325 = vst [vmem:[#allocation2 + $0xb0] sm:$0x3] 0
      %1326 = vst [vmem:[#allocation2 + $0xb4] sm:$0xf] 0
      %1327 = vst [vmem:[#allocation2 + $0xb8] sm:$0xf] 0
      %1328 = vst [vmem:[#allocation2 + $0xbc] sm:$0x3] 0
      %1329 = vst [vmem:[#allocation2 + $0xc0] sm:$0xf] 0
      %1330 = vst [vmem:[#allocation2 + $0xc4] sm:$0xf] 0
      %1331 = vst [vmem:[#allocation2 + $0xc8] sm:$0x3] 0
      %1332 = vst [vmem:[#allocation2 + $0xcc] sm:$0xf] 0
      %1333 = vst [vmem:[#allocation2 + $0xd0] sm:$0xf] 0
      %1334 = vst [vmem:[#allocation2 + $0xd4] sm:$0x3] 0
      %v1335 = vpack.c.bf16 %v1250, %v1249
      %v1336 = vpack.c.bf16 %v1252, %v1251
      %v1337 = vpack.c.bf16 %v1254, %v1253
      %v1338 = vpack.c.bf16 %v1256, %v1255
      %v1339 = vpack.c.bf16 %v1258, %v1257
      %v1340 = vpack.c.bf16 %v1260, %v1259
      %v1341 = vpack.c.bf16 %v1262, %v1261
      %v1342 = vpack.c.bf16 %v1264, %v1263
      %v1343 = vpack.c.bf16 %v1266, %v1265
      %v1344 = vpack.c.bf16 %v1268, %v1267
      %v1345 = vpack.c.bf16 %v1270, %v1269
      %v1346 = vpack.c.bf16 %v1272, %v1271
      %v1347 = vpack.c.bf16 %v1274, %v1273
      %v1348 = vpack.c.bf16 %v1276, %v1275
      %v1349 = vpack.c.bf16 %v1278, %v1277
      %v1350 = vpack.c.bf16 %v1280, %v1279
      %v1367 = vunpack.c.l.b16 %v1335
      %v1368 = vunpack.c.h.b16 %v1335
      %v1369 = vunpack.c.l.b16 %v1336
      %v1370 = vunpack.c.h.b16 %v1336
      %v1371 = vunpack.c.l.b16 %v1337
      %v1372 = vunpack.c.h.b16 %v1337
      %v1373 = vunpack.c.l.b16 %v1338
      %v1374 = vunpack.c.h.b16 %v1338
      %v1375 = vunpack.c.l.b16 %v1339
      %v1376 = vunpack.c.h.b16 %v1339
      %v1377 = vunpack.c.l.b16 %v1340
      %v1378 = vunpack.c.h.b16 %v1340
      %v1379 = vunpack.c.l.b16 %v1341
      %v1380 = vunpack.c.h.b16 %v1341
      %v1381 = vunpack.c.l.b16 %v1342
      %v1382 = vunpack.c.h.b16 %v1342
      %v1383 = vunpack.c.l.b16 %v1343
      %v1384 = vunpack.c.h.b16 %v1343
      %v1385 = vunpack.c.l.b16 %v1344
      %v1386 = vunpack.c.h.b16 %v1344
      %v1387 = vunpack.c.l.b16 %v1345
      %v1388 = vunpack.c.h.b16 %v1345
      %v1389 = vunpack.c.l.b16 %v1346
      %v1390 = vunpack.c.h.b16 %v1346
      %v1391 = vunpack.c.l.b16 %v1347
      %v1392 = vunpack.c.h.b16 %v1347
      %v1393 = vunpack.c.l.b16 %v1348
      %v1394 = vunpack.c.h.b16 %v1348
      %v1395 = vunpack.c.l.b16 %v1349
      %v1396 = vunpack.c.h.b16 %v1349
      %v1397 = vunpack.c.l.b16 %v1350
      %v1398 = vunpack.c.h.b16 %v1350
      %v1399 = vpack.c.b16 %v1367, %v1367
      %v1400 = vpack.c.b16 %v1368, %v1368
      %v1401 = vpack.c.b16 %v1369, %v1369
      %v1402 = vpack.c.b16 %v1370, %v1370
      %v1403 = vpack.c.b16 %v1371, %v1371
      %v1404 = vpack.c.b16 %v1372, %v1372
      %v1405 = vpack.c.b16 %v1373, %v1373
      %v1406 = vpack.c.b16 %v1374, %v1374
      %v1407 = vpack.c.b16 %v1375, %v1375
      %v1408 = vpack.c.b16 %v1376, %v1376
      %v1409 = vpack.c.b16 %v1377, %v1377
      %v1410 = vpack.c.b16 %v1378, %v1378
      %v1411 = vpack.c.b16 %v1379, %v1379
      %v1412 = vpack.c.b16 %v1380, %v1380
      %v1413 = vpack.c.b16 %v1381, %v1381
      %v1414 = vpack.c.b16 %v1382, %v1382
      %v1415 = vpack.c.b16 %v1383, %v1383
      %v1416 = vpack.c.b16 %v1384, %v1384
      %v1417 = vpack.c.b16 %v1385, %v1385
      %v1418 = vpack.c.b16 %v1386, %v1386
      %v1419 = vpack.c.b16 %v1387, %v1387
      %v1420 = vpack.c.b16 %v1388, %v1388
      %v1421 = vpack.c.b16 %v1389, %v1389
      %v1422 = vpack.c.b16 %v1390, %v1390
      %v1423 = vpack.c.b16 %v1391, %v1391
      %v1424 = vpack.c.b16 %v1392, %v1392
      %v1425 = vpack.c.b16 %v1393, %v1393
      %v1426 = vpack.c.b16 %v1394, %v1394
      %v1427 = vpack.c.b16 %v1395, %v1395
      %v1428 = vpack.c.b16 %v1396, %v1396
      %v1429 = vpack.c.b16 %v1397, %v1397
      %v1430 = vpack.c.b16 %v1398, %v1398
      %vm1431 = vcmask 1040384
      %vm1432 = vcmask 1044484
      %vm1433 = vmor %vm1431, %vm1432
      %v1434 = vrot.slane %v1399, 7
      %v1435 = vrot.slane %v1434, 4
      %v1436 = vrot.slane %v1400, 7
      %v1437 = vsel %vm1433, %v1435, %v1436
      %v1438 = vrot.slane %v1436, 4
      %v1439 = vrot.slane %v1401, 7
      %v1440 = vrot.slane %v1439, 4
      %v1441 = vrot.slane %v1402, 7
      %v1442 = vsel %vm1433, %v1440, %v1441
      %v1443 = vrot.slane %v1441, 4
      %v1444 = vrot.slane %v1403, 7
      %v1445 = vrot.slane %v1444, 4
      %v1446 = vrot.slane %v1404, 7
      %v1447 = vsel %vm1433, %v1445, %v1446
      %v1448 = vrot.slane %v1446, 4
      %v1449 = vrot.slane %v1405, 7
      %v1450 = vrot.slane %v1449, 4
      %v1451 = vrot.slane %v1406, 7
      %v1452 = vsel %vm1433, %v1450, %v1451
      %v1453 = vrot.slane %v1451, 4
      %v1454 = vrot.slane %v1407, 7
      %v1455 = vrot.slane %v1454, 4
      %v1456 = vrot.slane %v1408, 7
      %v1457 = vsel %vm1433, %v1455, %v1456
      %v1458 = vrot.slane %v1456, 4
      %v1459 = vrot.slane %v1409, 7
      %v1460 = vrot.slane %v1459, 4
      %v1461 = vrot.slane %v1410, 7
      %v1462 = vsel %vm1433, %v1460, %v1461
      %v1463 = vrot.slane %v1461, 4
      %v1464 = vrot.slane %v1411, 7
      %v1465 = vrot.slane %v1464, 4
      %v1466 = vrot.slane %v1412, 7
      %v1467 = vsel %vm1433, %v1465, %v1466
      %v1468 = vrot.slane %v1466, 4
      %v1469 = vrot.slane %v1413, 7
      %v1470 = vrot.slane %v1469, 4
      %v1471 = vrot.slane %v1414, 7
      %v1472 = vsel %vm1433, %v1470, %v1471
      %v1473 = vrot.slane %v1471, 4
      %v1474 = vrot.slane %v1415, 7
      %v1475 = vrot.slane %v1474, 4
      %v1476 = vrot.slane %v1416, 7
      %v1477 = vsel %vm1433, %v1475, %v1476
      %v1478 = vrot.slane %v1476, 4
      %v1479 = vrot.slane %v1417, 7
      %v1480 = vrot.slane %v1479, 4
      %v1481 = vrot.slane %v1418, 7
      %v1482 = vsel %vm1433, %v1480, %v1481
      %v1483 = vrot.slane %v1481, 4
      %v1484 = vrot.slane %v1419, 7
      %v1485 = vrot.slane %v1484, 4
      %v1486 = vrot.slane %v1420, 7
      %v1487 = vsel %vm1433, %v1485, %v1486
      %v1488 = vrot.slane %v1486, 4
      %v1489 = vrot.slane %v1421, 7
      %v1490 = vrot.slane %v1489, 4
      %v1491 = vrot.slane %v1422, 7
      %v1492 = vsel %vm1433, %v1490, %v1491
      %v1493 = vrot.slane %v1491, 4
      %v1494 = vrot.slane %v1423, 7
      %v1495 = vrot.slane %v1494, 4
      %v1496 = vrot.slane %v1424, 7
      %v1497 = vsel %vm1433, %v1495, %v1496
      %v1498 = vrot.slane %v1496, 4
      %v1499 = vrot.slane %v1425, 7
      %v1500 = vrot.slane %v1499, 4
      %v1501 = vrot.slane %v1426, 7
      %v1502 = vsel %vm1433, %v1500, %v1501
      %v1503 = vrot.slane %v1501, 4
      %v1504 = vrot.slane %v1427, 7
      %v1505 = vrot.slane %v1504, 4
      %v1506 = vrot.slane %v1428, 7
      %v1507 = vsel %vm1433, %v1505, %v1506
      %v1508 = vrot.slane %v1506, 4
      %v1509 = vrot.slane %v1429, 7
      %v1510 = vrot.slane %v1509, 4
      %v1511 = vrot.slane %v1430, 7
      %v1512 = vsel %vm1433, %v1510, %v1511
      %v1513 = vrot.slane %v1511, 4
      %s1562 = scalar_lea.vmem [#allocation2], 12
      %1563 = vst [vmem:[%s1562] sm:$0xe] %v1434
      %1564 = vst [vmem:[%s1562 + $0x4] sm:$0xf] %v1437
      %1565 = vst [vmem:[%s1562 + $0x8] sm:$0x1] %v1438
      %1566 = vst [vmem:[%s1562 + $0xc] sm:$0xe] %v1439
      %1567 = vst [vmem:[%s1562 + $0x10] sm:$0xf] %v1442
      %1568 = vst [vmem:[%s1562 + $0x14] sm:$0x1] %v1443
      %1569 = vst [vmem:[%s1562 + $0x18] sm:$0xe] %v1444
      %1570 = vst [vmem:[%s1562 + $0x1c] sm:$0xf] %v1447
      %1571 = vst [vmem:[%s1562 + $0x20] sm:$0x1] %v1448
      %1572 = vst [vmem:[%s1562 + $0x24] sm:$0xe] %v1449
      %1573 = vst [vmem:[%s1562 + $0x28] sm:$0xf] %v1452
      %1574 = vst [vmem:[%s1562 + $0x2c] sm:$0x1] %v1453
      %1575 = vst [vmem:[%s1562 + $0x30] sm:$0xe] %v1454
      %1576 = vst [vmem:[%s1562 + $0x34] sm:$0xf] %v1457
      %1577 = vst [vmem:[%s1562 + $0x38] sm:$0x1] %v1458
      %1578 = vst [vmem:[%s1562 + $0x3c] sm:$0xe] %v1459
      %1579 = vst [vmem:[%s1562 + $0x40] sm:$0xf] %v1462
      %1580 = vst [vmem:[%s1562 + $0x44] sm:$0x1] %v1463
      %1581 = vst [vmem:[%s1562 + $0x48] sm:$0xe] %v1464
      %1582 = vst [vmem:[%s1562 + $0x4c] sm:$0xf] %v1467
      %1583 = vst [vmem:[%s1562 + $0x50] sm:$0x1] %v1468
      %1584 = vst [vmem:[%s1562 + $0x54] sm:$0xe] %v1469
      %1585 = vst [vmem:[%s1562 + $0x58] sm:$0xf] %v1472
      %1586 = vst [vmem:[%s1562 + $0x5c] sm:$0x1] %v1473
      %1587 = vst [vmem:[%s1562 + $0x60] sm:$0xe] %v1474
      %1588 = vst [vmem:[%s1562 + $0x64] sm:$0xf] %v1477
      %1589 = vst [vmem:[%s1562 + $0x68] sm:$0x1] %v1478
      %1590 = vst [vmem:[%s1562 + $0x6c] sm:$0xe] %v1479
      %1591 = vst [vmem:[%s1562 + $0x70] sm:$0xf] %v1482
      %1592 = vst [vmem:[%s1562 + $0x74] sm:$0x1] %v1483
      %1593 = vst [vmem:[%s1562 + $0x78] sm:$0xe] %v1484
      %1594 = vst [vmem:[%s1562 + $0x7c] sm:$0xf] %v1487
      %1595 = vst [vmem:[%s1562 + $0x80] sm:$0x1] %v1488
      %1596 = vst [vmem:[%s1562 + $0x84] sm:$0xe] %v1489
      %1597 = vst [vmem:[%s1562 + $0x88] sm:$0xf] %v1492
      %1598 = vst [vmem:[%s1562 + $0x8c] sm:$0x1] %v1493
      %1599 = vst [vmem:[%s1562 + $0x90] sm:$0xe] %v1494
      %1600 = vst [vmem:[%s1562 + $0x94] sm:$0xf] %v1497
      %1601 = vst [vmem:[%s1562 + $0x98] sm:$0x1] %v1498
      %1602 = vst [vmem:[%s1562 + $0x9c] sm:$0xe] %v1499
      %1603 = vst [vmem:[%s1562 + $0xa0] sm:$0xf] %v1502
      %1604 = vst [vmem:[%s1562 + $0xa4] sm:$0x1] %v1503
      %1605 = vst [vmem:[%s1562 + $0xa8] sm:$0xe] %v1504
      %1606 = vst [vmem:[%s1562 + $0xac] sm:$0xf] %v1507
      %1607 = vst [vmem:[%s1562 + $0xb0] sm:$0x1] %v1508
      %1608 = vst [vmem:[%s1562 + $0xb4] sm:$0xe] %v1509
      %1609 = vst [vmem:[%s1562 + $0xb8] sm:$0xf] %v1512
      %1610 = vst [vmem:[%s1562 + $0xbc] sm:$0x1] %v1513
      %v1611 = vld [vmem:[#allocation2] sm:$0xf]
      %v1612 = vld [vmem:[#allocation2 + $0x4] sm:$0xf]
      %v1613 = vld [vmem:[#allocation2 + $0x8] sm:$0x1]
      %v1614 = vld [vmem:[#allocation2 + $0xc] sm:$0xf]
      %v1615 = vld [vmem:[#allocation2 + $0x10] sm:$0xf]
      %v1616 = vld [vmem:[#allocation2 + $0x14] sm:$0x1]
      %v1617 = vld [vmem:[#allocation2 + $0x18] sm:$0xf]
      %v1618 = vld [vmem:[#allocation2 + $0x1c] sm:$0xf]
      %v1619 = vld [vmem:[#allocation2 + $0x20] sm:$0x1]
      %v1620 = vld [vmem:[#allocation2 + $0x24] sm:$0xf]
      %v1621 = vld [vmem:[#allocation2 + $0x28] sm:$0xf]
      %v1622 = vld [vmem:[#allocation2 + $0x2c] sm:$0x1]
      %v1623 = vld [vmem:[#allocation2 + $0x30] sm:$0xf]
      %v1624 = vld [vmem:[#allocation2 + $0x34] sm:$0xf]
      %v1625 = vld [vmem:[#allocation2 + $0x38] sm:$0x1]
      %v1626 = vld [vmem:[#allocation2 + $0x3c] sm:$0xf]
      %v1627 = vld [vmem:[#allocation2 + $0x40] sm:$0xf]
      %v1628 = vld [vmem:[#allocation2 + $0x44] sm:$0x1]
      %v1629 = vld [vmem:[#allocation2 + $0x48] sm:$0xf]
      %v1630 = vld [vmem:[#allocation2 + $0x4c] sm:$0xf]
      %v1631 = vld [vmem:[#allocation2 + $0x50] sm:$0x1]
      %v1632 = vld [vmem:[#allocation2 + $0x54] sm:$0xf]
      %v1633 = vld [vmem:[#allocation2 + $0x58] sm:$0xf]
      %v1634 = vld [vmem:[#allocation2 + $0x5c] sm:$0x1]
      %v1635 = vld [vmem:[#allocation2 + $0x60] sm:$0xf]
      %v1636 = vld [vmem:[#allocation2 + $0x64] sm:$0xf]
      %v1637 = vld [vmem:[#allocation2 + $0x68] sm:$0x1]
      %v1638 = vld [vmem:[#allocation2 + $0x6c] sm:$0xf]
      %v1639 = vld [vmem:[#allocation2 + $0x70] sm:$0xf]
      %v1640 = vld [vmem:[#allocation2 + $0x74] sm:$0x1]
      %v1641 = vld [vmem:[#allocation2 + $0x78] sm:$0xf]
      %v1642 = vld [vmem:[#allocation2 + $0x7c] sm:$0xf]
      %v1643 = vld [vmem:[#allocation2 + $0x80] sm:$0x1]
      %v1644 = vld [vmem:[#allocation2 + $0x84] sm:$0xf]
      %v1645 = vld [vmem:[#allocation2 + $0x88] sm:$0xf]
      %v1646 = vld [vmem:[#allocation2 + $0x8c] sm:$0x1]
      %v1647 = vld [vmem:[#allocation2 + $0x90] sm:$0xf]
      %v1648 = vld [vmem:[#allocation2 + $0x94] sm:$0xf]
      %v1649 = vld [vmem:[#allocation2 + $0x98] sm:$0x1]
      %v1650 = vld [vmem:[#allocation2 + $0x9c] sm:$0xf]
      %v1651 = vld [vmem:[#allocation2 + $0xa0] sm:$0xf]
      %v1652 = vld [vmem:[#allocation2 + $0xa4] sm:$0x1]
      %v1653 = vld [vmem:[#allocation2 + $0xa8] sm:$0xf]
      %v1654 = vld [vmem:[#allocation2 + $0xac] sm:$0xf]
      %v1655 = vld [vmem:[#allocation2 + $0xb0] sm:$0x1]
      %v1656 = vld [vmem:[#allocation2 + $0xb4] sm:$0xf]
      %v1657 = vld [vmem:[#allocation2 + $0xb8] sm:$0xf]
      %v1658 = vld [vmem:[#allocation2 + $0xbc] sm:$0x1]
      %v1659 = vld [vmem:[#allocation2] sm:$0xe]
      %v1660 = vld [vmem:[#allocation2 + $0xc] sm:$0xe]
      %v1661 = vld [vmem:[#allocation2 + $0x18] sm:$0xe]
      %v1662 = vld [vmem:[#allocation2 + $0x24] sm:$0xe]
      %v1663 = vld [vmem:[#allocation2 + $0x30] sm:$0xe]
      %v1664 = vld [vmem:[#allocation2 + $0x3c] sm:$0xe]
      %v1665 = vld [vmem:[#allocation2 + $0x48] sm:$0xe]
      %v1666 = vld [vmem:[#allocation2 + $0x54] sm:$0xe]
      %v1667 = vld [vmem:[#allocation2 + $0x60] sm:$0xe]
      %v1668 = vld [vmem:[#allocation2 + $0x6c] sm:$0xe]
      %v1669 = vld [vmem:[#allocation2 + $0x78] sm:$0xe]
      %v1670 = vld [vmem:[#allocation2 + $0x84] sm:$0xe]
      %v1671 = vld [vmem:[#allocation2 + $0x90] sm:$0xe]
      %v1672 = vld [vmem:[#allocation2 + $0x9c] sm:$0xe]
      %v1673 = vld [vmem:[#allocation2 + $0xa8] sm:$0xe]
      %v1674 = vld [vmem:[#allocation2 + $0xb4] sm:$0xe]
      %v1675 = vld [vmem:[#allocation2 + $0x8] sm:$0x3]
      %v1676 = vld [vmem:[#allocation2 + $0x14] sm:$0x3]
      %v1677 = vld [vmem:[#allocation2 + $0x20] sm:$0x3]
      %v1678 = vld [vmem:[#allocation2 + $0x2c] sm:$0x3]
      %v1679 = vld [vmem:[#allocation2 + $0x38] sm:$0x3]
      %v1680 = vld [vmem:[#allocation2 + $0x44] sm:$0x3]
      %v1681 = vld [vmem:[#allocation2 + $0x50] sm:$0x3]
      %v1682 = vld [vmem:[#allocation2 + $0x5c] sm:$0x3]
      %v1683 = vld [vmem:[#allocation2 + $0x68] sm:$0x3]
      %v1684 = vld [vmem:[#allocation2 + $0x74] sm:$0x3]
      %v1685 = vld [vmem:[#allocation2 + $0x80] sm:$0x3]
      %v1686 = vld [vmem:[#allocation2 + $0x8c] sm:$0x3]
      %v1687 = vld [vmem:[#allocation2 + $0x98] sm:$0x3]
      %v1688 = vld [vmem:[#allocation2 + $0xa4] sm:$0x3]
      %v1689 = vld [vmem:[#allocation2 + $0xb0] sm:$0x3]
      %v1690 = vld [vmem:[#allocation2 + $0xbc] sm:$0x3]
      %v1739 = vunpack.c.l.b16 %v1611
      %v1740 = vunpack.c.l.b16 %v1612
      %v1741 = vunpack.c.l.b16 %v1613
      %v1742 = vunpack.c.l.b16 %v1614
      %v1743 = vunpack.c.l.b16 %v1615
      %v1744 = vunpack.c.l.b16 %v1616
      %v1745 = vunpack.c.l.b16 %v1617
      %v1746 = vunpack.c.l.b16 %v1618
      %v1747 = vunpack.c.l.b16 %v1619
      %v1748 = vunpack.c.l.b16 %v1620
      %v1749 = vunpack.c.l.b16 %v1621
      %v1750 = vunpack.c.l.b16 %v1622
      %v1751 = vunpack.c.l.b16 %v1623
      %v1752 = vunpack.c.l.b16 %v1624
      %v1753 = vunpack.c.l.b16 %v1625
      %v1754 = vunpack.c.l.b16 %v1626
      %v1755 = vunpack.c.l.b16 %v1627
      %v1756 = vunpack.c.l.b16 %v1628
      %v1757 = vunpack.c.l.b16 %v1629
      %v1758 = vunpack.c.l.b16 %v1630
      %v1759 = vunpack.c.l.b16 %v1631
      %v1760 = vunpack.c.l.b16 %v1632
      %v1761 = vunpack.c.l.b16 %v1633
      %v1762 = vunpack.c.l.b16 %v1634
      %v1763 = vunpack.c.l.b16 %v1635
      %v1764 = vunpack.c.l.b16 %v1636
      %v1765 = vunpack.c.l.b16 %v1637
      %v1766 = vunpack.c.l.b16 %v1638
      %v1767 = vunpack.c.l.b16 %v1639
      %v1768 = vunpack.c.l.b16 %v1640
      %v1769 = vunpack.c.l.b16 %v1641
      %v1770 = vunpack.c.l.b16 %v1642
      %v1771 = vunpack.c.l.b16 %v1643
      %v1772 = vunpack.c.l.b16 %v1644
      %v1773 = vunpack.c.l.b16 %v1645
      %v1774 = vunpack.c.l.b16 %v1646
      %v1775 = vunpack.c.l.b16 %v1647
      %v1776 = vunpack.c.l.b16 %v1648
      %v1777 = vunpack.c.l.b16 %v1649
      %v1778 = vunpack.c.l.b16 %v1650
      %v1779 = vunpack.c.l.b16 %v1651
      %v1780 = vunpack.c.l.b16 %v1652
      %v1781 = vunpack.c.l.b16 %v1653
      %v1782 = vunpack.c.l.b16 %v1654
      %v1783 = vunpack.c.l.b16 %v1655
      %v1784 = vunpack.c.l.b16 %v1656
      %v1785 = vunpack.c.l.b16 %v1657
      %v1786 = vunpack.c.l.b16 %v1658
      %v1787 = vpack.c.b16 %v1740, %v1739
      %v1788 = vpack.c.b16 %v1741, %v1741
      %v1789 = vpack.c.b16 %v1743, %v1742
      %v1790 = vpack.c.b16 %v1744, %v1744
      %v1791 = vpack.c.b16 %v1746, %v1745
      %v1792 = vpack.c.b16 %v1747, %v1747
      %v1793 = vpack.c.b16 %v1749, %v1748
      %v1794 = vpack.c.b16 %v1750, %v1750
      %v1795 = vpack.c.b16 %v1752, %v1751
      %v1796 = vpack.c.b16 %v1753, %v1753
      %v1797 = vpack.c.b16 %v1755, %v1754
      %v1798 = vpack.c.b16 %v1756, %v1756
      %v1799 = vpack.c.b16 %v1758, %v1757
      %v1800 = vpack.c.b16 %v1759, %v1759
      %v1801 = vpack.c.b16 %v1761, %v1760
      %v1802 = vpack.c.b16 %v1762, %v1762
      %v1803 = vpack.c.b16 %v1764, %v1763
      %v1804 = vpack.c.b16 %v1765, %v1765
      %v1805 = vpack.c.b16 %v1767, %v1766
      %v1806 = vpack.c.b16 %v1768, %v1768
      %v1807 = vpack.c.b16 %v1770, %v1769
      %v1808 = vpack.c.b16 %v1771, %v1771
      %v1809 = vpack.c.b16 %v1773, %v1772
      %v1810 = vpack.c.b16 %v1774, %v1774
      %v1811 = vpack.c.b16 %v1776, %v1775
      %v1812 = vpack.c.b16 %v1777, %v1777
      %v1813 = vpack.c.b16 %v1779, %v1778
      %v1814 = vpack.c.b16 %v1780, %v1780
      %v1815 = vpack.c.b16 %v1782, %v1781
      %v1816 = vpack.c.b16 %v1783, %v1783
      %v1817 = vpack.c.b16 %v1785, %v1784
      %v1818 = vpack.c.b16 %v1786, %v1786
      %v1835 = vunpack.c.l.b16 %v1659
      %v1836 = vunpack.c.l.b16 %v1660
      %v1837 = vunpack.c.l.b16 %v1661
      %v1838 = vunpack.c.l.b16 %v1662
      %v1839 = vunpack.c.l.b16 %v1663
      %v1840 = vunpack.c.l.b16 %v1664
      %v1841 = vunpack.c.l.b16 %v1665
      %v1842 = vunpack.c.l.b16 %v1666
      %v1843 = vunpack.c.l.b16 %v1667
      %v1844 = vunpack.c.l.b16 %v1668
      %v1845 = vunpack.c.l.b16 %v1669
      %v1846 = vunpack.c.l.b16 %v1670
      %v1847 = vunpack.c.l.b16 %v1671
      %v1848 = vunpack.c.l.b16 %v1672
      %v1849 = vunpack.c.l.b16 %v1673
      %v1850 = vunpack.c.l.b16 %v1674
      %v1851 = vpack.c.b16 %v1740, %v1835
      %v1852 = vpack.c.b16 %v1743, %v1836
      %v1853 = vpack.c.b16 %v1746, %v1837
      %v1854 = vpack.c.b16 %v1749, %v1838
      %v1855 = vpack.c.b16 %v1752, %v1839
      %v1856 = vpack.c.b16 %v1755, %v1840
      %v1857 = vpack.c.b16 %v1758, %v1841
      %v1858 = vpack.c.b16 %v1761, %v1842
      %v1859 = vpack.c.b16 %v1764, %v1843
      %v1860 = vpack.c.b16 %v1767, %v1844
      %v1861 = vpack.c.b16 %v1770, %v1845
      %v1862 = vpack.c.b16 %v1773, %v1846
      %v1863 = vpack.c.b16 %v1776, %v1847
      %v1864 = vpack.c.b16 %v1779, %v1848
      %v1865 = vpack.c.b16 %v1782, %v1849
      %v1866 = vpack.c.b16 %v1785, %v1850
      %vm1867 = vsmask.f32 7424
      %v1869 = vshrl.u32 %v1851, 16
      %v1871 = vshll.u32 %v1851, 16
      %v1873 = vrot.slane %v1871, 1
      %v1874 = vor.u32 %v1869, %v1873
      %v1876 = vshll.u32 %v1788, 16
      %v1878 = vrot.slane %v1876, 1
      %v1879 = vsel %vm1867, %v1874, %v1878
      %v1880 = vshrl.u32 %v1788, 16
      %v1883 = vshrl.u32 %v1852, 16
      %v1885 = vshll.u32 %v1852, 16
      %v1887 = vrot.slane %v1885, 1
      %v1888 = vor.u32 %v1883, %v1887
      %v1890 = vshll.u32 %v1790, 16
      %v1892 = vrot.slane %v1890, 1
      %v1893 = vsel %vm1867, %v1888, %v1892
      %v1894 = vshrl.u32 %v1790, 16
      %v1897 = vshrl.u32 %v1853, 16
      %v1899 = vshll.u32 %v1853, 16
      %v1901 = vrot.slane %v1899, 1
      %v1902 = vor.u32 %v1897, %v1901
      %v1904 = vshll.u32 %v1792, 16
      %v1906 = vrot.slane %v1904, 1
      %v1907 = vsel %vm1867, %v1902, %v1906
      %v1908 = vshrl.u32 %v1792, 16
      %v1911 = vshrl.u32 %v1854, 16
      %v1913 = vshll.u32 %v1854, 16
      %v1915 = vrot.slane %v1913, 1
      %v1916 = vor.u32 %v1911, %v1915
      %v1918 = vshll.u32 %v1794, 16
      %v1920 = vrot.slane %v1918, 1
      %v1921 = vsel %vm1867, %v1916, %v1920
      %v1922 = vshrl.u32 %v1794, 16
      %v1925 = vshrl.u32 %v1855, 16
      %v1927 = vshll.u32 %v1855, 16
      %v1929 = vrot.slane %v1927, 1
      %v1930 = vor.u32 %v1925, %v1929
      %v1932 = vshll.u32 %v1796, 16
      %v1934 = vrot.slane %v1932, 1
      %v1935 = vsel %vm1867, %v1930, %v1934
      %v1936 = vshrl.u32 %v1796, 16
      %v1939 = vshrl.u32 %v1856, 16
      %v1941 = vshll.u32 %v1856, 16
      %v1943 = vrot.slane %v1941, 1
      %v1944 = vor.u32 %v1939, %v1943
      %v1946 = vshll.u32 %v1798, 16
      %v1948 = vrot.slane %v1946, 1
      %v1949 = vsel %vm1867, %v1944, %v1948
      %v1950 = vshrl.u32 %v1798, 16
      %v1953 = vshrl.u32 %v1857, 16
      %v1955 = vshll.u32 %v1857, 16
      %v1957 = vrot.slane %v1955, 1
      %v1958 = vor.u32 %v1953, %v1957
      %v1960 = vshll.u32 %v1800, 16
      %v1962 = vrot.slane %v1960, 1
      %v1963 = vsel %vm1867, %v1958, %v1962
      %v1964 = vshrl.u32 %v1800, 16
      %v1967 = vshrl.u32 %v1858, 16
      %v1969 = vshll.u32 %v1858, 16
      %v1971 = vrot.slane %v1969, 1
      %v1972 = vor.u32 %v1967, %v1971
      %v1974 = vshll.u32 %v1802, 16
      %v1976 = vrot.slane %v1974, 1
      %v1977 = vsel %vm1867, %v1972, %v1976
      %v1978 = vshrl.u32 %v1802, 16
      %v1981 = vshrl.u32 %v1859, 16
      %v1983 = vshll.u32 %v1859, 16
      %v1985 = vrot.slane %v1983, 1
      %v1986 = vor.u32 %v1981, %v1985
      %v1988 = vshll.u32 %v1804, 16
      %v1990 = vrot.slane %v1988, 1
      %v1991 = vsel %vm1867, %v1986, %v1990
      %v1992 = vshrl.u32 %v1804, 16
      %v1995 = vshrl.u32 %v1860, 16
      %v1997 = vshll.u32 %v1860, 16
      %v1999 = vrot.slane %v1997, 1
      %v2000 = vor.u32 %v1995, %v1999
      %v2002 = vshll.u32 %v1806, 16
      %v2004 = vrot.slane %v2002, 1
      %v2005 = vsel %vm1867, %v2000, %v2004
      %v2006 = vshrl.u32 %v1806, 16
      %v2009 = vshrl.u32 %v1861, 16
      %v2011 = vshll.u32 %v1861, 16
      %v2013 = vrot.slane %v2011, 1
      %v2014 = vor.u32 %v2009, %v2013
      %v2016 = vshll.u32 %v1808, 16
      %v2018 = vrot.slane %v2016, 1
      %v2019 = vsel %vm1867, %v2014, %v2018
      %v2020 = vshrl.u32 %v1808, 16
      %v2023 = vshrl.u32 %v1862, 16
      %v2025 = vshll.u32 %v1862, 16
      %v2027 = vrot.slane %v2025, 1
      %v2028 = vor.u32 %v2023, %v2027
      %v2030 = vshll.u32 %v1810, 16
      %v2032 = vrot.slane %v2030, 1
      %v2033 = vsel %vm1867, %v2028, %v2032
      %v2034 = vshrl.u32 %v1810, 16
      %v2037 = vshrl.u32 %v1863, 16
      %v2039 = vshll.u32 %v1863, 16
      %v2041 = vrot.slane %v2039, 1
      %v2042 = vor.u32 %v2037, %v2041
      %v2044 = vshll.u32 %v1812, 16
      %v2046 = vrot.slane %v2044, 1
      %v2047 = vsel %vm1867, %v2042, %v2046
      %v2048 = vshrl.u32 %v1812, 16
      %v2051 = vshrl.u32 %v1864, 16
      %v2053 = vshll.u32 %v1864, 16
      %v2055 = vrot.slane %v2053, 1
      %v2056 = vor.u32 %v2051, %v2055
      %v2058 = vshll.u32 %v1814, 16
      %v2060 = vrot.slane %v2058, 1
      %v2061 = vsel %vm1867, %v2056, %v2060
      %v2062 = vshrl.u32 %v1814, 16
      %v2065 = vshrl.u32 %v1865, 16
      %v2067 = vshll.u32 %v1865, 16
      %v2069 = vrot.slane %v2067, 1
      %v2070 = vor.u32 %v2065, %v2069
      %v2072 = vshll.u32 %v1816, 16
      %v2074 = vrot.slane %v2072, 1
      %v2075 = vsel %vm1867, %v2070, %v2074
      %v2076 = vshrl.u32 %v1816, 16
      %v2079 = vshrl.u32 %v1866, 16
      %v2081 = vshll.u32 %v1866, 16
      %v2083 = vrot.slane %v2081, 1
      %v2084 = vor.u32 %v2079, %v2083
      %v2086 = vshll.u32 %v1818, 16
      %v2088 = vrot.slane %v2086, 1
      %v2089 = vsel %vm1867, %v2084, %v2088
      %v2090 = vshrl.u32 %v1818, 16
      %v2108 = vunpack.c.l.b16 %v1675
      %v2109 = vunpack.c.l.b16 %v1676
      %v2110 = vunpack.c.l.b16 %v1677
      %v2111 = vunpack.c.l.b16 %v1678
      %v2112 = vunpack.c.l.b16 %v1679
      %v2113 = vunpack.c.l.b16 %v1680
      %v2114 = vunpack.c.l.b16 %v1681
      %v2115 = vunpack.c.l.b16 %v1682
      %v2116 = vunpack.c.l.b16 %v1683
      %v2117 = vunpack.c.l.b16 %v1684
      %v2118 = vunpack.c.l.b16 %v1685
      %v2119 = vunpack.c.l.b16 %v1686
      %v2120 = vunpack.c.l.b16 %v1687
      %v2121 = vunpack.c.l.b16 %v1688
      %v2122 = vunpack.c.l.b16 %v1689
      %v2123 = vunpack.c.l.b16 %v1690
      %v2124 = vpack.c.b16 %v2108, %v2108
      %v2125 = vpack.c.b16 %v2109, %v2109
      %v2126 = vpack.c.b16 %v2110, %v2110
      %v2127 = vpack.c.b16 %v2111, %v2111
      %v2128 = vpack.c.b16 %v2112, %v2112
      %v2129 = vpack.c.b16 %v2113, %v2113
      %v2130 = vpack.c.b16 %v2114, %v2114
      %v2131 = vpack.c.b16 %v2115, %v2115
      %v2132 = vpack.c.b16 %v2116, %v2116
      %v2133 = vpack.c.b16 %v2117, %v2117
      %v2134 = vpack.c.b16 %v2118, %v2118
      %v2135 = vpack.c.b16 %v2119, %v2119
      %v2136 = vpack.c.b16 %v2120, %v2120
      %v2137 = vpack.c.b16 %v2121, %v2121
      %v2138 = vpack.c.b16 %v2122, %v2122
      %v2139 = vpack.c.b16 %v2123, %v2123
      %vm2140 = vcmask 1046528
      %v2141 = vrot.slane %v1851, 1
      %v2142 = vrot.slane %v2124, 1
      %v2143 = vsel %vm2140, %v2141, %v2142
      %v2144 = vrot.slane %v1852, 1
      %v2145 = vrot.slane %v2125, 1
      %v2146 = vsel %vm2140, %v2144, %v2145
      %v2147 = vrot.slane %v1853, 1
      %v2148 = vrot.slane %v2126, 1
      %v2149 = vsel %vm2140, %v2147, %v2148
      %v2150 = vrot.slane %v1854, 1
      %v2151 = vrot.slane %v2127, 1
      %v2152 = vsel %vm2140, %v2150, %v2151
      %v2153 = vrot.slane %v1855, 1
      %v2154 = vrot.slane %v2128, 1
      %v2155 = vsel %vm2140, %v2153, %v2154
      %v2156 = vrot.slane %v1856, 1
      %v2157 = vrot.slane %v2129, 1
      %v2158 = vsel %vm2140, %v2156, %v2157
      %v2159 = vrot.slane %v1857, 1
      %v2160 = vrot.slane %v2130, 1
      %v2161 = vsel %vm2140, %v2159, %v2160
      %v2162 = vrot.slane %v1858, 1
      %v2163 = vrot.slane %v2131, 1
      %v2164 = vsel %vm2140, %v2162, %v2163
      %v2165 = vrot.slane %v1859, 1
      %v2166 = vrot.slane %v2132, 1
      %v2167 = vsel %vm2140, %v2165, %v2166
      %v2168 = vrot.slane %v1860, 1
      %v2169 = vrot.slane %v2133, 1
      %v2170 = vsel %vm2140, %v2168, %v2169
      %v2171 = vrot.slane %v1861, 1
      %v2172 = vrot.slane %v2134, 1
      %v2173 = vsel %vm2140, %v2171, %v2172
      %v2174 = vrot.slane %v1862, 1
      %v2175 = vrot.slane %v2135, 1
      %v2176 = vsel %vm2140, %v2174, %v2175
      %v2177 = vrot.slane %v1863, 1
      %v2178 = vrot.slane %v2136, 1
      %v2179 = vsel %vm2140, %v2177, %v2178
      %v2180 = vrot.slane %v1864, 1
      %v2181 = vrot.slane %v2137, 1
      %v2182 = vsel %vm2140, %v2180, %v2181
      %v2183 = vrot.slane %v1865, 1
      %v2184 = vrot.slane %v2138, 1
      %v2185 = vsel %vm2140, %v2183, %v2184
      %v2186 = vrot.slane %v1866, 1
      %v2187 = vrot.slane %v2139, 1
      %v2188 = vsel %vm2140, %v2186, %v2187
      %v2190 = vshrl.u32 %v1787, 16
      %v2192 = vshll.u32 %v1787, 16
      %v2194 = vrot.slane %v2192, 1
      %v2195 = vor.u32 %v2190, %v2194
      %v2196 = vsel %vm1867, %v2195, %v1878
      %v2198 = vshrl.u32 %v1879, 16
      %v2200 = vshll.u32 %v1879, 16
      %v2202 = vrot.slane %v2200, 1
      %v2203 = vor.u32 %v2198, %v2202
      %v2205 = vshll.u32 %v1880, 16
      %v2207 = vrot.slane %v2205, 1
      %v2208 = vsel %vm1867, %v2203, %v2207
      %v2210 = vshrl.u32 %v2143, 16
      %v2212 = vshll.u32 %v2143, 16
      %v2214 = vrot.slane %v2212, 1
      %v2215 = vor.u32 %v2210, %v2214
      %v2217 = vshll.u32 %v2142, 16
      %v2219 = vrot.slane %v2217, 1
      %v2220 = vsel %vm1867, %v2215, %v2219
      %v2222 = vshrl.u32 %v1789, 16
      %v2224 = vshll.u32 %v1789, 16
      %v2226 = vrot.slane %v2224, 1
      %v2227 = vor.u32 %v2222, %v2226
      %v2228 = vsel %vm1867, %v2227, %v1892
      %v2230 = vshrl.u32 %v1893, 16
      %v2232 = vshll.u32 %v1893, 16
      %v2234 = vrot.slane %v2232, 1
      %v2235 = vor.u32 %v2230, %v2234
      %v2237 = vshll.u32 %v1894, 16
      %v2239 = vrot.slane %v2237, 1
      %v2240 = vsel %vm1867, %v2235, %v2239
      %v2242 = vshrl.u32 %v2146, 16
      %v2244 = vshll.u32 %v2146, 16
      %v2246 = vrot.slane %v2244, 1
      %v2247 = vor.u32 %v2242, %v2246
      %v2249 = vshll.u32 %v2145, 16
      %v2251 = vrot.slane %v2249, 1
      %v2252 = vsel %vm1867, %v2247, %v2251
      %v2254 = vshrl.u32 %v1791, 16
      %v2256 = vshll.u32 %v1791, 16
      %v2258 = vrot.slane %v2256, 1
      %v2259 = vor.u32 %v2254, %v2258
      %v2260 = vsel %vm1867, %v2259, %v1906
      %v2262 = vshrl.u32 %v1907, 16
      %v2264 = vshll.u32 %v1907, 16
      %v2266 = vrot.slane %v2264, 1
      %v2267 = vor.u32 %v2262, %v2266
      %v2269 = vshll.u32 %v1908, 16
      %v2271 = vrot.slane %v2269, 1
      %v2272 = vsel %vm1867, %v2267, %v2271
      %v2274 = vshrl.u32 %v2149, 16
      %v2276 = vshll.u32 %v2149, 16
      %v2278 = vrot.slane %v2276, 1
      %v2279 = vor.u32 %v2274, %v2278
      %v2281 = vshll.u32 %v2148, 16
      %v2283 = vrot.slane %v2281, 1
      %v2284 = vsel %vm1867, %v2279, %v2283
      %v2286 = vshrl.u32 %v1793, 16
      %v2288 = vshll.u32 %v1793, 16
      %v2290 = vrot.slane %v2288, 1
      %v2291 = vor.u32 %v2286, %v2290
      %v2292 = vsel %vm1867, %v2291, %v1920
      %v2294 = vshrl.u32 %v1921, 16
      %v2296 = vshll.u32 %v1921, 16
      %v2298 = vrot.slane %v2296, 1
      %v2299 = vor.u32 %v2294, %v2298
      %v2301 = vshll.u32 %v1922, 16
      %v2303 = vrot.slane %v2301, 1
      %v2304 = vsel %vm1867, %v2299, %v2303
      %v2306 = vshrl.u32 %v2152, 16
      %v2308 = vshll.u32 %v2152, 16
      %v2310 = vrot.slane %v2308, 1
      %v2311 = vor.u32 %v2306, %v2310
      %v2313 = vshll.u32 %v2151, 16
      %v2315 = vrot.slane %v2313, 1
      %v2316 = vsel %vm1867, %v2311, %v2315
      %v2318 = vshrl.u32 %v1795, 16
      %v2320 = vshll.u32 %v1795, 16
      %v2322 = vrot.slane %v2320, 1
      %v2323 = vor.u32 %v2318, %v2322
      %v2324 = vsel %vm1867, %v2323, %v1934
      %v2326 = vshrl.u32 %v1935, 16
      %v2328 = vshll.u32 %v1935, 16
      %v2330 = vrot.slane %v2328, 1
      %v2331 = vor.u32 %v2326, %v2330
      %v2333 = vshll.u32 %v1936, 16
      %v2335 = vrot.slane %v2333, 1
      %v2336 = vsel %vm1867, %v2331, %v2335
      %v2338 = vshrl.u32 %v2155, 16
      %v2340 = vshll.u32 %v2155, 16
      %v2342 = vrot.slane %v2340, 1
      %v2343 = vor.u32 %v2338, %v2342
      %v2345 = vshll.u32 %v2154, 16
      %v2347 = vrot.slane %v2345, 1
      %v2348 = vsel %vm1867, %v2343, %v2347
      %v2350 = vshrl.u32 %v1797, 16
      %v2352 = vshll.u32 %v1797, 16
      %v2354 = vrot.slane %v2352, 1
      %v2355 = vor.u32 %v2350, %v2354
      %v2356 = vsel %vm1867, %v2355, %v1948
      %v2358 = vshrl.u32 %v1949, 16
      %v2360 = vshll.u32 %v1949, 16
      %v2362 = vrot.slane %v2360, 1
      %v2363 = vor.u32 %v2358, %v2362
      %v2365 = vshll.u32 %v1950, 16
      %v2367 = vrot.slane %v2365, 1
      %v2368 = vsel %vm1867, %v2363, %v2367
      %v2370 = vshrl.u32 %v2158, 16
      %v2372 = vshll.u32 %v2158, 16
      %v2374 = vrot.slane %v2372, 1
      %v2375 = vor.u32 %v2370, %v2374
      %v2377 = vshll.u32 %v2157, 16
      %v2379 = vrot.slane %v2377, 1
      %v2380 = vsel %vm1867, %v2375, %v2379
      %v2382 = vshrl.u32 %v1799, 16
      %v2384 = vshll.u32 %v1799, 16
      %v2386 = vrot.slane %v2384, 1
      %v2387 = vor.u32 %v2382, %v2386
      %v2388 = vsel %vm1867, %v2387, %v1962
      %v2390 = vshrl.u32 %v1963, 16
      %v2392 = vshll.u32 %v1963, 16
      %v2394 = vrot.slane %v2392, 1
      %v2395 = vor.u32 %v2390, %v2394
      %v2397 = vshll.u32 %v1964, 16
      %v2399 = vrot.slane %v2397, 1
      %v2400 = vsel %vm1867, %v2395, %v2399
      %v2402 = vshrl.u32 %v2161, 16
      %v2404 = vshll.u32 %v2161, 16
      %v2406 = vrot.slane %v2404, 1
      %v2407 = vor.u32 %v2402, %v2406
      %v2409 = vshll.u32 %v2160, 16
      %v2411 = vrot.slane %v2409, 1
      %v2412 = vsel %vm1867, %v2407, %v2411
      %v2414 = vshrl.u32 %v1801, 16
      %v2416 = vshll.u32 %v1801, 16
      %v2418 = vrot.slane %v2416, 1
      %v2419 = vor.u32 %v2414, %v2418
      %v2420 = vsel %vm1867, %v2419, %v1976
      %v2422 = vshrl.u32 %v1977, 16
      %v2424 = vshll.u32 %v1977, 16
      %v2426 = vrot.slane %v2424, 1
      %v2427 = vor.u32 %v2422, %v2426
      %v2429 = vshll.u32 %v1978, 16
      %v2431 = vrot.slane %v2429, 1
      %v2432 = vsel %vm1867, %v2427, %v2431
      %v2434 = vshrl.u32 %v2164, 16
      %v2436 = vshll.u32 %v2164, 16
      %v2438 = vrot.slane %v2436, 1
      %v2439 = vor.u32 %v2434, %v2438
      %v2441 = vshll.u32 %v2163, 16
      %v2443 = vrot.slane %v2441, 1
      %v2444 = vsel %vm1867, %v2439, %v2443
      %v2446 = vshrl.u32 %v1803, 16
      %v2448 = vshll.u32 %v1803, 16
      %v2450 = vrot.slane %v2448, 1
      %v2451 = vor.u32 %v2446, %v2450
      %v2452 = vsel %vm1867, %v2451, %v1990
      %v2454 = vshrl.u32 %v1991, 16
      %v2456 = vshll.u32 %v1991, 16
      %v2458 = vrot.slane %v2456, 1
      %v2459 = vor.u32 %v2454, %v2458
      %v2461 = vshll.u32 %v1992, 16
      %v2463 = vrot.slane %v2461, 1
      %v2464 = vsel %vm1867, %v2459, %v2463
      %v2466 = vshrl.u32 %v2167, 16
      %v2468 = vshll.u32 %v2167, 16
      %v2470 = vrot.slane %v2468, 1
      %v2471 = vor.u32 %v2466, %v2470
      %v2473 = vshll.u32 %v2166, 16
      %v2475 = vrot.slane %v2473, 1
      %v2476 = vsel %vm1867, %v2471, %v2475
      %v2478 = vshrl.u32 %v1805, 16
      %v2480 = vshll.u32 %v1805, 16
      %v2482 = vrot.slane %v2480, 1
      %v2483 = vor.u32 %v2478, %v2482
      %v2484 = vsel %vm1867, %v2483, %v2004
      %v2486 = vshrl.u32 %v2005, 16
      %v2488 = vshll.u32 %v2005, 16
      %v2490 = vrot.slane %v2488, 1
      %v2491 = vor.u32 %v2486, %v2490
      %v2493 = vshll.u32 %v2006, 16
      %v2495 = vrot.slane %v2493, 1
      %v2496 = vsel %vm1867, %v2491, %v2495
      %v2498 = vshrl.u32 %v2170, 16
      %v2500 = vshll.u32 %v2170, 16
      %v2502 = vrot.slane %v2500, 1
      %v2503 = vor.u32 %v2498, %v2502
      %v2505 = vshll.u32 %v2169, 16
      %v2507 = vrot.slane %v2505, 1
      %v2508 = vsel %vm1867, %v2503, %v2507
      %v2510 = vshrl.u32 %v1807, 16
      %v2512 = vshll.u32 %v1807, 16
      %v2514 = vrot.slane %v2512, 1
      %v2515 = vor.u32 %v2510, %v2514
      %v2516 = vsel %vm1867, %v2515, %v2018
      %v2518 = vshrl.u32 %v2019, 16
      %v2520 = vshll.u32 %v2019, 16
      %v2522 = vrot.slane %v2520, 1
      %v2523 = vor.u32 %v2518, %v2522
      %v2525 = vshll.u32 %v2020, 16
      %v2527 = vrot.slane %v2525, 1
      %v2528 = vsel %vm1867, %v2523, %v2527
      %v2530 = vshrl.u32 %v2173, 16
      %v2532 = vshll.u32 %v2173, 16
      %v2534 = vrot.slane %v2532, 1
      %v2535 = vor.u32 %v2530, %v2534
      %v2537 = vshll.u32 %v2172, 16
      %v2539 = vrot.slane %v2537, 1
      %v2540 = vsel %vm1867, %v2535, %v2539
      %v2542 = vshrl.u32 %v1809, 16
      %v2544 = vshll.u32 %v1809, 16
      %v2546 = vrot.slane %v2544, 1
      %v2547 = vor.u32 %v2542, %v2546
      %v2548 = vsel %vm1867, %v2547, %v2032
      %v2550 = vshrl.u32 %v2033, 16
      %v2552 = vshll.u32 %v2033, 16
      %v2554 = vrot.slane %v2552, 1
      %v2555 = vor.u32 %v2550, %v2554
      %v2557 = vshll.u32 %v2034, 16
      %v2559 = vrot.slane %v2557, 1
      %v2560 = vsel %vm1867, %v2555, %v2559
      %v2562 = vshrl.u32 %v2176, 16
      %v2564 = vshll.u32 %v2176, 16
      %v2566 = vrot.slane %v2564, 1
      %v2567 = vor.u32 %v2562, %v2566
      %v2569 = vshll.u32 %v2175, 16
      %v2571 = vrot.slane %v2569, 1
      %v2572 = vsel %vm1867, %v2567, %v2571
      %v2574 = vshrl.u32 %v1811, 16
      %v2576 = vshll.u32 %v1811, 16
      %v2578 = vrot.slane %v2576, 1
      %v2579 = vor.u32 %v2574, %v2578
      %v2580 = vsel %vm1867, %v2579, %v2046
      %v2582 = vshrl.u32 %v2047, 16
      %v2584 = vshll.u32 %v2047, 16
      %v2586 = vrot.slane %v2584, 1
      %v2587 = vor.u32 %v2582, %v2586
      %v2589 = vshll.u32 %v2048, 16
      %v2591 = vrot.slane %v2589, 1
      %v2592 = vsel %vm1867, %v2587, %v2591
      %v2594 = vshrl.u32 %v2179, 16
      %v2596 = vshll.u32 %v2179, 16
      %v2598 = vrot.slane %v2596, 1
      %v2599 = vor.u32 %v2594, %v2598
      %v2601 = vshll.u32 %v2178, 16
      %v2603 = vrot.slane %v2601, 1
      %v2604 = vsel %vm1867, %v2599, %v2603
      %v2606 = vshrl.u32 %v1813, 16
      %v2608 = vshll.u32 %v1813, 16
      %v2610 = vrot.slane %v2608, 1
      %v2611 = vor.u32 %v2606, %v2610
      %v2612 = vsel %vm1867, %v2611, %v2060
      %v2614 = vshrl.u32 %v2061, 16
      %v2616 = vshll.u32 %v2061, 16
      %v2618 = vrot.slane %v2616, 1
      %v2619 = vor.u32 %v2614, %v2618
      %v2621 = vshll.u32 %v2062, 16
      %v2623 = vrot.slane %v2621, 1
      %v2624 = vsel %vm1867, %v2619, %v2623
      %v2626 = vshrl.u32 %v2182, 16
      %v2628 = vshll.u32 %v2182, 16
      %v2630 = vrot.slane %v2628, 1
      %v2631 = vor.u32 %v2626, %v2630
      %v2633 = vshll.u32 %v2181, 16
      %v2635 = vrot.slane %v2633, 1
      %v2636 = vsel %vm1867, %v2631, %v2635
      %v2638 = vshrl.u32 %v1815, 16
      %v2640 = vshll.u32 %v1815, 16
      %v2642 = vrot.slane %v2640, 1
      %v2643 = vor.u32 %v2638, %v2642
      %v2644 = vsel %vm1867, %v2643, %v2074
      %v2646 = vshrl.u32 %v2075, 16
      %v2648 = vshll.u32 %v2075, 16
      %v2650 = vrot.slane %v2648, 1
      %v2651 = vor.u32 %v2646, %v2650
      %v2653 = vshll.u32 %v2076, 16
      %v2655 = vrot.slane %v2653, 1
      %v2656 = vsel %vm1867, %v2651, %v2655
      %v2658 = vshrl.u32 %v2185, 16
      %v2660 = vshll.u32 %v2185, 16
      %v2662 = vrot.slane %v2660, 1
      %v2663 = vor.u32 %v2658, %v2662
      %v2665 = vshll.u32 %v2184, 16
      %v2667 = vrot.slane %v2665, 1
      %v2668 = vsel %vm1867, %v2663, %v2667
      %v2670 = vshrl.u32 %v1817, 16
      %v2672 = vshll.u32 %v1817, 16
      %v2674 = vrot.slane %v2672, 1
      %v2675 = vor.u32 %v2670, %v2674
      %v2676 = vsel %vm1867, %v2675, %v2088
      %v2678 = vshrl.u32 %v2089, 16
      %v2680 = vshll.u32 %v2089, 16
      %v2682 = vrot.slane %v2680, 1
      %v2683 = vor.u32 %v2678, %v2682
      %v2685 = vshll.u32 %v2090, 16
      %v2687 = vrot.slane %v2685, 1
      %v2688 = vsel %vm1867, %v2683, %v2687
      %v2690 = vshrl.u32 %v2188, 16
      %v2692 = vshll.u32 %v2188, 16
      %v2694 = vrot.slane %v2692, 1
      %v2695 = vor.u32 %v2690, %v2694
      %v2697 = vshll.u32 %v2187, 16
      %v2699 = vrot.slane %v2697, 1
      %v2700 = vsel %vm1867, %v2695, %v2699
      %v2749 = vld [vmem:[%s3] sm:$0xf]
      %v2750 = vld [vmem:[%s3 + $0x4] sm:$0xf]
      %v2751 = vld [vmem:[%s3 + $0x8] sm:$0xf]
      %v2752 = vld [vmem:[%s3 + $0xc] sm:$0xf]
      %v2753 = vld [vmem:[%s3 + $0x10] sm:$0xf]
      %v2754 = vld [vmem:[%s3 + $0x14] sm:$0xf]
      %v2755 = vld [vmem:[%s3 + $0x18] sm:$0xf]
      %v2756 = vld [vmem:[%s3 + $0x1c] sm:$0xf]
      %v2757 = vld [vmem:[%s3 + $0x20] sm:$0xf]
      %v2758 = vld [vmem:[%s3 + $0x24] sm:$0xf]
      %v2759 = vld [vmem:[%s3 + $0x28] sm:$0xf]
      %v2760 = vld [vmem:[%s3 + $0x2c] sm:$0xf]
      %v2761 = vld [vmem:[%s3 + $0x30] sm:$0xf]
      %v2762 = vld [vmem:[%s3 + $0x34] sm:$0xf]
      %v2763 = vld [vmem:[%s3 + $0x38] sm:$0xf]
      %v2764 = vld [vmem:[%s3 + $0x3c] sm:$0xf]
      %v2765 = vld [vmem:[%s3 + $0x40] sm:$0xf]
      %v2766 = vld [vmem:[%s3 + $0x44] sm:$0xf]
      %v2767 = vld [vmem:[%s3 + $0x48] sm:$0xf]
      %v2768 = vld [vmem:[%s3 + $0x4c] sm:$0xf]
      %v2769 = vld [vmem:[%s3 + $0x50] sm:$0xf]
      %v2770 = vld [vmem:[%s3 + $0x54] sm:$0xf]
      %v2771 = vld [vmem:[%s3 + $0x58] sm:$0xf]
      %v2772 = vld [vmem:[%s3 + $0x5c] sm:$0xf]
      %v2773 = vld [vmem:[%s3 + $0x60] sm:$0xf]
      %v2774 = vld [vmem:[%s3 + $0x64] sm:$0xf]
      %v2775 = vld [vmem:[%s3 + $0x68] sm:$0xf]
      %v2776 = vld [vmem:[%s3 + $0x6c] sm:$0xf]
      %v2777 = vld [vmem:[%s3 + $0x70] sm:$0xf]
      %v2778 = vld [vmem:[%s3 + $0x74] sm:$0xf]
      %v2779 = vld [vmem:[%s3 + $0x78] sm:$0xf]
      %v2780 = vld [vmem:[%s3 + $0x7c] sm:$0xf]
      %v2781 = vld [vmem:[%s3 + $0x80] sm:$0xf]
      %v2782 = vld [vmem:[%s3 + $0x84] sm:$0xf]
      %v2783 = vld [vmem:[%s3 + $0x88] sm:$0xf]
      %v2784 = vld [vmem:[%s3 + $0x8c] sm:$0xf]
      %v2785 = vld [vmem:[%s3 + $0x90] sm:$0xf]
      %v2786 = vld [vmem:[%s3 + $0x94] sm:$0xf]
      %v2787 = vld [vmem:[%s3 + $0x98] sm:$0xf]
      %v2788 = vld [vmem:[%s3 + $0x9c] sm:$0xf]
      %v2789 = vld [vmem:[%s3 + $0xa0] sm:$0xf]
      %v2790 = vld [vmem:[%s3 + $0xa4] sm:$0xf]
      %v2791 = vld [vmem:[%s3 + $0xa8] sm:$0xf]
      %v2792 = vld [vmem:[%s3 + $0xac] sm:$0xf]
      %v2793 = vld [vmem:[%s3 + $0xb0] sm:$0xf]
      %v2794 = vld [vmem:[%s3 + $0xb4] sm:$0xf]
      %v2795 = vld [vmem:[%s3 + $0xb8] sm:$0xf]
      %v2796 = vld [vmem:[%s3 + $0xbc] sm:$0xf]
      %v2797 = vld [vmem:[%s1562] sm:$0xf]
      %v2798 = vld [vmem:[%s1562 + $0x4] sm:$0xf]
      %v2799 = vld [vmem:[%s1562 + $0x8] sm:$0x1]
      %v2800 = vld [vmem:[%s1562 + $0xc] sm:$0xf]
      %v2801 = vld [vmem:[%s1562 + $0x10] sm:$0xf]
      %v2802 = vld [vmem:[%s1562 + $0x14] sm:$0x1]
      %v2803 = vld [vmem:[%s1562 + $0x18] sm:$0xf]
      %v2804 = vld [vmem:[%s1562 + $0x1c] sm:$0xf]
      %v2805 = vld [vmem:[%s1562 + $0x20] sm:$0x1]
      %v2806 = vld [vmem:[%s1562 + $0x24] sm:$0xf]
      %v2807 = vld [vmem:[%s1562 + $0x28] sm:$0xf]
      %v2808 = vld [vmem:[%s1562 + $0x2c] sm:$0x1]
      %v2809 = vld [vmem:[%s1562 + $0x30] sm:$0xf]
      %v2810 = vld [vmem:[%s1562 + $0x34] sm:$0xf]
      %v2811 = vld [vmem:[%s1562 + $0x38] sm:$0x1]
      %v2812 = vld [vmem:[%s1562 + $0x3c] sm:$0xf]
      %v2813 = vld [vmem:[%s1562 + $0x40] sm:$0xf]
      %v2814 = vld [vmem:[%s1562 + $0x44] sm:$0x1]
      %v2815 = vld [vmem:[%s1562 + $0x48] sm:$0xf]
      %v2816 = vld [vmem:[%s1562 + $0x4c] sm:$0xf]
      %v2817 = vld [vmem:[%s1562 + $0x50] sm:$0x1]
      %v2818 = vld [vmem:[%s1562 + $0x54] sm:$0xf]
      %v2819 = vld [vmem:[%s1562 + $0x58] sm:$0xf]
      %v2820 = vld [vmem:[%s1562 + $0x5c] sm:$0x1]
      %v2821 = vld [vmem:[%s1562 + $0x60] sm:$0xf]
      %v2822 = vld [vmem:[%s1562 + $0x64] sm:$0xf]
      %v2823 = vld [vmem:[%s1562 + $0x68] sm:$0x1]
      %v2824 = vld [vmem:[%s1562 + $0x6c] sm:$0xf]
      %v2825 = vld [vmem:[%s1562 + $0x70] sm:$0xf]
      %v2826 = vld [vmem:[%s1562 + $0x74] sm:$0x1]
      %v2827 = vld [vmem:[%s1562 + $0x78] sm:$0xf]
      %v2828 = vld [vmem:[%s1562 + $0x7c] sm:$0xf]
      %v2829 = vld [vmem:[%s1562 + $0x80] sm:$0x1]
      %v2830 = vld [vmem:[%s1562 + $0x84] sm:$0xf]
      %v2831 = vld [vmem:[%s1562 + $0x88] sm:$0xf]
      %v2832 = vld [vmem:[%s1562 + $0x8c] sm:$0x1]
      %v2833 = vld [vmem:[%s1562 + $0x90] sm:$0xf]
      %v2834 = vld [vmem:[%s1562 + $0x94] sm:$0xf]
      %v2835 = vld [vmem:[%s1562 + $0x98] sm:$0x1]
      %v2836 = vld [vmem:[%s1562 + $0x9c] sm:$0xf]
      %v2837 = vld [vmem:[%s1562 + $0xa0] sm:$0xf]
      %v2838 = vld [vmem:[%s1562 + $0xa4] sm:$0x1]
      %v2839 = vld [vmem:[%s1562 + $0xa8] sm:$0xf]
      %v2840 = vld [vmem:[%s1562 + $0xac] sm:$0xf]
      %v2841 = vld [vmem:[%s1562 + $0xb0] sm:$0x1]
      %v2842 = vld [vmem:[%s1562 + $0xb4] sm:$0xf]
      %v2843 = vld [vmem:[%s1562 + $0xb8] sm:$0xf]
      %v2844 = vld [vmem:[%s1562 + $0xbc] sm:$0x1]
      %v2845 = vld [vmem:[%s1562] sm:$0xe]
      %v2846 = vld [vmem:[%s1562 + $0xc] sm:$0xe]
      %v2847 = vld [vmem:[%s1562 + $0x18] sm:$0xe]
      %v2848 = vld [vmem:[%s1562 + $0x24] sm:$0xe]
      %v2849 = vld [vmem:[%s1562 + $0x30] sm:$0xe]
      %v2850 = vld [vmem:[%s1562 + $0x3c] sm:$0xe]
      %v2851 = vld [vmem:[%s1562 + $0x48] sm:$0xe]
      %v2852 = vld [vmem:[%s1562 + $0x54] sm:$0xe]
      %v2853 = vld [vmem:[%s1562 + $0x60] sm:$0xe]
      %v2854 = vld [vmem:[%s1562 + $0x6c] sm:$0xe]
      %v2855 = vld [vmem:[%s1562 + $0x78] sm:$0xe]
      %v2856 = vld [vmem:[%s1562 + $0x84] sm:$0xe]
      %v2857 = vld [vmem:[%s1562 + $0x90] sm:$0xe]
      %v2858 = vld [vmem:[%s1562 + $0x9c] sm:$0xe]
      %v2859 = vld [vmem:[%s1562 + $0xa8] sm:$0xe]
      %v2860 = vld [vmem:[%s1562 + $0xb4] sm:$0xe]
      %v2861 = vld [vmem:[%s1562 + $0x8] sm:$0x3]
      %v2862 = vld [vmem:[%s1562 + $0x14] sm:$0x3]
      %v2863 = vld [vmem:[%s1562 + $0x20] sm:$0x3]
      %v2864 = vld [vmem:[%s1562 + $0x2c] sm:$0x3]
      %v2865 = vld [vmem:[%s1562 + $0x38] sm:$0x3]
      %v2866 = vld [vmem:[%s1562 + $0x44] sm:$0x3]
      %v2867 = vld [vmem:[%s1562 + $0x50] sm:$0x3]
      %v2868 = vld [vmem:[%s1562 + $0x5c] sm:$0x3]
      %v2869 = vld [vmem:[%s1562 + $0x68] sm:$0x3]
      %v2870 = vld [vmem:[%s1562 + $0x74] sm:$0x3]
      %v2871 = vld [vmem:[%s1562 + $0x80] sm:$0x3]
      %v2872 = vld [vmem:[%s1562 + $0x8c] sm:$0x3]
      %v2873 = vld [vmem:[%s1562 + $0x98] sm:$0x3]
      %v2874 = vld [vmem:[%s1562 + $0xa4] sm:$0x3]
      %v2875 = vld [vmem:[%s1562 + $0xb0] sm:$0x3]
      %v2876 = vld [vmem:[%s1562 + $0xbc] sm:$0x3]
      %v2925 = vunpack.c.l.b16 %v2797
      %v2926 = vunpack.c.l.b16 %v2798
      %v2927 = vunpack.c.l.b16 %v2799
      %v2928 = vunpack.c.l.b16 %v2800
      %v2929 = vunpack.c.l.b16 %v2801
      %v2930 = vunpack.c.l.b16 %v2802
      %v2931 = vunpack.c.l.b16 %v2803
      %v2932 = vunpack.c.l.b16 %v2804
      %v2933 = vunpack.c.l.b16 %v2805
      %v2934 = vunpack.c.l.b16 %v2806
      %v2935 = vunpack.c.l.b16 %v2807
      %v2936 = vunpack.c.l.b16 %v2808
      %v2937 = vunpack.c.l.b16 %v2809
      %v2938 = vunpack.c.l.b16 %v2810
      %v2939 = vunpack.c.l.b16 %v2811
      %v2940 = vunpack.c.l.b16 %v2812
      %v2941 = vunpack.c.l.b16 %v2813
      %v2942 = vunpack.c.l.b16 %v2814
      %v2943 = vunpack.c.l.b16 %v2815
      %v2944 = vunpack.c.l.b16 %v2816
      %v2945 = vunpack.c.l.b16 %v2817
      %v2946 = vunpack.c.l.b16 %v2818
      %v2947 = vunpack.c.l.b16 %v2819
      %v2948 = vunpack.c.l.b16 %v2820
      %v2949 = vunpack.c.l.b16 %v2821
      %v2950 = vunpack.c.l.b16 %v2822
      %v2951 = vunpack.c.l.b16 %v2823
      %v2952 = vunpack.c.l.b16 %v2824
      %v2953 = vunpack.c.l.b16 %v2825
      %v2954 = vunpack.c.l.b16 %v2826
      %v2955 = vunpack.c.l.b16 %v2827
      %v2956 = vunpack.c.l.b16 %v2828
      %v2957 = vunpack.c.l.b16 %v2829
      %v2958 = vunpack.c.l.b16 %v2830
      %v2959 = vunpack.c.l.b16 %v2831
      %v2960 = vunpack.c.l.b16 %v2832
      %v2961 = vunpack.c.l.b16 %v2833
      %v2962 = vunpack.c.l.b16 %v2834
      %v2963 = vunpack.c.l.b16 %v2835
      %v2964 = vunpack.c.l.b16 %v2836
      %v2965 = vunpack.c.l.b16 %v2837
      %v2966 = vunpack.c.l.b16 %v2838
      %v2967 = vunpack.c.l.b16 %v2839
      %v2968 = vunpack.c.l.b16 %v2840
      %v2969 = vunpack.c.l.b16 %v2841
      %v2970 = vunpack.c.l.b16 %v2842
      %v2971 = vunpack.c.l.b16 %v2843
      %v2972 = vunpack.c.l.b16 %v2844
      %v2973 = vpack.c.b16 %v2926, %v2925
      %v2974 = vpack.c.b16 %v2927, %v2927
      %v2975 = vpack.c.b16 %v2929, %v2928
      %v2976 = vpack.c.b16 %v2930, %v2930
      %v2977 = vpack.c.b16 %v2932, %v2931
      %v2978 = vpack.c.b16 %v2933, %v2933
      %v2979 = vpack.c.b16 %v2935, %v2934
      %v2980 = vpack.c.b16 %v2936, %v2936
      %v2981 = vpack.c.b16 %v2938, %v2937
      %v2982 = vpack.c.b16 %v2939, %v2939
      %v2983 = vpack.c.b16 %v2941, %v2940
      %v2984 = vpack.c.b16 %v2942, %v2942
      %v2985 = vpack.c.b16 %v2944, %v2943
      %v2986 = vpack.c.b16 %v2945, %v2945
      %v2987 = vpack.c.b16 %v2947, %v2946
      %v2988 = vpack.c.b16 %v2948, %v2948
      %v2989 = vpack.c.b16 %v2950, %v2949
      %v2990 = vpack.c.b16 %v2951, %v2951
      %v2991 = vpack.c.b16 %v2953, %v2952
      %v2992 = vpack.c.b16 %v2954, %v2954
      %v2993 = vpack.c.b16 %v2956, %v2955
      %v2994 = vpack.c.b16 %v2957, %v2957
      %v2995 = vpack.c.b16 %v2959, %v2958
      %v2996 = vpack.c.b16 %v2960, %v2960
      %v2997 = vpack.c.b16 %v2962, %v2961
      %v2998 = vpack.c.b16 %v2963, %v2963
      %v2999 = vpack.c.b16 %v2965, %v2964
      %v3000 = vpack.c.b16 %v2966, %v2966
      %v3001 = vpack.c.b16 %v2968, %v2967
      %v3002 = vpack.c.b16 %v2969, %v2969
      %v3003 = vpack.c.b16 %v2971, %v2970
      %v3004 = vpack.c.b16 %v2972, %v2972
      %v3021 = vunpack.c.l.b16 %v2845
      %v3022 = vunpack.c.l.b16 %v2846
      %v3023 = vunpack.c.l.b16 %v2847
      %v3024 = vunpack.c.l.b16 %v2848
      %v3025 = vunpack.c.l.b16 %v2849
      %v3026 = vunpack.c.l.b16 %v2850
      %v3027 = vunpack.c.l.b16 %v2851
      %v3028 = vunpack.c.l.b16 %v2852
      %v3029 = vunpack.c.l.b16 %v2853
      %v3030 = vunpack.c.l.b16 %v2854
      %v3031 = vunpack.c.l.b16 %v2855
      %v3032 = vunpack.c.l.b16 %v2856
      %v3033 = vunpack.c.l.b16 %v2857
      %v3034 = vunpack.c.l.b16 %v2858
      %v3035 = vunpack.c.l.b16 %v2859
      %v3036 = vunpack.c.l.b16 %v2860
      %v3037 = vpack.c.b16 %v2926, %v3021
      %v3038 = vpack.c.b16 %v2929, %v3022
      %v3039 = vpack.c.b16 %v2932, %v3023
      %v3040 = vpack.c.b16 %v2935, %v3024
      %v3041 = vpack.c.b16 %v2938, %v3025
      %v3042 = vpack.c.b16 %v2941, %v3026
      %v3043 = vpack.c.b16 %v2944, %v3027
      %v3044 = vpack.c.b16 %v2947, %v3028
      %v3045 = vpack.c.b16 %v2950, %v3029
      %v3046 = vpack.c.b16 %v2953, %v3030
      %v3047 = vpack.c.b16 %v2956, %v3031
      %v3048 = vpack.c.b16 %v2959, %v3032
      %v3049 = vpack.c.b16 %v2962, %v3033
      %v3050 = vpack.c.b16 %v2965, %v3034
      %v3051 = vpack.c.b16 %v2968, %v3035
      %v3052 = vpack.c.b16 %v2971, %v3036
      %v3054 = vshrl.u32 %v3037, 16
      %v3056 = vshll.u32 %v3037, 16
      %v3058 = vrot.slane %v3056, 1
      %v3059 = vor.u32 %v3054, %v3058
      %v3061 = vshll.u32 %v2974, 16
      %v3063 = vrot.slane %v3061, 1
      %v3064 = vsel %vm1867, %v3059, %v3063
      %v3065 = vshrl.u32 %v2974, 16
      %v3068 = vshrl.u32 %v3038, 16
      %v3070 = vshll.u32 %v3038, 16
      %v3072 = vrot.slane %v3070, 1
      %v3073 = vor.u32 %v3068, %v3072
      %v3075 = vshll.u32 %v2976, 16
      %v3077 = vrot.slane %v3075, 1
      %v3078 = vsel %vm1867, %v3073, %v3077
      %v3079 = vshrl.u32 %v2976, 16
      %v3082 = vshrl.u32 %v3039, 16
      %v3084 = vshll.u32 %v3039, 16
      %v3086 = vrot.slane %v3084, 1
      %v3087 = vor.u32 %v3082, %v3086
      %v3089 = vshll.u32 %v2978, 16
      %v3091 = vrot.slane %v3089, 1
      %v3092 = vsel %vm1867, %v3087, %v3091
      %v3093 = vshrl.u32 %v2978, 16
      %v3096 = vshrl.u32 %v3040, 16
      %v3098 = vshll.u32 %v3040, 16
      %v3100 = vrot.slane %v3098, 1
      %v3101 = vor.u32 %v3096, %v3100
      %v3103 = vshll.u32 %v2980, 16
      %v3105 = vrot.slane %v3103, 1
      %v3106 = vsel %vm1867, %v3101, %v3105
      %v3107 = vshrl.u32 %v2980, 16
      %v3110 = vshrl.u32 %v3041, 16
      %v3112 = vshll.u32 %v3041, 16
      %v3114 = vrot.slane %v3112, 1
      %v3115 = vor.u32 %v3110, %v3114
      %v3117 = vshll.u32 %v2982, 16
      %v3119 = vrot.slane %v3117, 1
      %v3120 = vsel %vm1867, %v3115, %v3119
      %v3121 = vshrl.u32 %v2982, 16
      %v3124 = vshrl.u32 %v3042, 16
      %v3126 = vshll.u32 %v3042, 16
      %v3128 = vrot.slane %v3126, 1
      %v3129 = vor.u32 %v3124, %v3128
      %v3131 = vshll.u32 %v2984, 16
      %v3133 = vrot.slane %v3131, 1
      %v3134 = vsel %vm1867, %v3129, %v3133
      %v3135 = vshrl.u32 %v2984, 16
      %v3138 = vshrl.u32 %v3043, 16
      %v3140 = vshll.u32 %v3043, 16
      %v3142 = vrot.slane %v3140, 1
      %v3143 = vor.u32 %v3138, %v3142
      %v3145 = vshll.u32 %v2986, 16
      %v3147 = vrot.slane %v3145, 1
      %v3148 = vsel %vm1867, %v3143, %v3147
      %v3149 = vshrl.u32 %v2986, 16
      %v3152 = vshrl.u32 %v3044, 16
      %v3154 = vshll.u32 %v3044, 16
      %v3156 = vrot.slane %v3154, 1
      %v3157 = vor.u32 %v3152, %v3156
      %v3159 = vshll.u32 %v2988, 16
      %v3161 = vrot.slane %v3159, 1
      %v3162 = vsel %vm1867, %v3157, %v3161
      %v3163 = vshrl.u32 %v2988, 16
      %v3166 = vshrl.u32 %v3045, 16
      %v3168 = vshll.u32 %v3045, 16
      %v3170 = vrot.slane %v3168, 1
      %v3171 = vor.u32 %v3166, %v3170
      %v3173 = vshll.u32 %v2990, 16
      %v3175 = vrot.slane %v3173, 1
      %v3176 = vsel %vm1867, %v3171, %v3175
      %v3177 = vshrl.u32 %v2990, 16
      %v3180 = vshrl.u32 %v3046, 16
      %v3182 = vshll.u32 %v3046, 16
      %v3184 = vrot.slane %v3182, 1
      %v3185 = vor.u32 %v3180, %v3184
      %v3187 = vshll.u32 %v2992, 16
      %v3189 = vrot.slane %v3187, 1
      %v3190 = vsel %vm1867, %v3185, %v3189
      %v3191 = vshrl.u32 %v2992, 16
      %v3194 = vshrl.u32 %v3047, 16
      %v3196 = vshll.u32 %v3047, 16
      %v3198 = vrot.slane %v3196, 1
      %v3199 = vor.u32 %v3194, %v3198
      %v3201 = vshll.u32 %v2994, 16
      %v3203 = vrot.slane %v3201, 1
      %v3204 = vsel %vm1867, %v3199, %v3203
      %v3205 = vshrl.u32 %v2994, 16
      %v3208 = vshrl.u32 %v3048, 16
      %v3210 = vshll.u32 %v3048, 16
      %v3212 = vrot.slane %v3210, 1
      %v3213 = vor.u32 %v3208, %v3212
      %v3215 = vshll.u32 %v2996, 16
      %v3217 = vrot.slane %v3215, 1
      %v3218 = vsel %vm1867, %v3213, %v3217
      %v3219 = vshrl.u32 %v2996, 16
      %v3222 = vshrl.u32 %v3049, 16
      %v3224 = vshll.u32 %v3049, 16
      %v3226 = vrot.slane %v3224, 1
      %v3227 = vor.u32 %v3222, %v3226
      %v3229 = vshll.u32 %v2998, 16
      %v3231 = vrot.slane %v3229, 1
      %v3232 = vsel %vm1867, %v3227, %v3231
      %v3233 = vshrl.u32 %v2998, 16
      %v3236 = vshrl.u32 %v3050, 16
      %v3238 = vshll.u32 %v3050, 16
      %v3240 = vrot.slane %v3238, 1
      %v3241 = vor.u32 %v3236, %v3240
      %v3243 = vshll.u32 %v3000, 16
      %v3245 = vrot.slane %v3243, 1
      %v3246 = vsel %vm1867, %v3241, %v3245
      %v3247 = vshrl.u32 %v3000, 16
      %v3250 = vshrl.u32 %v3051, 16
      %v3252 = vshll.u32 %v3051, 16
      %v3254 = vrot.slane %v3252, 1
      %v3255 = vor.u32 %v3250, %v3254
      %v3257 = vshll.u32 %v3002, 16
      %v3259 = vrot.slane %v3257, 1
      %v3260 = vsel %vm1867, %v3255, %v3259
      %v3261 = vshrl.u32 %v3002, 16
      %v3264 = vshrl.u32 %v3052, 16
      %v3266 = vshll.u32 %v3052, 16
      %v3268 = vrot.slane %v3266, 1
      %v3269 = vor.u32 %v3264, %v3268
      %v3271 = vshll.u32 %v3004, 16
      %v3273 = vrot.slane %v3271, 1
      %v3274 = vsel %vm1867, %v3269, %v3273
      %v3275 = vshrl.u32 %v3004, 16
      %v3293 = vunpack.c.l.b16 %v2861
      %v3294 = vunpack.c.l.b16 %v2862
      %v3295 = vunpack.c.l.b16 %v2863
      %v3296 = vunpack.c.l.b16 %v2864
      %v3297 = vunpack.c.l.b16 %v2865
      %v3298 = vunpack.c.l.b16 %v2866
      %v3299 = vunpack.c.l.b16 %v2867
      %v3300 = vunpack.c.l.b16 %v2868
      %v3301 = vunpack.c.l.b16 %v2869
      %v3302 = vunpack.c.l.b16 %v2870
      %v3303 = vunpack.c.l.b16 %v2871
      %v3304 = vunpack.c.l.b16 %v2872
      %v3305 = vunpack.c.l.b16 %v2873
      %v3306 = vunpack.c.l.b16 %v2874
      %v3307 = vunpack.c.l.b16 %v2875
      %v3308 = vunpack.c.l.b16 %v2876
      %v3309 = vpack.c.b16 %v3293, %v3293
      %v3310 = vpack.c.b16 %v3294, %v3294
      %v3311 = vpack.c.b16 %v3295, %v3295
      %v3312 = vpack.c.b16 %v3296, %v3296
      %v3313 = vpack.c.b16 %v3297, %v3297
      %v3314 = vpack.c.b16 %v3298, %v3298
      %v3315 = vpack.c.b16 %v3299, %v3299
      %v3316 = vpack.c.b16 %v3300, %v3300
      %v3317 = vpack.c.b16 %v3301, %v3301
      %v3318 = vpack.c.b16 %v3302, %v3302
      %v3319 = vpack.c.b16 %v3303, %v3303
      %v3320 = vpack.c.b16 %v3304, %v3304
      %v3321 = vpack.c.b16 %v3305, %v3305
      %v3322 = vpack.c.b16 %v3306, %v3306
      %v3323 = vpack.c.b16 %v3307, %v3307
      %v3324 = vpack.c.b16 %v3308, %v3308
      %v3325 = vrot.slane %v3037, 1
      %v3326 = vrot.slane %v3309, 1
      %v3327 = vsel %vm2140, %v3325, %v3326
      %v3328 = vrot.slane %v3038, 1
      %v3329 = vrot.slane %v3310, 1
      %v3330 = vsel %vm2140, %v3328, %v3329
      %v3331 = vrot.slane %v3039, 1
      %v3332 = vrot.slane %v3311, 1
      %v3333 = vsel %vm2140, %v3331, %v3332
      %v3334 = vrot.slane %v3040, 1
      %v3335 = vrot.slane %v3312, 1
      %v3336 = vsel %vm2140, %v3334, %v3335
      %v3337 = vrot.slane %v3041, 1
      %v3338 = vrot.slane %v3313, 1
      %v3339 = vsel %vm2140, %v3337, %v3338
      %v3340 = vrot.slane %v3042, 1
      %v3341 = vrot.slane %v3314, 1
      %v3342 = vsel %vm2140, %v3340, %v3341
      %v3343 = vrot.slane %v3043, 1
      %v3344 = vrot.slane %v3315, 1
      %v3345 = vsel %vm2140, %v3343, %v3344
      %v3346 = vrot.slane %v3044, 1
      %v3347 = vrot.slane %v3316, 1
      %v3348 = vsel %vm2140, %v3346, %v3347
      %v3349 = vrot.slane %v3045, 1
      %v3350 = vrot.slane %v3317, 1
      %v3351 = vsel %vm2140, %v3349, %v3350
      %v3352 = vrot.slane %v3046, 1
      %v3353 = vrot.slane %v3318, 1
      %v3354 = vsel %vm2140, %v3352, %v3353
      %v3355 = vrot.slane %v3047, 1
      %v3356 = vrot.slane %v3319, 1
      %v3357 = vsel %vm2140, %v3355, %v3356
      %v3358 = vrot.slane %v3048, 1
      %v3359 = vrot.slane %v3320, 1
      %v3360 = vsel %vm2140, %v3358, %v3359
      %v3361 = vrot.slane %v3049, 1
      %v3362 = vrot.slane %v3321, 1
      %v3363 = vsel %vm2140, %v3361, %v3362
      %v3364 = vrot.slane %v3050, 1
      %v3365 = vrot.slane %v3322, 1
      %v3366 = vsel %vm2140, %v3364, %v3365
      %v3367 = vrot.slane %v3051, 1
      %v3368 = vrot.slane %v3323, 1
      %v3369 = vsel %vm2140, %v3367, %v3368
      %v3370 = vrot.slane %v3052, 1
      %v3371 = vrot.slane %v3324, 1
      %v3372 = vsel %vm2140, %v3370, %v3371
      %v3374 = vshrl.u32 %v2973, 16
      %v3376 = vshll.u32 %v2973, 16
      %v3378 = vrot.slane %v3376, 1
      %v3379 = vor.u32 %v3374, %v3378
      %v3380 = vsel %vm1867, %v3379, %v3063
      %v3382 = vshrl.u32 %v3064, 16
      %v3384 = vshll.u32 %v3064, 16
      %v3386 = vrot.slane %v3384, 1
      %v3387 = vor.u32 %v3382, %v3386
      %v3389 = vshll.u32 %v3065, 16
      %v3391 = vrot.slane %v3389, 1
      %v3392 = vsel %vm1867, %v3387, %v3391
      %v3394 = vshrl.u32 %v3327, 16
      %v3396 = vshll.u32 %v3327, 16
      %v3398 = vrot.slane %v3396, 1
      %v3399 = vor.u32 %v3394, %v3398
      %v3401 = vshll.u32 %v3326, 16
      %v3403 = vrot.slane %v3401, 1
      %v3404 = vsel %vm1867, %v3399, %v3403
      %v3406 = vshrl.u32 %v2975, 16
      %v3408 = vshll.u32 %v2975, 16
      %v3410 = vrot.slane %v3408, 1
      %v3411 = vor.u32 %v3406, %v3410
      %v3412 = vsel %vm1867, %v3411, %v3077
      %v3414 = vshrl.u32 %v3078, 16
      %v3416 = vshll.u32 %v3078, 16
      %v3418 = vrot.slane %v3416, 1
      %v3419 = vor.u32 %v3414, %v3418
      %v3421 = vshll.u32 %v3079, 16
      %v3423 = vrot.slane %v3421, 1
      %v3424 = vsel %vm1867, %v3419, %v3423
      %v3426 = vshrl.u32 %v3330, 16
      %v3428 = vshll.u32 %v3330, 16
      %v3430 = vrot.slane %v3428, 1
      %v3431 = vor.u32 %v3426, %v3430
      %v3433 = vshll.u32 %v3329, 16
      %v3435 = vrot.slane %v3433, 1
      %v3436 = vsel %vm1867, %v3431, %v3435
      %v3438 = vshrl.u32 %v2977, 16
      %v3440 = vshll.u32 %v2977, 16
      %v3442 = vrot.slane %v3440, 1
      %v3443 = vor.u32 %v3438, %v3442
      %v3444 = vsel %vm1867, %v3443, %v3091
      %v3446 = vshrl.u32 %v3092, 16
      %v3448 = vshll.u32 %v3092, 16
      %v3450 = vrot.slane %v3448, 1
      %v3451 = vor.u32 %v3446, %v3450
      %v3453 = vshll.u32 %v3093, 16
      %v3455 = vrot.slane %v3453, 1
      %v3456 = vsel %vm1867, %v3451, %v3455
      %v3458 = vshrl.u32 %v3333, 16
      %v3460 = vshll.u32 %v3333, 16
      %v3462 = vrot.slane %v3460, 1
      %v3463 = vor.u32 %v3458, %v3462
      %v3465 = vshll.u32 %v3332, 16
      %v3467 = vrot.slane %v3465, 1
      %v3468 = vsel %vm1867, %v3463, %v3467
      %v3470 = vshrl.u32 %v2979, 16
      %v3472 = vshll.u32 %v2979, 16
      %v3474 = vrot.slane %v3472, 1
      %v3475 = vor.u32 %v3470, %v3474
      %v3476 = vsel %vm1867, %v3475, %v3105
      %v3478 = vshrl.u32 %v3106, 16
      %v3480 = vshll.u32 %v3106, 16
      %v3482 = vrot.slane %v3480, 1
      %v3483 = vor.u32 %v3478, %v3482
      %v3485 = vshll.u32 %v3107, 16
      %v3487 = vrot.slane %v3485, 1
      %v3488 = vsel %vm1867, %v3483, %v3487
      %v3490 = vshrl.u32 %v3336, 16
      %v3492 = vshll.u32 %v3336, 16
      %v3494 = vrot.slane %v3492, 1
      %v3495 = vor.u32 %v3490, %v3494
      %v3497 = vshll.u32 %v3335, 16
      %v3499 = vrot.slane %v3497, 1
      %v3500 = vsel %vm1867, %v3495, %v3499
      %v3502 = vshrl.u32 %v2981, 16
      %v3504 = vshll.u32 %v2981, 16
      %v3506 = vrot.slane %v3504, 1
      %v3507 = vor.u32 %v3502, %v3506
      %v3508 = vsel %vm1867, %v3507, %v3119
      %v3510 = vshrl.u32 %v3120, 16
      %v3512 = vshll.u32 %v3120, 16
      %v3514 = vrot.slane %v3512, 1
      %v3515 = vor.u32 %v3510, %v3514
      %v3517 = vshll.u32 %v3121, 16
      %v3519 = vrot.slane %v3517, 1
      %v3520 = vsel %vm1867, %v3515, %v3519
      %v3522 = vshrl.u32 %v3339, 16
      %v3524 = vshll.u32 %v3339, 16
      %v3526 = vrot.slane %v3524, 1
      %v3527 = vor.u32 %v3522, %v3526
      %v3529 = vshll.u32 %v3338, 16
      %v3531 = vrot.slane %v3529, 1
      %v3532 = vsel %vm1867, %v3527, %v3531
      %v3534 = vshrl.u32 %v2983, 16
      %v3536 = vshll.u32 %v2983, 16
      %v3538 = vrot.slane %v3536, 1
      %v3539 = vor.u32 %v3534, %v3538
      %v3540 = vsel %vm1867, %v3539, %v3133
      %v3542 = vshrl.u32 %v3134, 16
      %v3544 = vshll.u32 %v3134, 16
      %v3546 = vrot.slane %v3544, 1
      %v3547 = vor.u32 %v3542, %v3546
      %v3549 = vshll.u32 %v3135, 16
      %v3551 = vrot.slane %v3549, 1
      %v3552 = vsel %vm1867, %v3547, %v3551
      %v3554 = vshrl.u32 %v3342, 16
      %v3556 = vshll.u32 %v3342, 16
      %v3558 = vrot.slane %v3556, 1
      %v3559 = vor.u32 %v3554, %v3558
      %v3561 = vshll.u32 %v3341, 16
      %v3563 = vrot.slane %v3561, 1
      %v3564 = vsel %vm1867, %v3559, %v3563
      %v3566 = vshrl.u32 %v2985, 16
      %v3568 = vshll.u32 %v2985, 16
      %v3570 = vrot.slane %v3568, 1
      %v3571 = vor.u32 %v3566, %v3570
      %v3572 = vsel %vm1867, %v3571, %v3147
      %v3574 = vshrl.u32 %v3148, 16
      %v3576 = vshll.u32 %v3148, 16
      %v3578 = vrot.slane %v3576, 1
      %v3579 = vor.u32 %v3574, %v3578
      %v3581 = vshll.u32 %v3149, 16
      %v3583 = vrot.slane %v3581, 1
      %v3584 = vsel %vm1867, %v3579, %v3583
      %v3586 = vshrl.u32 %v3345, 16
      %v3588 = vshll.u32 %v3345, 16
      %v3590 = vrot.slane %v3588, 1
      %v3591 = vor.u32 %v3586, %v3590
      %v3593 = vshll.u32 %v3344, 16
      %v3595 = vrot.slane %v3593, 1
      %v3596 = vsel %vm1867, %v3591, %v3595
      %v3598 = vshrl.u32 %v2987, 16
      %v3600 = vshll.u32 %v2987, 16
      %v3602 = vrot.slane %v3600, 1
      %v3603 = vor.u32 %v3598, %v3602
      %v3604 = vsel %vm1867, %v3603, %v3161
      %v3606 = vshrl.u32 %v3162, 16
      %v3608 = vshll.u32 %v3162, 16
      %v3610 = vrot.slane %v3608, 1
      %v3611 = vor.u32 %v3606, %v3610
      %v3613 = vshll.u32 %v3163, 16
      %v3615 = vrot.slane %v3613, 1
      %v3616 = vsel %vm1867, %v3611, %v3615
      %v3618 = vshrl.u32 %v3348, 16
      %v3620 = vshll.u32 %v3348, 16
      %v3622 = vrot.slane %v3620, 1
      %v3623 = vor.u32 %v3618, %v3622
      %v3625 = vshll.u32 %v3347, 16
      %v3627 = vrot.slane %v3625, 1
      %v3628 = vsel %vm1867, %v3623, %v3627
      %v3630 = vshrl.u32 %v2989, 16
      %v3632 = vshll.u32 %v2989, 16
      %v3634 = vrot.slane %v3632, 1
      %v3635 = vor.u32 %v3630, %v3634
      %v3636 = vsel %vm1867, %v3635, %v3175
      %v3638 = vshrl.u32 %v3176, 16
      %v3640 = vshll.u32 %v3176, 16
      %v3642 = vrot.slane %v3640, 1
      %v3643 = vor.u32 %v3638, %v3642
      %v3645 = vshll.u32 %v3177, 16
      %v3647 = vrot.slane %v3645, 1
      %v3648 = vsel %vm1867, %v3643, %v3647
      %v3650 = vshrl.u32 %v3351, 16
      %v3652 = vshll.u32 %v3351, 16
      %v3654 = vrot.slane %v3652, 1
      %v3655 = vor.u32 %v3650, %v3654
      %v3657 = vshll.u32 %v3350, 16
      %v3659 = vrot.slane %v3657, 1
      %v3660 = vsel %vm1867, %v3655, %v3659
      %v3662 = vshrl.u32 %v2991, 16
      %v3664 = vshll.u32 %v2991, 16
      %v3666 = vrot.slane %v3664, 1
      %v3667 = vor.u32 %v3662, %v3666
      %v3668 = vsel %vm1867, %v3667, %v3189
      %v3670 = vshrl.u32 %v3190, 16
      %v3672 = vshll.u32 %v3190, 16
      %v3674 = vrot.slane %v3672, 1
      %v3675 = vor.u32 %v3670, %v3674
      %v3677 = vshll.u32 %v3191, 16
      %v3679 = vrot.slane %v3677, 1
      %v3680 = vsel %vm1867, %v3675, %v3679
      %v3682 = vshrl.u32 %v3354, 16
      %v3684 = vshll.u32 %v3354, 16
      %v3686 = vrot.slane %v3684, 1
      %v3687 = vor.u32 %v3682, %v3686
      %v3689 = vshll.u32 %v3353, 16
      %v3691 = vrot.slane %v3689, 1
      %v3692 = vsel %vm1867, %v3687, %v3691
      %v3694 = vshrl.u32 %v2993, 16
      %v3696 = vshll.u32 %v2993, 16
      %v3698 = vrot.slane %v3696, 1
      %v3699 = vor.u32 %v3694, %v3698
      %v3700 = vsel %vm1867, %v3699, %v3203
      %v3702 = vshrl.u32 %v3204, 16
      %v3704 = vshll.u32 %v3204, 16
      %v3706 = vrot.slane %v3704, 1
      %v3707 = vor.u32 %v3702, %v3706
      %v3709 = vshll.u32 %v3205, 16
      %v3711 = vrot.slane %v3709, 1
      %v3712 = vsel %vm1867, %v3707, %v3711
      %v3714 = vshrl.u32 %v3357, 16
      %v3716 = vshll.u32 %v3357, 16
      %v3718 = vrot.slane %v3716, 1
      %v3719 = vor.u32 %v3714, %v3718
      %v3721 = vshll.u32 %v3356, 16
      %v3723 = vrot.slane %v3721, 1
      %v3724 = vsel %vm1867, %v3719, %v3723
      %v3726 = vshrl.u32 %v2995, 16
      %v3728 = vshll.u32 %v2995, 16
      %v3730 = vrot.slane %v3728, 1
      %v3731 = vor.u32 %v3726, %v3730
      %v3732 = vsel %vm1867, %v3731, %v3217
      %v3734 = vshrl.u32 %v3218, 16
      %v3736 = vshll.u32 %v3218, 16
      %v3738 = vrot.slane %v3736, 1
      %v3739 = vor.u32 %v3734, %v3738
      %v3741 = vshll.u32 %v3219, 16
      %v3743 = vrot.slane %v3741, 1
      %v3744 = vsel %vm1867, %v3739, %v3743
      %v3746 = vshrl.u32 %v3360, 16
      %v3748 = vshll.u32 %v3360, 16
      %v3750 = vrot.slane %v3748, 1
      %v3751 = vor.u32 %v3746, %v3750
      %v3753 = vshll.u32 %v3359, 16
      %v3755 = vrot.slane %v3753, 1
      %v3756 = vsel %vm1867, %v3751, %v3755
      %v3758 = vshrl.u32 %v2997, 16
      %v3760 = vshll.u32 %v2997, 16
      %v3762 = vrot.slane %v3760, 1
      %v3763 = vor.u32 %v3758, %v3762
      %v3764 = vsel %vm1867, %v3763, %v3231
      %v3766 = vshrl.u32 %v3232, 16
      %v3768 = vshll.u32 %v3232, 16
      %v3770 = vrot.slane %v3768, 1
      %v3771 = vor.u32 %v3766, %v3770
      %v3773 = vshll.u32 %v3233, 16
      %v3775 = vrot.slane %v3773, 1
      %v3776 = vsel %vm1867, %v3771, %v3775
      %v3778 = vshrl.u32 %v3363, 16
      %v3780 = vshll.u32 %v3363, 16
      %v3782 = vrot.slane %v3780, 1
      %v3783 = vor.u32 %v3778, %v3782
      %v3785 = vshll.u32 %v3362, 16
      %v3787 = vrot.slane %v3785, 1
      %v3788 = vsel %vm1867, %v3783, %v3787
      %v3790 = vshrl.u32 %v2999, 16
      %v3792 = vshll.u32 %v2999, 16
      %v3794 = vrot.slane %v3792, 1
      %v3795 = vor.u32 %v3790, %v3794
      %v3796 = vsel %vm1867, %v3795, %v3245
      %v3798 = vshrl.u32 %v3246, 16
      %v3800 = vshll.u32 %v3246, 16
      %v3802 = vrot.slane %v3800, 1
      %v3803 = vor.u32 %v3798, %v3802
      %v3805 = vshll.u32 %v3247, 16
      %v3807 = vrot.slane %v3805, 1
      %v3808 = vsel %vm1867, %v3803, %v3807
      %v3810 = vshrl.u32 %v3366, 16
      %v3812 = vshll.u32 %v3366, 16
      %v3814 = vrot.slane %v3812, 1
      %v3815 = vor.u32 %v3810, %v3814
      %v3817 = vshll.u32 %v3365, 16
      %v3819 = vrot.slane %v3817, 1
      %v3820 = vsel %vm1867, %v3815, %v3819
      %v3822 = vshrl.u32 %v3001, 16
      %v3824 = vshll.u32 %v3001, 16
      %v3826 = vrot.slane %v3824, 1
      %v3827 = vor.u32 %v3822, %v3826
      %v3828 = vsel %vm1867, %v3827, %v3259
      %v3830 = vshrl.u32 %v3260, 16
      %v3832 = vshll.u32 %v3260, 16
      %v3834 = vrot.slane %v3832, 1
      %v3835 = vor.u32 %v3830, %v3834
      %v3837 = vshll.u32 %v3261, 16
      %v3839 = vrot.slane %v3837, 1
      %v3840 = vsel %vm1867, %v3835, %v3839
      %v3842 = vshrl.u32 %v3369, 16
      %v3844 = vshll.u32 %v3369, 16
      %v3846 = vrot.slane %v3844, 1
      %v3847 = vor.u32 %v3842, %v3846
      %v3849 = vshll.u32 %v3368, 16
      %v3851 = vrot.slane %v3849, 1
      %v3852 = vsel %vm1867, %v3847, %v3851
      %v3854 = vshrl.u32 %v3003, 16
      %v3856 = vshll.u32 %v3003, 16
      %v3858 = vrot.slane %v3856, 1
      %v3859 = vor.u32 %v3854, %v3858
      %v3860 = vsel %vm1867, %v3859, %v3273
      %v3862 = vshrl.u32 %v3274, 16
      %v3864 = vshll.u32 %v3274, 16
      %v3866 = vrot.slane %v3864, 1
      %v3867 = vor.u32 %v3862, %v3866
      %v3869 = vshll.u32 %v3275, 16
      %v3871 = vrot.slane %v3869, 1
      %v3872 = vsel %vm1867, %v3867, %v3871
      %v3874 = vshrl.u32 %v3372, 16
      %v3876 = vshll.u32 %v3372, 16
      %v3878 = vrot.slane %v3876, 1
      %v3879 = vor.u32 %v3874, %v3878
      %v3881 = vshll.u32 %v3371, 16
      %v3883 = vrot.slane %v3881, 1
      %v3884 = vsel %vm1867, %v3879, %v3883
      %s3933 = scalar_lea.vmem %s3, 192
      %v3934 = vld [vmem:[%s3933] sm:$0xf]
      %v3935 = vld [vmem:[%s3933 + $0x4] sm:$0xf]
      %v3936 = vld [vmem:[%s3933 + $0x8] sm:$0xf]
      %v3937 = vld [vmem:[%s3933 + $0xc] sm:$0xf]
      %v3938 = vld [vmem:[%s3933 + $0x10] sm:$0xf]
      %v3939 = vld [vmem:[%s3933 + $0x14] sm:$0xf]
      %v3940 = vld [vmem:[%s3933 + $0x18] sm:$0xf]
      %v3941 = vld [vmem:[%s3933 + $0x1c] sm:$0xf]
      %v3942 = vld [vmem:[%s3933 + $0x20] sm:$0xf]
      %v3943 = vld [vmem:[%s3933 + $0x24] sm:$0xf]
      %v3944 = vld [vmem:[%s3933 + $0x28] sm:$0xf]
      %v3945 = vld [vmem:[%s3933 + $0x2c] sm:$0xf]
      %v3946 = vld [vmem:[%s3933 + $0x30] sm:$0xf]
      %v3947 = vld [vmem:[%s3933 + $0x34] sm:$0xf]
      %v3948 = vld [vmem:[%s3933 + $0x38] sm:$0xf]
      %v3949 = vld [vmem:[%s3933 + $0x3c] sm:$0xf]
      %v3950 = vld [vmem:[%s3933 + $0x40] sm:$0xf]
      %v3951 = vld [vmem:[%s3933 + $0x44] sm:$0xf]
      %v3952 = vld [vmem:[%s3933 + $0x48] sm:$0xf]
      %v3953 = vld [vmem:[%s3933 + $0x4c] sm:$0xf]
      %v3954 = vld [vmem:[%s3933 + $0x50] sm:$0xf]
      %v3955 = vld [vmem:[%s3933 + $0x54] sm:$0xf]
      %v3956 = vld [vmem:[%s3933 + $0x58] sm:$0xf]
      %v3957 = vld [vmem:[%s3933 + $0x5c] sm:$0xf]
      %v3958 = vld [vmem:[%s3933 + $0x60] sm:$0xf]
      %v3959 = vld [vmem:[%s3933 + $0x64] sm:$0xf]
      %v3960 = vld [vmem:[%s3933 + $0x68] sm:$0xf]
      %v3961 = vld [vmem:[%s3933 + $0x6c] sm:$0xf]
      %v3962 = vld [vmem:[%s3933 + $0x70] sm:$0xf]
      %v3963 = vld [vmem:[%s3933 + $0x74] sm:$0xf]
      %v3964 = vld [vmem:[%s3933 + $0x78] sm:$0xf]
      %v3965 = vld [vmem:[%s3933 + $0x7c] sm:$0xf]
      %v3966 = vld [vmem:[%s3933 + $0x80] sm:$0xf]
      %v3967 = vld [vmem:[%s3933 + $0x84] sm:$0xf]
      %v3968 = vld [vmem:[%s3933 + $0x88] sm:$0xf]
      %v3969 = vld [vmem:[%s3933 + $0x8c] sm:$0xf]
      %v3970 = vld [vmem:[%s3933 + $0x90] sm:$0xf]
      %v3971 = vld [vmem:[%s3933 + $0x94] sm:$0xf]
      %v3972 = vld [vmem:[%s3933 + $0x98] sm:$0xf]
      %v3973 = vld [vmem:[%s3933 + $0x9c] sm:$0xf]
      %v3974 = vld [vmem:[%s3933 + $0xa0] sm:$0xf]
      %v3975 = vld [vmem:[%s3933 + $0xa4] sm:$0xf]
      %v3976 = vld [vmem:[%s3933 + $0xa8] sm:$0xf]
      %v3977 = vld [vmem:[%s3933 + $0xac] sm:$0xf]
      %v3978 = vld [vmem:[%s3933 + $0xb0] sm:$0xf]
      %v3979 = vld [vmem:[%s3933 + $0xb4] sm:$0xf]
      %v3980 = vld [vmem:[%s3933 + $0xb8] sm:$0xf]
      %v3981 = vld [vmem:[%s3933 + $0xbc] sm:$0xf]
      %v4030 = vunpack.c.l.b16 %v3934
      %v4031 = vunpack.c.l.b16 %v3935
      %v4032 = vunpack.c.l.b16 %v3936
      %v4033 = vunpack.c.l.b16 %v3937
      %v4034 = vunpack.c.l.b16 %v3938
      %v4035 = vunpack.c.l.b16 %v3939
      %v4036 = vunpack.c.l.b16 %v3940
      %v4037 = vunpack.c.l.b16 %v3941
      %v4038 = vunpack.c.l.b16 %v3942
      %v4039 = vunpack.c.l.b16 %v3943
      %v4040 = vunpack.c.l.b16 %v3944
      %v4041 = vunpack.c.l.b16 %v3945
      %v4042 = vunpack.c.l.b16 %v3946
      %v4043 = vunpack.c.l.b16 %v3947
      %v4044 = vunpack.c.l.b16 %v3948
      %v4045 = vunpack.c.l.b16 %v3949
      %v4046 = vunpack.c.l.b16 %v3950
      %v4047 = vunpack.c.l.b16 %v3951
      %v4048 = vunpack.c.l.b16 %v3952
      %v4049 = vunpack.c.l.b16 %v3953
      %v4050 = vunpack.c.l.b16 %v3954
      %v4051 = vunpack.c.l.b16 %v3955
      %v4052 = vunpack.c.l.b16 %v3956
      %v4053 = vunpack.c.l.b16 %v3957
      %v4054 = vunpack.c.l.b16 %v3958
      %v4055 = vunpack.c.l.b16 %v3959
      %v4056 = vunpack.c.l.b16 %v3960
      %v4057 = vunpack.c.l.b16 %v3961
      %v4058 = vunpack.c.l.b16 %v3962
      %v4059 = vunpack.c.l.b16 %v3963
      %v4060 = vunpack.c.l.b16 %v3964
      %v4061 = vunpack.c.l.b16 %v3965
      %v4062 = vunpack.c.l.b16 %v3966
      %v4063 = vunpack.c.l.b16 %v3967
      %v4064 = vunpack.c.l.b16 %v3968
      %v4065 = vunpack.c.l.b16 %v3969
      %v4066 = vunpack.c.l.b16 %v3970
      %v4067 = vunpack.c.l.b16 %v3971
      %v4068 = vunpack.c.l.b16 %v3972
      %v4069 = vunpack.c.l.b16 %v3973
      %v4070 = vunpack.c.l.b16 %v3974
      %v4071 = vunpack.c.l.b16 %v3975
      %v4072 = vunpack.c.l.b16 %v3976
      %v4073 = vunpack.c.l.b16 %v3977
      %v4074 = vunpack.c.l.b16 %v3978
      %v4075 = vunpack.c.l.b16 %v3979
      %v4076 = vunpack.c.l.b16 %v3980
      %v4077 = vunpack.c.l.b16 %v3981
      %v4078 = vpack.c.b16 %v4031, %v4030
      %v4079 = vpack.c.b16 %v4033, %v4032
      %v4080 = vpack.c.b16 %v4035, %v4034
      %v4081 = vpack.c.b16 %v4037, %v4036
      %v4082 = vpack.c.b16 %v4039, %v4038
      %v4083 = vpack.c.b16 %v4041, %v4040
      %v4084 = vpack.c.b16 %v4043, %v4042
      %v4085 = vpack.c.b16 %v4045, %v4044
      %v4086 = vpack.c.b16 %v4047, %v4046
      %v4087 = vpack.c.b16 %v4049, %v4048
      %v4088 = vpack.c.b16 %v4051, %v4050
      %v4089 = vpack.c.b16 %v4053, %v4052
      %v4090 = vpack.c.b16 %v4055, %v4054
      %v4091 = vpack.c.b16 %v4057, %v4056
      %v4092 = vpack.c.b16 %v4059, %v4058
      %v4093 = vpack.c.b16 %v4061, %v4060
      %v4094 = vpack.c.b16 %v4063, %v4062
      %v4095 = vpack.c.b16 %v4065, %v4064
      %v4096 = vpack.c.b16 %v4067, %v4066
      %v4097 = vpack.c.b16 %v4069, %v4068
      %v4098 = vpack.c.b16 %v4071, %v4070
      %v4099 = vpack.c.b16 %v4073, %v4072
      %v4100 = vpack.c.b16 %v4075, %v4074
      %v4101 = vpack.c.b16 %v4077, %v4076
      %4126 = vmatprep.subr.bf16.mxu0 0
      %4127 = vmatpush1.bf16.msra.mxu0 %v4078
      %4128 = vmatprep.subr.bf16.mxu0 0
      %4129 = vmatpush1.bf16.msra.mxu0 %v4079
      %4130 = vmatprep.subr.bf16.mxu0 0
      %4131 = vmatpush1.bf16.msra.mxu0 %v4080
      %4132 = vmatprep.subr.bf16.mxu0 0
      %4133 = vmatpush1.bf16.msra.mxu0 %v4081
      %4134 = vmatprep.subr.bf16.mxu0 0
      %4135 = vmatpush1.bf16.msra.mxu0 %v4082
      %4136 = vmatprep.subr.bf16.mxu0 0
      %4137 = vmatpush1.bf16.msra.mxu0 %v4083
      %4138 = vmatprep.subr.bf16.mxu0 0
      %4139 = vmatpush1.bf16.msra.mxu0 %v4084
      %4140 = vmatprep.subr.bf16.mxu0 0
      %4141 = vmatpush1.bf16.msra.mxu0 %v4085
      %4142 = vmatprep.subr.bf16.mxu0 0
      %4143 = vmatpush1.bf16.msra.mxu0 %v4086
      %4144 = vmatprep.subr.bf16.mxu0 0
      %4145 = vmatpush1.bf16.msra.mxu0 %v4087
      %4146 = vmatprep.subr.bf16.mxu0 0
      %4147 = vmatpush1.bf16.msra.mxu0 %v4088
      %4148 = vmatprep.subr.bf16.mxu0 0
      %4149 = vmatpush1.bf16.msra.mxu0 %v4089
      %4150 = vmatprep.subr.bf16.mxu0 0
      %4151 = vmatpush1.bf16.msra.mxu0 %v4090
      %4152 = vmatprep.subr.bf16.mxu0 0
      %4153 = vmatpush1.bf16.msra.mxu0 %v4091
      %4154 = vmatprep.subr.bf16.mxu0 0
      %4155 = vmatpush1.bf16.msra.mxu0 %v4092
      %4156 = vmatprep.subr.bf16.mxu0 0
      %4157 = vmatpush1.bf16.msra.mxu0 %v4093
      %4158 = vmatprep.mubr.bf16.mxu0 %v3392
      %4159 = vmatmul.mubr.bf16.gmra.mrb[0].mxu0 %v3380
      %v4160 = vpop.f32.mrb[0].mxu0
      %v4161 = vadd.f32 0.0, %v4160
      %v4162 = vpop.f32.mrb[0].mxu0
      %v4163 = vpop.f32.mrb[0].mxu0
      %v4164 = vadd.f32 0.0, %v4163
      %v4165 = vpop.f32.mrb[0].mxu0
      %4166 = vmatprep.mubr.bf16.mxu0 %v3424
      %4167 = vmatmul.mubr.bf16.gmra.mrb[0].mxu0 %v3412
      %v4168 = vpop.f32.mrb[0].mxu0
      %v4169 = vadd.f32 0.0, %v4168
      %v4170 = vpop.f32.mrb[0].mxu0
      %v4171 = vpop.f32.mrb[0].mxu0
      %v4172 = vadd.f32 0.0, %v4171
      %v4173 = vpop.f32.mrb[0].mxu0
      %4174 = vmatprep.mubr.bf16.mxu0 %v3456
      %4175 = vmatmul.mubr.bf16.gmra.mrb[0].mxu0 %v3444
      %v4176 = vpop.f32.mrb[0].mxu0
      %v4177 = vadd.f32 0.0, %v4176
      %v4178 = vpop.f32.mrb[0].mxu0
      %v4179 = vpop.f32.mrb[0].mxu0
      %v4180 = vadd.f32 0.0, %v4179
      %v4181 = vpop.f32.mrb[0].mxu0
      %4182 = vmatprep.mubr.bf16.mxu0 %v3488
      %4183 = vmatmul.mubr.bf16.gmra.mrb[0].mxu0 %v3476
      %v4184 = vpop.f32.mrb[0].mxu0
      %v4185 = vadd.f32 0.0, %v4184
      %v4186 = vpop.f32.mrb[0].mxu0
      %v4187 = vpop.f32.mrb[0].mxu0
      %v4188 = vadd.f32 0.0, %v4187
      %v4189 = vpop.f32.mrb[0].mxu0
      %4190 = vmatprep.mubr.bf16.mxu0 %v3520
      %4191 = vmatmul.mubr.bf16.gmra.mrb[0].mxu0 %v3508
      %v4192 = vpop.f32.mrb[0].mxu0
      %v4193 = vadd.f32 0.0, %v4192
      %v4194 = vpop.f32.mrb[0].mxu0
      %v4195 = vpop.f32.mrb[0].mxu0
      %v4196 = vadd.f32 0.0, %v4195
      %v4197 = vpop.f32.mrb[0].mxu0
      %4198 = vmatprep.mubr.bf16.mxu0 %v3552
      %4199 = vmatmul.mubr.bf16.gmra.mrb[0].mxu0 %v3540
      %v4200 = vpop.f32.mrb[0].mxu0
      %v4201 = vadd.f32 0.0, %v4200
      %v4202 = vpop.f32.mrb[0].mxu0
      %v4203 = vpop.f32.mrb[0].mxu0
      %v4204 = vadd.f32 0.0, %v4203
      %v4205 = vpop.f32.mrb[0].mxu0
      %4206 = vmatprep.mubr.bf16.mxu0 %v3584
      %4207 = vmatmul.mubr.bf16.gmra.mrb[0].mxu0 %v3572
      %v4208 = vpop.f32.mrb[0].mxu0
      %v4209 = vadd.f32 0.0, %v4208
      %v4210 = vpop.f32.mrb[0].mxu0
      %v4211 = vpop.f32.mrb[0].mxu0
      %v4212 = vadd.f32 0.0, %v4211
      %v4213 = vpop.f32.mrb[0].mxu0
      %4214 = vmatprep.mubr.bf16.mxu0 %v3616
      %4215 = vmatmul.mubr.bf16.gmra.mrb[0].mxu0 %v3604
      %v4216 = vpop.f32.mrb[0].mxu0
      %v4217 = vadd.f32 0.0, %v4216
      %v4218 = vpop.f32.mrb[0].mxu0
      %v4219 = vpop.f32.mrb[0].mxu0
      %v4220 = vadd.f32 0.0, %v4219
      %v4221 = vpop.f32.mrb[0].mxu0
      %4222 = vmatprep.mubr.bf16.mxu0 %v3648
      %4223 = vmatmul.mubr.bf16.gmra.mrb[0].mxu0 %v3636
      %v4224 = vpop.f32.mrb[0].mxu0
      %v4225 = vadd.f32 0.0, %v4224
      %v4226 = vpop.f32.mrb[0].mxu0
      %v4227 = vpop.f32.mrb[0].mxu0
      %v4228 = vadd.f32 0.0, %v4227
      %v4229 = vpop.f32.mrb[0].mxu0
      %4230 = vmatprep.mubr.bf16.mxu0 %v3680
      %4231 = vmatmul.mubr.bf16.gmra.mrb[0].mxu0 %v3668
      %v4232 = vpop.f32.mrb[0].mxu0
      %v4233 = vadd.f32 0.0, %v4232
      %v4234 = vpop.f32.mrb[0].mxu0
      %v4235 = vpop.f32.mrb[0].mxu0
      %v4236 = vadd.f32 0.0, %v4235
      %v4237 = vpop.f32.mrb[0].mxu0
      %4238 = vmatprep.mubr.bf16.mxu0 %v3712
      %4239 = vmatmul.mubr.bf16.gmra.mrb[0].mxu0 %v3700
      %v4240 = vpop.f32.mrb[0].mxu0
      %v4241 = vadd.f32 0.0, %v4240
      %v4242 = vpop.f32.mrb[0].mxu0
      %v4243 = vpop.f32.mrb[0].mxu0
      %v4244 = vadd.f32 0.0, %v4243
      %v4245 = vpop.f32.mrb[0].mxu0
      %4246 = vmatprep.mubr.bf16.mxu0 %v3744
      %4247 = vmatmul.mubr.bf16.gmra.mrb[0].mxu0 %v3732
      %v4248 = vpop.f32.mrb[0].mxu0
      %v4249 = vadd.f32 0.0, %v4248
      %v4250 = vpop.f32.mrb[0].mxu0
      %v4251 = vpop.f32.mrb[0].mxu0
      %v4252 = vadd.f32 0.0, %v4251
      %v4253 = vpop.f32.mrb[0].mxu0
      %4254 = vmatprep.mubr.bf16.mxu0 %v3776
      %4255 = vmatmul.mubr.bf16.gmra.mrb[0].mxu0 %v3764
      %v4256 = vpop.f32.mrb[0].mxu0
      %v4257 = vadd.f32 0.0, %v4256
      %v4258 = vpop.f32.mrb[0].mxu0
      %v4259 = vpop.f32.mrb[0].mxu0
      %v4260 = vadd.f32 0.0, %v4259
      %v4261 = vpop.f32.mrb[0].mxu0
      %4262 = vmatprep.mubr.bf16.mxu0 %v3808
      %4263 = vmatmul.mubr.bf16.gmra.mrb[0].mxu0 %v3796
      %v4264 = vpop.f32.mrb[0].mxu0
      %v4265 = vadd.f32 0.0, %v4264
      %v4266 = vpop.f32.mrb[0].mxu0
      %v4267 = vpop.f32.mrb[0].mxu0
      %v4268 = vadd.f32 0.0, %v4267
      %v4269 = vpop.f32.mrb[0].mxu0
      %4270 = vmatprep.mubr.bf16.mxu0 %v3840
      %4271 = vmatmul.mubr.bf16.gmra.mrb[0].mxu0 %v3828
      %v4272 = vpop.f32.mrb[0].mxu0
      %v4273 = vadd.f32 0.0, %v4272
      %v4274 = vpop.f32.mrb[0].mxu0
      %v4275 = vpop.f32.mrb[0].mxu0
      %v4276 = vadd.f32 0.0, %v4275
      %v4277 = vpop.f32.mrb[0].mxu0
      %4278 = vmatprep.mubr.bf16.mxu0 %v3872
      %4279 = vmatmul.mubr.bf16.gmra.mrb[0].mxu0 %v3860
      %v4280 = vpop.f32.mrb[0].mxu0
      %v4281 = vadd.f32 0.0, %v4280
      %v4282 = vpop.f32.mrb[0].mxu0
      %v4283 = vpop.f32.mrb[0].mxu0
      %v4284 = vadd.f32 0.0, %v4283
      %v4285 = vpop.f32.mrb[0].mxu0
      %4286 = vdwg.mxu0
      %4287 = vmatprep.subr.bf16.mxu0 0
      %4288 = vmatpush1.bf16.msra.mxu0 %v4094
      %4289 = vmatprep.subr.bf16.mxu0 0
      %4290 = vmatpush1.bf16.msra.mxu0 %v4095
      %4291 = vmatprep.subr.bf16.mxu0 0
      %4292 = vmatpush1.bf16.msra.mxu0 %v4096
      %4293 = vmatprep.subr.bf16.mxu0 0
      %4294 = vmatpush1.bf16.msra.mxu0 %v4097
      %4295 = vmatprep.subr.bf16.mxu0 0
      %4296 = vmatpush1.bf16.msra.mxu0 %v4098
      %4297 = vmatprep.subr.bf16.mxu0 0
      %4298 = vmatpush1.bf16.msra.mxu0 %v4099
      %4299 = vmatprep.subr.bf16.mxu0 0
      %4300 = vmatpush1.bf16.msra.mxu0 %v4100
      %4301 = vmatprep.subr.bf16.mxu0 0
      %4302 = vmatpush1.bf16.msra.mxu0 %v4101
      %4303 = vmatprep.subr.bf16.mxu0 0
      %4304 = vmatpush1.bf16.msra.mxu0 0
      %4305 = vmatprep.subr.bf16.mxu0 0
      %4306 = vmatpush1.bf16.msra.mxu0 0
      %4307 = vmatprep.subr.bf16.mxu0 0
      %4308 = vmatpush1.bf16.msra.mxu0 0
      %4309 = vmatprep.subr.bf16.mxu0 0
      %4310 = vmatpush1.bf16.msra.mxu0 0
      %4311 = vmatprep.subr.bf16.mxu0 0
      %4312 = vmatpush1.bf16.msra.mxu0 0
      %4313 = vmatprep.subr.bf16.mxu0 0
      %4314 = vmatpush1.bf16.msra.mxu0 0
      %4315 = vmatprep.subr.bf16.mxu0 0
      %4316 = vmatpush1.bf16.msra.mxu0 0
      %4317 = vmatprep.subr.bf16.mxu0 0
      %4318 = vmatpush1.bf16.msra.mxu0 0
      %4319 = vmatprep.mubr.bf16.mxu0 0
      %4320 = vmatmul.mubr.bf16.gmra.mrb[0].mxu0 %v3404
      %v4321 = vpop.f32.mrb[0].mxu0
      %v4322 = vadd.f32 %v4161, %v4321
      %v4323 = vpop.f32.mrb[0].mxu0
      %v4324 = vpop.f32.mrb[0].mxu0
      %v4325 = vadd.f32 %v4164, %v4324
      %v4326 = vpop.f32.mrb[0].mxu0
      %4327 = vmatprep.mubr.bf16.mxu0 0
      %4328 = vmatmul.mubr.bf16.gmra.mrb[0].mxu0 %v3436
      %v4329 = vpop.f32.mrb[0].mxu0
      %v4330 = vadd.f32 %v4169, %v4329
      %v4331 = vpop.f32.mrb[0].mxu0
      %v4332 = vpop.f32.mrb[0].mxu0
      %v4333 = vadd.f32 %v4172, %v4332
      %v4334 = vpop.f32.mrb[0].mxu0
      %4335 = vmatprep.mubr.bf16.mxu0 0
      %4336 = vmatmul.mubr.bf16.gmra.mrb[0].mxu0 %v3468
      %v4337 = vpop.f32.mrb[0].mxu0
      %v4338 = vadd.f32 %v4177, %v4337
      %v4339 = vpop.f32.mrb[0].mxu0
      %v4340 = vpop.f32.mrb[0].mxu0
      %v4341 = vadd.f32 %v4180, %v4340
      %v4342 = vpop.f32.mrb[0].mxu0
      %4343 = vmatprep.mubr.bf16.mxu0 0
      %4344 = vmatmul.mubr.bf16.gmra.mrb[0].mxu0 %v3500
      %v4345 = vpop.f32.mrb[0].mxu0
      %v4346 = vadd.f32 %v4185, %v4345
      %v4347 = vpop.f32.mrb[0].mxu0
      %v4348 = vpop.f32.mrb[0].mxu0
      %v4349 = vadd.f32 %v4188, %v4348
      %v4350 = vpop.f32.mrb[0].mxu0
      %4351 = vmatprep.mubr.bf16.mxu0 0
      %4352 = vmatmul.mubr.bf16.gmra.mrb[0].mxu0 %v3532
      %v4353 = vpop.f32.mrb[0].mxu0
      %v4354 = vadd.f32 %v4193, %v4353
      %v4355 = vpop.f32.mrb[0].mxu0
      %v4356 = vpop.f32.mrb[0].mxu0
      %v4357 = vadd.f32 %v4196, %v4356
      %v4358 = vpop.f32.mrb[0].mxu0
      %4359 = vmatprep.mubr.bf16.mxu0 0
      %4360 = vmatmul.mubr.bf16.gmra.mrb[0].mxu0 %v3564
      %v4361 = vpop.f32.mrb[0].mxu0
      %v4362 = vadd.f32 %v4201, %v4361
      %v4363 = vpop.f32.mrb[0].mxu0
      %v4364 = vpop.f32.mrb[0].mxu0
      %v4365 = vadd.f32 %v4204, %v4364
      %v4366 = vpop.f32.mrb[0].mxu0
      %4367 = vmatprep.mubr.bf16.mxu0 0
      %4368 = vmatmul.mubr.bf16.gmra.mrb[0].mxu0 %v3596
      %v4369 = vpop.f32.mrb[0].mxu0
      %v4370 = vadd.f32 %v4209, %v4369
      %v4371 = vpop.f32.mrb[0].mxu0
      %v4372 = vpop.f32.mrb[0].mxu0
      %v4373 = vadd.f32 %v4212, %v4372
      %v4374 = vpop.f32.mrb[0].mxu0
      %4375 = vmatprep.mubr.bf16.mxu0 0
      %4376 = vmatmul.mubr.bf16.gmra.mrb[0].mxu0 %v3628
      %v4377 = vpop.f32.mrb[0].mxu0
      %v4378 = vadd.f32 %v4217, %v4377
      %v4379 = vpop.f32.mrb[0].mxu0
      %v4380 = vpop.f32.mrb[0].mxu0
      %v4381 = vadd.f32 %v4220, %v4380
      %v4382 = vpop.f32.mrb[0].mxu0
      %4383 = vmatprep.mubr.bf16.mxu0 0
      %4384 = vmatmul.mubr.bf16.gmra.mrb[0].mxu0 %v3660
      %v4385 = vpop.f32.mrb[0].mxu0
      %v4386 = vadd.f32 %v4225, %v4385
      %v4387 = vpop.f32.mrb[0].mxu0
      %v4388 = vpop.f32.mrb[0].mxu0
      %v4389 = vadd.f32 %v4228, %v4388
      %v4390 = vpop.f32.mrb[0].mxu0
      %4391 = vmatprep.mubr.bf16.mxu0 0
      %4392 = vmatmul.mubr.bf16.gmra.mrb[0].mxu0 %v3692
      %v4393 = vpop.f32.mrb[0].mxu0
      %v4394 = vadd.f32 %v4233, %v4393
      %v4395 = vpop.f32.mrb[0].mxu0
      %v4396 = vpop.f32.mrb[0].mxu0
      %v4397 = vadd.f32 %v4236, %v4396
      %v4398 = vpop.f32.mrb[0].mxu0
      %4399 = vmatprep.mubr.bf16.mxu0 0
      %4400 = vmatmul.mubr.bf16.gmra.mrb[0].mxu0 %v3724
      %v4401 = vpop.f32.mrb[0].mxu0
      %v4402 = vadd.f32 %v4241, %v4401
      %v4403 = vpop.f32.mrb[0].mxu0
      %v4404 = vpop.f32.mrb[0].mxu0
      %v4405 = vadd.f32 %v4244, %v4404
      %v4406 = vpop.f32.mrb[0].mxu0
      %4407 = vmatprep.mubr.bf16.mxu0 0
      %4408 = vmatmul.mubr.bf16.gmra.mrb[0].mxu0 %v3756
      %v4409 = vpop.f32.mrb[0].mxu0
      %v4410 = vadd.f32 %v4249, %v4409
      %v4411 = vpop.f32.mrb[0].mxu0
      %v4412 = vpop.f32.mrb[0].mxu0
      %v4413 = vadd.f32 %v4252, %v4412
      %v4414 = vpop.f32.mrb[0].mxu0
      %4415 = vmatprep.mubr.bf16.mxu0 0
      %4416 = vmatmul.mubr.bf16.gmra.mrb[0].mxu0 %v3788
      %v4417 = vpop.f32.mrb[0].mxu0
      %v4418 = vadd.f32 %v4257, %v4417
      %v4419 = vpop.f32.mrb[0].mxu0
      %v4420 = vpop.f32.mrb[0].mxu0
      %v4421 = vadd.f32 %v4260, %v4420
      %v4422 = vpop.f32.mrb[0].mxu0
      %4423 = vmatprep.mubr.bf16.mxu0 0
      %4424 = vmatmul.mubr.bf16.gmra.mrb[0].mxu0 %v3820
      %v4425 = vpop.f32.mrb[0].mxu0
      %v4426 = vadd.f32 %v4265, %v4425
      %v4427 = vpop.f32.mrb[0].mxu0
      %v4428 = vpop.f32.mrb[0].mxu0
      %v4429 = vadd.f32 %v4268, %v4428
      %v4430 = vpop.f32.mrb[0].mxu0
      %4431 = vmatprep.mubr.bf16.mxu0 0
      %4432 = vmatmul.mubr.bf16.gmra.mrb[0].mxu0 %v3852
      %v4433 = vpop.f32.mrb[0].mxu0
      %v4434 = vadd.f32 %v4273, %v4433
      %v4435 = vpop.f32.mrb[0].mxu0
      %v4436 = vpop.f32.mrb[0].mxu0
      %v4437 = vadd.f32 %v4276, %v4436
      %v4438 = vpop.f32.mrb[0].mxu0
      %4439 = vmatprep.mubr.bf16.mxu0 0
      %4440 = vmatmul.mubr.bf16.gmra.mrb[0].mxu0 %v3884
      %v4441 = vpop.f32.mrb[0].mxu0
      %v4442 = vadd.f32 %v4281, %v4441
      %v4443 = vpop.f32.mrb[0].mxu0
      %v4444 = vpop.f32.mrb[0].mxu0
      %v4445 = vadd.f32 %v4284, %v4444
      %v4446 = vpop.f32.mrb[0].mxu0
      %4447 = vdwg.mxu0
      %v4496 = vunpack.c.l.b16 %v2749
      %v4497 = vunpack.c.l.b16 %v2750
      %v4498 = vunpack.c.l.b16 %v2751
      %v4499 = vunpack.c.l.b16 %v2752
      %v4500 = vunpack.c.l.b16 %v2753
      %v4501 = vunpack.c.l.b16 %v2754
      %v4502 = vunpack.c.l.b16 %v2755
      %v4503 = vunpack.c.l.b16 %v2756
      %v4504 = vunpack.c.l.b16 %v2757
      %v4505 = vunpack.c.l.b16 %v2758
      %v4506 = vunpack.c.l.b16 %v2759
      %v4507 = vunpack.c.l.b16 %v2760
      %v4508 = vunpack.c.l.b16 %v2761
      %v4509 = vunpack.c.l.b16 %v2762
      %v4510 = vunpack.c.l.b16 %v2763
      %v4511 = vunpack.c.l.b16 %v2764
      %v4512 = vunpack.c.l.b16 %v2765
      %v4513 = vunpack.c.l.b16 %v2766
      %v4514 = vunpack.c.l.b16 %v2767
      %v4515 = vunpack.c.l.b16 %v2768
      %v4516 = vunpack.c.l.b16 %v2769
      %v4517 = vunpack.c.l.b16 %v2770
      %v4518 = vunpack.c.l.b16 %v2771
      %v4519 = vunpack.c.l.b16 %v2772
      %v4520 = vunpack.c.l.b16 %v2773
      %v4521 = vunpack.c.l.b16 %v2774
      %v4522 = vunpack.c.l.b16 %v2775
      %v4523 = vunpack.c.l.b16 %v2776
      %v4524 = vunpack.c.l.b16 %v2777
      %v4525 = vunpack.c.l.b16 %v2778
      %v4526 = vunpack.c.l.b16 %v2779
      %v4527 = vunpack.c.l.b16 %v2780
      %v4528 = vunpack.c.l.b16 %v2781
      %v4529 = vunpack.c.l.b16 %v2782
      %v4530 = vunpack.c.l.b16 %v2783
      %v4531 = vunpack.c.l.b16 %v2784
      %v4532 = vunpack.c.l.b16 %v2785
      %v4533 = vunpack.c.l.b16 %v2786
      %v4534 = vunpack.c.l.b16 %v2787
      %v4535 = vunpack.c.l.b16 %v2788
      %v4536 = vunpack.c.l.b16 %v2789
      %v4537 = vunpack.c.l.b16 %v2790
      %v4538 = vunpack.c.l.b16 %v2791
      %v4539 = vunpack.c.l.b16 %v2792
      %v4540 = vunpack.c.l.b16 %v2793
      %v4541 = vunpack.c.l.b16 %v2794
      %v4542 = vunpack.c.l.b16 %v2795
      %v4543 = vunpack.c.l.b16 %v2796
      %v4544 = vpack.c.b16 %v4497, %v4496
      %v4545 = vpack.c.b16 %v4499, %v4498
      %v4546 = vpack.c.b16 %v4501, %v4500
      %v4547 = vpack.c.b16 %v4503, %v4502
      %v4548 = vpack.c.b16 %v4505, %v4504
      %v4549 = vpack.c.b16 %v4507, %v4506
      %v4550 = vpack.c.b16 %v4509, %v4508
      %v4551 = vpack.c.b16 %v4511, %v4510
      %v4552 = vpack.c.b16 %v4513, %v4512
      %v4553 = vpack.c.b16 %v4515, %v4514
      %v4554 = vpack.c.b16 %v4517, %v4516
      %v4555 = vpack.c.b16 %v4519, %v4518
      %v4556 = vpack.c.b16 %v4521, %v4520
      %v4557 = vpack.c.b16 %v4523, %v4522
      %v4558 = vpack.c.b16 %v4525, %v4524
      %v4559 = vpack.c.b16 %v4527, %v4526
      %v4560 = vpack.c.b16 %v4529, %v4528
      %v4561 = vpack.c.b16 %v4531, %v4530
      %v4562 = vpack.c.b16 %v4533, %v4532
      %v4563 = vpack.c.b16 %v4535, %v4534
      %v4564 = vpack.c.b16 %v4537, %v4536
      %v4565 = vpack.c.b16 %v4539, %v4538
      %v4566 = vpack.c.b16 %v4541, %v4540
      %v4567 = vpack.c.b16 %v4543, %v4542
      %4592 = vmatprep.subr.bf16.mxu0 0
      %4593 = vmatpush1.bf16.msra.mxu0 %v4544
      %4594 = vmatprep.subr.bf16.mxu0 0
      %4595 = vmatpush1.bf16.msra.mxu0 %v4545
      %4596 = vmatprep.subr.bf16.mxu0 0
      %4597 = vmatpush1.bf16.msra.mxu0 %v4546
      %4598 = vmatprep.subr.bf16.mxu0 0
      %4599 = vmatpush1.bf16.msra.mxu0 %v4547
      %4600 = vmatprep.subr.bf16.mxu0 0
      %4601 = vmatpush1.bf16.msra.mxu0 %v4548
      %4602 = vmatprep.subr.bf16.mxu0 0
      %4603 = vmatpush1.bf16.msra.mxu0 %v4549
      %4604 = vmatprep.subr.bf16.mxu0 0
      %4605 = vmatpush1.bf16.msra.mxu0 %v4550
      %4606 = vmatprep.subr.bf16.mxu0 0
      %4607 = vmatpush1.bf16.msra.mxu0 %v4551
      %4608 = vmatprep.subr.bf16.mxu0 0
      %4609 = vmatpush1.bf16.msra.mxu0 %v4552
      %4610 = vmatprep.subr.bf16.mxu0 0
      %4611 = vmatpush1.bf16.msra.mxu0 %v4553
      %4612 = vmatprep.subr.bf16.mxu0 0
      %4613 = vmatpush1.bf16.msra.mxu0 %v4554
      %4614 = vmatprep.subr.bf16.mxu0 0
      %4615 = vmatpush1.bf16.msra.mxu0 %v4555
      %4616 = vmatprep.subr.bf16.mxu0 0
      %4617 = vmatpush1.bf16.msra.mxu0 %v4556
      %4618 = vmatprep.subr.bf16.mxu0 0
      %4619 = vmatpush1.bf16.msra.mxu0 %v4557
      %4620 = vmatprep.subr.bf16.mxu0 0
      %4621 = vmatpush1.bf16.msra.mxu0 %v4558
      %4622 = vmatprep.subr.bf16.mxu0 0
      %4623 = vmatpush1.bf16.msra.mxu0 %v4559
      %4624 = vmatprep.mubr.bf16.mxu0 %v2208
      %4625 = vmatmul.mubr.bf16.gmra.mrb[0].mxu0 %v2196
      %v4626 = vpop.f32.mrb[0].mxu0
      %v4627 = vadd.f32 %v4322, %v4626
      %v4628 = vpop.f32.mrb[0].mxu0
      %v4629 = vpop.f32.mrb[0].mxu0
      %v4630 = vadd.f32 %v4325, %v4629
      %v4631 = vpop.f32.mrb[0].mxu0
      %4632 = vmatprep.mubr.bf16.mxu0 %v2240
      %4633 = vmatmul.mubr.bf16.gmra.mrb[0].mxu0 %v2228
      %v4634 = vpop.f32.mrb[0].mxu0
      %v4635 = vadd.f32 %v4330, %v4634
      %v4636 = vpop.f32.mrb[0].mxu0
      %v4637 = vpop.f32.mrb[0].mxu0
      %v4638 = vadd.f32 %v4333, %v4637
      %v4639 = vpop.f32.mrb[0].mxu0
      %4640 = vmatprep.mubr.bf16.mxu0 %v2272
      %4641 = vmatmul.mubr.bf16.gmra.mrb[0].mxu0 %v2260
      %v4642 = vpop.f32.mrb[0].mxu0
      %v4643 = vadd.f32 %v4338, %v4642
      %v4644 = vpop.f32.mrb[0].mxu0
      %v4645 = vpop.f32.mrb[0].mxu0
      %v4646 = vadd.f32 %v4341, %v4645
      %v4647 = vpop.f32.mrb[0].mxu0
      %4648 = vmatprep.mubr.bf16.mxu0 %v2304
      %4649 = vmatmul.mubr.bf16.gmra.mrb[0].mxu0 %v2292
      %v4650 = vpop.f32.mrb[0].mxu0
      %v4651 = vadd.f32 %v4346, %v4650
      %v4652 = vpop.f32.mrb[0].mxu0
      %v4653 = vpop.f32.mrb[0].mxu0
      %v4654 = vadd.f32 %v4349, %v4653
      %v4655 = vpop.f32.mrb[0].mxu0
      %4656 = vmatprep.mubr.bf16.mxu0 %v2336
      %4657 = vmatmul.mubr.bf16.gmra.mrb[0].mxu0 %v2324
      %v4658 = vpop.f32.mrb[0].mxu0
      %v4659 = vadd.f32 %v4354, %v4658
      %v4660 = vpop.f32.mrb[0].mxu0
      %v4661 = vpop.f32.mrb[0].mxu0
      %v4662 = vadd.f32 %v4357, %v4661
      %v4663 = vpop.f32.mrb[0].mxu0
      %4664 = vmatprep.mubr.bf16.mxu0 %v2368
      %4665 = vmatmul.mubr.bf16.gmra.mrb[0].mxu0 %v2356
      %v4666 = vpop.f32.mrb[0].mxu0
      %v4667 = vadd.f32 %v4362, %v4666
      %v4668 = vpop.f32.mrb[0].mxu0
      %v4669 = vpop.f32.mrb[0].mxu0
      %v4670 = vadd.f32 %v4365, %v4669
      %v4671 = vpop.f32.mrb[0].mxu0
      %4672 = vmatprep.mubr.bf16.mxu0 %v2400
      %4673 = vmatmul.mubr.bf16.gmra.mrb[0].mxu0 %v2388
      %v4674 = vpop.f32.mrb[0].mxu0
      %v4675 = vadd.f32 %v4370, %v4674
      %v4676 = vpop.f32.mrb[0].mxu0
      %v4677 = vpop.f32.mrb[0].mxu0
      %v4678 = vadd.f32 %v4373, %v4677
      %v4679 = vpop.f32.mrb[0].mxu0
      %4680 = vmatprep.mubr.bf16.mxu0 %v2432
      %4681 = vmatmul.mubr.bf16.gmra.mrb[0].mxu0 %v2420
      %v4682 = vpop.f32.mrb[0].mxu0
      %v4683 = vadd.f32 %v4378, %v4682
      %v4684 = vpop.f32.mrb[0].mxu0
      %v4685 = vpop.f32.mrb[0].mxu0
      %v4686 = vadd.f32 %v4381, %v4685
      %v4687 = vpop.f32.mrb[0].mxu0
      %4688 = vmatprep.mubr.bf16.mxu0 %v2464
      %4689 = vmatmul.mubr.bf16.gmra.mrb[0].mxu0 %v2452
      %v4690 = vpop.f32.mrb[0].mxu0
      %v4691 = vadd.f32 %v4386, %v4690
      %v4692 = vpop.f32.mrb[0].mxu0
      %v4693 = vpop.f32.mrb[0].mxu0
      %v4694 = vadd.f32 %v4389, %v4693
      %v4695 = vpop.f32.mrb[0].mxu0
      %4696 = vmatprep.mubr.bf16.mxu0 %v2496
      %4697 = vmatmul.mubr.bf16.gmra.mrb[0].mxu0 %v2484
      %v4698 = vpop.f32.mrb[0].mxu0
      %v4699 = vadd.f32 %v4394, %v4698
      %v4700 = vpop.f32.mrb[0].mxu0
      %v4701 = vpop.f32.mrb[0].mxu0
      %v4702 = vadd.f32 %v4397, %v4701
      %v4703 = vpop.f32.mrb[0].mxu0
      %4704 = vmatprep.mubr.bf16.mxu0 %v2528
      %4705 = vmatmul.mubr.bf16.gmra.mrb[0].mxu0 %v2516
      %v4706 = vpop.f32.mrb[0].mxu0
      %v4707 = vadd.f32 %v4402, %v4706
      %v4708 = vpop.f32.mrb[0].mxu0
      %v4709 = vpop.f32.mrb[0].mxu0
      %v4710 = vadd.f32 %v4405, %v4709
      %v4711 = vpop.f32.mrb[0].mxu0
      %4712 = vmatprep.mubr.bf16.mxu0 %v2560
      %4713 = vmatmul.mubr.bf16.gmra.mrb[0].mxu0 %v2548
      %v4714 = vpop.f32.mrb[0].mxu0
      %v4715 = vadd.f32 %v4410, %v4714
      %v4716 = vpop.f32.mrb[0].mxu0
      %v4717 = vpop.f32.mrb[0].mxu0
      %v4718 = vadd.f32 %v4413, %v4717
      %v4719 = vpop.f32.mrb[0].mxu0
      %4720 = vmatprep.mubr.bf16.mxu0 %v2592
      %4721 = vmatmul.mubr.bf16.gmra.mrb[0].mxu0 %v2580
      %v4722 = vpop.f32.mrb[0].mxu0
      %v4723 = vadd.f32 %v4418, %v4722
      %v4724 = vpop.f32.mrb[0].mxu0
      %v4725 = vpop.f32.mrb[0].mxu0
      %v4726 = vadd.f32 %v4421, %v4725
      %v4727 = vpop.f32.mrb[0].mxu0
      %4728 = vmatprep.mubr.bf16.mxu0 %v2624
      %4729 = vmatmul.mubr.bf16.gmra.mrb[0].mxu0 %v2612
      %v4730 = vpop.f32.mrb[0].mxu0
      %v4731 = vadd.f32 %v4426, %v4730
      %v4732 = vpop.f32.mrb[0].mxu0
      %v4733 = vpop.f32.mrb[0].mxu0
      %v4734 = vadd.f32 %v4429, %v4733
      %v4735 = vpop.f32.mrb[0].mxu0
      %4736 = vmatprep.mubr.bf16.mxu0 %v2656
      %4737 = vmatmul.mubr.bf16.gmra.mrb[0].mxu0 %v2644
      %v4738 = vpop.f32.mrb[0].mxu0
      %v4739 = vadd.f32 %v4434, %v4738
      %v4740 = vpop.f32.mrb[0].mxu0
      %v4741 = vpop.f32.mrb[0].mxu0
      %v4742 = vadd.f32 %v4437, %v4741
      %v4743 = vpop.f32.mrb[0].mxu0
      %4744 = vmatprep.mubr.bf16.mxu0 %v2688
      %4745 = vmatmul.mubr.bf16.gmra.mrb[0].mxu0 %v2676
      %v4746 = vpop.f32.mrb[0].mxu0
      %v4747 = vadd.f32 %v4442, %v4746
      %v4748 = vpop.f32.mrb[0].mxu0
      %v4749 = vpop.f32.mrb[0].mxu0
      %v4750 = vadd.f32 %v4445, %v4749
      %v4751 = vpop.f32.mrb[0].mxu0
      %4752 = vdwg.mxu0
      %4753 = vmatprep.subr.bf16.mxu0 0
      %4754 = vmatpush1.bf16.msra.mxu0 %v4560
      %4755 = vmatprep.subr.bf16.mxu0 0
      %4756 = vmatpush1.bf16.msra.mxu0 %v4561
      %4757 = vmatprep.subr.bf16.mxu0 0
      %4758 = vmatpush1.bf16.msra.mxu0 %v4562
      %4759 = vmatprep.subr.bf16.mxu0 0
      %4760 = vmatpush1.bf16.msra.mxu0 %v4563
      %4761 = vmatprep.subr.bf16.mxu0 0
      %4762 = vmatpush1.bf16.msra.mxu0 %v4564
      %4763 = vmatprep.subr.bf16.mxu0 0
      %4764 = vmatpush1.bf16.msra.mxu0 %v4565
      %4765 = vmatprep.subr.bf16.mxu0 0
      %4766 = vmatpush1.bf16.msra.mxu0 %v4566
      %4767 = vmatprep.subr.bf16.mxu0 0
      %4768 = vmatpush1.bf16.msra.mxu0 %v4567
      %4769 = vmatprep.subr.bf16.mxu0 0
      %4770 = vmatpush1.bf16.msra.mxu0 0
      %4771 = vmatprep.subr.bf16.mxu0 0
      %4772 = vmatpush1.bf16.msra.mxu0 0
      %4773 = vmatprep.subr.bf16.mxu0 0
      %4774 = vmatpush1.bf16.msra.mxu0 0
      %4775 = vmatprep.subr.bf16.mxu0 0
      %4776 = vmatpush1.bf16.msra.mxu0 0
      %4777 = vmatprep.subr.bf16.mxu0 0
      %4778 = vmatpush1.bf16.msra.mxu0 0
      %4779 = vmatprep.subr.bf16.mxu0 0
      %4780 = vmatpush1.bf16.msra.mxu0 0
      %4781 = vmatprep.subr.bf16.mxu0 0
      %4782 = vmatpush1.bf16.msra.mxu0 0
      %4783 = vmatprep.subr.bf16.mxu0 0
      %4784 = vmatpush1.bf16.msra.mxu0 0
      %4785 = vmatprep.mubr.bf16.mxu0 0
      %4786 = vmatmul.mubr.bf16.gmra.mrb[0].mxu0 %v2220
      %v4787 = vpop.f32.mrb[0].mxu0
      %v4788 = vadd.f32 %v4627, %v4787
      %v4789 = vpop.f32.mrb[0].mxu0
      %v4790 = vpop.f32.mrb[0].mxu0
      %v4791 = vadd.f32 %v4630, %v4790
      %v4792 = vpop.f32.mrb[0].mxu0
      %4793 = vmatprep.mubr.bf16.mxu0 0
      %4794 = vmatmul.mubr.bf16.gmra.mrb[0].mxu0 %v2252
      %v4795 = vpop.f32.mrb[0].mxu0
      %v4796 = vadd.f32 %v4635, %v4795
      %v4797 = vpop.f32.mrb[0].mxu0
      %v4798 = vpop.f32.mrb[0].mxu0
      %v4799 = vadd.f32 %v4638, %v4798
      %v4800 = vpop.f32.mrb[0].mxu0
      %4801 = vmatprep.mubr.bf16.mxu0 0
      %4802 = vmatmul.mubr.bf16.gmra.mrb[0].mxu0 %v2284
      %v4803 = vpop.f32.mrb[0].mxu0
      %v4804 = vadd.f32 %v4643, %v4803
      %v4805 = vpop.f32.mrb[0].mxu0
      %v4806 = vpop.f32.mrb[0].mxu0
      %v4807 = vadd.f32 %v4646, %v4806
      %v4808 = vpop.f32.mrb[0].mxu0
      %4809 = vmatprep.mubr.bf16.mxu0 0
      %4810 = vmatmul.mubr.bf16.gmra.mrb[0].mxu0 %v2316
      %v4811 = vpop.f32.mrb[0].mxu0
      %v4812 = vadd.f32 %v4651, %v4811
      %v4813 = vpop.f32.mrb[0].mxu0
      %v4814 = vpop.f32.mrb[0].mxu0
      %v4815 = vadd.f32 %v4654, %v4814
      %v4816 = vpop.f32.mrb[0].mxu0
      %4817 = vmatprep.mubr.bf16.mxu0 0
      %4818 = vmatmul.mubr.bf16.gmra.mrb[0].mxu0 %v2348
      %v4819 = vpop.f32.mrb[0].mxu0
      %v4820 = vadd.f32 %v4659, %v4819
      %v4821 = vpop.f32.mrb[0].mxu0
      %v4822 = vpop.f32.mrb[0].mxu0
      %v4823 = vadd.f32 %v4662, %v4822
      %v4824 = vpop.f32.mrb[0].mxu0
      %4825 = vmatprep.mubr.bf16.mxu0 0
      %4826 = vmatmul.mubr.bf16.gmra.mrb[0].mxu0 %v2380
      %v4827 = vpop.f32.mrb[0].mxu0
      %v4828 = vadd.f32 %v4667, %v4827
      %v4829 = vpop.f32.mrb[0].mxu0
      %v4830 = vpop.f32.mrb[0].mxu0
      %v4831 = vadd.f32 %v4670, %v4830
      %v4832 = vpop.f32.mrb[0].mxu0
      %4833 = vmatprep.mubr.bf16.mxu0 0
      %4834 = vmatmul.mubr.bf16.gmra.mrb[0].mxu0 %v2412
      %v4835 = vpop.f32.mrb[0].mxu0
      %v4836 = vadd.f32 %v4675, %v4835
      %v4837 = vpop.f32.mrb[0].mxu0
      %v4838 = vpop.f32.mrb[0].mxu0
      %v4839 = vadd.f32 %v4678, %v4838
      %v4840 = vpop.f32.mrb[0].mxu0
      %4841 = vmatprep.mubr.bf16.mxu0 0
      %4842 = vmatmul.mubr.bf16.gmra.mrb[0].mxu0 %v2444
      %v4843 = vpop.f32.mrb[0].mxu0
      %v4844 = vadd.f32 %v4683, %v4843
      %v4845 = vpop.f32.mrb[0].mxu0
      %v4846 = vpop.f32.mrb[0].mxu0
      %v4847 = vadd.f32 %v4686, %v4846
      %v4848 = vpop.f32.mrb[0].mxu0
      %4849 = vmatprep.mubr.bf16.mxu0 0
      %4850 = vmatmul.mubr.bf16.gmra.mrb[0].mxu0 %v2476
      %v4851 = vpop.f32.mrb[0].mxu0
      %v4852 = vadd.f32 %v4691, %v4851
      %v4853 = vpop.f32.mrb[0].mxu0
      %v4854 = vpop.f32.mrb[0].mxu0
      %v4855 = vadd.f32 %v4694, %v4854
      %v4856 = vpop.f32.mrb[0].mxu0
      %4857 = vmatprep.mubr.bf16.mxu0 0
      %4858 = vmatmul.mubr.bf16.gmra.mrb[0].mxu0 %v2508
      %v4859 = vpop.f32.mrb[0].mxu0
      %v4860 = vadd.f32 %v4699, %v4859
      %v4861 = vpop.f32.mrb[0].mxu0
      %v4862 = vpop.f32.mrb[0].mxu0
      %v4863 = vadd.f32 %v4702, %v4862
      %v4864 = vpop.f32.mrb[0].mxu0
      %4865 = vmatprep.mubr.bf16.mxu0 0
      %4866 = vmatmul.mubr.bf16.gmra.mrb[0].mxu0 %v2540
      %v4867 = vpop.f32.mrb[0].mxu0
      %v4868 = vadd.f32 %v4707, %v4867
      %v4869 = vpop.f32.mrb[0].mxu0
      %v4870 = vpop.f32.mrb[0].mxu0
      %v4871 = vadd.f32 %v4710, %v4870
      %v4872 = vpop.f32.mrb[0].mxu0
      %4873 = vmatprep.mubr.bf16.mxu0 0
      %4874 = vmatmul.mubr.bf16.gmra.mrb[0].mxu0 %v2572
      %v4875 = vpop.f32.mrb[0].mxu0
      %v4876 = vadd.f32 %v4715, %v4875
      %v4877 = vpop.f32.mrb[0].mxu0
      %v4878 = vpop.f32.mrb[0].mxu0
      %v4879 = vadd.f32 %v4718, %v4878
      %v4880 = vpop.f32.mrb[0].mxu0
      %4881 = vmatprep.mubr.bf16.mxu0 0
      %4882 = vmatmul.mubr.bf16.gmra.mrb[0].mxu0 %v2604
      %v4883 = vpop.f32.mrb[0].mxu0
      %v4884 = vadd.f32 %v4723, %v4883
      %v4885 = vpop.f32.mrb[0].mxu0
      %v4886 = vpop.f32.mrb[0].mxu0
      %v4887 = vadd.f32 %v4726, %v4886
      %v4888 = vpop.f32.mrb[0].mxu0
      %4889 = vmatprep.mubr.bf16.mxu0 0
      %4890 = vmatmul.mubr.bf16.gmra.mrb[0].mxu0 %v2636
      %v4891 = vpop.f32.mrb[0].mxu0
      %v4892 = vadd.f32 %v4731, %v4891
      %v4893 = vpop.f32.mrb[0].mxu0
      %v4894 = vpop.f32.mrb[0].mxu0
      %v4895 = vadd.f32 %v4734, %v4894
      %v4896 = vpop.f32.mrb[0].mxu0
      %4897 = vmatprep.mubr.bf16.mxu0 0
      %4898 = vmatmul.mubr.bf16.gmra.mrb[0].mxu0 %v2668
      %v4899 = vpop.f32.mrb[0].mxu0
      %v4900 = vadd.f32 %v4739, %v4899
      %v4901 = vpop.f32.mrb[0].mxu0
      %v4902 = vpop.f32.mrb[0].mxu0
      %v4903 = vadd.f32 %v4742, %v4902
      %v4904 = vpop.f32.mrb[0].mxu0
      %4905 = vmatprep.mubr.bf16.mxu0 0
      %4906 = vmatmul.mubr.bf16.gmra.mrb[0].mxu0 %v2700
      %v4907 = vpop.f32.mrb[0].mxu0
      %v4908 = vadd.f32 %v4747, %v4907
      %v4909 = vpop.f32.mrb[0].mxu0
      %v4910 = vpop.f32.mrb[0].mxu0
      %v4911 = vadd.f32 %v4750, %v4910
      %v4912 = vpop.f32.mrb[0].mxu0
      %4913 = vdwg.mxu0
      %s4914 = scalar_lea.vmem [#allocation2], 24
      %v4915 = vld [vmem:[%s4914] sm:$0xf]
      %v4916 = vld [vmem:[%s4914 + $0x4] sm:$0xf]
      %v4917 = vld [vmem:[%s4914 + $0x8] sm:$0x1]
      %v4918 = vld [vmem:[%s4914 + $0xc] sm:$0xf]
      %v4919 = vld [vmem:[%s4914 + $0x10] sm:$0xf]
      %v4920 = vld [vmem:[%s4914 + $0x14] sm:$0x1]
      %v4921 = vld [vmem:[%s4914 + $0x18] sm:$0xf]
      %v4922 = vld [vmem:[%s4914 + $0x1c] sm:$0xf]
      %v4923 = vld [vmem:[%s4914 + $0x20] sm:$0x1]
      %v4924 = vld [vmem:[%s4914 + $0x24] sm:$0xf]
      %v4925 = vld [vmem:[%s4914 + $0x28] sm:$0xf]
      %v4926 = vld [vmem:[%s4914 + $0x2c] sm:$0x1]
      %v4927 = vld [vmem:[%s4914 + $0x30] sm:$0xf]
      %v4928 = vld [vmem:[%s4914 + $0x34] sm:$0xf]
      %v4929 = vld [vmem:[%s4914 + $0x38] sm:$0x1]
      %v4930 = vld [vmem:[%s4914 + $0x3c] sm:$0xf]
      %v4931 = vld [vmem:[%s4914 + $0x40] sm:$0xf]
      %v4932 = vld [vmem:[%s4914 + $0x44] sm:$0x1]
      %v4933 = vld [vmem:[%s4914 + $0x48] sm:$0xf]
      %v4934 = vld [vmem:[%s4914 + $0x4c] sm:$0xf]
      %v4935 = vld [vmem:[%s4914 + $0x50] sm:$0x1]
      %v4936 = vld [vmem:[%s4914 + $0x54] sm:$0xf]
      %v4937 = vld [vmem:[%s4914 + $0x58] sm:$0xf]
      %v4938 = vld [vmem:[%s4914 + $0x5c] sm:$0x1]
      %v4939 = vld [vmem:[%s4914 + $0x60] sm:$0xf]
      %v4940 = vld [vmem:[%s4914 + $0x64] sm:$0xf]
      %v4941 = vld [vmem:[%s4914 + $0x68] sm:$0x1]
      %v4942 = vld [vmem:[%s4914 + $0x6c] sm:$0xf]
      %v4943 = vld [vmem:[%s4914 + $0x70] sm:$0xf]
      %v4944 = vld [vmem:[%s4914 + $0x74] sm:$0x1]
      %v4945 = vld [vmem:[%s4914 + $0x78] sm:$0xf]
      %v4946 = vld [vmem:[%s4914 + $0x7c] sm:$0xf]
      %v4947 = vld [vmem:[%s4914 + $0x80] sm:$0x1]
      %v4948 = vld [vmem:[%s4914 + $0x84] sm:$0xf]
      %v4949 = vld [vmem:[%s4914 + $0x88] sm:$0xf]
      %v4950 = vld [vmem:[%s4914 + $0x8c] sm:$0x1]
      %v4951 = vld [vmem:[%s4914 + $0x90] sm:$0xf]
      %v4952 = vld [vmem:[%s4914 + $0x94] sm:$0xf]
      %v4953 = vld [vmem:[%s4914 + $0x98] sm:$0x1]
      %v4954 = vld [vmem:[%s4914 + $0x9c] sm:$0xf]
      %v4955 = vld [vmem:[%s4914 + $0xa0] sm:$0xf]
      %v4956 = vld [vmem:[%s4914 + $0xa4] sm:$0x1]
      %v4957 = vld [vmem:[%s4914 + $0xa8] sm:$0xf]
      %v4958 = vld [vmem:[%s4914 + $0xac] sm:$0xf]
      %v4959 = vld [vmem:[%s4914 + $0xb0] sm:$0x1]
      %v4960 = vld [vmem:[%s4914 + $0xb4] sm:$0xf]
      %v4961 = vld [vmem:[%s4914 + $0xb8] sm:$0xf]
      %v4962 = vld [vmem:[%s4914 + $0xbc] sm:$0x1]
      %v4963 = vld [vmem:[%s4914] sm:$0xe]
      %v4964 = vld [vmem:[%s4914 + $0xc] sm:$0xe]
      %v4965 = vld [vmem:[%s4914 + $0x18] sm:$0xe]
      %v4966 = vld [vmem:[%s4914 + $0x24] sm:$0xe]
      %v4967 = vld [vmem:[%s4914 + $0x30] sm:$0xe]
      %v4968 = vld [vmem:[%s4914 + $0x3c] sm:$0xe]
      %v4969 = vld [vmem:[%s4914 + $0x48] sm:$0xe]
      %v4970 = vld [vmem:[%s4914 + $0x54] sm:$0xe]
      %v4971 = vld [vmem:[%s4914 + $0x60] sm:$0xe]
      %v4972 = vld [vmem:[%s4914 + $0x6c] sm:$0xe]
      %v4973 = vld [vmem:[%s4914 + $0x78] sm:$0xe]
      %v4974 = vld [vmem:[%s4914 + $0x84] sm:$0xe]
      %v4975 = vld [vmem:[%s4914 + $0x90] sm:$0xe]
      %v4976 = vld [vmem:[%s4914 + $0x9c] sm:$0xe]
      %v4977 = vld [vmem:[%s4914 + $0xa8] sm:$0xe]
      %v4978 = vld [vmem:[%s4914 + $0xb4] sm:$0xe]
      %v4979 = vld [vmem:[%s4914 + $0x8] sm:$0x3]
      %v4980 = vld [vmem:[%s4914 + $0x14] sm:$0x3]
      %v4981 = vld [vmem:[%s4914 + $0x20] sm:$0x3]
      %v4982 = vld [vmem:[%s4914 + $0x2c] sm:$0x3]
      %v4983 = vld [vmem:[%s4914 + $0x38] sm:$0x3]
      %v4984 = vld [vmem:[%s4914 + $0x44] sm:$0x3]
      %v4985 = vld [vmem:[%s4914 + $0x50] sm:$0x3]
      %v4986 = vld [vmem:[%s4914 + $0x5c] sm:$0x3]
      %v4987 = vld [vmem:[%s4914 + $0x68] sm:$0x3]
      %v4988 = vld [vmem:[%s4914 + $0x74] sm:$0x3]
      %v4989 = vld [vmem:[%s4914 + $0x80] sm:$0x3]
      %v4990 = vld [vmem:[%s4914 + $0x8c] sm:$0x3]
      %v4991 = vld [vmem:[%s4914 + $0x98] sm:$0x3]
      %v4992 = vld [vmem:[%s4914 + $0xa4] sm:$0x3]
      %v4993 = vld [vmem:[%s4914 + $0xb0] sm:$0x3]
      %v4994 = vld [vmem:[%s4914 + $0xbc] sm:$0x3]
      %v5043 = vunpack.c.l.b16 %v4915
      %v5044 = vunpack.c.l.b16 %v4916
      %v5045 = vunpack.c.l.b16 %v4917
      %v5046 = vunpack.c.l.b16 %v4918
      %v5047 = vunpack.c.l.b16 %v4919
      %v5048 = vunpack.c.l.b16 %v4920
      %v5049 = vunpack.c.l.b16 %v4921
      %v5050 = vunpack.c.l.b16 %v4922
      %v5051 = vunpack.c.l.b16 %v4923
      %v5052 = vunpack.c.l.b16 %v4924
      %v5053 = vunpack.c.l.b16 %v4925
      %v5054 = vunpack.c.l.b16 %v4926
      %v5055 = vunpack.c.l.b16 %v4927
      %v5056 = vunpack.c.l.b16 %v4928
      %v5057 = vunpack.c.l.b16 %v4929
      %v5058 = vunpack.c.l.b16 %v4930
      %v5059 = vunpack.c.l.b16 %v4931
      %v5060 = vunpack.c.l.b16 %v4932
      %v5061 = vunpack.c.l.b16 %v4933
      %v5062 = vunpack.c.l.b16 %v4934
      %v5063 = vunpack.c.l.b16 %v4935
      %v5064 = vunpack.c.l.b16 %v4936
      %v5065 = vunpack.c.l.b16 %v4937
      %v5066 = vunpack.c.l.b16 %v4938
      %v5067 = vunpack.c.l.b16 %v4939
      %v5068 = vunpack.c.l.b16 %v4940
      %v5069 = vunpack.c.l.b16 %v4941
      %v5070 = vunpack.c.l.b16 %v4942
      %v5071 = vunpack.c.l.b16 %v4943
      %v5072 = vunpack.c.l.b16 %v4944
      %v5073 = vunpack.c.l.b16 %v4945
      %v5074 = vunpack.c.l.b16 %v4946
      %v5075 = vunpack.c.l.b16 %v4947
      %v5076 = vunpack.c.l.b16 %v4948
      %v5077 = vunpack.c.l.b16 %v4949
      %v5078 = vunpack.c.l.b16 %v4950
      %v5079 = vunpack.c.l.b16 %v4951
      %v5080 = vunpack.c.l.b16 %v4952
      %v5081 = vunpack.c.l.b16 %v4953
      %v5082 = vunpack.c.l.b16 %v4954
      %v5083 = vunpack.c.l.b16 %v4955
      %v5084 = vunpack.c.l.b16 %v4956
      %v5085 = vunpack.c.l.b16 %v4957
      %v5086 = vunpack.c.l.b16 %v4958
      %v5087 = vunpack.c.l.b16 %v4959
      %v5088 = vunpack.c.l.b16 %v4960
      %v5089 = vunpack.c.l.b16 %v4961
      %v5090 = vunpack.c.l.b16 %v4962
      %v5091 = vpack.c.b16 %v5044, %v5043
      %v5092 = vpack.c.b16 %v5045, %v5045
      %v5093 = vpack.c.b16 %v5047, %v5046
      %v5094 = vpack.c.b16 %v5048, %v5048
      %v5095 = vpack.c.b16 %v5050, %v5049
      %v5096 = vpack.c.b16 %v5051, %v5051
      %v5097 = vpack.c.b16 %v5053, %v5052
      %v5098 = vpack.c.b16 %v5054, %v5054
      %v5099 = vpack.c.b16 %v5056, %v5055
      %v5100 = vpack.c.b16 %v5057, %v5057
      %v5101 = vpack.c.b16 %v5059, %v5058
      %v5102 = vpack.c.b16 %v5060, %v5060
      %v5103 = vpack.c.b16 %v5062, %v5061
      %v5104 = vpack.c.b16 %v5063, %v5063
      %v5105 = vpack.c.b16 %v5065, %v5064
      %v5106 = vpack.c.b16 %v5066, %v5066
      %v5107 = vpack.c.b16 %v5068, %v5067
      %v5108 = vpack.c.b16 %v5069, %v5069
      %v5109 = vpack.c.b16 %v5071, %v5070
      %v5110 = vpack.c.b16 %v5072, %v5072
      %v5111 = vpack.c.b16 %v5074, %v5073
      %v5112 = vpack.c.b16 %v5075, %v5075
      %v5113 = vpack.c.b16 %v5077, %v5076
      %v5114 = vpack.c.b16 %v5078, %v5078
      %v5115 = vpack.c.b16 %v5080, %v5079
      %v5116 = vpack.c.b16 %v5081, %v5081
      %v5117 = vpack.c.b16 %v5083, %v5082
      %v5118 = vpack.c.b16 %v5084, %v5084
      %v5119 = vpack.c.b16 %v5086, %v5085
      %v5120 = vpack.c.b16 %v5087, %v5087
      %v5121 = vpack.c.b16 %v5089, %v5088
      %v5122 = vpack.c.b16 %v5090, %v5090
      %v5139 = vunpack.c.l.b16 %v4963
      %v5140 = vunpack.c.l.b16 %v4964
      %v5141 = vunpack.c.l.b16 %v4965
      %v5142 = vunpack.c.l.b16 %v4966
      %v5143 = vunpack.c.l.b16 %v4967
      %v5144 = vunpack.c.l.b16 %v4968
      %v5145 = vunpack.c.l.b16 %v4969
      %v5146 = vunpack.c.l.b16 %v4970
      %v5147 = vunpack.c.l.b16 %v4971
      %v5148 = vunpack.c.l.b16 %v4972
      %v5149 = vunpack.c.l.b16 %v4973
      %v5150 = vunpack.c.l.b16 %v4974
      %v5151 = vunpack.c.l.b16 %v4975
      %v5152 = vunpack.c.l.b16 %v4976
      %v5153 = vunpack.c.l.b16 %v4977
      %v5154 = vunpack.c.l.b16 %v4978
      %v5155 = vpack.c.b16 %v5044, %v5139
      %v5156 = vpack.c.b16 %v5047, %v5140
      %v5157 = vpack.c.b16 %v5050, %v5141
      %v5158 = vpack.c.b16 %v5053, %v5142
      %v5159 = vpack.c.b16 %v5056, %v5143
      %v5160 = vpack.c.b16 %v5059, %v5144
      %v5161 = vpack.c.b16 %v5062, %v5145
      %v5162 = vpack.c.b16 %v5065, %v5146
      %v5163 = vpack.c.b16 %v5068, %v5147
      %v5164 = vpack.c.b16 %v5071, %v5148
      %v5165 = vpack.c.b16 %v5074, %v5149
      %v5166 = vpack.c.b16 %v5077, %v5150
      %v5167 = vpack.c.b16 %v5080, %v5151
      %v5168 = vpack.c.b16 %v5083, %v5152
      %v5169 = vpack.c.b16 %v5086, %v5153
      %v5170 = vpack.c.b16 %v5089, %v5154
      %v5172 = vshrl.u32 %v5155, 16
      %v5174 = vshll.u32 %v5155, 16
      %v5176 = vrot.slane %v5174, 1
      %v5177 = vor.u32 %v5172, %v5176
      %v5179 = vshll.u32 %v5092, 16
      %v5181 = vrot.slane %v5179, 1
      %v5182 = vsel %vm1867, %v5177, %v5181
      %v5183 = vshrl.u32 %v5092, 16
      %v5186 = vshrl.u32 %v5156, 16
      %v5188 = vshll.u32 %v5156, 16
      %v5190 = vrot.slane %v5188, 1
      %v5191 = vor.u32 %v5186, %v5190
      %v5193 = vshll.u32 %v5094, 16
      %v5195 = vrot.slane %v5193, 1
      %v5196 = vsel %vm1867, %v5191, %v5195
      %v5197 = vshrl.u32 %v5094, 16
      %v5200 = vshrl.u32 %v5157, 16
      %v5202 = vshll.u32 %v5157, 16
      %v5204 = vrot.slane %v5202, 1
      %v5205 = vor.u32 %v5200, %v5204
      %v5207 = vshll.u32 %v5096, 16
      %v5209 = vrot.slane %v5207, 1
      %v5210 = vsel %vm1867, %v5205, %v5209
      %v5211 = vshrl.u32 %v5096, 16
      %v5214 = vshrl.u32 %v5158, 16
      %v5216 = vshll.u32 %v5158, 16
      %v5218 = vrot.slane %v5216, 1
      %v5219 = vor.u32 %v5214, %v5218
      %v5221 = vshll.u32 %v5098, 16
      %v5223 = vrot.slane %v5221, 1
      %v5224 = vsel %vm1867, %v5219, %v5223
      %v5225 = vshrl.u32 %v5098, 16
      %v5228 = vshrl.u32 %v5159, 16
      %v5230 = vshll.u32 %v5159, 16
      %v5232 = vrot.slane %v5230, 1
      %v5233 = vor.u32 %v5228, %v5232
      %v5235 = vshll.u32 %v5100, 16
      %v5237 = vrot.slane %v5235, 1
      %v5238 = vsel %vm1867, %v5233, %v5237
      %v5239 = vshrl.u32 %v5100, 16
      %v5242 = vshrl.u32 %v5160, 16
      %v5244 = vshll.u32 %v5160, 16
      %v5246 = vrot.slane %v5244, 1
      %v5247 = vor.u32 %v5242, %v5246
      %v5249 = vshll.u32 %v5102, 16
      %v5251 = vrot.slane %v5249, 1
      %v5252 = vsel %vm1867, %v5247, %v5251
      %v5253 = vshrl.u32 %v5102, 16
      %v5256 = vshrl.u32 %v5161, 16
      %v5258 = vshll.u32 %v5161, 16
      %v5260 = vrot.slane %v5258, 1
      %v5261 = vor.u32 %v5256, %v5260
      %v5263 = vshll.u32 %v5104, 16
      %v5265 = vrot.slane %v5263, 1
      %v5266 = vsel %vm1867, %v5261, %v5265
      %v5267 = vshrl.u32 %v5104, 16
      %v5270 = vshrl.u32 %v5162, 16
      %v5272 = vshll.u32 %v5162, 16
      %v5274 = vrot.slane %v5272, 1
      %v5275 = vor.u32 %v5270, %v5274
      %v5277 = vshll.u32 %v5106, 16
      %v5279 = vrot.slane %v5277, 1
      %v5280 = vsel %vm1867, %v5275, %v5279
      %v5281 = vshrl.u32 %v5106, 16
      %v5284 = vshrl.u32 %v5163, 16
      %v5286 = vshll.u32 %v5163, 16
      %v5288 = vrot.slane %v5286, 1
      %v5289 = vor.u32 %v5284, %v5288
      %v5291 = vshll.u32 %v5108, 16
      %v5293 = vrot.slane %v5291, 1
      %v5294 = vsel %vm1867, %v5289, %v5293
      %v5295 = vshrl.u32 %v5108, 16
      %v5298 = vshrl.u32 %v5164, 16
      %v5300 = vshll.u32 %v5164, 16
      %v5302 = vrot.slane %v5300, 1
      %v5303 = vor.u32 %v5298, %v5302
      %v5305 = vshll.u32 %v5110, 16
      %v5307 = vrot.slane %v5305, 1
      %v5308 = vsel %vm1867, %v5303, %v5307
      %v5309 = vshrl.u32 %v5110, 16
      %v5312 = vshrl.u32 %v5165, 16
      %v5314 = vshll.u32 %v5165, 16
      %v5316 = vrot.slane %v5314, 1
      %v5317 = vor.u32 %v5312, %v5316
      %v5319 = vshll.u32 %v5112, 16
      %v5321 = vrot.slane %v5319, 1
      %v5322 = vsel %vm1867, %v5317, %v5321
      %v5323 = vshrl.u32 %v5112, 16
      %v5326 = vshrl.u32 %v5166, 16
      %v5328 = vshll.u32 %v5166, 16
      %v5330 = vrot.slane %v5328, 1
      %v5331 = vor.u32 %v5326, %v5330
      %v5333 = vshll.u32 %v5114, 16
      %v5335 = vrot.slane %v5333, 1
      %v5336 = vsel %vm1867, %v5331, %v5335
      %v5337 = vshrl.u32 %v5114, 16
      %v5340 = vshrl.u32 %v5167, 16
      %v5342 = vshll.u32 %v5167, 16
      %v5344 = vrot.slane %v5342, 1
      %v5345 = vor.u32 %v5340, %v5344
      %v5347 = vshll.u32 %v5116, 16
      %v5349 = vrot.slane %v5347, 1
      %v5350 = vsel %vm1867, %v5345, %v5349
      %v5351 = vshrl.u32 %v5116, 16
      %v5354 = vshrl.u32 %v5168, 16
      %v5356 = vshll.u32 %v5168, 16
      %v5358 = vrot.slane %v5356, 1
      %v5359 = vor.u32 %v5354, %v5358
      %v5361 = vshll.u32 %v5118, 16
      %v5363 = vrot.slane %v5361, 1
      %v5364 = vsel %vm1867, %v5359, %v5363
      %v5365 = vshrl.u32 %v5118, 16
      %v5368 = vshrl.u32 %v5169, 16
      %v5370 = vshll.u32 %v5169, 16
      %v5372 = vrot.slane %v5370, 1
      %v5373 = vor.u32 %v5368, %v5372
      %v5375 = vshll.u32 %v5120, 16
      %v5377 = vrot.slane %v5375, 1
      %v5378 = vsel %vm1867, %v5373, %v5377
      %v5379 = vshrl.u32 %v5120, 16
      %v5382 = vshrl.u32 %v5170, 16
      %v5384 = vshll.u32 %v5170, 16
      %v5386 = vrot.slane %v5384, 1
      %v5387 = vor.u32 %v5382, %v5386
      %v5389 = vshll.u32 %v5122, 16
      %v5391 = vrot.slane %v5389, 1
      %v5392 = vsel %vm1867, %v5387, %v5391
      %v5393 = vshrl.u32 %v5122, 16
      %v5411 = vunpack.c.l.b16 %v4979
      %v5412 = vunpack.c.l.b16 %v4980
      %v5413 = vunpack.c.l.b16 %v4981
      %v5414 = vunpack.c.l.b16 %v4982
      %v5415 = vunpack.c.l.b16 %v4983
      %v5416 = vunpack.c.l.b16 %v4984
      %v5417 = vunpack.c.l.b16 %v4985
      %v5418 = vunpack.c.l.b16 %v4986
      %v5419 = vunpack.c.l.b16 %v4987
      %v5420 = vunpack.c.l.b16 %v4988
      %v5421 = vunpack.c.l.b16 %v4989
      %v5422 = vunpack.c.l.b16 %v4990
      %v5423 = vunpack.c.l.b16 %v4991
      %v5424 = vunpack.c.l.b16 %v4992
      %v5425 = vunpack.c.l.b16 %v4993
      %v5426 = vunpack.c.l.b16 %v4994
      %v5427 = vpack.c.b16 %v5411, %v5411
      %v5428 = vpack.c.b16 %v5412, %v5412
      %v5429 = vpack.c.b16 %v5413, %v5413
      %v5430 = vpack.c.b16 %v5414, %v5414
      %v5431 = vpack.c.b16 %v5415, %v5415
      %v5432 = vpack.c.b16 %v5416, %v5416
      %v5433 = vpack.c.b16 %v5417, %v5417
      %v5434 = vpack.c.b16 %v5418, %v5418
      %v5435 = vpack.c.b16 %v5419, %v5419
      %v5436 = vpack.c.b16 %v5420, %v5420
      %v5437 = vpack.c.b16 %v5421, %v5421
      %v5438 = vpack.c.b16 %v5422, %v5422
      %v5439 = vpack.c.b16 %v5423, %v5423
      %v5440 = vpack.c.b16 %v5424, %v5424
      %v5441 = vpack.c.b16 %v5425, %v5425
      %v5442 = vpack.c.b16 %v5426, %v5426
      %v5443 = vrot.slane %v5155, 1
      %v5444 = vrot.slane %v5427, 1
      %v5445 = vsel %vm2140, %v5443, %v5444
      %v5446 = vrot.slane %v5156, 1
      %v5447 = vrot.slane %v5428, 1
      %v5448 = vsel %vm2140, %v5446, %v5447
      %v5449 = vrot.slane %v5157, 1
      %v5450 = vrot.slane %v5429, 1
      %v5451 = vsel %vm2140, %v5449, %v5450
      %v5452 = vrot.slane %v5158, 1
      %v5453 = vrot.slane %v5430, 1
      %v5454 = vsel %vm2140, %v5452, %v5453
      %v5455 = vrot.slane %v5159, 1
      %v5456 = vrot.slane %v5431, 1
      %v5457 = vsel %vm2140, %v5455, %v5456
      %v5458 = vrot.slane %v5160, 1
      %v5459 = vrot.slane %v5432, 1
      %v5460 = vsel %vm2140, %v5458, %v5459
      %v5461 = vrot.slane %v5161, 1
      %v5462 = vrot.slane %v5433, 1
      %v5463 = vsel %vm2140, %v5461, %v5462
      %v5464 = vrot.slane %v5162, 1
      %v5465 = vrot.slane %v5434, 1
      %v5466 = vsel %vm2140, %v5464, %v5465
      %v5467 = vrot.slane %v5163, 1
      %v5468 = vrot.slane %v5435, 1
      %v5469 = vsel %vm2140, %v5467, %v5468
      %v5470 = vrot.slane %v5164, 1
      %v5471 = vrot.slane %v5436, 1
      %v5472 = vsel %vm2140, %v5470, %v5471
      %v5473 = vrot.slane %v5165, 1
      %v5474 = vrot.slane %v5437, 1
      %v5475 = vsel %vm2140, %v5473, %v5474
      %v5476 = vrot.slane %v5166, 1
      %v5477 = vrot.slane %v5438, 1
      %v5478 = vsel %vm2140, %v5476, %v5477
      %v5479 = vrot.slane %v5167, 1
      %v5480 = vrot.slane %v5439, 1
      %v5481 = vsel %vm2140, %v5479, %v5480
      %v5482 = vrot.slane %v5168, 1
      %v5483 = vrot.slane %v5440, 1
      %v5484 = vsel %vm2140, %v5482, %v5483
      %v5485 = vrot.slane %v5169, 1
      %v5486 = vrot.slane %v5441, 1
      %v5487 = vsel %vm2140, %v5485, %v5486
      %v5488 = vrot.slane %v5170, 1
      %v5489 = vrot.slane %v5442, 1
      %v5490 = vsel %vm2140, %v5488, %v5489
      %v5492 = vshrl.u32 %v5091, 16
      %v5494 = vshll.u32 %v5091, 16
      %v5496 = vrot.slane %v5494, 1
      %v5497 = vor.u32 %v5492, %v5496
      %v5498 = vsel %vm1867, %v5497, %v5181
      %v5500 = vshrl.u32 %v5182, 16
      %v5502 = vshll.u32 %v5182, 16
      %v5504 = vrot.slane %v5502, 1
      %v5505 = vor.u32 %v5500, %v5504
      %v5507 = vshll.u32 %v5183, 16
      %v5509 = vrot.slane %v5507, 1
      %v5510 = vsel %vm1867, %v5505, %v5509
      %v5512 = vshrl.u32 %v5445, 16
      %v5514 = vshll.u32 %v5445, 16
      %v5516 = vrot.slane %v5514, 1
      %v5517 = vor.u32 %v5512, %v5516
      %v5519 = vshll.u32 %v5444, 16
      %v5521 = vrot.slane %v5519, 1
      %v5522 = vsel %vm1867, %v5517, %v5521
      %v5524 = vshrl.u32 %v5093, 16
      %v5526 = vshll.u32 %v5093, 16
      %v5528 = vrot.slane %v5526, 1
      %v5529 = vor.u32 %v5524, %v5528
      %v5530 = vsel %vm1867, %v5529, %v5195
      %v5532 = vshrl.u32 %v5196, 16
      %v5534 = vshll.u32 %v5196, 16
      %v5536 = vrot.slane %v5534, 1
      %v5537 = vor.u32 %v5532, %v5536
      %v5539 = vshll.u32 %v5197, 16
      %v5541 = vrot.slane %v5539, 1
      %v5542 = vsel %vm1867, %v5537, %v5541
      %v5544 = vshrl.u32 %v5448, 16
      %v5546 = vshll.u32 %v5448, 16
      %v5548 = vrot.slane %v5546, 1
      %v5549 = vor.u32 %v5544, %v5548
      %v5551 = vshll.u32 %v5447, 16
      %v5553 = vrot.slane %v5551, 1
      %v5554 = vsel %vm1867, %v5549, %v5553
      %v5556 = vshrl.u32 %v5095, 16
      %v5558 = vshll.u32 %v5095, 16
      %v5560 = vrot.slane %v5558, 1
      %v5561 = vor.u32 %v5556, %v5560
      %v5562 = vsel %vm1867, %v5561, %v5209
      %v5564 = vshrl.u32 %v5210, 16
      %v5566 = vshll.u32 %v5210, 16
      %v5568 = vrot.slane %v5566, 1
      %v5569 = vor.u32 %v5564, %v5568
      %v5571 = vshll.u32 %v5211, 16
      %v5573 = vrot.slane %v5571, 1
      %v5574 = vsel %vm1867, %v5569, %v5573
      %v5576 = vshrl.u32 %v5451, 16
      %v5578 = vshll.u32 %v5451, 16
      %v5580 = vrot.slane %v5578, 1
      %v5581 = vor.u32 %v5576, %v5580
      %v5583 = vshll.u32 %v5450, 16
      %v5585 = vrot.slane %v5583, 1
      %v5586 = vsel %vm1867, %v5581, %v5585
      %v5588 = vshrl.u32 %v5097, 16
      %v5590 = vshll.u32 %v5097, 16
      %v5592 = vrot.slane %v5590, 1
      %v5593 = vor.u32 %v5588, %v5592
      %v5594 = vsel %vm1867, %v5593, %v5223
      %v5596 = vshrl.u32 %v5224, 16
      %v5598 = vshll.u32 %v5224, 16
      %v5600 = vrot.slane %v5598, 1
      %v5601 = vor.u32 %v5596, %v5600
      %v5603 = vshll.u32 %v5225, 16
      %v5605 = vrot.slane %v5603, 1
      %v5606 = vsel %vm1867, %v5601, %v5605
      %v5608 = vshrl.u32 %v5454, 16
      %v5610 = vshll.u32 %v5454, 16
      %v5612 = vrot.slane %v5610, 1
      %v5613 = vor.u32 %v5608, %v5612
      %v5615 = vshll.u32 %v5453, 16
      %v5617 = vrot.slane %v5615, 1
      %v5618 = vsel %vm1867, %v5613, %v5617
      %v5620 = vshrl.u32 %v5099, 16
      %v5622 = vshll.u32 %v5099, 16
      %v5624 = vrot.slane %v5622, 1
      %v5625 = vor.u32 %v5620, %v5624
      %v5626 = vsel %vm1867, %v5625, %v5237
      %v5628 = vshrl.u32 %v5238, 16
      %v5630 = vshll.u32 %v5238, 16
      %v5632 = vrot.slane %v5630, 1
      %v5633 = vor.u32 %v5628, %v5632
      %v5635 = vshll.u32 %v5239, 16
      %v5637 = vrot.slane %v5635, 1
      %v5638 = vsel %vm1867, %v5633, %v5637
      %v5640 = vshrl.u32 %v5457, 16
      %v5642 = vshll.u32 %v5457, 16
      %v5644 = vrot.slane %v5642, 1
      %v5645 = vor.u32 %v5640, %v5644
      %v5647 = vshll.u32 %v5456, 16
      %v5649 = vrot.slane %v5647, 1
      %v5650 = vsel %vm1867, %v5645, %v5649
      %v5652 = vshrl.u32 %v5101, 16
      %v5654 = vshll.u32 %v5101, 16
      %v5656 = vrot.slane %v5654, 1
      %v5657 = vor.u32 %v5652, %v5656
      %v5658 = vsel %vm1867, %v5657, %v5251
      %v5660 = vshrl.u32 %v5252, 16
      %v5662 = vshll.u32 %v5252, 16
      %v5664 = vrot.slane %v5662, 1
      %v5665 = vor.u32 %v5660, %v5664
      %v5667 = vshll.u32 %v5253, 16
      %v5669 = vrot.slane %v5667, 1
      %v5670 = vsel %vm1867, %v5665, %v5669
      %v5672 = vshrl.u32 %v5460, 16
      %v5674 = vshll.u32 %v5460, 16
      %v5676 = vrot.slane %v5674, 1
      %v5677 = vor.u32 %v5672, %v5676
      %v5679 = vshll.u32 %v5459, 16
      %v5681 = vrot.slane %v5679, 1
      %v5682 = vsel %vm1867, %v5677, %v5681
      %v5684 = vshrl.u32 %v5103, 16
      %v5686 = vshll.u32 %v5103, 16
      %v5688 = vrot.slane %v5686, 1
      %v5689 = vor.u32 %v5684, %v5688
      %v5690 = vsel %vm1867, %v5689, %v5265
      %v5692 = vshrl.u32 %v5266, 16
      %v5694 = vshll.u32 %v5266, 16
      %v5696 = vrot.slane %v5694, 1
      %v5697 = vor.u32 %v5692, %v5696
      %v5699 = vshll.u32 %v5267, 16
      %v5701 = vrot.slane %v5699, 1
      %v5702 = vsel %vm1867, %v5697, %v5701
      %v5704 = vshrl.u32 %v5463, 16
      %v5706 = vshll.u32 %v5463, 16
      %v5708 = vrot.slane %v5706, 1
      %v5709 = vor.u32 %v5704, %v5708
      %v5711 = vshll.u32 %v5462, 16
      %v5713 = vrot.slane %v5711, 1
      %v5714 = vsel %vm1867, %v5709, %v5713
      %v5716 = vshrl.u32 %v5105, 16
      %v5718 = vshll.u32 %v5105, 16
      %v5720 = vrot.slane %v5718, 1
      %v5721 = vor.u32 %v5716, %v5720
      %v5722 = vsel %vm1867, %v5721, %v5279
      %v5724 = vshrl.u32 %v5280, 16
      %v5726 = vshll.u32 %v5280, 16
      %v5728 = vrot.slane %v5726, 1
      %v5729 = vor.u32 %v5724, %v5728
      %v5731 = vshll.u32 %v5281, 16
      %v5733 = vrot.slane %v5731, 1
      %v5734 = vsel %vm1867, %v5729, %v5733
      %v5736 = vshrl.u32 %v5466, 16
      %v5738 = vshll.u32 %v5466, 16
      %v5740 = vrot.slane %v5738, 1
      %v5741 = vor.u32 %v5736, %v5740
      %v5743 = vshll.u32 %v5465, 16
      %v5745 = vrot.slane %v5743, 1
      %v5746 = vsel %vm1867, %v5741, %v5745
      %v5748 = vshrl.u32 %v5107, 16
      %v5750 = vshll.u32 %v5107, 16
      %v5752 = vrot.slane %v5750, 1
      %v5753 = vor.u32 %v5748, %v5752
      %v5754 = vsel %vm1867, %v5753, %v5293
      %v5756 = vshrl.u32 %v5294, 16
      %v5758 = vshll.u32 %v5294, 16
      %v5760 = vrot.slane %v5758, 1
      %v5761 = vor.u32 %v5756, %v5760
      %v5763 = vshll.u32 %v5295, 16
      %v5765 = vrot.slane %v5763, 1
      %v5766 = vsel %vm1867, %v5761, %v5765
      %v5768 = vshrl.u32 %v5469, 16
      %v5770 = vshll.u32 %v5469, 16
      %v5772 = vrot.slane %v5770, 1
      %v5773 = vor.u32 %v5768, %v5772
      %v5775 = vshll.u32 %v5468, 16
      %v5777 = vrot.slane %v5775, 1
      %v5778 = vsel %vm1867, %v5773, %v5777
      %v5780 = vshrl.u32 %v5109, 16
      %v5782 = vshll.u32 %v5109, 16
      %v5784 = vrot.slane %v5782, 1
      %v5785 = vor.u32 %v5780, %v5784
      %v5786 = vsel %vm1867, %v5785, %v5307
      %v5788 = vshrl.u32 %v5308, 16
      %v5790 = vshll.u32 %v5308, 16
      %v5792 = vrot.slane %v5790, 1
      %v5793 = vor.u32 %v5788, %v5792
      %v5795 = vshll.u32 %v5309, 16
      %v5797 = vrot.slane %v5795, 1
      %v5798 = vsel %vm1867, %v5793, %v5797
      %v5800 = vshrl.u32 %v5472, 16
      %v5802 = vshll.u32 %v5472, 16
      %v5804 = vrot.slane %v5802, 1
      %v5805 = vor.u32 %v5800, %v5804
      %v5807 = vshll.u32 %v5471, 16
      %v5809 = vrot.slane %v5807, 1
      %v5810 = vsel %vm1867, %v5805, %v5809
      %v5812 = vshrl.u32 %v5111, 16
      %v5814 = vshll.u32 %v5111, 16
      %v5816 = vrot.slane %v5814, 1
      %v5817 = vor.u32 %v5812, %v5816
      %v5818 = vsel %vm1867, %v5817, %v5321
      %v5820 = vshrl.u32 %v5322, 16
      %v5822 = vshll.u32 %v5322, 16
      %v5824 = vrot.slane %v5822, 1
      %v5825 = vor.u32 %v5820, %v5824
      %v5827 = vshll.u32 %v5323, 16
      %v5829 = vrot.slane %v5827, 1
      %v5830 = vsel %vm1867, %v5825, %v5829
      %v5832 = vshrl.u32 %v5475, 16
      %v5834 = vshll.u32 %v5475, 16
      %v5836 = vrot.slane %v5834, 1
      %v5837 = vor.u32 %v5832, %v5836
      %v5839 = vshll.u32 %v5474, 16
      %v5841 = vrot.slane %v5839, 1
      %v5842 = vsel %vm1867, %v5837, %v5841
      %v5844 = vshrl.u32 %v5113, 16
      %v5846 = vshll.u32 %v5113, 16
      %v5848 = vrot.slane %v5846, 1
      %v5849 = vor.u32 %v5844, %v5848
      %v5850 = vsel %vm1867, %v5849, %v5335
      %v5852 = vshrl.u32 %v5336, 16
      %v5854 = vshll.u32 %v5336, 16
      %v5856 = vrot.slane %v5854, 1
      %v5857 = vor.u32 %v5852, %v5856
      %v5859 = vshll.u32 %v5337, 16
      %v5861 = vrot.slane %v5859, 1
      %v5862 = vsel %vm1867, %v5857, %v5861
      %v5864 = vshrl.u32 %v5478, 16
      %v5866 = vshll.u32 %v5478, 16
      %v5868 = vrot.slane %v5866, 1
      %v5869 = vor.u32 %v5864, %v5868
      %v5871 = vshll.u32 %v5477, 16
      %v5873 = vrot.slane %v5871, 1
      %v5874 = vsel %vm1867, %v5869, %v5873
      %v5876 = vshrl.u32 %v5115, 16
      %v5878 = vshll.u32 %v5115, 16
      %v5880 = vrot.slane %v5878, 1
      %v5881 = vor.u32 %v5876, %v5880
      %v5882 = vsel %vm1867, %v5881, %v5349
      %v5884 = vshrl.u32 %v5350, 16
      %v5886 = vshll.u32 %v5350, 16
      %v5888 = vrot.slane %v5886, 1
      %v5889 = vor.u32 %v5884, %v5888
      %v5891 = vshll.u32 %v5351, 16
      %v5893 = vrot.slane %v5891, 1
      %v5894 = vsel %vm1867, %v5889, %v5893
      %v5896 = vshrl.u32 %v5481, 16
      %v5898 = vshll.u32 %v5481, 16
      %v5900 = vrot.slane %v5898, 1
      %v5901 = vor.u32 %v5896, %v5900
      %v5903 = vshll.u32 %v5480, 16
      %v5905 = vrot.slane %v5903, 1
      %v5906 = vsel %vm1867, %v5901, %v5905
      %v5908 = vshrl.u32 %v5117, 16
      %v5910 = vshll.u32 %v5117, 16
      %v5912 = vrot.slane %v5910, 1
      %v5913 = vor.u32 %v5908, %v5912
      %v5914 = vsel %vm1867, %v5913, %v5363
      %v5916 = vshrl.u32 %v5364, 16
      %v5918 = vshll.u32 %v5364, 16
      %v5920 = vrot.slane %v5918, 1
      %v5921 = vor.u32 %v5916, %v5920
      %v5923 = vshll.u32 %v5365, 16
      %v5925 = vrot.slane %v5923, 1
      %v5926 = vsel %vm1867, %v5921, %v5925
      %v5928 = vshrl.u32 %v5484, 16
      %v5930 = vshll.u32 %v5484, 16
      %v5932 = vrot.slane %v5930, 1
      %v5933 = vor.u32 %v5928, %v5932
      %v5935 = vshll.u32 %v5483, 16
      %v5937 = vrot.slane %v5935, 1
      %v5938 = vsel %vm1867, %v5933, %v5937
      %v5940 = vshrl.u32 %v5119, 16
      %v5942 = vshll.u32 %v5119, 16
      %v5944 = vrot.slane %v5942, 1
      %v5945 = vor.u32 %v5940, %v5944
      %v5946 = vsel %vm1867, %v5945, %v5377
      %v5948 = vshrl.u32 %v5378, 16
      %v5950 = vshll.u32 %v5378, 16
      %v5952 = vrot.slane %v5950, 1
      %v5953 = vor.u32 %v5948, %v5952
      %v5955 = vshll.u32 %v5379, 16
      %v5957 = vrot.slane %v5955, 1
      %v5958 = vsel %vm1867, %v5953, %v5957
      %v5960 = vshrl.u32 %v5487, 16
      %v5962 = vshll.u32 %v5487, 16
      %v5964 = vrot.slane %v5962, 1
      %v5965 = vor.u32 %v5960, %v5964
      %v5967 = vshll.u32 %v5486, 16
      %v5969 = vrot.slane %v5967, 1
      %v5970 = vsel %vm1867, %v5965, %v5969
      %v5972 = vshrl.u32 %v5121, 16
      %v5974 = vshll.u32 %v5121, 16
      %v5976 = vrot.slane %v5974, 1
      %v5977 = vor.u32 %v5972, %v5976
      %v5978 = vsel %vm1867, %v5977, %v5391
      %v5980 = vshrl.u32 %v5392, 16
      %v5982 = vshll.u32 %v5392, 16
      %v5984 = vrot.slane %v5982, 1
      %v5985 = vor.u32 %v5980, %v5984
      %v5987 = vshll.u32 %v5393, 16
      %v5989 = vrot.slane %v5987, 1
      %v5990 = vsel %vm1867, %v5985, %v5989
      %v5992 = vshrl.u32 %v5490, 16
      %v5994 = vshll.u32 %v5490, 16
      %v5996 = vrot.slane %v5994, 1
      %v5997 = vor.u32 %v5992, %v5996
      %v5999 = vshll.u32 %v5489, 16
      %v6001 = vrot.slane %v5999, 1
      %v6002 = vsel %vm1867, %v5997, %v6001
      %s6051 = scalar_lea.vmem %s3, 384
      %v6052 = vld [vmem:[%s6051] sm:$0xf]
      %v6053 = vld [vmem:[%s6051 + $0x4] sm:$0xf]
      %v6054 = vld [vmem:[%s6051 + $0x8] sm:$0xf]
      %v6055 = vld [vmem:[%s6051 + $0xc] sm:$0xf]
      %v6056 = vld [vmem:[%s6051 + $0x10] sm:$0xf]
      %v6057 = vld [vmem:[%s6051 + $0x14] sm:$0xf]
      %v6058 = vld [vmem:[%s6051 + $0x18] sm:$0xf]
      %v6059 = vld [vmem:[%s6051 + $0x1c] sm:$0xf]
      %v6060 = vld [vmem:[%s6051 + $0x20] sm:$0xf]
      %v6061 = vld [vmem:[%s6051 + $0x24] sm:$0xf]
      %v6062 = vld [vmem:[%s6051 + $0x28] sm:$0xf]
      %v6063 = vld [vmem:[%s6051 + $0x2c] sm:$0xf]
      %v6064 = vld [vmem:[%s6051 + $0x30] sm:$0xf]
      %v6065 = vld [vmem:[%s6051 + $0x34] sm:$0xf]
      %v6066 = vld [vmem:[%s6051 + $0x38] sm:$0xf]
      %v6067 = vld [vmem:[%s6051 + $0x3c] sm:$0xf]
      %v6068 = vld [vmem:[%s6051 + $0x40] sm:$0xf]
      %v6069 = vld [vmem:[%s6051 + $0x44] sm:$0xf]
      %v6070 = vld [vmem:[%s6051 + $0x48] sm:$0xf]
      %v6071 = vld [vmem:[%s6051 + $0x4c] sm:$0xf]
      %v6072 = vld [vmem:[%s6051 + $0x50] sm:$0xf]
      %v6073 = vld [vmem:[%s6051 + $0x54] sm:$0xf]
      %v6074 = vld [vmem:[%s6051 + $0x58] sm:$0xf]
      %v6075 = vld [vmem:[%s6051 + $0x5c] sm:$0xf]
      %v6076 = vld [vmem:[%s6051 + $0x60] sm:$0xf]
      %v6077 = vld [vmem:[%s6051 + $0x64] sm:$0xf]
      %v6078 = vld [vmem:[%s6051 + $0x68] sm:$0xf]
      %v6079 = vld [vmem:[%s6051 + $0x6c] sm:$0xf]
      %v6080 = vld [vmem:[%s6051 + $0x70] sm:$0xf]
      %v6081 = vld [vmem:[%s6051 + $0x74] sm:$0xf]
      %v6082 = vld [vmem:[%s6051 + $0x78] sm:$0xf]
      %v6083 = vld [vmem:[%s6051 + $0x7c] sm:$0xf]
      %v6084 = vld [vmem:[%s6051 + $0x80] sm:$0xf]
      %v6085 = vld [vmem:[%s6051 + $0x84] sm:$0xf]
      %v6086 = vld [vmem:[%s6051 + $0x88] sm:$0xf]
      %v6087 = vld [vmem:[%s6051 + $0x8c] sm:$0xf]
      %v6088 = vld [vmem:[%s6051 + $0x90] sm:$0xf]
      %v6089 = vld [vmem:[%s6051 + $0x94] sm:$0xf]
      %v6090 = vld [vmem:[%s6051 + $0x98] sm:$0xf]
      %v6091 = vld [vmem:[%s6051 + $0x9c] sm:$0xf]
      %v6092 = vld [vmem:[%s6051 + $0xa0] sm:$0xf]
      %v6093 = vld [vmem:[%s6051 + $0xa4] sm:$0xf]
      %v6094 = vld [vmem:[%s6051 + $0xa8] sm:$0xf]
      %v6095 = vld [vmem:[%s6051 + $0xac] sm:$0xf]
      %v6096 = vld [vmem:[%s6051 + $0xb0] sm:$0xf]
      %v6097 = vld [vmem:[%s6051 + $0xb4] sm:$0xf]
      %v6098 = vld [vmem:[%s6051 + $0xb8] sm:$0xf]
      %v6099 = vld [vmem:[%s6051 + $0xbc] sm:$0xf]
      %v6148 = vunpack.c.l.b16 %v6052
      %v6149 = vunpack.c.l.b16 %v6053
      %v6150 = vunpack.c.l.b16 %v6054
      %v6151 = vunpack.c.l.b16 %v6055
      %v6152 = vunpack.c.l.b16 %v6056
      %v6153 = vunpack.c.l.b16 %v6057
      %v6154 = vunpack.c.l.b16 %v6058
      %v6155 = vunpack.c.l.b16 %v6059
      %v6156 = vunpack.c.l.b16 %v6060
      %v6157 = vunpack.c.l.b16 %v6061
      %v6158 = vunpack.c.l.b16 %v6062
      %v6159 = vunpack.c.l.b16 %v6063
      %v6160 = vunpack.c.l.b16 %v6064
      %v6161 = vunpack.c.l.b16 %v6065
      %v6162 = vunpack.c.l.b16 %v6066
      %v6163 = vunpack.c.l.b16 %v6067
      %v6164 = vunpack.c.l.b16 %v6068
      %v6165 = vunpack.c.l.b16 %v6069
      %v6166 = vunpack.c.l.b16 %v6070
      %v6167 = vunpack.c.l.b16 %v6071
      %v6168 = vunpack.c.l.b16 %v6072
      %v6169 = vunpack.c.l.b16 %v6073
      %v6170 = vunpack.c.l.b16 %v6074
      %v6171 = vunpack.c.l.b16 %v6075
      %v6172 = vunpack.c.l.b16 %v6076
      %v6173 = vunpack.c.l.b16 %v6077
      %v6174 = vunpack.c.l.b16 %v6078
      %v6175 = vunpack.c.l.b16 %v6079
      %v6176 = vunpack.c.l.b16 %v6080
      %v6177 = vunpack.c.l.b16 %v6081
      %v6178 = vunpack.c.l.b16 %v6082
      %v6179 = vunpack.c.l.b16 %v6083
      %v6180 = vunpack.c.l.b16 %v6084
      %v6181 = vunpack.c.l.b16 %v6085
      %v6182 = vunpack.c.l.b16 %v6086
      %v6183 = vunpack.c.l.b16 %v6087
      %v6184 = vunpack.c.l.b16 %v6088
      %v6185 = vunpack.c.l.b16 %v6089
      %v6186 = vunpack.c.l.b16 %v6090
      %v6187 = vunpack.c.l.b16 %v6091
      %v6188 = vunpack.c.l.b16 %v6092
      %v6189 = vunpack.c.l.b16 %v6093
      %v6190 = vunpack.c.l.b16 %v6094
      %v6191 = vunpack.c.l.b16 %v6095
      %v6192 = vunpack.c.l.b16 %v6096
      %v6193 = vunpack.c.l.b16 %v6097
      %v6194 = vunpack.c.l.b16 %v6098
      %v6195 = vunpack.c.l.b16 %v6099
      %v6196 = vpack.c.b16 %v6149, %v6148
      %v6197 = vpack.c.b16 %v6151, %v6150
      %v6198 = vpack.c.b16 %v6153, %v6152
      %v6199 = vpack.c.b16 %v6155, %v6154
      %v6200 = vpack.c.b16 %v6157, %v6156
      %v6201 = vpack.c.b16 %v6159, %v6158
      %v6202 = vpack.c.b16 %v6161, %v6160
      %v6203 = vpack.c.b16 %v6163, %v6162
      %v6204 = vpack.c.b16 %v6165, %v6164
      %v6205 = vpack.c.b16 %v6167, %v6166
      %v6206 = vpack.c.b16 %v6169, %v6168
      %v6207 = vpack.c.b16 %v6171, %v6170
      %v6208 = vpack.c.b16 %v6173, %v6172
      %v6209 = vpack.c.b16 %v6175, %v6174
      %v6210 = vpack.c.b16 %v6177, %v6176
      %v6211 = vpack.c.b16 %v6179, %v6178
      %v6212 = vpack.c.b16 %v6181, %v6180
      %v6213 = vpack.c.b16 %v6183, %v6182
      %v6214 = vpack.c.b16 %v6185, %v6184
      %v6215 = vpack.c.b16 %v6187, %v6186
      %v6216 = vpack.c.b16 %v6189, %v6188
      %v6217 = vpack.c.b16 %v6191, %v6190
      %v6218 = vpack.c.b16 %v6193, %v6192
      %v6219 = vpack.c.b16 %v6195, %v6194
      %6244 = vmatprep.subr.bf16.mxu0 0
      %6245 = vmatpush1.bf16.msra.mxu0 %v6196
      %6246 = vmatprep.subr.bf16.mxu0 0
      %6247 = vmatpush1.bf16.msra.mxu0 %v6197
      %6248 = vmatprep.subr.bf16.mxu0 0
      %6249 = vmatpush1.bf16.msra.mxu0 %v6198
      %6250 = vmatprep.subr.bf16.mxu0 0
      %6251 = vmatpush1.bf16.msra.mxu0 %v6199
      %6252 = vmatprep.subr.bf16.mxu0 0
      %6253 = vmatpush1.bf16.msra.mxu0 %v6200
      %6254 = vmatprep.subr.bf16.mxu0 0
      %6255 = vmatpush1.bf16.msra.mxu0 %v6201
      %6256 = vmatprep.subr.bf16.mxu0 0
      %6257 = vmatpush1.bf16.msra.mxu0 %v6202
      %6258 = vmatprep.subr.bf16.mxu0 0
      %6259 = vmatpush1.bf16.msra.mxu0 %v6203
      %6260 = vmatprep.subr.bf16.mxu0 0
      %6261 = vmatpush1.bf16.msra.mxu0 %v6204
      %6262 = vmatprep.subr.bf16.mxu0 0
      %6263 = vmatpush1.bf16.msra.mxu0 %v6205
      %6264 = vmatprep.subr.bf16.mxu0 0
      %6265 = vmatpush1.bf16.msra.mxu0 %v6206
      %6266 = vmatprep.subr.bf16.mxu0 0
      %6267 = vmatpush1.bf16.msra.mxu0 %v6207
      %6268 = vmatprep.subr.bf16.mxu0 0
      %6269 = vmatpush1.bf16.msra.mxu0 %v6208
      %6270 = vmatprep.subr.bf16.mxu0 0
      %6271 = vmatpush1.bf16.msra.mxu0 %v6209
      %6272 = vmatprep.subr.bf16.mxu0 0
      %6273 = vmatpush1.bf16.msra.mxu0 %v6210
      %6274 = vmatprep.subr.bf16.mxu0 0
      %6275 = vmatpush1.bf16.msra.mxu0 %v6211
      %6276 = vmatprep.mubr.bf16.mxu0 %v5510
      %6277 = vmatmul.mubr.bf16.gmra.mrb[0].mxu0 %v5498
      %v6278 = vpop.f32.mrb[0].mxu0
      %v6279 = vadd.f32 0.0, %v6278
      %v6280 = vpop.f32.mrb[0].mxu0
      %v6281 = vpop.f32.mrb[0].mxu0
      %v6282 = vadd.f32 0.0, %v6281
      %v6283 = vpop.f32.mrb[0].mxu0
      %6284 = vmatprep.mubr.bf16.mxu0 %v5542
      %6285 = vmatmul.mubr.bf16.gmra.mrb[0].mxu0 %v5530
      %v6286 = vpop.f32.mrb[0].mxu0
      %v6287 = vadd.f32 0.0, %v6286
      %v6288 = vpop.f32.mrb[0].mxu0
      %v6289 = vpop.f32.mrb[0].mxu0
      %v6290 = vadd.f32 0.0, %v6289
      %v6291 = vpop.f32.mrb[0].mxu0
      %6292 = vmatprep.mubr.bf16.mxu0 %v5574
      %6293 = vmatmul.mubr.bf16.gmra.mrb[0].mxu0 %v5562
      %v6294 = vpop.f32.mrb[0].mxu0
      %v6295 = vadd.f32 0.0, %v6294
      %v6296 = vpop.f32.mrb[0].mxu0
      %v6297 = vpop.f32.mrb[0].mxu0
      %v6298 = vadd.f32 0.0, %v6297
      %v6299 = vpop.f32.mrb[0].mxu0
      %6300 = vmatprep.mubr.bf16.mxu0 %v5606
      %6301 = vmatmul.mubr.bf16.gmra.mrb[0].mxu0 %v5594
      %v6302 = vpop.f32.mrb[0].mxu0
      %v6303 = vadd.f32 0.0, %v6302
      %v6304 = vpop.f32.mrb[0].mxu0
      %v6305 = vpop.f32.mrb[0].mxu0
      %v6306 = vadd.f32 0.0, %v6305
      %v6307 = vpop.f32.mrb[0].mxu0
      %6308 = vmatprep.mubr.bf16.mxu0 %v5638
      %6309 = vmatmul.mubr.bf16.gmra.mrb[0].mxu0 %v5626
      %v6310 = vpop.f32.mrb[0].mxu0
      %v6311 = vadd.f32 0.0, %v6310
      %v6312 = vpop.f32.mrb[0].mxu0
      %v6313 = vpop.f32.mrb[0].mxu0
      %v6314 = vadd.f32 0.0, %v6313
      %v6315 = vpop.f32.mrb[0].mxu0
      %6316 = vmatprep.mubr.bf16.mxu0 %v5670
      %6317 = vmatmul.mubr.bf16.gmra.mrb[0].mxu0 %v5658
      %v6318 = vpop.f32.mrb[0].mxu0
      %v6319 = vadd.f32 0.0, %v6318
      %v6320 = vpop.f32.mrb[0].mxu0
      %v6321 = vpop.f32.mrb[0].mxu0
      %v6322 = vadd.f32 0.0, %v6321
      %v6323 = vpop.f32.mrb[0].mxu0
      %6324 = vmatprep.mubr.bf16.mxu0 %v5702
      %6325 = vmatmul.mubr.bf16.gmra.mrb[0].mxu0 %v5690
      %v6326 = vpop.f32.mrb[0].mxu0
      %v6327 = vadd.f32 0.0, %v6326
      %v6328 = vpop.f32.mrb[0].mxu0
      %v6329 = vpop.f32.mrb[0].mxu0
      %v6330 = vadd.f32 0.0, %v6329
      %v6331 = vpop.f32.mrb[0].mxu0
      %6332 = vmatprep.mubr.bf16.mxu0 %v5734
      %6333 = vmatmul.mubr.bf16.gmra.mrb[0].mxu0 %v5722
      %v6334 = vpop.f32.mrb[0].mxu0
      %v6335 = vadd.f32 0.0, %v6334
      %v6336 = vpop.f32.mrb[0].mxu0
      %v6337 = vpop.f32.mrb[0].mxu0
      %v6338 = vadd.f32 0.0, %v6337
      %v6339 = vpop.f32.mrb[0].mxu0
      %6340 = vmatprep.mubr.bf16.mxu0 %v5766
      %6341 = vmatmul.mubr.bf16.gmra.mrb[0].mxu0 %v5754
      %v6342 = vpop.f32.mrb[0].mxu0
      %v6343 = vadd.f32 0.0, %v6342
      %v6344 = vpop.f32.mrb[0].mxu0
      %v6345 = vpop.f32.mrb[0].mxu0
      %v6346 = vadd.f32 0.0, %v6345
      %v6347 = vpop.f32.mrb[0].mxu0
      %6348 = vmatprep.mubr.bf16.mxu0 %v5798
      %6349 = vmatmul.mubr.bf16.gmra.mrb[0].mxu0 %v5786
      %v6350 = vpop.f32.mrb[0].mxu0
      %v6351 = vadd.f32 0.0, %v6350
      %v6352 = vpop.f32.mrb[0].mxu0
      %v6353 = vpop.f32.mrb[0].mxu0
      %v6354 = vadd.f32 0.0, %v6353
      %v6355 = vpop.f32.mrb[0].mxu0
      %6356 = vmatprep.mubr.bf16.mxu0 %v5830
      %6357 = vmatmul.mubr.bf16.gmra.mrb[0].mxu0 %v5818
      %v6358 = vpop.f32.mrb[0].mxu0
      %v6359 = vadd.f32 0.0, %v6358
      %v6360 = vpop.f32.mrb[0].mxu0
      %v6361 = vpop.f32.mrb[0].mxu0
      %v6362 = vadd.f32 0.0, %v6361
      %v6363 = vpop.f32.mrb[0].mxu0
      %6364 = vmatprep.mubr.bf16.mxu0 %v5862
      %6365 = vmatmul.mubr.bf16.gmra.mrb[0].mxu0 %v5850
      %v6366 = vpop.f32.mrb[0].mxu0
      %v6367 = vadd.f32 0.0, %v6366
      %v6368 = vpop.f32.mrb[0].mxu0
      %v6369 = vpop.f32.mrb[0].mxu0
      %v6370 = vadd.f32 0.0, %v6369
      %v6371 = vpop.f32.mrb[0].mxu0
      %6372 = vmatprep.mubr.bf16.mxu0 %v5894
      %6373 = vmatmul.mubr.bf16.gmra.mrb[0].mxu0 %v5882
      %v6374 = vpop.f32.mrb[0].mxu0
      %v6375 = vadd.f32 0.0, %v6374
      %v6376 = vpop.f32.mrb[0].mxu0
      %v6377 = vpop.f32.mrb[0].mxu0
      %v6378 = vadd.f32 0.0, %v6377
      %v6379 = vpop.f32.mrb[0].mxu0
      %6380 = vmatprep.mubr.bf16.mxu0 %v5926
      %6381 = vmatmul.mubr.bf16.gmra.mrb[0].mxu0 %v5914
      %v6382 = vpop.f32.mrb[0].mxu0
      %v6383 = vadd.f32 0.0, %v6382
      %v6384 = vpop.f32.mrb[0].mxu0
      %v6385 = vpop.f32.mrb[0].mxu0
      %v6386 = vadd.f32 0.0, %v6385
      %v6387 = vpop.f32.mrb[0].mxu0
      %6388 = vmatprep.mubr.bf16.mxu0 %v5958
      %6389 = vmatmul.mubr.bf16.gmra.mrb[0].mxu0 %v5946
      %v6390 = vpop.f32.mrb[0].mxu0
      %v6391 = vadd.f32 0.0, %v6390
      %v6392 = vpop.f32.mrb[0].mxu0
      %v6393 = vpop.f32.mrb[0].mxu0
      %v6394 = vadd.f32 0.0, %v6393
      %v6395 = vpop.f32.mrb[0].mxu0
      %6396 = vmatprep.mubr.bf16.mxu0 %v5990
      %6397 = vmatmul.mubr.bf16.gmra.mrb[0].mxu0 %v5978
      %v6398 = vpop.f32.mrb[0].mxu0
      %v6399 = vadd.f32 0.0, %v6398
      %v6400 = vpop.f32.mrb[0].mxu0
      %v6401 = vpop.f32.mrb[0].mxu0
      %v6402 = vadd.f32 0.0, %v6401
      %v6403 = vpop.f32.mrb[0].mxu0
      %6404 = vdwg.mxu0
      %6405 = vmatprep.subr.bf16.mxu0 0
      %6406 = vmatpush1.bf16.msra.mxu0 %v6212
      %6407 = vmatprep.subr.bf16.mxu0 0
      %6408 = vmatpush1.bf16.msra.mxu0 %v6213
      %6409 = vmatprep.subr.bf16.mxu0 0
      %6410 = vmatpush1.bf16.msra.mxu0 %v6214
      %6411 = vmatprep.subr.bf16.mxu0 0
      %6412 = vmatpush1.bf16.msra.mxu0 %v6215
      %6413 = vmatprep.subr.bf16.mxu0 0
      %6414 = vmatpush1.bf16.msra.mxu0 %v6216
      %6415 = vmatprep.subr.bf16.mxu0 0
      %6416 = vmatpush1.bf16.msra.mxu0 %v6217
      %6417 = vmatprep.subr.bf16.mxu0 0
      %6418 = vmatpush1.bf16.msra.mxu0 %v6218
      %6419 = vmatprep.subr.bf16.mxu0 0
      %6420 = vmatpush1.bf16.msra.mxu0 %v6219
      %6421 = vmatprep.subr.bf16.mxu0 0
      %6422 = vmatpush1.bf16.msra.mxu0 0
      %6423 = vmatprep.subr.bf16.mxu0 0
      %6424 = vmatpush1.bf16.msra.mxu0 0
      %6425 = vmatprep.subr.bf16.mxu0 0
      %6426 = vmatpush1.bf16.msra.mxu0 0
      %6427 = vmatprep.subr.bf16.mxu0 0
      %6428 = vmatpush1.bf16.msra.mxu0 0
      %6429 = vmatprep.subr.bf16.mxu0 0
      %6430 = vmatpush1.bf16.msra.mxu0 0
      %6431 = vmatprep.subr.bf16.mxu0 0
      %6432 = vmatpush1.bf16.msra.mxu0 0
      %6433 = vmatprep.subr.bf16.mxu0 0
      %6434 = vmatpush1.bf16.msra.mxu0 0
      %6435 = vmatprep.subr.bf16.mxu0 0
      %6436 = vmatpush1.bf16.msra.mxu0 0
      %6437 = vmatprep.mubr.bf16.mxu0 0
      %6438 = vmatmul.mubr.bf16.gmra.mrb[0].mxu0 %v5522
      %v6439 = vpop.f32.mrb[0].mxu0
      %v6440 = vadd.f32 %v6279, %v6439
      %v6441 = vpop.f32.mrb[0].mxu0
      %v6442 = vpop.f32.mrb[0].mxu0
      %v6443 = vadd.f32 %v6282, %v6442
      %v6444 = vpop.f32.mrb[0].mxu0
      %6445 = vmatprep.mubr.bf16.mxu0 0
      %6446 = vmatmul.mubr.bf16.gmra.mrb[0].mxu0 %v5554
      %v6447 = vpop.f32.mrb[0].mxu0
      %v6448 = vadd.f32 %v6287, %v6447
      %v6449 = vpop.f32.mrb[0].mxu0
      %v6450 = vpop.f32.mrb[0].mxu0
      %v6451 = vadd.f32 %v6290, %v6450
      %v6452 = vpop.f32.mrb[0].mxu0
      %6453 = vmatprep.mubr.bf16.mxu0 0
      %6454 = vmatmul.mubr.bf16.gmra.mrb[0].mxu0 %v5586
      %v6455 = vpop.f32.mrb[0].mxu0
      %v6456 = vadd.f32 %v6295, %v6455
      %v6457 = vpop.f32.mrb[0].mxu0
      %v6458 = vpop.f32.mrb[0].mxu0
      %v6459 = vadd.f32 %v6298, %v6458
      %v6460 = vpop.f32.mrb[0].mxu0
      %6461 = vmatprep.mubr.bf16.mxu0 0
      %6462 = vmatmul.mubr.bf16.gmra.mrb[0].mxu0 %v5618
      %v6463 = vpop.f32.mrb[0].mxu0
      %v6464 = vadd.f32 %v6303, %v6463
      %v6465 = vpop.f32.mrb[0].mxu0
      %v6466 = vpop.f32.mrb[0].mxu0
      %v6467 = vadd.f32 %v6306, %v6466
      %v6468 = vpop.f32.mrb[0].mxu0
      %6469 = vmatprep.mubr.bf16.mxu0 0
      %6470 = vmatmul.mubr.bf16.gmra.mrb[0].mxu0 %v5650
      %v6471 = vpop.f32.mrb[0].mxu0
      %v6472 = vadd.f32 %v6311, %v6471
      %v6473 = vpop.f32.mrb[0].mxu0
      %v6474 = vpop.f32.mrb[0].mxu0
      %v6475 = vadd.f32 %v6314, %v6474
      %v6476 = vpop.f32.mrb[0].mxu0
      %6477 = vmatprep.mubr.bf16.mxu0 0
      %6478 = vmatmul.mubr.bf16.gmra.mrb[0].mxu0 %v5682
      %v6479 = vpop.f32.mrb[0].mxu0
      %v6480 = vadd.f32 %v6319, %v6479
      %v6481 = vpop.f32.mrb[0].mxu0
      %v6482 = vpop.f32.mrb[0].mxu0
      %v6483 = vadd.f32 %v6322, %v6482
      %v6484 = vpop.f32.mrb[0].mxu0
      %6485 = vmatprep.mubr.bf16.mxu0 0
      %6486 = vmatmul.mubr.bf16.gmra.mrb[0].mxu0 %v5714
      %v6487 = vpop.f32.mrb[0].mxu0
      %v6488 = vadd.f32 %v6327, %v6487
      %v6489 = vpop.f32.mrb[0].mxu0
      %v6490 = vpop.f32.mrb[0].mxu0
      %v6491 = vadd.f32 %v6330, %v6490
      %v6492 = vpop.f32.mrb[0].mxu0
      %6493 = vmatprep.mubr.bf16.mxu0 0
      %6494 = vmatmul.mubr.bf16.gmra.mrb[0].mxu0 %v5746
      %v6495 = vpop.f32.mrb[0].mxu0
      %v6496 = vadd.f32 %v6335, %v6495
      %v6497 = vpop.f32.mrb[0].mxu0
      %v6498 = vpop.f32.mrb[0].mxu0
      %v6499 = vadd.f32 %v6338, %v6498
      %v6500 = vpop.f32.mrb[0].mxu0
      %6501 = vmatprep.mubr.bf16.mxu0 0
      %6502 = vmatmul.mubr.bf16.gmra.mrb[0].mxu0 %v5778
      %v6503 = vpop.f32.mrb[0].mxu0
      %v6504 = vadd.f32 %v6343, %v6503
      %v6505 = vpop.f32.mrb[0].mxu0
      %v6506 = vpop.f32.mrb[0].mxu0
      %v6507 = vadd.f32 %v6346, %v6506
      %v6508 = vpop.f32.mrb[0].mxu0
      %6509 = vmatprep.mubr.bf16.mxu0 0
      %6510 = vmatmul.mubr.bf16.gmra.mrb[0].mxu0 %v5810
      %v6511 = vpop.f32.mrb[0].mxu0
      %v6512 = vadd.f32 %v6351, %v6511
      %v6513 = vpop.f32.mrb[0].mxu0
      %v6514 = vpop.f32.mrb[0].mxu0
      %v6515 = vadd.f32 %v6354, %v6514
      %v6516 = vpop.f32.mrb[0].mxu0
      %6517 = vmatprep.mubr.bf16.mxu0 0
      %6518 = vmatmul.mubr.bf16.gmra.mrb[0].mxu0 %v5842
      %v6519 = vpop.f32.mrb[0].mxu0
      %v6520 = vadd.f32 %v6359, %v6519
      %v6521 = vpop.f32.mrb[0].mxu0
      %v6522 = vpop.f32.mrb[0].mxu0
      %v6523 = vadd.f32 %v6362, %v6522
      %v6524 = vpop.f32.mrb[0].mxu0
      %6525 = vmatprep.mubr.bf16.mxu0 0
      %6526 = vmatmul.mubr.bf16.gmra.mrb[0].mxu0 %v5874
      %v6527 = vpop.f32.mrb[0].mxu0
      %v6528 = vadd.f32 %v6367, %v6527
      %v6529 = vpop.f32.mrb[0].mxu0
      %v6530 = vpop.f32.mrb[0].mxu0
      %v6531 = vadd.f32 %v6370, %v6530
      %v6532 = vpop.f32.mrb[0].mxu0
      %6533 = vmatprep.mubr.bf16.mxu0 0
      %6534 = vmatmul.mubr.bf16.gmra.mrb[0].mxu0 %v5906
      %v6535 = vpop.f32.mrb[0].mxu0
      %v6536 = vadd.f32 %v6375, %v6535
      %v6537 = vpop.f32.mrb[0].mxu0
      %v6538 = vpop.f32.mrb[0].mxu0
      %v6539 = vadd.f32 %v6378, %v6538
      %v6540 = vpop.f32.mrb[0].mxu0
      %6541 = vmatprep.mubr.bf16.mxu0 0
      %6542 = vmatmul.mubr.bf16.gmra.mrb[0].mxu0 %v5938
      %v6543 = vpop.f32.mrb[0].mxu0
      %v6544 = vadd.f32 %v6383, %v6543
      %v6545 = vpop.f32.mrb[0].mxu0
      %v6546 = vpop.f32.mrb[0].mxu0
      %v6547 = vadd.f32 %v6386, %v6546
      %v6548 = vpop.f32.mrb[0].mxu0
      %6549 = vmatprep.mubr.bf16.mxu0 0
      %6550 = vmatmul.mubr.bf16.gmra.mrb[0].mxu0 %v5970
      %v6551 = vpop.f32.mrb[0].mxu0
      %v6552 = vadd.f32 %v6391, %v6551
      %v6553 = vpop.f32.mrb[0].mxu0
      %v6554 = vpop.f32.mrb[0].mxu0
      %v6555 = vadd.f32 %v6394, %v6554
      %v6556 = vpop.f32.mrb[0].mxu0
      %6557 = vmatprep.mubr.bf16.mxu0 0
      %6558 = vmatmul.mubr.bf16.gmra.mrb[0].mxu0 %v6002
      %v6559 = vpop.f32.mrb[0].mxu0
      %v6560 = vadd.f32 %v6399, %v6559
      %v6561 = vpop.f32.mrb[0].mxu0
      %v6562 = vpop.f32.mrb[0].mxu0
      %v6563 = vadd.f32 %v6402, %v6562
      %v6564 = vpop.f32.mrb[0].mxu0
      %6565 = vdwg.mxu0
      %v6566 = vadd.f32 %v4788, %v6440
      %v6567 = vadd.f32 %v4791, %v6443
      %v6568 = vadd.f32 %v4796, %v6448
      %v6569 = vadd.f32 %v4799, %v6451
      %v6570 = vadd.f32 %v4804, %v6456
      %v6571 = vadd.f32 %v4807, %v6459
      %v6572 = vadd.f32 %v4812, %v6464
      %v6573 = vadd.f32 %v4815, %v6467
      %v6574 = vadd.f32 %v4820, %v6472
      %v6575 = vadd.f32 %v4823, %v6475
      %v6576 = vadd.f32 %v4828, %v6480
      %v6577 = vadd.f32 %v4831, %v6483
      %v6578 = vadd.f32 %v4836, %v6488
      %v6579 = vadd.f32 %v4839, %v6491
      %v6580 = vadd.f32 %v4844, %v6496
      %v6581 = vadd.f32 %v4847, %v6499
      %v6582 = vadd.f32 %v4852, %v6504
      %v6583 = vadd.f32 %v4855, %v6507
      %v6584 = vadd.f32 %v4860, %v6512
      %v6585 = vadd.f32 %v4863, %v6515
      %v6586 = vadd.f32 %v4868, %v6520
      %v6587 = vadd.f32 %v4871, %v6523
      %v6588 = vadd.f32 %v4876, %v6528
      %v6589 = vadd.f32 %v4879, %v6531
      %v6590 = vadd.f32 %v4884, %v6536
      %v6591 = vadd.f32 %v4887, %v6539
      %v6592 = vadd.f32 %v4892, %v6544
      %v6593 = vadd.f32 %v4895, %v6547
      %v6594 = vadd.f32 %v4900, %v6552
      %v6595 = vadd.f32 %v4903, %v6555
      %v6596 = vadd.f32 %v4908, %v6560
      %v6597 = vadd.f32 %v4911, %v6563
      %v6598 = vld [vmem:[%s4] sm:$0x1]
      %v6600 = vlaneseq
      %v6601 = vshrl.u32 %v6600, 7
      %v6602 = vsub.s32 0, %v6601
      %v6603 = vrot.slane %v6598, %v6602
      %v6605 = vadd.f32 %v6566, %v6603
      %v6606 = vadd.f32 %v6567, %v6603
      %v6607 = vadd.f32 %v6568, %v6603
      %v6608 = vadd.f32 %v6569, %v6603
      %v6609 = vadd.f32 %v6570, %v6603
      %v6610 = vadd.f32 %v6571, %v6603
      %v6611 = vadd.f32 %v6572, %v6603
      %v6612 = vadd.f32 %v6573, %v6603
      %v6613 = vadd.f32 %v6574, %v6603
      %v6614 = vadd.f32 %v6575, %v6603
      %v6615 = vadd.f32 %v6576, %v6603
      %v6616 = vadd.f32 %v6577, %v6603
      %v6617 = vadd.f32 %v6578, %v6603
      %v6618 = vadd.f32 %v6579, %v6603
      %v6619 = vadd.f32 %v6580, %v6603
      %v6620 = vadd.f32 %v6581, %v6603
      %v6621 = vadd.f32 %v6582, %v6603
      %v6622 = vadd.f32 %v6583, %v6603
      %v6623 = vadd.f32 %v6584, %v6603
      %v6624 = vadd.f32 %v6585, %v6603
      %v6625 = vadd.f32 %v6586, %v6603
      %v6626 = vadd.f32 %v6587, %v6603
      %v6627 = vadd.f32 %v6588, %v6603
      %v6628 = vadd.f32 %v6589, %v6603
      %v6629 = vadd.f32 %v6590, %v6603
      %v6630 = vadd.f32 %v6591, %v6603
      %v6631 = vadd.f32 %v6592, %v6603
      %v6632 = vadd.f32 %v6593, %v6603
      %v6633 = vadd.f32 %v6594, %v6603
      %v6634 = vadd.f32 %v6595, %v6603
      %v6635 = vadd.f32 %v6596, %v6603
      %v6636 = vadd.f32 %v6597, %v6603
      %v6637 = vmax.f32 %v6605, 0.0
      %v6638 = vmax.f32 %v6606, 0.0
      %v6639 = vmax.f32 %v6607, 0.0
      %v6640 = vmax.f32 %v6608, 0.0
      %v6641 = vmax.f32 %v6609, 0.0
      %v6642 = vmax.f32 %v6610, 0.0
      %v6643 = vmax.f32 %v6611, 0.0
      %v6644 = vmax.f32 %v6612, 0.0
      %v6645 = vmax.f32 %v6613, 0.0
      %v6646 = vmax.f32 %v6614, 0.0
      %v6647 = vmax.f32 %v6615, 0.0
      %v6648 = vmax.f32 %v6616, 0.0
      %v6649 = vmax.f32 %v6617, 0.0
      %v6650 = vmax.f32 %v6618, 0.0
      %v6651 = vmax.f32 %v6619, 0.0
      %v6652 = vmax.f32 %v6620, 0.0
      %v6653 = vmax.f32 %v6621, 0.0
      %v6654 = vmax.f32 %v6622, 0.0
      %v6655 = vmax.f32 %v6623, 0.0
      %v6656 = vmax.f32 %v6624, 0.0
      %v6657 = vmax.f32 %v6625, 0.0
      %v6658 = vmax.f32 %v6626, 0.0
      %v6659 = vmax.f32 %v6627, 0.0
      %v6660 = vmax.f32 %v6628, 0.0
      %v6661 = vmax.f32 %v6629, 0.0
      %v6662 = vmax.f32 %v6630, 0.0
      %v6663 = vmax.f32 %v6631, 0.0
      %v6664 = vmax.f32 %v6632, 0.0
      %v6665 = vmax.f32 %v6633, 0.0
      %v6666 = vmax.f32 %v6634, 0.0
      %v6667 = vmax.f32 %v6635, 0.0
      %v6668 = vmax.f32 %v6636, 0.0
      %v6669 = vpack.c.bf16 %v6638, %v6637
      %v6670 = vpack.c.bf16 %v6640, %v6639
      %v6671 = vpack.c.bf16 %v6642, %v6641
      %v6672 = vpack.c.bf16 %v6644, %v6643
      %v6673 = vpack.c.bf16 %v6646, %v6645
      %v6674 = vpack.c.bf16 %v6648, %v6647
      %v6675 = vpack.c.bf16 %v6650, %v6649
      %v6676 = vpack.c.bf16 %v6652, %v6651
      %v6677 = vpack.c.bf16 %v6654, %v6653
      %v6678 = vpack.c.bf16 %v6656, %v6655
      %v6679 = vpack.c.bf16 %v6658, %v6657
      %v6680 = vpack.c.bf16 %v6660, %v6659
      %v6681 = vpack.c.bf16 %v6662, %v6661
      %v6682 = vpack.c.bf16 %v6664, %v6663
      %v6683 = vpack.c.bf16 %v6666, %v6665
      %v6684 = vpack.c.bf16 %v6668, %v6667
      %v6685 = vld [vmem:[%s5] sm:$0xff]
      %v6686 = vld [vmem:[%s5 + $0x8] sm:$0xff]
      %v6687 = vld [vmem:[%s5 + $0x10] sm:$0xff]
      %v6688 = vld [vmem:[%s5 + $0x18] sm:$0xff]
      %v6689 = vld [vmem:[%s5 + $0x20] sm:$0xff]
      %v6690 = vld [vmem:[%s5 + $0x28] sm:$0xff]
      %v6691 = vld [vmem:[%s5 + $0x30] sm:$0xff]
      %v6692 = vld [vmem:[%s5 + $0x38] sm:$0xff]
      %v6693 = vld [vmem:[%s5 + $0x40] sm:$0xff]
      %v6694 = vld [vmem:[%s5 + $0x48] sm:$0xff]
      %v6695 = vld [vmem:[%s5 + $0x50] sm:$0xff]
      %v6696 = vld [vmem:[%s5 + $0x58] sm:$0xff]
      %v6697 = vld [vmem:[%s5 + $0x60] sm:$0xff]
      %v6698 = vld [vmem:[%s5 + $0x68] sm:$0xff]
      %v6699 = vld [vmem:[%s5 + $0x70] sm:$0xff]
      %v6700 = vld [vmem:[%s5 + $0x78] sm:$0xff]
      %v6701 = vld [vmem:[%s5 + $0x80] sm:$0xff]
      %v6702 = vld [vmem:[%s5 + $0x88] sm:$0xff]
      %v6703 = vld [vmem:[%s5 + $0x90] sm:$0xff]
      %v6704 = vld [vmem:[%s5 + $0x98] sm:$0xff]
      %v6705 = vld [vmem:[%s5 + $0xa0] sm:$0xff]
      %v6706 = vld [vmem:[%s5 + $0xa8] sm:$0xff]
      %v6707 = vld [vmem:[%s5 + $0xb0] sm:$0xff]
      %v6708 = vld [vmem:[%s5 + $0xb8] sm:$0xff]
      %v6709 = vld [vmem:[%s5 + $0xc0] sm:$0xff]
      %v6710 = vld [vmem:[%s5 + $0xc8] sm:$0xff]
      %v6711 = vld [vmem:[%s5 + $0xd0] sm:$0xff]
      %v6712 = vld [vmem:[%s5 + $0xd8] sm:$0xff]
      %v6713 = vld [vmem:[%s5 + $0xe0] sm:$0xff]
      %v6714 = vld [vmem:[%s5 + $0xe8] sm:$0xff]
      %v6715 = vld [vmem:[%s5 + $0xf0] sm:$0xff]
      %v6716 = vld [vmem:[%s5 + $0xf8] sm:$0xff]
      %v6717 = vld [vmem:[%s6] sm:$0xf]
      %v6719 = vlaneseq
      %v6720 = vshrl.u32 %v6719, 7
      %v6721 = vsub.s32 0, %v6720
      %v6722 = vrot.slane %v6717, %v6721
      %v6723 = vlaneseq
      %v6724 = vshrl.u32 %v6723, 7
      %v6725 = vsub.s32 1, %v6724
      %v6726 = vrot.slane %v6717, %v6725
      %v6727 = vlaneseq
      %v6728 = vshrl.u32 %v6727, 7
      %v6729 = vsub.s32 2, %v6728
      %v6730 = vrot.slane %v6717, %v6729
      %v6731 = vlaneseq
      %v6732 = vshrl.u32 %v6731, 7
      %v6733 = vsub.s32 3, %v6732
      %v6734 = vrot.slane %v6717, %v6733
      %v6771 = vunpack.c.l.b16 %v6685
      %v6772 = vunpack.c.h.b16 %v6685
      %v6773 = vunpack.c.l.b16 %v6686
      %v6774 = vunpack.c.h.b16 %v6686
      %v6775 = vunpack.c.l.b16 %v6687
      %v6776 = vunpack.c.h.b16 %v6687
      %v6777 = vunpack.c.l.b16 %v6688
      %v6778 = vunpack.c.h.b16 %v6688
      %v6779 = vunpack.c.l.b16 %v6689
      %v6780 = vunpack.c.h.b16 %v6689
      %v6781 = vunpack.c.l.b16 %v6690
      %v6782 = vunpack.c.h.b16 %v6690
      %v6783 = vunpack.c.l.b16 %v6691
      %v6784 = vunpack.c.h.b16 %v6691
      %v6785 = vunpack.c.l.b16 %v6692
      %v6786 = vunpack.c.h.b16 %v6692
      %v6787 = vunpack.c.l.b16 %v6693
      %v6788 = vunpack.c.h.b16 %v6693
      %v6789 = vunpack.c.l.b16 %v6694
      %v6790 = vunpack.c.h.b16 %v6694
      %v6791 = vunpack.c.l.b16 %v6695
      %v6792 = vunpack.c.h.b16 %v6695
      %v6793 = vunpack.c.l.b16 %v6696
      %v6794 = vunpack.c.h.b16 %v6696
      %v6795 = vunpack.c.l.b16 %v6697
      %v6796 = vunpack.c.h.b16 %v6697
      %v6797 = vunpack.c.l.b16 %v6698
      %v6798 = vunpack.c.h.b16 %v6698
      %v6799 = vunpack.c.l.b16 %v6699
      %v6800 = vunpack.c.h.b16 %v6699
      %v6801 = vunpack.c.l.b16 %v6700
      %v6802 = vunpack.c.h.b16 %v6700
      %v6803 = vunpack.c.l.b16 %v6701
      %v6804 = vunpack.c.h.b16 %v6701
      %v6805 = vunpack.c.l.b16 %v6702
      %v6806 = vunpack.c.h.b16 %v6702
      %v6807 = vunpack.c.l.b16 %v6703
      %v6808 = vunpack.c.h.b16 %v6703
      %v6809 = vunpack.c.l.b16 %v6704
      %v6810 = vunpack.c.h.b16 %v6704
      %v6811 = vunpack.c.l.b16 %v6705
      %v6812 = vunpack.c.h.b16 %v6705
      %v6813 = vunpack.c.l.b16 %v6706
      %v6814 = vunpack.c.h.b16 %v6706
      %v6815 = vunpack.c.l.b16 %v6707
      %v6816 = vunpack.c.h.b16 %v6707
      %v6817 = vunpack.c.l.b16 %v6708
      %v6818 = vunpack.c.h.b16 %v6708
      %v6819 = vunpack.c.l.b16 %v6709
      %v6820 = vunpack.c.h.b16 %v6709
      %v6821 = vunpack.c.l.b16 %v6710
      %v6822 = vunpack.c.h.b16 %v6710
      %v6823 = vunpack.c.l.b16 %v6711
      %v6824 = vunpack.c.h.b16 %v6711
      %v6825 = vunpack.c.l.b16 %v6712
      %v6826 = vunpack.c.h.b16 %v6712
      %v6827 = vunpack.c.l.b16 %v6713
      %v6828 = vunpack.c.h.b16 %v6713
      %v6829 = vunpack.c.l.b16 %v6714
      %v6830 = vunpack.c.h.b16 %v6714
      %v6831 = vunpack.c.l.b16 %v6715
      %v6832 = vunpack.c.h.b16 %v6715
      %v6833 = vunpack.c.l.b16 %v6716
      %v6834 = vunpack.c.h.b16 %v6716
      %v6835 = vpack.c.b16 %v6775, %v6771
      %v6836 = vpack.c.b16 %v6776, %v6772
      %v6837 = vpack.c.b16 %v6777, %v6773
      %v6838 = vpack.c.b16 %v6778, %v6774
      %v6839 = vpack.c.b16 %v6783, %v6779
      %v6840 = vpack.c.b16 %v6784, %v6780
      %v6841 = vpack.c.b16 %v6785, %v6781
      %v6842 = vpack.c.b16 %v6786, %v6782
      %v6843 = vpack.c.b16 %v6791, %v6787
      %v6844 = vpack.c.b16 %v6792, %v6788
      %v6845 = vpack.c.b16 %v6793, %v6789
      %v6846 = vpack.c.b16 %v6794, %v6790
      %v6847 = vpack.c.b16 %v6799, %v6795
      %v6848 = vpack.c.b16 %v6800, %v6796
      %v6849 = vpack.c.b16 %v6801, %v6797
      %v6850 = vpack.c.b16 %v6802, %v6798
      %v6851 = vpack.c.b16 %v6807, %v6803
      %v6852 = vpack.c.b16 %v6808, %v6804
      %v6853 = vpack.c.b16 %v6809, %v6805
      %v6854 = vpack.c.b16 %v6810, %v6806
      %v6855 = vpack.c.b16 %v6815, %v6811
      %v6856 = vpack.c.b16 %v6816, %v6812
      %v6857 = vpack.c.b16 %v6817, %v6813
      %v6858 = vpack.c.b16 %v6818, %v6814
      %v6859 = vpack.c.b16 %v6823, %v6819
      %v6860 = vpack.c.b16 %v6824, %v6820
      %v6861 = vpack.c.b16 %v6825, %v6821
      %v6862 = vpack.c.b16 %v6826, %v6822
      %v6863 = vpack.c.b16 %v6831, %v6827
      %v6864 = vpack.c.b16 %v6832, %v6828
      %v6865 = vpack.c.b16 %v6833, %v6829
      %v6866 = vpack.c.b16 %v6834, %v6830
      %6899 = vmatprep.subr.bf16.mxu0 %v6836
      %6900 = vmatpush1.bf16.msra.mxu0 %v6835
      %6901 = vmatprep.subr.bf16.mxu0 %v6840
      %6902 = vmatpush1.bf16.msra.mxu0 %v6839
      %6903 = vmatprep.subr.bf16.mxu0 %v6844
      %6904 = vmatpush1.bf16.msra.mxu0 %v6843
      %6905 = vmatprep.subr.bf16.mxu0 %v6848
      %6906 = vmatpush1.bf16.msra.mxu0 %v6847
      %6907 = vmatprep.subr.bf16.mxu0 %v6852
      %6908 = vmatpush1.bf16.msra.mxu0 %v6851
      %6909 = vmatprep.subr.bf16.mxu0 %v6856
      %6910 = vmatpush1.bf16.msra.mxu0 %v6855
      %6911 = vmatprep.subr.bf16.mxu0 %v6860
      %6912 = vmatpush1.bf16.msra.mxu0 %v6859
      %6913 = vmatprep.subr.bf16.mxu0 %v6864
      %6914 = vmatpush1.bf16.msra.mxu0 %v6863
      %6915 = vmatprep.subr.bf16.mxu0 0
      %6916 = vmatpush1.bf16.msra.mxu0 0
      %6917 = vmatprep.subr.bf16.mxu0 0
      %6918 = vmatpush1.bf16.msra.mxu0 0
      %6919 = vmatprep.subr.bf16.mxu0 0
      %6920 = vmatpush1.bf16.msra.mxu0 0
      %6921 = vmatprep.subr.bf16.mxu0 0
      %6922 = vmatpush1.bf16.msra.mxu0 0
      %6923 = vmatprep.subr.bf16.mxu0 0
      %6924 = vmatpush1.bf16.msra.mxu0 0
      %6925 = vmatprep.subr.bf16.mxu0 0
      %6926 = vmatpush1.bf16.msra.mxu0 0
      %6927 = vmatprep.subr.bf16.mxu0 0
      %6928 = vmatpush1.bf16.msra.mxu0 0
      %6929 = vmatprep.subr.bf16.mxu0 0
      %6930 = vmatpush1.bf16.msra.mxu0 0
      %6931 = vmatprep.mubr.bf16.mxu0 0
      %6932 = vmatmul.mubr.bf16.gmra.mrb[0].mxu0 %v6669
      %v6933 = vpop.f32.mrb[0].mxu0
      %v6934 = vadd.f32 %v6722, %v6933
      %v6935 = vpop.f32.mrb[0].mxu0
      %v6936 = vadd.f32 %v6726, %v6935
      %v6937 = vpop.f32.mrb[0].mxu0
      %v6938 = vadd.f32 %v6722, %v6937
      %v6939 = vpop.f32.mrb[0].mxu0
      %v6940 = vadd.f32 %v6726, %v6939
      %6941 = vmatprep.mubr.bf16.mxu0 0
      %6942 = vmatmul.mubr.bf16.gmra.mrb[0].mxu0 %v6670
      %v6943 = vpop.f32.mrb[0].mxu0
      %v6944 = vadd.f32 %v6722, %v6943
      %v6945 = vpop.f32.mrb[0].mxu0
      %v6946 = vadd.f32 %v6726, %v6945
      %v6947 = vpop.f32.mrb[0].mxu0
      %v6948 = vadd.f32 %v6722, %v6947
      %v6949 = vpop.f32.mrb[0].mxu0
      %v6950 = vadd.f32 %v6726, %v6949
      %6951 = vmatprep.mubr.bf16.mxu0 0
      %6952 = vmatmul.mubr.bf16.gmra.mrb[0].mxu0 %v6671
      %v6953 = vpop.f32.mrb[0].mxu0
      %v6954 = vadd.f32 %v6722, %v6953
      %v6955 = vpop.f32.mrb[0].mxu0
      %v6956 = vadd.f32 %v6726, %v6955
      %v6957 = vpop.f32.mrb[0].mxu0
      %v6958 = vadd.f32 %v6722, %v6957
      %v6959 = vpop.f32.mrb[0].mxu0
      %v6960 = vadd.f32 %v6726, %v6959
      %6961 = vmatprep.mubr.bf16.mxu0 0
      %6962 = vmatmul.mubr.bf16.gmra.mrb[0].mxu0 %v6672
      %v6963 = vpop.f32.mrb[0].mxu0
      %v6964 = vadd.f32 %v6722, %v6963
      %v6965 = vpop.f32.mrb[0].mxu0
      %v6966 = vadd.f32 %v6726, %v6965
      %v6967 = vpop.f32.mrb[0].mxu0
      %v6968 = vadd.f32 %v6722, %v6967
      %v6969 = vpop.f32.mrb[0].mxu0
      %v6970 = vadd.f32 %v6726, %v6969
      %6971 = vmatprep.mubr.bf16.mxu0 0
      %6972 = vmatmul.mubr.bf16.gmra.mrb[0].mxu0 %v6673
      %v6973 = vpop.f32.mrb[0].mxu0
      %v6974 = vadd.f32 %v6722, %v6973
      %v6975 = vpop.f32.mrb[0].mxu0
      %v6976 = vadd.f32 %v6726, %v6975
      %v6977 = vpop.f32.mrb[0].mxu0
      %v6978 = vadd.f32 %v6722, %v6977
      %v6979 = vpop.f32.mrb[0].mxu0
      %v6980 = vadd.f32 %v6726, %v6979
      %6981 = vmatprep.mubr.bf16.mxu0 0
      %6982 = vmatmul.mubr.bf16.gmra.mrb[0].mxu0 %v6674
      %v6983 = vpop.f32.mrb[0].mxu0
      %v6984 = vadd.f32 %v6722, %v6983
      %v6985 = vpop.f32.mrb[0].mxu0
      %v6986 = vadd.f32 %v6726, %v6985
      %v6987 = vpop.f32.mrb[0].mxu0
      %v6988 = vadd.f32 %v6722, %v6987
      %v6989 = vpop.f32.mrb[0].mxu0
      %v6990 = vadd.f32 %v6726, %v6989
      %6991 = vmatprep.mubr.bf16.mxu0 0
      %6992 = vmatmul.mubr.bf16.gmra.mrb[0].mxu0 %v6675
      %v6993 = vpop.f32.mrb[0].mxu0
      %v6994 = vadd.f32 %v6722, %v6993
      %v6995 = vpop.f32.mrb[0].mxu0
      %v6996 = vadd.f32 %v6726, %v6995
      %v6997 = vpop.f32.mrb[0].mxu0
      %v6998 = vadd.f32 %v6722, %v6997
      %v6999 = vpop.f32.mrb[0].mxu0
      %v7000 = vadd.f32 %v6726, %v6999
      %7001 = vmatprep.mubr.bf16.mxu0 0
      %7002 = vmatmul.mubr.bf16.gmra.mrb[0].mxu0 %v6676
      %v7003 = vpop.f32.mrb[0].mxu0
      %v7004 = vadd.f32 %v6722, %v7003
      %v7005 = vpop.f32.mrb[0].mxu0
      %v7006 = vadd.f32 %v6726, %v7005
      %v7007 = vpop.f32.mrb[0].mxu0
      %v7008 = vadd.f32 %v6722, %v7007
      %v7009 = vpop.f32.mrb[0].mxu0
      %v7010 = vadd.f32 %v6726, %v7009
      %7011 = vmatprep.mubr.bf16.mxu0 0
      %7012 = vmatmul.mubr.bf16.gmra.mrb[0].mxu0 %v6677
      %v7013 = vpop.f32.mrb[0].mxu0
      %v7014 = vadd.f32 %v6722, %v7013
      %v7015 = vpop.f32.mrb[0].mxu0
      %v7016 = vadd.f32 %v6726, %v7015
      %v7017 = vpop.f32.mrb[0].mxu0
      %v7018 = vadd.f32 %v6722, %v7017
      %v7019 = vpop.f32.mrb[0].mxu0
      %v7020 = vadd.f32 %v6726, %v7019
      %7021 = vmatprep.mubr.bf16.mxu0 0
      %7022 = vmatmul.mubr.bf16.gmra.mrb[0].mxu0 %v6678
      %v7023 = vpop.f32.mrb[0].mxu0
      %v7024 = vadd.f32 %v6722, %v7023
      %v7025 = vpop.f32.mrb[0].mxu0
      %v7026 = vadd.f32 %v6726, %v7025
      %v7027 = vpop.f32.mrb[0].mxu0
      %v7028 = vadd.f32 %v6722, %v7027
      %v7029 = vpop.f32.mrb[0].mxu0
      %v7030 = vadd.f32 %v6726, %v7029
      %7031 = vmatprep.mubr.bf16.mxu0 0
      %7032 = vmatmul.mubr.bf16.gmra.mrb[0].mxu0 %v6679
      %v7033 = vpop.f32.mrb[0].mxu0
      %v7034 = vadd.f32 %v6722, %v7033
      %v7035 = vpop.f32.mrb[0].mxu0
      %v7036 = vadd.f32 %v6726, %v7035
      %v7037 = vpop.f32.mrb[0].mxu0
      %v7038 = vadd.f32 %v6722, %v7037
      %v7039 = vpop.f32.mrb[0].mxu0
      %v7040 = vadd.f32 %v6726, %v7039
      %7041 = vmatprep.mubr.bf16.mxu0 0
      %7042 = vmatmul.mubr.bf16.gmra.mrb[0].mxu0 %v6680
      %v7043 = vpop.f32.mrb[0].mxu0
      %v7044 = vadd.f32 %v6722, %v7043
      %v7045 = vpop.f32.mrb[0].mxu0
      %v7046 = vadd.f32 %v6726, %v7045
      %v7047 = vpop.f32.mrb[0].mxu0
      %v7048 = vadd.f32 %v6722, %v7047
      %v7049 = vpop.f32.mrb[0].mxu0
      %v7050 = vadd.f32 %v6726, %v7049
      %7051 = vmatprep.mubr.bf16.mxu0 0
      %7052 = vmatmul.mubr.bf16.gmra.mrb[0].mxu0 %v6681
      %v7053 = vpop.f32.mrb[0].mxu0
      %v7054 = vadd.f32 %v6722, %v7053
      %v7055 = vpop.f32.mrb[0].mxu0
      %v7056 = vadd.f32 %v6726, %v7055
      %v7057 = vpop.f32.mrb[0].mxu0
      %v7058 = vadd.f32 %v6722, %v7057
      %v7059 = vpop.f32.mrb[0].mxu0
      %v7060 = vadd.f32 %v6726, %v7059
      %7061 = vmatprep.mubr.bf16.mxu0 0
      %7062 = vmatmul.mubr.bf16.gmra.mrb[0].mxu0 %v6682
      %v7063 = vpop.f32.mrb[0].mxu0
      %v7064 = vadd.f32 %v6722, %v7063
      %v7065 = vpop.f32.mrb[0].mxu0
      %v7066 = vadd.f32 %v6726, %v7065
      %v7067 = vpop.f32.mrb[0].mxu0
      %v7068 = vadd.f32 %v6722, %v7067
      %v7069 = vpop.f32.mrb[0].mxu0
      %v7070 = vadd.f32 %v6726, %v7069
      %7071 = vmatprep.mubr.bf16.mxu0 0
      %7072 = vmatmul.mubr.bf16.gmra.mrb[0].mxu0 %v6683
      %v7073 = vpop.f32.mrb[0].mxu0
      %v7074 = vadd.f32 %v6722, %v7073
      %v7075 = vpop.f32.mrb[0].mxu0
      %v7076 = vadd.f32 %v6726, %v7075
      %v7077 = vpop.f32.mrb[0].mxu0
      %v7078 = vadd.f32 %v6722, %v7077
      %v7079 = vpop.f32.mrb[0].mxu0
      %v7080 = vadd.f32 %v6726, %v7079
      %7081 = vmatprep.mubr.bf16.mxu0 0
      %7082 = vmatmul.mubr.bf16.gmra.mrb[0].mxu0 %v6684
      %v7083 = vpop.f32.mrb[0].mxu0
      %v7084 = vadd.f32 %v6722, %v7083
      %v7085 = vpop.f32.mrb[0].mxu0
      %v7086 = vadd.f32 %v6726, %v7085
      %v7087 = vpop.f32.mrb[0].mxu0
      %v7088 = vadd.f32 %v6722, %v7087
      %v7089 = vpop.f32.mrb[0].mxu0
      %v7090 = vadd.f32 %v6726, %v7089
      %7091 = vdwg.mxu0
      %7092 = vmatprep.subr.bf16.mxu0 %v6838
      %7093 = vmatpush1.bf16.msra.mxu0 %v6837
      %7094 = vmatprep.subr.bf16.mxu0 %v6842
      %7095 = vmatpush1.bf16.msra.mxu0 %v6841
      %7096 = vmatprep.subr.bf16.mxu0 %v6846
      %7097 = vmatpush1.bf16.msra.mxu0 %v6845
      %7098 = vmatprep.subr.bf16.mxu0 %v6850
      %7099 = vmatpush1.bf16.msra.mxu0 %v6849
      %7100 = vmatprep.subr.bf16.mxu0 %v6854
      %7101 = vmatpush1.bf16.msra.mxu0 %v6853
      %7102 = vmatprep.subr.bf16.mxu0 %v6858
      %7103 = vmatpush1.bf16.msra.mxu0 %v6857
      %7104 = vmatprep.subr.bf16.mxu0 %v6862
      %7105 = vmatpush1.bf16.msra.mxu0 %v6861
      %7106 = vmatprep.subr.bf16.mxu0 %v6866
      %7107 = vmatpush1.bf16.msra.mxu0 %v6865
      %7108 = vmatprep.subr.bf16.mxu0 0
      %7109 = vmatpush1.bf16.msra.mxu0 0
      %7110 = vmatprep.subr.bf16.mxu0 0
      %7111 = vmatpush1.bf16.msra.mxu0 0
      %7112 = vmatprep.subr.bf16.mxu0 0
      %7113 = vmatpush1.bf16.msra.mxu0 0
      %7114 = vmatprep.subr.bf16.mxu0 0
      %7115 = vmatpush1.bf16.msra.mxu0 0
      %7116 = vmatprep.subr.bf16.mxu0 0
      %7117 = vmatpush1.bf16.msra.mxu0 0
      %7118 = vmatprep.subr.bf16.mxu0 0
      %7119 = vmatpush1.bf16.msra.mxu0 0
      %7120 = vmatprep.subr.bf16.mxu0 0
      %7121 = vmatpush1.bf16.msra.mxu0 0
      %7122 = vmatprep.subr.bf16.mxu0 0
      %7123 = vmatpush1.bf16.msra.mxu0 0
      %7124 = vmatprep.mubr.bf16.mxu0 0
      %7125 = vmatmul.mubr.bf16.gmra.mrb[0].mxu0 %v6669
      %v7126 = vpop.f32.mrb[0].mxu0
      %v7127 = vadd.f32 %v6730, %v7126
      %v7128 = vpop.f32.mrb[0].mxu0
      %v7129 = vadd.f32 %v6734, %v7128
      %v7130 = vpop.f32.mrb[0].mxu0
      %v7131 = vadd.f32 %v6730, %v7130
      %v7132 = vpop.f32.mrb[0].mxu0
      %v7133 = vadd.f32 %v6734, %v7132
      %7134 = vmatprep.mubr.bf16.mxu0 0
      %7135 = vmatmul.mubr.bf16.gmra.mrb[0].mxu0 %v6670
      %v7136 = vpop.f32.mrb[0].mxu0
      %v7137 = vadd.f32 %v6730, %v7136
      %v7138 = vpop.f32.mrb[0].mxu0
      %v7139 = vadd.f32 %v6734, %v7138
      %v7140 = vpop.f32.mrb[0].mxu0
      %v7141 = vadd.f32 %v6730, %v7140
      %v7142 = vpop.f32.mrb[0].mxu0
      %v7143 = vadd.f32 %v6734, %v7142
      %7144 = vmatprep.mubr.bf16.mxu0 0
      %7145 = vmatmul.mubr.bf16.gmra.mrb[0].mxu0 %v6671
      %v7146 = vpop.f32.mrb[0].mxu0
      %v7147 = vadd.f32 %v6730, %v7146
      %v7148 = vpop.f32.mrb[0].mxu0
      %v7149 = vadd.f32 %v6734, %v7148
      %v7150 = vpop.f32.mrb[0].mxu0
      %v7151 = vadd.f32 %v6730, %v7150
      %v7152 = vpop.f32.mrb[0].mxu0
      %v7153 = vadd.f32 %v6734, %v7152
      %7154 = vmatprep.mubr.bf16.mxu0 0
      %7155 = vmatmul.mubr.bf16.gmra.mrb[0].mxu0 %v6672
      %v7156 = vpop.f32.mrb[0].mxu0
      %v7157 = vadd.f32 %v6730, %v7156
      %v7158 = vpop.f32.mrb[0].mxu0
      %v7159 = vadd.f32 %v6734, %v7158
      %v7160 = vpop.f32.mrb[0].mxu0
      %v7161 = vadd.f32 %v6730, %v7160
      %v7162 = vpop.f32.mrb[0].mxu0
      %v7163 = vadd.f32 %v6734, %v7162
      %7164 = vmatprep.mubr.bf16.mxu0 0
      %7165 = vmatmul.mubr.bf16.gmra.mrb[0].mxu0 %v6673
      %v7166 = vpop.f32.mrb[0].mxu0
      %v7167 = vadd.f32 %v6730, %v7166
      %v7168 = vpop.f32.mrb[0].mxu0
      %v7169 = vadd.f32 %v6734, %v7168
      %v7170 = vpop.f32.mrb[0].mxu0
      %v7171 = vadd.f32 %v6730, %v7170
      %v7172 = vpop.f32.mrb[0].mxu0
      %v7173 = vadd.f32 %v6734, %v7172
      %7174 = vmatprep.mubr.bf16.mxu0 0
      %7175 = vmatmul.mubr.bf16.gmra.mrb[0].mxu0 %v6674
      %v7176 = vpop.f32.mrb[0].mxu0
      %v7177 = vadd.f32 %v6730, %v7176
      %v7178 = vpop.f32.mrb[0].mxu0
      %v7179 = vadd.f32 %v6734, %v7178
      %v7180 = vpop.f32.mrb[0].mxu0
      %v7181 = vadd.f32 %v6730, %v7180
      %v7182 = vpop.f32.mrb[0].mxu0
      %v7183 = vadd.f32 %v6734, %v7182
      %7184 = vmatprep.mubr.bf16.mxu0 0
      %7185 = vmatmul.mubr.bf16.gmra.mrb[0].mxu0 %v6675
      %v7186 = vpop.f32.mrb[0].mxu0
      %v7187 = vadd.f32 %v6730, %v7186
      %v7188 = vpop.f32.mrb[0].mxu0
      %v7189 = vadd.f32 %v6734, %v7188
      %v7190 = vpop.f32.mrb[0].mxu0
      %v7191 = vadd.f32 %v6730, %v7190
      %v7192 = vpop.f32.mrb[0].mxu0
      %v7193 = vadd.f32 %v6734, %v7192
      %7194 = vmatprep.mubr.bf16.mxu0 0
      %7195 = vmatmul.mubr.bf16.gmra.mrb[0].mxu0 %v6676
      %v7196 = vpop.f32.mrb[0].mxu0
      %v7197 = vadd.f32 %v6730, %v7196
      %v7198 = vpop.f32.mrb[0].mxu0
      %v7199 = vadd.f32 %v6734, %v7198
      %v7200 = vpop.f32.mrb[0].mxu0
      %v7201 = vadd.f32 %v6730, %v7200
      %v7202 = vpop.f32.mrb[0].mxu0
      %v7203 = vadd.f32 %v6734, %v7202
      %7204 = vmatprep.mubr.bf16.mxu0 0
      %7205 = vmatmul.mubr.bf16.gmra.mrb[0].mxu0 %v6677
      %v7206 = vpop.f32.mrb[0].mxu0
      %v7207 = vadd.f32 %v6730, %v7206
      %v7208 = vpop.f32.mrb[0].mxu0
      %v7209 = vadd.f32 %v6734, %v7208
      %v7210 = vpop.f32.mrb[0].mxu0
      %v7211 = vadd.f32 %v6730, %v7210
      %v7212 = vpop.f32.mrb[0].mxu0
      %v7213 = vadd.f32 %v6734, %v7212
      %7214 = vmatprep.mubr.bf16.mxu0 0
      %7215 = vmatmul.mubr.bf16.gmra.mrb[0].mxu0 %v6678
      %v7216 = vpop.f32.mrb[0].mxu0
      %v7217 = vadd.f32 %v6730, %v7216
      %v7218 = vpop.f32.mrb[0].mxu0
      %v7219 = vadd.f32 %v6734, %v7218
      %v7220 = vpop.f32.mrb[0].mxu0
      %v7221 = vadd.f32 %v6730, %v7220
      %v7222 = vpop.f32.mrb[0].mxu0
      %v7223 = vadd.f32 %v6734, %v7222
      %7224 = vmatprep.mubr.bf16.mxu0 0
      %7225 = vmatmul.mubr.bf16.gmra.mrb[0].mxu0 %v6679
      %v7226 = vpop.f32.mrb[0].mxu0
      %v7227 = vadd.f32 %v6730, %v7226
      %v7228 = vpop.f32.mrb[0].mxu0
      %v7229 = vadd.f32 %v6734, %v7228
      %v7230 = vpop.f32.mrb[0].mxu0
      %v7231 = vadd.f32 %v6730, %v7230
      %v7232 = vpop.f32.mrb[0].mxu0
      %v7233 = vadd.f32 %v6734, %v7232
      %7234 = vmatprep.mubr.bf16.mxu0 0
      %7235 = vmatmul.mubr.bf16.gmra.mrb[0].mxu0 %v6680
      %v7236 = vpop.f32.mrb[0].mxu0
      %v7237 = vadd.f32 %v6730, %v7236
      %v7238 = vpop.f32.mrb[0].mxu0
      %v7239 = vadd.f32 %v6734, %v7238
      %v7240 = vpop.f32.mrb[0].mxu0
      %v7241 = vadd.f32 %v6730, %v7240
      %v7242 = vpop.f32.mrb[0].mxu0
      %v7243 = vadd.f32 %v6734, %v7242
      %7244 = vmatprep.mubr.bf16.mxu0 0
      %7245 = vmatmul.mubr.bf16.gmra.mrb[0].mxu0 %v6681
      %v7246 = vpop.f32.mrb[0].mxu0
      %v7247 = vadd.f32 %v6730, %v7246
      %v7248 = vpop.f32.mrb[0].mxu0
      %v7249 = vadd.f32 %v6734, %v7248
      %v7250 = vpop.f32.mrb[0].mxu0
      %v7251 = vadd.f32 %v6730, %v7250
      %v7252 = vpop.f32.mrb[0].mxu0
      %v7253 = vadd.f32 %v6734, %v7252
      %7254 = vmatprep.mubr.bf16.mxu0 0
      %7255 = vmatmul.mubr.bf16.gmra.mrb[0].mxu0 %v6682
      %v7256 = vpop.f32.mrb[0].mxu0
      %v7257 = vadd.f32 %v6730, %v7256
      %v7258 = vpop.f32.mrb[0].mxu0
      %v7259 = vadd.f32 %v6734, %v7258
      %v7260 = vpop.f32.mrb[0].mxu0
      %v7261 = vadd.f32 %v6730, %v7260
      %v7262 = vpop.f32.mrb[0].mxu0
      %v7263 = vadd.f32 %v6734, %v7262
      %7264 = vmatprep.mubr.bf16.mxu0 0
      %7265 = vmatmul.mubr.bf16.gmra.mrb[0].mxu0 %v6683
      %v7266 = vpop.f32.mrb[0].mxu0
      %v7267 = vadd.f32 %v6730, %v7266
      %v7268 = vpop.f32.mrb[0].mxu0
      %v7269 = vadd.f32 %v6734, %v7268
      %v7270 = vpop.f32.mrb[0].mxu0
      %v7271 = vadd.f32 %v6730, %v7270
      %v7272 = vpop.f32.mrb[0].mxu0
      %v7273 = vadd.f32 %v6734, %v7272
      %7274 = vmatprep.mubr.bf16.mxu0 0
      %7275 = vmatmul.mubr.bf16.gmra.mrb[0].mxu0 %v6684
      %v7276 = vpop.f32.mrb[0].mxu0
      %v7277 = vadd.f32 %v6730, %v7276
      %v7278 = vpop.f32.mrb[0].mxu0
      %v7279 = vadd.f32 %v6734, %v7278
      %v7280 = vpop.f32.mrb[0].mxu0
      %v7281 = vadd.f32 %v6730, %v7280
      %v7282 = vpop.f32.mrb[0].mxu0
      %v7283 = vadd.f32 %v6734, %v7282
      %7284 = vdwg.mxu0
      %v7285 = vld [vmem:[%s273] sm:$0xff]
      %v7286 = vld [vmem:[%s273 + $0x8] sm:$0xff]
      %v7287 = vld [vmem:[%s273 + $0x10] sm:$0xff]
      %v7288 = vld [vmem:[%s273 + $0x18] sm:$0xff]
      %v7289 = vld [vmem:[%s273 + $0x20] sm:$0xff]
      %v7290 = vld [vmem:[%s273 + $0x28] sm:$0xff]
      %v7291 = vld [vmem:[%s273 + $0x30] sm:$0xff]
      %v7292 = vld [vmem:[%s273 + $0x38] sm:$0xff]
      %v7293 = vld [vmem:[%s273 + $0x40] sm:$0xff]
      %v7294 = vld [vmem:[%s273 + $0x48] sm:$0xff]
      %v7295 = vld [vmem:[%s273 + $0x50] sm:$0xff]
      %v7296 = vld [vmem:[%s273 + $0x58] sm:$0xff]
      %v7297 = vld [vmem:[%s273 + $0x60] sm:$0xff]
      %v7298 = vld [vmem:[%s273 + $0x68] sm:$0xff]
      %v7299 = vld [vmem:[%s273 + $0x70] sm:$0xff]
      %v7300 = vld [vmem:[%s273 + $0x78] sm:$0xff]
      %v7301 = vld [vmem:[%s273 + $0x80] sm:$0xff]
      %v7302 = vld [vmem:[%s273 + $0x88] sm:$0xff]
      %v7303 = vld [vmem:[%s273 + $0x90] sm:$0xff]
      %v7304 = vld [vmem:[%s273 + $0x98] sm:$0xff]
      %v7305 = vld [vmem:[%s273 + $0xa0] sm:$0xff]
      %v7306 = vld [vmem:[%s273 + $0xa8] sm:$0xff]
      %v7307 = vld [vmem:[%s273 + $0xb0] sm:$0xff]
      %v7308 = vld [vmem:[%s273 + $0xb8] sm:$0xff]
      %v7309 = vld [vmem:[%s273 + $0xc0] sm:$0xff]
      %v7310 = vld [vmem:[%s273 + $0xc8] sm:$0xff]
      %v7311 = vld [vmem:[%s273 + $0xd0] sm:$0xff]
      %v7312 = vld [vmem:[%s273 + $0xd8] sm:$0xff]
      %v7313 = vld [vmem:[%s273 + $0xe0] sm:$0xff]
      %v7314 = vld [vmem:[%s273 + $0xe8] sm:$0xff]
      %v7315 = vld [vmem:[%s273 + $0xf0] sm:$0xff]
      %v7316 = vld [vmem:[%s273 + $0xf8] sm:$0xff]
      %v7317 = vld [vmem:[%s273 + $0x100] sm:$0xff]
      %v7318 = vld [vmem:[%s273 + $0x108] sm:$0xff]
      %v7319 = vld [vmem:[%s273 + $0x110] sm:$0xff]
      %v7320 = vld [vmem:[%s273 + $0x118] sm:$0xff]
      %v7321 = vld [vmem:[%s273 + $0x120] sm:$0xff]
      %v7322 = vld [vmem:[%s273 + $0x128] sm:$0xff]
      %v7323 = vld [vmem:[%s273 + $0x130] sm:$0xff]
      %v7324 = vld [vmem:[%s273 + $0x138] sm:$0xff]
      %v7325 = vld [vmem:[%s273 + $0x140] sm:$0xff]
      %v7326 = vld [vmem:[%s273 + $0x148] sm:$0xff]
      %v7327 = vld [vmem:[%s273 + $0x150] sm:$0xff]
      %v7328 = vld [vmem:[%s273 + $0x158] sm:$0xff]
      %v7329 = vld [vmem:[%s273 + $0x160] sm:$0xff]
      %v7330 = vld [vmem:[%s273 + $0x168] sm:$0xff]
      %v7331 = vld [vmem:[%s273 + $0x170] sm:$0xff]
      %v7332 = vld [vmem:[%s273 + $0x178] sm:$0xff]
      %v7333 = vld [vmem:[%s273 + $0x180] sm:$0xff]
      %v7334 = vld [vmem:[%s273 + $0x188] sm:$0xff]
      %v7335 = vld [vmem:[%s273 + $0x190] sm:$0xff]
      %v7336 = vld [vmem:[%s273 + $0x198] sm:$0xff]
      %v7337 = vld [vmem:[%s273 + $0x1a0] sm:$0xff]
      %v7338 = vld [vmem:[%s273 + $0x1a8] sm:$0xff]
      %v7339 = vld [vmem:[%s273 + $0x1b0] sm:$0xff]
      %v7340 = vld [vmem:[%s273 + $0x1b8] sm:$0xff]
      %v7341 = vld [vmem:[%s273 + $0x1c0] sm:$0xff]
      %v7342 = vld [vmem:[%s273 + $0x1c8] sm:$0xff]
      %v7343 = vld [vmem:[%s273 + $0x1d0] sm:$0xff]
      %v7344 = vld [vmem:[%s273 + $0x1d8] sm:$0xff]
      %v7345 = vld [vmem:[%s273 + $0x1e0] sm:$0xff]
      %v7346 = vld [vmem:[%s273 + $0x1e8] sm:$0xff]
      %v7347 = vld [vmem:[%s273 + $0x1f0] sm:$0xff]
      %v7348 = vld [vmem:[%s273 + $0x1f8] sm:$0xff]
      %v7349 = vunpack.c.l.bf16 %v7285
      %v7350 = vunpack.c.h.bf16 %v7285
      %v7351 = vunpack.c.l.bf16 %v7286
      %v7352 = vunpack.c.h.bf16 %v7286
      %v7353 = vunpack.c.l.bf16 %v7287
      %v7354 = vunpack.c.h.bf16 %v7287
      %v7355 = vunpack.c.l.bf16 %v7288
      %v7356 = vunpack.c.h.bf16 %v7288
      %v7357 = vunpack.c.l.bf16 %v7289
      %v7358 = vunpack.c.h.bf16 %v7289
      %v7359 = vunpack.c.l.bf16 %v7290
      %v7360 = vunpack.c.h.bf16 %v7290
      %v7361 = vunpack.c.l.bf16 %v7291
      %v7362 = vunpack.c.h.bf16 %v7291
      %v7363 = vunpack.c.l.bf16 %v7292
      %v7364 = vunpack.c.h.bf16 %v7292
      %v7365 = vunpack.c.l.bf16 %v7293
      %v7366 = vunpack.c.h.bf16 %v7293
      %v7367 = vunpack.c.l.bf16 %v7294
      %v7368 = vunpack.c.h.bf16 %v7294
      %v7369 = vunpack.c.l.bf16 %v7295
      %v7370 = vunpack.c.h.bf16 %v7295
      %v7371 = vunpack.c.l.bf16 %v7296
      %v7372 = vunpack.c.h.bf16 %v7296
      %v7373 = vunpack.c.l.bf16 %v7297
      %v7374 = vunpack.c.h.bf16 %v7297
      %v7375 = vunpack.c.l.bf16 %v7298
      %v7376 = vunpack.c.h.bf16 %v7298
      %v7377 = vunpack.c.l.bf16 %v7299
      %v7378 = vunpack.c.h.bf16 %v7299
      %v7379 = vunpack.c.l.bf16 %v7300
      %v7380 = vunpack.c.h.bf16 %v7300
      %v7381 = vunpack.c.l.bf16 %v7301
      %v7382 = vunpack.c.h.bf16 %v7301
      %v7383 = vunpack.c.l.bf16 %v7302
      %v7384 = vunpack.c.h.bf16 %v7302
      %v7385 = vunpack.c.l.bf16 %v7303
      %v7386 = vunpack.c.h.bf16 %v7303
      %v7387 = vunpack.c.l.bf16 %v7304
      %v7388 = vunpack.c.h.bf16 %v7304
      %v7389 = vunpack.c.l.bf16 %v7305
      %v7390 = vunpack.c.h.bf16 %v7305
      %v7391 = vunpack.c.l.bf16 %v7306
      %v7392 = vunpack.c.h.bf16 %v7306
      %v7393 = vunpack.c.l.bf16 %v7307
      %v7394 = vunpack.c.h.bf16 %v7307
      %v7395 = vunpack.c.l.bf16 %v7308
      %v7396 = vunpack.c.h.bf16 %v7308
      %v7397 = vunpack.c.l.bf16 %v7309
      %v7398 = vunpack.c.h.bf16 %v7309
      %v7399 = vunpack.c.l.bf16 %v7310
      %v7400 = vunpack.c.h.bf16 %v7310
      %v7401 = vunpack.c.l.bf16 %v7311
      %v7402 = vunpack.c.h.bf16 %v7311
      %v7403 = vunpack.c.l.bf16 %v7312
      %v7404 = vunpack.c.h.bf16 %v7312
      %v7405 = vunpack.c.l.bf16 %v7313
      %v7406 = vunpack.c.h.bf16 %v7313
      %v7407 = vunpack.c.l.bf16 %v7314
      %v7408 = vunpack.c.h.bf16 %v7314
      %v7409 = vunpack.c.l.bf16 %v7315
      %v7410 = vunpack.c.h.bf16 %v7315
      %v7411 = vunpack.c.l.bf16 %v7316
      %v7412 = vunpack.c.h.bf16 %v7316
      %v7413 = vunpack.c.l.bf16 %v7317
      %v7414 = vunpack.c.h.bf16 %v7317
      %v7415 = vunpack.c.l.bf16 %v7318
      %v7416 = vunpack.c.h.bf16 %v7318
      %v7417 = vunpack.c.l.bf16 %v7319
      %v7418 = vunpack.c.h.bf16 %v7319
      %v7419 = vunpack.c.l.bf16 %v7320
      %v7420 = vunpack.c.h.bf16 %v7320
      %v7421 = vunpack.c.l.bf16 %v7321
      %v7422 = vunpack.c.h.bf16 %v7321
      %v7423 = vunpack.c.l.bf16 %v7322
      %v7424 = vunpack.c.h.bf16 %v7322
      %v7425 = vunpack.c.l.bf16 %v7323
      %v7426 = vunpack.c.h.bf16 %v7323
      %v7427 = vunpack.c.l.bf16 %v7324
      %v7428 = vunpack.c.h.bf16 %v7324
      %v7429 = vunpack.c.l.bf16 %v7325
      %v7430 = vunpack.c.h.bf16 %v7325
      %v7431 = vunpack.c.l.bf16 %v7326
      %v7432 = vunpack.c.h.bf16 %v7326
      %v7433 = vunpack.c.l.bf16 %v7327
      %v7434 = vunpack.c.h.bf16 %v7327
      %v7435 = vunpack.c.l.bf16 %v7328
      %v7436 = vunpack.c.h.bf16 %v7328
      %v7437 = vunpack.c.l.bf16 %v7329
      %v7438 = vunpack.c.h.bf16 %v7329
      %v7439 = vunpack.c.l.bf16 %v7330
      %v7440 = vunpack.c.h.bf16 %v7330
      %v7441 = vunpack.c.l.bf16 %v7331
      %v7442 = vunpack.c.h.bf16 %v7331
      %v7443 = vunpack.c.l.bf16 %v7332
      %v7444 = vunpack.c.h.bf16 %v7332
      %v7445 = vunpack.c.l.bf16 %v7333
      %v7446 = vunpack.c.h.bf16 %v7333
      %v7447 = vunpack.c.l.bf16 %v7334
      %v7448 = vunpack.c.h.bf16 %v7334
      %v7449 = vunpack.c.l.bf16 %v7335
      %v7450 = vunpack.c.h.bf16 %v7335
      %v7451 = vunpack.c.l.bf16 %v7336
      %v7452 = vunpack.c.h.bf16 %v7336
      %v7453 = vunpack.c.l.bf16 %v7337
      %v7454 = vunpack.c.h.bf16 %v7337
      %v7455 = vunpack.c.l.bf16 %v7338
      %v7456 = vunpack.c.h.bf16 %v7338
      %v7457 = vunpack.c.l.bf16 %v7339
      %v7458 = vunpack.c.h.bf16 %v7339
      %v7459 = vunpack.c.l.bf16 %v7340
      %v7460 = vunpack.c.h.bf16 %v7340
      %v7461 = vunpack.c.l.bf16 %v7341
      %v7462 = vunpack.c.h.bf16 %v7341
      %v7463 = vunpack.c.l.bf16 %v7342
      %v7464 = vunpack.c.h.bf16 %v7342
      %v7465 = vunpack.c.l.bf16 %v7343
      %v7466 = vunpack.c.h.bf16 %v7343
      %v7467 = vunpack.c.l.bf16 %v7344
      %v7468 = vunpack.c.h.bf16 %v7344
      %v7469 = vunpack.c.l.bf16 %v7345
      %v7470 = vunpack.c.h.bf16 %v7345
      %v7471 = vunpack.c.l.bf16 %v7346
      %v7472 = vunpack.c.h.bf16 %v7346
      %v7473 = vunpack.c.l.bf16 %v7347
      %v7474 = vunpack.c.h.bf16 %v7347
      %v7475 = vunpack.c.l.bf16 %v7348
      %v7476 = vunpack.c.h.bf16 %v7348
      %v7477 = vadd.f32 %v6934, %v7349
      %v7478 = vadd.f32 %v6936, %v7350
      %v7479 = vadd.f32 %v7127, %v7351
      %v7480 = vadd.f32 %v7129, %v7352
      %v7481 = vadd.f32 %v6938, %v7353
      %v7482 = vadd.f32 %v6940, %v7354
      %v7483 = vadd.f32 %v7131, %v7355
      %v7484 = vadd.f32 %v7133, %v7356
      %v7485 = vadd.f32 %v6944, %v7357
      %v7486 = vadd.f32 %v6946, %v7358
      %v7487 = vadd.f32 %v7137, %v7359
      %v7488 = vadd.f32 %v7139, %v7360
      %v7489 = vadd.f32 %v6948, %v7361
      %v7490 = vadd.f32 %v6950, %v7362
      %v7491 = vadd.f32 %v7141, %v7363
      %v7492 = vadd.f32 %v7143, %v7364
      %v7493 = vadd.f32 %v6954, %v7365
      %v7494 = vadd.f32 %v6956, %v7366
      %v7495 = vadd.f32 %v7147, %v7367
      %v7496 = vadd.f32 %v7149, %v7368
      %v7497 = vadd.f32 %v6958, %v7369
      %v7498 = vadd.f32 %v6960, %v7370
      %v7499 = vadd.f32 %v7151, %v7371
      %v7500 = vadd.f32 %v7153, %v7372
      %v7501 = vadd.f32 %v6964, %v7373
      %v7502 = vadd.f32 %v6966, %v7374
      %v7503 = vadd.f32 %v7157, %v7375
      %v7504 = vadd.f32 %v7159, %v7376
      %v7505 = vadd.f32 %v6968, %v7377
      %v7506 = vadd.f32 %v6970, %v7378
      %v7507 = vadd.f32 %v7161, %v7379
      %v7508 = vadd.f32 %v7163, %v7380
      %v7509 = vadd.f32 %v6974, %v7381
      %v7510 = vadd.f32 %v6976, %v7382
      %v7511 = vadd.f32 %v7167, %v7383
      %v7512 = vadd.f32 %v7169, %v7384
      %v7513 = vadd.f32 %v6978, %v7385
      %v7514 = vadd.f32 %v6980, %v7386
      %v7515 = vadd.f32 %v7171, %v7387
      %v7516 = vadd.f32 %v7173, %v7388
      %v7517 = vadd.f32 %v6984, %v7389
      %v7518 = vadd.f32 %v6986, %v7390
      %v7519 = vadd.f32 %v7177, %v7391
      %v7520 = vadd.f32 %v7179, %v7392
      %v7521 = vadd.f32 %v6988, %v7393
      %v7522 = vadd.f32 %v6990, %v7394
      %v7523 = vadd.f32 %v7181, %v7395
      %v7524 = vadd.f32 %v7183, %v7396
      %v7525 = vadd.f32 %v6994, %v7397
      %v7526 = vadd.f32 %v6996, %v7398
      %v7527 = vadd.f32 %v7187, %v7399
      %v7528 = vadd.f32 %v7189, %v7400
      %v7529 = vadd.f32 %v6998, %v7401
      %v7530 = vadd.f32 %v7000, %v7402
      %v7531 = vadd.f32 %v7191, %v7403
      %v7532 = vadd.f32 %v7193, %v7404
      %v7533 = vadd.f32 %v7004, %v7405
      %v7534 = vadd.f32 %v7006, %v7406
      %v7535 = vadd.f32 %v7197, %v7407
      %v7536 = vadd.f32 %v7199, %v7408
      %v7537 = vadd.f32 %v7008, %v7409
      %v7538 = vadd.f32 %v7010, %v7410
      %v7539 = vadd.f32 %v7201, %v7411
      %v7540 = vadd.f32 %v7203, %v7412
      %v7541 = vadd.f32 %v7014, %v7413
      %v7542 = vadd.f32 %v7016, %v7414
      %v7543 = vadd.f32 %v7207, %v7415
      %v7544 = vadd.f32 %v7209, %v7416
      %v7545 = vadd.f32 %v7018, %v7417
      %v7546 = vadd.f32 %v7020, %v7418
      %v7547 = vadd.f32 %v7211, %v7419
      %v7548 = vadd.f32 %v7213, %v7420
      %v7549 = vadd.f32 %v7024, %v7421
      %v7550 = vadd.f32 %v7026, %v7422
      %v7551 = vadd.f32 %v7217, %v7423
      %v7552 = vadd.f32 %v7219, %v7424
      %v7553 = vadd.f32 %v7028, %v7425
      %v7554 = vadd.f32 %v7030, %v7426
      %v7555 = vadd.f32 %v7221, %v7427
      %v7556 = vadd.f32 %v7223, %v7428
      %v7557 = vadd.f32 %v7034, %v7429
      %v7558 = vadd.f32 %v7036, %v7430
      %v7559 = vadd.f32 %v7227, %v7431
      %v7560 = vadd.f32 %v7229, %v7432
      %v7561 = vadd.f32 %v7038, %v7433
      %v7562 = vadd.f32 %v7040, %v7434
      %v7563 = vadd.f32 %v7231, %v7435
      %v7564 = vadd.f32 %v7233, %v7436
      %v7565 = vadd.f32 %v7044, %v7437
      %v7566 = vadd.f32 %v7046, %v7438
      %v7567 = vadd.f32 %v7237, %v7439
      %v7568 = vadd.f32 %v7239, %v7440
      %v7569 = vadd.f32 %v7048, %v7441
      %v7570 = vadd.f32 %v7050, %v7442
      %v7571 = vadd.f32 %v7241, %v7443
      %v7572 = vadd.f32 %v7243, %v7444
      %v7573 = vadd.f32 %v7054, %v7445
      %v7574 = vadd.f32 %v7056, %v7446
      %v7575 = vadd.f32 %v7247, %v7447
      %v7576 = vadd.f32 %v7249, %v7448
      %v7577 = vadd.f32 %v7058, %v7449
      %v7578 = vadd.f32 %v7060, %v7450
      %v7579 = vadd.f32 %v7251, %v7451
      %v7580 = vadd.f32 %v7253, %v7452
      %v7581 = vadd.f32 %v7064, %v7453
      %v7582 = vadd.f32 %v7066, %v7454
      %v7583 = vadd.f32 %v7257, %v7455
      %v7584 = vadd.f32 %v7259, %v7456
      %v7585 = vadd.f32 %v7068, %v7457
      %v7586 = vadd.f32 %v7070, %v7458
      %v7587 = vadd.f32 %v7261, %v7459
      %v7588 = vadd.f32 %v7263, %v7460
      %v7589 = vadd.f32 %v7074, %v7461
      %v7590 = vadd.f32 %v7076, %v7462
      %v7591 = vadd.f32 %v7267, %v7463
      %v7592 = vadd.f32 %v7269, %v7464
      %v7593 = vadd.f32 %v7078, %v7465
      %v7594 = vadd.f32 %v7080, %v7466
      %v7595 = vadd.f32 %v7271, %v7467
      %v7596 = vadd.f32 %v7273, %v7468
      %v7597 = vadd.f32 %v7084, %v7469
      %v7598 = vadd.f32 %v7086, %v7470
      %v7599 = vadd.f32 %v7277, %v7471
      %v7600 = vadd.f32 %v7279, %v7472
      %v7601 = vadd.f32 %v7088, %v7473
      %v7602 = vadd.f32 %v7090, %v7474
      %v7603 = vadd.f32 %v7281, %v7475
      %v7604 = vadd.f32 %v7283, %v7476
      %v7605 = vmax.f32 %v7477, 0.0
      %v7606 = vmax.f32 %v7478, 0.0
      %v7607 = vmax.f32 %v7479, 0.0
      %v7608 = vmax.f32 %v7480, 0.0
      %v7609 = vmax.f32 %v7481, 0.0
      %v7610 = vmax.f32 %v7482, 0.0
      %v7611 = vmax.f32 %v7483, 0.0
      %v7612 = vmax.f32 %v7484, 0.0
      %v7613 = vmax.f32 %v7485, 0.0
      %v7614 = vmax.f32 %v7486, 0.0
      %v7615 = vmax.f32 %v7487, 0.0
      %v7616 = vmax.f32 %v7488, 0.0
      %v7617 = vmax.f32 %v7489, 0.0
      %v7618 = vmax.f32 %v7490, 0.0
      %v7619 = vmax.f32 %v7491, 0.0
      %v7620 = vmax.f32 %v7492, 0.0
      %v7621 = vmax.f32 %v7493, 0.0
      %v7622 = vmax.f32 %v7494, 0.0
      %v7623 = vmax.f32 %v7495, 0.0
      %v7624 = vmax.f32 %v7496, 0.0
      %v7625 = vmax.f32 %v7497, 0.0
      %v7626 = vmax.f32 %v7498, 0.0
      %v7627 = vmax.f32 %v7499, 0.0
      %v7628 = vmax.f32 %v7500, 0.0
      %v7629 = vmax.f32 %v7501, 0.0
      %v7630 = vmax.f32 %v7502, 0.0
      %v7631 = vmax.f32 %v7503, 0.0
      %v7632 = vmax.f32 %v7504, 0.0
      %v7633 = vmax.f32 %v7505, 0.0
      %v7634 = vmax.f32 %v7506, 0.0
      %v7635 = vmax.f32 %v7507, 0.0
      %v7636 = vmax.f32 %v7508, 0.0
      %v7637 = vmax.f32 %v7509, 0.0
      %v7638 = vmax.f32 %v7510, 0.0
      %v7639 = vmax.f32 %v7511, 0.0
      %v7640 = vmax.f32 %v7512, 0.0
      %v7641 = vmax.f32 %v7513, 0.0
      %v7642 = vmax.f32 %v7514, 0.0
      %v7643 = vmax.f32 %v7515, 0.0
      %v7644 = vmax.f32 %v7516, 0.0
      %v7645 = vmax.f32 %v7517, 0.0
      %v7646 = vmax.f32 %v7518, 0.0
      %v7647 = vmax.f32 %v7519, 0.0
      %v7648 = vmax.f32 %v7520, 0.0
      %v7649 = vmax.f32 %v7521, 0.0
      %v7650 = vmax.f32 %v7522, 0.0
      %v7651 = vmax.f32 %v7523, 0.0
      %v7652 = vmax.f32 %v7524, 0.0
      %v7653 = vmax.f32 %v7525, 0.0
      %v7654 = vmax.f32 %v7526, 0.0
      %v7655 = vmax.f32 %v7527, 0.0
      %v7656 = vmax.f32 %v7528, 0.0
      %v7657 = vmax.f32 %v7529, 0.0
      %v7658 = vmax.f32 %v7530, 0.0
      %v7659 = vmax.f32 %v7531, 0.0
      %v7660 = vmax.f32 %v7532, 0.0
      %v7661 = vmax.f32 %v7533, 0.0
      %v7662 = vmax.f32 %v7534, 0.0
      %v7663 = vmax.f32 %v7535, 0.0
      %v7664 = vmax.f32 %v7536, 0.0
      %v7665 = vmax.f32 %v7537, 0.0
      %v7666 = vmax.f32 %v7538, 0.0
      %v7667 = vmax.f32 %v7539, 0.0
      %v7668 = vmax.f32 %v7540, 0.0
      %v7669 = vmax.f32 %v7541, 0.0
      %v7670 = vmax.f32 %v7542, 0.0
      %v7671 = vmax.f32 %v7543, 0.0
      %v7672 = vmax.f32 %v7544, 0.0
      %v7673 = vmax.f32 %v7545, 0.0
      %v7674 = vmax.f32 %v7546, 0.0
      %v7675 = vmax.f32 %v7547, 0.0
      %v7676 = vmax.f32 %v7548, 0.0
      %v7677 = vmax.f32 %v7549, 0.0
      %v7678 = vmax.f32 %v7550, 0.0
      %v7679 = vmax.f32 %v7551, 0.0
      %v7680 = vmax.f32 %v7552, 0.0
      %v7681 = vmax.f32 %v7553, 0.0
      %v7682 = vmax.f32 %v7554, 0.0
      %v7683 = vmax.f32 %v7555, 0.0
      %v7684 = vmax.f32 %v7556, 0.0
      %v7685 = vmax.f32 %v7557, 0.0
      %v7686 = vmax.f32 %v7558, 0.0
      %v7687 = vmax.f32 %v7559, 0.0
      %v7688 = vmax.f32 %v7560, 0.0
      %v7689 = vmax.f32 %v7561, 0.0
      %v7690 = vmax.f32 %v7562, 0.0
      %v7691 = vmax.f32 %v7563, 0.0
      %v7692 = vmax.f32 %v7564, 0.0
      %v7693 = vmax.f32 %v7565, 0.0
      %v7694 = vmax.f32 %v7566, 0.0
      %v7695 = vmax.f32 %v7567, 0.0
      %v7696 = vmax.f32 %v7568, 0.0
      %v7697 = vmax.f32 %v7569, 0.0
      %v7698 = vmax.f32 %v7570, 0.0
      %v7699 = vmax.f32 %v7571, 0.0
      %v7700 = vmax.f32 %v7572, 0.0
      %v7701 = vmax.f32 %v7573, 0.0
      %v7702 = vmax.f32 %v7574, 0.0
      %v7703 = vmax.f32 %v7575, 0.0
      %v7704 = vmax.f32 %v7576, 0.0
      %v7705 = vmax.f32 %v7577, 0.0
      %v7706 = vmax.f32 %v7578, 0.0
      %v7707 = vmax.f32 %v7579, 0.0
      %v7708 = vmax.f32 %v7580, 0.0
      %v7709 = vmax.f32 %v7581, 0.0
      %v7710 = vmax.f32 %v7582, 0.0
      %v7711 = vmax.f32 %v7583, 0.0
      %v7712 = vmax.f32 %v7584, 0.0
      %v7713 = vmax.f32 %v7585, 0.0
      %v7714 = vmax.f32 %v7586, 0.0
      %v7715 = vmax.f32 %v7587, 0.0
      %v7716 = vmax.f32 %v7588, 0.0
      %v7717 = vmax.f32 %v7589, 0.0
      %v7718 = vmax.f32 %v7590, 0.0
      %v7719 = vmax.f32 %v7591, 0.0
      %v7720 = vmax.f32 %v7592, 0.0
      %v7721 = vmax.f32 %v7593, 0.0
      %v7722 = vmax.f32 %v7594, 0.0
      %v7723 = vmax.f32 %v7595, 0.0
      %v7724 = vmax.f32 %v7596, 0.0
      %v7725 = vmax.f32 %v7597, 0.0
      %v7726 = vmax.f32 %v7598, 0.0
      %v7727 = vmax.f32 %v7599, 0.0
      %v7728 = vmax.f32 %v7600, 0.0
      %v7729 = vmax.f32 %v7601, 0.0
      %v7730 = vmax.f32 %v7602, 0.0
      %v7731 = vmax.f32 %v7603, 0.0
      %v7732 = vmax.f32 %v7604, 0.0
      %v7733 = vpack.c.bf16 %v7609, %v7605
      %v7734 = vpack.c.bf16 %v7610, %v7606
      %v7735 = vpack.c.bf16 %v7611, %v7607
      %v7736 = vpack.c.bf16 %v7612, %v7608
      %v7737 = vpack.c.bf16 %v7617, %v7613
      %v7738 = vpack.c.bf16 %v7618, %v7614
      %v7739 = vpack.c.bf16 %v7619, %v7615
      %v7740 = vpack.c.bf16 %v7620, %v7616
      %v7741 = vpack.c.bf16 %v7625, %v7621
      %v7742 = vpack.c.bf16 %v7626, %v7622
      %v7743 = vpack.c.bf16 %v7627, %v7623
      %v7744 = vpack.c.bf16 %v7628, %v7624
      %v7745 = vpack.c.bf16 %v7633, %v7629
      %v7746 = vpack.c.bf16 %v7634, %v7630
      %v7747 = vpack.c.bf16 %v7635, %v7631
      %v7748 = vpack.c.bf16 %v7636, %v7632
      %v7749 = vpack.c.bf16 %v7641, %v7637
      %v7750 = vpack.c.bf16 %v7642, %v7638
      %v7751 = vpack.c.bf16 %v7643, %v7639
      %v7752 = vpack.c.bf16 %v7644, %v7640
      %v7753 = vpack.c.bf16 %v7649, %v7645
      %v7754 = vpack.c.bf16 %v7650, %v7646
      %v7755 = vpack.c.bf16 %v7651, %v7647
      %v7756 = vpack.c.bf16 %v7652, %v7648
      %v7757 = vpack.c.bf16 %v7657, %v7653
      %v7758 = vpack.c.bf16 %v7658, %v7654
      %v7759 = vpack.c.bf16 %v7659, %v7655
      %v7760 = vpack.c.bf16 %v7660, %v7656
      %v7761 = vpack.c.bf16 %v7665, %v7661
      %v7762 = vpack.c.bf16 %v7666, %v7662
      %v7763 = vpack.c.bf16 %v7667, %v7663
      %v7764 = vpack.c.bf16 %v7668, %v7664
      %v7765 = vpack.c.bf16 %v7673, %v7669
      %v7766 = vpack.c.bf16 %v7674, %v7670
      %v7767 = vpack.c.bf16 %v7675, %v7671
      %v7768 = vpack.c.bf16 %v7676, %v7672
      %v7769 = vpack.c.bf16 %v7681, %v7677
      %v7770 = vpack.c.bf16 %v7682, %v7678
      %v7771 = vpack.c.bf16 %v7683, %v7679
      %v7772 = vpack.c.bf16 %v7684, %v7680
      %v7773 = vpack.c.bf16 %v7689, %v7685
      %v7774 = vpack.c.bf16 %v7690, %v7686
      %v7775 = vpack.c.bf16 %v7691, %v7687
      %v7776 = vpack.c.bf16 %v7692, %v7688
      %v7777 = vpack.c.bf16 %v7697, %v7693
      %v7778 = vpack.c.bf16 %v7698, %v7694
      %v7779 = vpack.c.bf16 %v7699, %v7695
      %v7780 = vpack.c.bf16 %v7700, %v7696
      %v7781 = vpack.c.bf16 %v7705, %v7701
      %v7782 = vpack.c.bf16 %v7706, %v7702
      %v7783 = vpack.c.bf16 %v7707, %v7703
      %v7784 = vpack.c.bf16 %v7708, %v7704
      %v7785 = vpack.c.bf16 %v7713, %v7709
      %v7786 = vpack.c.bf16 %v7714, %v7710
      %v7787 = vpack.c.bf16 %v7715, %v7711
      %v7788 = vpack.c.bf16 %v7716, %v7712
      %v7789 = vpack.c.bf16 %v7721, %v7717
      %v7790 = vpack.c.bf16 %v7722, %v7718
      %v7791 = vpack.c.bf16 %v7723, %v7719
      %v7792 = vpack.c.bf16 %v7724, %v7720
      %v7793 = vpack.c.bf16 %v7729, %v7725
      %v7794 = vpack.c.bf16 %v7730, %v7726
      %v7795 = vpack.c.bf16 %v7731, %v7727
      %v7796 = vpack.c.bf16 %v7732, %v7728
      %v7861 = vunpack.c.l.b16 %v7733
      %v7862 = vunpack.c.l.b16 %v7734
      %v7863 = vunpack.c.l.b16 %v7735
      %v7864 = vunpack.c.l.b16 %v7736
      %v7865 = vunpack.c.h.b16 %v7733
      %v7866 = vunpack.c.h.b16 %v7734
      %v7867 = vunpack.c.h.b16 %v7735
      %v7868 = vunpack.c.h.b16 %v7736
      %v7869 = vunpack.c.l.b16 %v7737
      %v7870 = vunpack.c.l.b16 %v7738
      %v7871 = vunpack.c.l.b16 %v7739
      %v7872 = vunpack.c.l.b16 %v7740
      %v7873 = vunpack.c.h.b16 %v7737
      %v7874 = vunpack.c.h.b16 %v7738
      %v7875 = vunpack.c.h.b16 %v7739
      %v7876 = vunpack.c.h.b16 %v7740
      %v7877 = vunpack.c.l.b16 %v7741
      %v7878 = vunpack.c.l.b16 %v7742
      %v7879 = vunpack.c.l.b16 %v7743
      %v7880 = vunpack.c.l.b16 %v7744
      %v7881 = vunpack.c.h.b16 %v7741
      %v7882 = vunpack.c.h.b16 %v7742
      %v7883 = vunpack.c.h.b16 %v7743
      %v7884 = vunpack.c.h.b16 %v7744
      %v7885 = vunpack.c.l.b16 %v7745
      %v7886 = vunpack.c.l.b16 %v7746
      %v7887 = vunpack.c.l.b16 %v7747
      %v7888 = vunpack.c.l.b16 %v7748
      %v7889 = vunpack.c.h.b16 %v7745
      %v7890 = vunpack.c.h.b16 %v7746
      %v7891 = vunpack.c.h.b16 %v7747
      %v7892 = vunpack.c.h.b16 %v7748
      %v7893 = vunpack.c.l.b16 %v7749
      %v7894 = vunpack.c.l.b16 %v7750
      %v7895 = vunpack.c.l.b16 %v7751
      %v7896 = vunpack.c.l.b16 %v7752
      %v7897 = vunpack.c.h.b16 %v7749
      %v7898 = vunpack.c.h.b16 %v7750
      %v7899 = vunpack.c.h.b16 %v7751
      %v7900 = vunpack.c.h.b16 %v7752
      %v7901 = vunpack.c.l.b16 %v7753
      %v7902 = vunpack.c.l.b16 %v7754
      %v7903 = vunpack.c.l.b16 %v7755
      %v7904 = vunpack.c.l.b16 %v7756
      %v7905 = vunpack.c.h.b16 %v7753
      %v7906 = vunpack.c.h.b16 %v7754
      %v7907 = vunpack.c.h.b16 %v7755
      %v7908 = vunpack.c.h.b16 %v7756
      %v7909 = vunpack.c.l.b16 %v7757
      %v7910 = vunpack.c.l.b16 %v7758
      %v7911 = vunpack.c.l.b16 %v7759
      %v7912 = vunpack.c.l.b16 %v7760
      %v7913 = vunpack.c.h.b16 %v7757
      %v7914 = vunpack.c.h.b16 %v7758
      %v7915 = vunpack.c.h.b16 %v7759
      %v7916 = vunpack.c.h.b16 %v7760
      %v7917 = vunpack.c.l.b16 %v7761
      %v7918 = vunpack.c.l.b16 %v7762
      %v7919 = vunpack.c.l.b16 %v7763
      %v7920 = vunpack.c.l.b16 %v7764
      %v7921 = vunpack.c.h.b16 %v7761
      %v7922 = vunpack.c.h.b16 %v7762
      %v7923 = vunpack.c.h.b16 %v7763
      %v7924 = vunpack.c.h.b16 %v7764
      %v7925 = vunpack.c.l.b16 %v7765
      %v7926 = vunpack.c.l.b16 %v7766
      %v7927 = vunpack.c.l.b16 %v7767
      %v7928 = vunpack.c.l.b16 %v7768
      %v7929 = vunpack.c.h.b16 %v7765
      %v7930 = vunpack.c.h.b16 %v7766
      %v7931 = vunpack.c.h.b16 %v7767
      %v7932 = vunpack.c.h.b16 %v7768
      %v7933 = vunpack.c.l.b16 %v7769
      %v7934 = vunpack.c.l.b16 %v7770
      %v7935 = vunpack.c.l.b16 %v7771
      %v7936 = vunpack.c.l.b16 %v7772
      %v7937 = vunpack.c.h.b16 %v7769
      %v7938 = vunpack.c.h.b16 %v7770
      %v7939 = vunpack.c.h.b16 %v7771
      %v7940 = vunpack.c.h.b16 %v7772
      %v7941 = vunpack.c.l.b16 %v7773
      %v7942 = vunpack.c.l.b16 %v7774
      %v7943 = vunpack.c.l.b16 %v7775
      %v7944 = vunpack.c.l.b16 %v7776
      %v7945 = vunpack.c.h.b16 %v7773
      %v7946 = vunpack.c.h.b16 %v7774
      %v7947 = vunpack.c.h.b16 %v7775
      %v7948 = vunpack.c.h.b16 %v7776
      %v7949 = vunpack.c.l.b16 %v7777
      %v7950 = vunpack.c.l.b16 %v7778
      %v7951 = vunpack.c.l.b16 %v7779
      %v7952 = vunpack.c.l.b16 %v7780
      %v7953 = vunpack.c.h.b16 %v7777
      %v7954 = vunpack.c.h.b16 %v7778
      %v7955 = vunpack.c.h.b16 %v7779
      %v7956 = vunpack.c.h.b16 %v7780
      %v7957 = vunpack.c.l.b16 %v7781
      %v7958 = vunpack.c.l.b16 %v7782
      %v7959 = vunpack.c.l.b16 %v7783
      %v7960 = vunpack.c.l.b16 %v7784
      %v7961 = vunpack.c.h.b16 %v7781
      %v7962 = vunpack.c.h.b16 %v7782
      %v7963 = vunpack.c.h.b16 %v7783
      %v7964 = vunpack.c.h.b16 %v7784
      %v7965 = vunpack.c.l.b16 %v7785
      %v7966 = vunpack.c.l.b16 %v7786
      %v7967 = vunpack.c.l.b16 %v7787
      %v7968 = vunpack.c.l.b16 %v7788
      %v7969 = vunpack.c.h.b16 %v7785
      %v7970 = vunpack.c.h.b16 %v7786
      %v7971 = vunpack.c.h.b16 %v7787
      %v7972 = vunpack.c.h.b16 %v7788
      %v7973 = vunpack.c.l.b16 %v7789
      %v7974 = vunpack.c.l.b16 %v7790
      %v7975 = vunpack.c.l.b16 %v7791
      %v7976 = vunpack.c.l.b16 %v7792
      %v7977 = vunpack.c.h.b16 %v7789
      %v7978 = vunpack.c.h.b16 %v7790
      %v7979 = vunpack.c.h.b16 %v7791
      %v7980 = vunpack.c.h.b16 %v7792
      %v7981 = vunpack.c.l.b16 %v7793
      %v7982 = vunpack.c.l.b16 %v7794
      %v7983 = vunpack.c.l.b16 %v7795
      %v7984 = vunpack.c.l.b16 %v7796
      %v7985 = vunpack.c.h.b16 %v7793
      %v7986 = vunpack.c.h.b16 %v7794
      %v7987 = vunpack.c.h.b16 %v7795
      %v7988 = vunpack.c.h.b16 %v7796
      %v7989 = vpack.c.b16 %v7862, %v7861
      %v7990 = vpack.c.b16 %v7864, %v7863
      %v7991 = vpack.c.b16 %v7866, %v7865
      %v7992 = vpack.c.b16 %v7868, %v7867
      %v7993 = vpack.c.b16 %v7870, %v7869
      %v7994 = vpack.c.b16 %v7872, %v7871
      %v7995 = vpack.c.b16 %v7874, %v7873
      %v7996 = vpack.c.b16 %v7876, %v7875
      %v7997 = vpack.c.b16 %v7878, %v7877
      %v7998 = vpack.c.b16 %v7880, %v7879
      %v7999 = vpack.c.b16 %v7882, %v7881
      %v8000 = vpack.c.b16 %v7884, %v7883
      %v8001 = vpack.c.b16 %v7886, %v7885
      %v8002 = vpack.c.b16 %v7888, %v7887
      %v8003 = vpack.c.b16 %v7890, %v7889
      %v8004 = vpack.c.b16 %v7892, %v7891
      %v8005 = vpack.c.b16 %v7894, %v7893
      %v8006 = vpack.c.b16 %v7896, %v7895
      %v8007 = vpack.c.b16 %v7898, %v7897
      %v8008 = vpack.c.b16 %v7900, %v7899
      %v8009 = vpack.c.b16 %v7902, %v7901
      %v8010 = vpack.c.b16 %v7904, %v7903
      %v8011 = vpack.c.b16 %v7906, %v7905
      %v8012 = vpack.c.b16 %v7908, %v7907
      %v8013 = vpack.c.b16 %v7910, %v7909
      %v8014 = vpack.c.b16 %v7912, %v7911
      %v8015 = vpack.c.b16 %v7914, %v7913
      %v8016 = vpack.c.b16 %v7916, %v7915
      %v8017 = vpack.c.b16 %v7918, %v7917
      %v8018 = vpack.c.b16 %v7920, %v7919
      %v8019 = vpack.c.b16 %v7922, %v7921
      %v8020 = vpack.c.b16 %v7924, %v7923
      %v8021 = vpack.c.b16 %v7926, %v7925
      %v8022 = vpack.c.b16 %v7928, %v7927
      %v8023 = vpack.c.b16 %v7930, %v7929
      %v8024 = vpack.c.b16 %v7932, %v7931
      %v8025 = vpack.c.b16 %v7934, %v7933
      %v8026 = vpack.c.b16 %v7936, %v7935
      %v8027 = vpack.c.b16 %v7938, %v7937
      %v8028 = vpack.c.b16 %v7940, %v7939
      %v8029 = vpack.c.b16 %v7942, %v7941
      %v8030 = vpack.c.b16 %v7944, %v7943
      %v8031 = vpack.c.b16 %v7946, %v7945
      %v8032 = vpack.c.b16 %v7948, %v7947
      %v8033 = vpack.c.b16 %v7950, %v7949
      %v8034 = vpack.c.b16 %v7952, %v7951
      %v8035 = vpack.c.b16 %v7954, %v7953
      %v8036 = vpack.c.b16 %v7956, %v7955
      %v8037 = vpack.c.b16 %v7958, %v7957
      %v8038 = vpack.c.b16 %v7960, %v7959
      %v8039 = vpack.c.b16 %v7962, %v7961
      %v8040 = vpack.c.b16 %v7964, %v7963
      %v8041 = vpack.c.b16 %v7966, %v7965
      %v8042 = vpack.c.b16 %v7968, %v7967
      %v8043 = vpack.c.b16 %v7970, %v7969
      %v8044 = vpack.c.b16 %v7972, %v7971
      %v8045 = vpack.c.b16 %v7974, %v7973
      %v8046 = vpack.c.b16 %v7976, %v7975
      %v8047 = vpack.c.b16 %v7978, %v7977
      %v8048 = vpack.c.b16 %v7980, %v7979
      %v8049 = vpack.c.b16 %v7982, %v7981
      %v8050 = vpack.c.b16 %v7984, %v7983
      %v8051 = vpack.c.b16 %v7986, %v7985
      %v8052 = vpack.c.b16 %v7988, %v7987
      %8117 = vst [vmem:[%s278] sm:$0xff] %v7989
      %8118 = vst [vmem:[%s278 + $0x8] sm:$0xff] %v7990
      %8119 = vst [vmem:[%s278 + $0x10] sm:$0xff] %v7991
      %8120 = vst [vmem:[%s278 + $0x18] sm:$0xff] %v7992
      %8121 = vst [vmem:[%s278 + $0x20] sm:$0xff] %v7993
      %8122 = vst [vmem:[%s278 + $0x28] sm:$0xff] %v7994
      %8123 = vst [vmem:[%s278 + $0x30] sm:$0xff] %v7995
      %8124 = vst [vmem:[%s278 + $0x38] sm:$0xff] %v7996
      %8125 = vst [vmem:[%s278 + $0x40] sm:$0xff] %v7997
      %8126 = vst [vmem:[%s278 + $0x48] sm:$0xff] %v7998
      %8127 = vst [vmem:[%s278 + $0x50] sm:$0xff] %v7999
      %8128 = vst [vmem:[%s278 + $0x58] sm:$0xff] %v8000
      %8129 = vst [vmem:[%s278 + $0x60] sm:$0xff] %v8001
      %8130 = vst [vmem:[%s278 + $0x68] sm:$0xff] %v8002
      %8131 = vst [vmem:[%s278 + $0x70] sm:$0xff] %v8003
      %8132 = vst [vmem:[%s278 + $0x78] sm:$0xff] %v8004
      %8133 = vst [vmem:[%s278 + $0x80] sm:$0xff] %v8005
      %8134 = vst [vmem:[%s278 + $0x88] sm:$0xff] %v8006
      %8135 = vst [vmem:[%s278 + $0x90] sm:$0xff] %v8007
      %8136 = vst [vmem:[%s278 + $0x98] sm:$0xff] %v8008
      %8137 = vst [vmem:[%s278 + $0xa0] sm:$0xff] %v8009
      %8138 = vst [vmem:[%s278 + $0xa8] sm:$0xff] %v8010
      %8139 = vst [vmem:[%s278 + $0xb0] sm:$0xff] %v8011
      %8140 = vst [vmem:[%s278 + $0xb8] sm:$0xff] %v8012
      %8141 = vst [vmem:[%s278 + $0xc0] sm:$0xff] %v8013
      %8142 = vst [vmem:[%s278 + $0xc8] sm:$0xff] %v8014
      %8143 = vst [vmem:[%s278 + $0xd0] sm:$0xff] %v8015
      %8144 = vst [vmem:[%s278 + $0xd8] sm:$0xff] %v8016
      %8145 = vst [vmem:[%s278 + $0xe0] sm:$0xff] %v8017
      %8146 = vst [vmem:[%s278 + $0xe8] sm:$0xff] %v8018
      %8147 = vst [vmem:[%s278 + $0xf0] sm:$0xff] %v8019
      %8148 = vst [vmem:[%s278 + $0xf8] sm:$0xff] %v8020
      %8149 = vst [vmem:[%s278 + $0x100] sm:$0xff] %v8021
      %8150 = vst [vmem:[%s278 + $0x108] sm:$0xff] %v8022
      %8151 = vst [vmem:[%s278 + $0x110] sm:$0xff] %v8023
      %8152 = vst [vmem:[%s278 + $0x118] sm:$0xff] %v8024
      %8153 = vst [vmem:[%s278 + $0x120] sm:$0xff] %v8025
      %8154 = vst [vmem:[%s278 + $0x128] sm:$0xff] %v8026
      %8155 = vst [vmem:[%s278 + $0x130] sm:$0xff] %v8027
      %8156 = vst [vmem:[%s278 + $0x138] sm:$0xff] %v8028
      %8157 = vst [vmem:[%s278 + $0x140] sm:$0xff] %v8029
      %8158 = vst [vmem:[%s278 + $0x148] sm:$0xff] %v8030
      %8159 = vst [vmem:[%s278 + $0x150] sm:$0xff] %v8031
      %8160 = vst [vmem:[%s278 + $0x158] sm:$0xff] %v8032
      %8161 = vst [vmem:[%s278 + $0x160] sm:$0xff] %v8033
      %8162 = vst [vmem:[%s278 + $0x168] sm:$0xff] %v8034
      %8163 = vst [vmem:[%s278 + $0x170] sm:$0xff] %v8035
      %8164 = vst [vmem:[%s278 + $0x178] sm:$0xff] %v8036
      %8165 = vst [vmem:[%s278 + $0x180] sm:$0xff] %v8037
      %8166 = vst [vmem:[%s278 + $0x188] sm:$0xff] %v8038
      %8167 = vst [vmem:[%s278 + $0x190] sm:$0xff] %v8039
      %8168 = vst [vmem:[%s278 + $0x198] sm:$0xff] %v8040
      %8169 = vst [vmem:[%s278 + $0x1a0] sm:$0xff] %v8041
      %8170 = vst [vmem:[%s278 + $0x1a8] sm:$0xff] %v8042
      %8171 = vst [vmem:[%s278 + $0x1b0] sm:$0xff] %v8043
      %8172 = vst [vmem:[%s278 + $0x1b8] sm:$0xff] %v8044
      %8173 = vst [vmem:[%s278 + $0x1c0] sm:$0xff] %v8045
      %8174 = vst [vmem:[%s278 + $0x1c8] sm:$0xff] %v8046
      %8175 = vst [vmem:[%s278 + $0x1d0] sm:$0xff] %v8047
      %8176 = vst [vmem:[%s278 + $0x1d8] sm:$0xff] %v8048
      %8177 = vst [vmem:[%s278 + $0x1e0] sm:$0xff] %v8049
      %8178 = vst [vmem:[%s278 + $0x1e8] sm:$0xff] %v8050
      %8179 = vst [vmem:[%s278 + $0x1f0] sm:$0xff] %v8051
      %8180 = vst [vmem:[%s278 + $0x1f8] sm:$0xff] %v8052
      %p8181 = scmp.lt.s32.totalorder %s18, 1
      %s8182 = scalar_select %p8181, %s18, 1
      %s8183 = smul.addr %s8182, 128
      %s8184 = smul.addr %s8183, 4
      %s8185 = scalar_lea.vmem %s7, %s8184
      // Predicated region
      $region49: #{bottleneck_forward.1} parent=47 // pred_check
        %p8186 = pneg %p188
      $region50: #{bottleneck_forward.1} parent=47 // pred_check_branch
        %8188 = sbr.rel (%p8186) target = $region52
      $region51: #{bottleneck_forward.1} parent=47 // pred_region
        _
      $region52: #{bottleneck_forward.1} parent=47 // pred_fallthru
        _
    $region48: #{bottleneck_forward.1} parent=5 // pred_fallthru
      _
    %p8189 = scmp.le.s32.totalorder 2, %s13
    // Predicated region
    $region53: #{bottleneck_forward.1} parent=5 // pred_check
      %p8190 = pneg %p8189
    $region54: #{bottleneck_forward.1} parent=5 // pred_check_branch
      %8192 = sbr.rel (%p8190) target = $region56
    $region55: #{bottleneck_forward.1} parent=5 // pred_region
      %s8193 = ssub.s32 %s13, 2
      // Predicated region
      $region57: #{bottleneck_forward.1} parent=55 // pred_check
        %p8194 = pneg %p194
      $region58: #{bottleneck_forward.1} parent=55 // pred_check_branch
        %8196 = sbr.rel (%p8194) target = $region60
      $region59: #{bottleneck_forward.1} parent=55 // pred_region
        %p8197 = scmp.lt.s32.totalorder %s19, 1
        %s8198 = scalar_select %p8197, %s19, 1
        %s8199 = smul.addr %s8198, 128
        %s8200 = smul.addr %s8199, 4
        %s8201 = scalar_lea.vmem %s7, %s8200
      $region60: #{bottleneck_forward.1} parent=55 // pred_fallthru
        _
    $region56: #{bottleneck_forward.1} parent=5 // pred_fallthru
      _
  $region6: #{bottleneck_forward.1} parent=0 // loop_footer
    %s17 = sadd.s32 1, %s13
  $region7: #{bottleneck_forward.1} parent=0 // loop_footer_branch
    %12 = sbr.rel target = $region3
  $region8: #{bottleneck_forward.1} parent=0 // loop_exit
    _

</llo_original>
